<compile_context>
chip_gen: v5e
topology: v5e:2x2
jax: 0.10.0
libtpu: 0.0.40
codegen_flags: <defaults>
</compile_context>

<pallas_src>
import functools

import jax
import jax.numpy as jnp
from jax.experimental import pallas as pl
from jax.experimental.pallas import tpu as pltpu

SPATIAL_LEN = 40   # matches the PyTorch module
MAX_TILE_B = 1024  # cap on the batch tile (multiple of 256 for v6e/v7x MXU)


def _round_up(x, m):
    return ((x + m - 1) // m) * m


def pick_tile_b(B):
    """Batch tile: big enough to hide per-step overhead, >=2 tiles when possible."""
    if B <= 256:
        return 256
    return min(MAX_TILE_B, _round_up(pl.cdiv(B, 2), 256))


# ----------------------------------------------------------------------------
# Kernel: one batch tile, all weights resident in VMEM, one packed output slab.
# ----------------------------------------------------------------------------
def kernel(p,  # static: number of endmembers P (code lanes)
           x_ref, w1_ref, b1_ref, w2_ref, b2_ref,
           wfc1_ref, bfc1_ref, wfc2_ref,
           wb1_ref, bb1_ref, wb2_ref, bcat_ref,
           wc1_ref, bc1_ref, wc2_ref, bc2_ref,
           wde_ref, out_ref):
    f32, bf16 = jnp.float32, jnp.bfloat16
    x = x_ref[...].astype(bf16)                                     # (TB, L*9)

    # conv1 (3x3, pad=1 on the 3x3 patch): all 9 output positions in ONE matmul.
    y1 = jnp.dot(x, w1_ref[...], preferred_element_type=f32) + b1_ref[...]
    y1 = jnp.maximum(y1, 0.0)                                       # (TB, 9*128)

    # conv2 (3x3 valid -> 1x1): single K=1152 contraction.
    y2 = jnp.dot(y1.astype(bf16), w2_ref[...],
                 preferred_element_type=f32) + b2_ref[...]
    y2 = jnp.maximum(y2, 0.0)                                       # (TB, 128)

    # fc_conv[0] / fc_band[0]
    h = jnp.tanh(jnp.dot(y2.astype(bf16), wfc1_ref[...],
                         preferred_element_type=f32) + bfc1_ref[...])       # (TB,128)
    g = jnp.tanh(jnp.dot(x, wb1_ref[...],
                         preferred_element_type=f32) + bb1_ref[...])        # (TB,128)

    # fc_conv[2] + fc_band[2] + concat fused into one lane-dense (TB,128) tile:
    # lanes 0..39 = tanh(fc_conv[2]), lanes 40..99 = tanh(fc_band[2]), rest = 0.
    line_cat = jnp.tanh(
        jnp.dot(h.astype(bf16), wfc2_ref[...], preferred_element_type=f32)
        + jnp.dot(g.astype(bf16), wb2_ref[...], preferred_element_type=f32)
        + bcat_ref[...])                                                    # (TB,128)

    # fc_cat: single aligned K=128 matmul (padding rows of wc1 are zero).
    c = jnp.tanh(jnp.dot(line_cat.astype(bf16), wc1_ref[...],
                         preferred_element_type=f32) + bc1_ref[...])        # (TB, 50)
    # Lane-padded logits: lanes >= P carry a -1e30 f32 bias so softmax gives 0.
    logits = jnp.dot(c.astype(bf16), wc2_ref[...],
                     preferred_element_type=f32) + bc2_ref[...]             # (TB,128)

    # softmax(dim=1), f32, exact reciprocal (keeps row-sum == 1).
    m = jnp.max(logits, axis=1, keepdims=True)
    e = jnp.exp(logits - m)
    code = e * pl.reciprocal(jnp.sum(e, axis=1, keepdims=True), approx=False)

    # de_main folded to lanes [P, P+L): recon = code @ wdep (code lanes >= P are 0).
    recon = jnp.dot(code.astype(bf16), wde_ref[...],
                    preferred_element_type=f32)                             # (TB,128)
    lane = jax.lax.broadcasted_iota(jnp.int32, code.shape, 1)
    # Single full-width store: lanes < P hold the exact f32 code, the rest recon.
    out_ref[...] = jnp.where(lane < p, code, recon)


# ----------------------------------------------------------------------------
# One-time weight preparation (done at parameter-load time, NOT per forward).
# ----------------------------------------------------------------------------
def prepare_params(params, dtype=jnp.bfloat16):
    (w1, b1, w2, b2, wfc1, bfc1, wfc2, bfc2,
     wb1, bb1, wb2, bb2, wc1, bc1, wc2, bc2, wde) = params
    f32 = jnp.float32
    L = w1.shape[1]
    P = wc2.shape[0]
    assert P + L <= 128, "packed output slab requires P + L <= 128"

    # conv1 folded: W1eff[c*9+q, p*128+o] = w1[o, c, qi-pi+1, qj-pj+1] (0 if OOB).
    cols = []
    for pi in range(3):
        for pj in range(3):
            blk = jnp.zeros((L, 9, 128), f32)                     # [c_in, q, o]
            for qi in range(3):
                for qj in range(3):
                    ki, kj = qi - pi + 1, qj - pj + 1
                    if 0 <= ki < 3 and 0 <= kj < 3:
                        blk = blk.at[:, qi * 3 + qj, :].set(w1[:, :, ki, kj].T)
            cols.append(blk.reshape(L * 9, 128))
    w1e = jnp.concatenate(cols, axis=1)                           # (L*9, 9*128)
    b1e = jnp.tile(b1, 9)[None, :]                                # (1, 9*128)

    # conv2 folded: y1 layout [p*128 + c_in]  ->  W2eff[(pi*3+pj)*128 + c_in, o].
    w2e = jnp.transpose(w2, (2, 3, 1, 0)).reshape(9 * 128, 128)

    # fc_band first layer with the center-pixel (q == 4) selection folded in.
    wb1e = jnp.zeros((L, 9, 128), f32).at[:, 4, :].set(wb1.T).reshape(L * 9, 128)

    S = SPATIAL_LEN
    # Fused line_cat layer: lanes 0..S-1 from fc_conv[2], lanes S..99 from fc_band[2].
    wfc2p = jnp.zeros((128, 128), f32).at[:, :S].set(wfc2.T)
    wb2p = jnp.zeros((128, 128), f32).at[:, S:100].set(wb2.T)
    bcat = jnp.zeros((128,), f32).at[:S].set(bfc2).at[S:100].set(bb2)[None, :]
    # fc_cat[0] as one K=128 matmul (padding rows zero).
    wc1p = jnp.zeros((128, 50), f32).at[:100, :].set(wc1.T)
    # Lane-dense logits / packed output weights.
    wc2p = jnp.zeros((50, 128), f32).at[:, :P].set(wc2.T)
    bc2p = jnp.full((1, 128), -1e30, f32).at[0, :P].set(bc2)      # MUST stay f32
    wdep = jnp.zeros((128, 128), f32).at[:P, P:P + L].set(wde.T)  # recon in lanes P..P+L-1

    wcast = lambda w: w.astype(dtype)
    bcast = lambda b: b.reshape(1, -1).astype(f32)
    weights = (wcast(w1e), b1e.astype(f32), wcast(w2e), bcast(b2),
               wcast(wfc1.T), bcast(bfc1), wcast(wfc2p),
               wcast(wb1e), bcast(bb1), wcast(wb2p), bcat.astype(f32),
               wcast(wc1p), bcast(bc1),
               wcast(wc2p), bc2p, wcast(wdep))
    return {"L": L, "P": P, "weights": weights}


# ----------------------------------------------------------------------------
# Forward wrapper: batch-tiled pallas_call, single packed (B, 128) output.
# ----------------------------------------------------------------------------
def sscat_ae_forward(x, prepared, *, tile_b=None):
    """x: (B, L, 3, 3) float32 NCHW. Returns (code (B, P), output (B, L))."""
    L, P = prepared["L"], prepared["P"]
    weights = prepared["weights"]
    B = x.shape[0]
    assert x.shape[1:] == (L, 3, 3), "view(-1,128) in forward() requires 3x3 patches"

    if tile_b is None:
        tile_b = pick_tile_b(B)
    n_tiles = pl.cdiv(B, tile_b)

    # Free contiguous reshape; dtype stays f32 — the bf16 cast happens in-kernel.
    xf = x.reshape(B, L * 9)

    const2 = lambda i: (0, 0)                                     # weights: resident
    in_specs = [pl.BlockSpec((tile_b, L * 9), lambda i: (i, 0))]
    in_specs += [pl.BlockSpec(w.shape, const2) for w in weights]
    out_specs = pl.BlockSpec((tile_b, 128), lambda i: (i, 0))

    out = pl.pallas_call(
        functools.partial(kernel, P),
        grid=(n_tiles,),
        in_specs=in_specs,
        out_specs=out_specs,
        out_shape=jax.ShapeDtypeStruct((B, 128), jnp.float32),
        compiler_params=pltpu.CompilerParams(
            dimension_semantics=("parallel",),
            vmem_limit_bytes=48 * 1024 * 1024),
    )(xf, *weights)

    # Two cheap lane slices of the single packed slab (keep `out` if the
    # consumer can take the padded layout directly).
    return out[:, :P], out[:, P:P + L]


# ----------------------------------------------------------------------------
# Pure-JAX reference mirroring the PyTorch module exactly (f32).
# ----------------------------------------------------------------------------
def reference_forward(x, params):
    (w1, b1, w2, b2, wfc1, bfc1, wfc2, bfc2,
     wb1, bb1, wb2, bb2, wc1, bc1, wc2, bc2, wde) = params
    dn = ('NCHW', 'OIHW', 'NCHW')
    y = jax.lax.conv_general_dilated(x, w1, (1, 1), ((1, 1), (1, 1)),
                                     dimension_numbers=dn)
    y = jnp.maximum(y + b1[None, :, None, None], 0.0)
    y = jax.lax.conv_general_dilated(y, w2, (1, 1), 'VALID', dimension_numbers=dn)
    y = jnp.maximum(y + b2[None, :, None, None], 0.0)
    line1 = y.reshape(-1, 128)
    line1 = jnp.tanh(line1 @ wfc1.T + bfc1)
    line1 = jnp.tanh(line1 @ wfc2.T + bfc2)
    line2 = jnp.tanh(x[:, :, 1, 1] @ wb1.T + bb1)
    line2 = jnp.tanh(line2 @ wb2.T + bb2)
    cat = jnp.concatenate([line1, line2], axis=1)
    h = jnp.tanh(cat @ wc1.T + bc1)
    logits = h @ wc2.T + bc2
    code = jax.nn.softmax(logits, axis=1)
    return code, code @ wde.T


if __name__ == "__main__":
    L, P = 16, 4
    B = 500  # non-multiple of the tile to exercise the ragged last block + 2 tiles

    key = jax.random.PRNGKey(0)
    keys = jax.random.split(key, 18)

    def u(k, shape, fan_in):
        bound = 1.0 / (fan_in ** 0.5)
        return jax.random.uniform(k, shape, jnp.float32, -bound, bound)

    # PyTorch parameter shapes (weights stored as (out, in) / OIHW), deterministic init.
    params = (
        u(keys[0], (128, L, 3, 3), L * 9),      u(keys[1], (128,), L * 9),       # conv1
        u(keys[2], (128, 128, 3, 3), 128 * 9),  u(keys[3], (128,), 128 * 9),     # conv2
        u(keys[4], (128, 128), 128),            u(keys[5], (128,), 128),         # fc_conv[0]
        u(keys[6], (SPATIAL_LEN, 128), 128),    u(keys[7], (SPATIAL_LEN,), 128), # fc_conv[2]
        u(keys[8], (128, L), L),                u(keys[9], (128,), L),           # fc_band[0]
        u(keys[10], (100 - SPATIAL_LEN, 128), 128),
        u(keys[11], (100 - SPATIAL_LEN,), 128),                                   # fc_band[2]
        u(keys[12], (50, 100), 100),            u(keys[13], (50,), 100),         # fc_cat[0]
        u(keys[14], (P, 50), 50),               u(keys[15], (P,), 50),           # fc_cat[2]
        u(keys[16], (L, P), P),                                                   # de_main
    )

    x = jax.random.normal(keys[17], (B, L, 3, 3), jnp.float32)

    prepared = prepare_params(params)          # one-time weight layout / folding
    code, output = sscat_ae_forward(x, prepared)
    jax.block_until_ready((code, output))

    code_ref, output_ref = reference_forward(x, params)
    assert code.shape == (B, P) and output.shape == (B, L)
    assert bool(jnp.allclose(code, code_ref, rtol=2e-2, atol=2e-2))
    assert bool(jnp.allclose(output, output_ref, rtol=2e-2, atol=2e-2))
    assert bool(jnp.allclose(jnp.sum(code, axis=1), jnp.ones((B,)), atol=1e-4))

    print("KERNEL_OK")
</pallas_src>

<mosaic_0001>
module attributes {stable_mosaic.version = 11 : i64} {
  func.func @kernel(%arg0: i32, %arg1: memref<256x144xf32, #tpu.memory_space<vmem>>, %arg2: memref<144x1152xbf16, #tpu.memory_space<vmem>>, %arg3: memref<1x1152xf32, #tpu.memory_space<vmem>>, %arg4: memref<1152x128xbf16, #tpu.memory_space<vmem>>, %arg5: memref<1x128xf32, #tpu.memory_space<vmem>>, %arg6: memref<128x128xbf16, #tpu.memory_space<vmem>>, %arg7: memref<1x128xf32, #tpu.memory_space<vmem>>, %arg8: memref<128x128xbf16, #tpu.memory_space<vmem>>, %arg9: memref<144x128xbf16, #tpu.memory_space<vmem>>, %arg10: memref<1x128xf32, #tpu.memory_space<vmem>>, %arg11: memref<128x128xbf16, #tpu.memory_space<vmem>>, %arg12: memref<1x128xf32, #tpu.memory_space<vmem>>, %arg13: memref<128x50xbf16, #tpu.memory_space<vmem>>, %arg14: memref<1x50xf32, #tpu.memory_space<vmem>>, %arg15: memref<50x128xbf16, #tpu.memory_space<vmem>>, %arg16: memref<1x128xf32, #tpu.memory_space<vmem>>, %arg17: memref<128x128xbf16, #tpu.memory_space<vmem>>, %arg18: memref<256x128xf32, #tpu.memory_space<vmem>>) attributes {dimension_semantics = [#tpu.dimension_semantics<parallel>], iteration_bounds = array<i64: 2>, scalar_prefetch = 0 : i64, scratch_operands = 0 : i64, tpu.core_type = #tpu.core_type<tc>, window_params = [{transform_indices = @transform_0, window_bounds = array<i64: 256, 144>}, {pipeline_mode = #tpu.pipeline_mode<synchronous>, transform_indices = @transform_1, window_bounds = array<i64: 144, 1152>}, {pipeline_mode = #tpu.pipeline_mode<synchronous>, transform_indices = @transform_2, window_bounds = array<i64: 1, 1152>}, {pipeline_mode = #tpu.pipeline_mode<synchronous>, transform_indices = @transform_3, window_bounds = array<i64: 1152, 128>}, {pipeline_mode = #tpu.pipeline_mode<synchronous>, transform_indices = @transform_4, window_bounds = array<i64: 1, 128>}, {pipeline_mode = #tpu.pipeline_mode<synchronous>, transform_indices = @transform_5, window_bounds = array<i64: 128, 128>}, {pipeline_mode = #tpu.pipeline_mode<synchronous>, transform_indices = @transform_6, window_bounds = array<i64: 1, 128>}, {pipeline_mode = #tpu.pipeline_mode<synchronous>, transform_indices = @transform_7, window_bounds = array<i64: 128, 128>}, {pipeline_mode = #tpu.pipeline_mode<synchronous>, transform_indices = @transform_8, window_bounds = array<i64: 144, 128>}, {pipeline_mode = #tpu.pipeline_mode<synchronous>, transform_indices = @transform_9, window_bounds = array<i64: 1, 128>}, {pipeline_mode = #tpu.pipeline_mode<synchronous>, transform_indices = @transform_10, window_bounds = array<i64: 128, 128>}, {pipeline_mode = #tpu.pipeline_mode<synchronous>, transform_indices = @transform_11, window_bounds = array<i64: 1, 128>}, {pipeline_mode = #tpu.pipeline_mode<synchronous>, transform_indices = @transform_12, window_bounds = array<i64: 128, 50>}, {pipeline_mode = #tpu.pipeline_mode<synchronous>, transform_indices = @transform_13, window_bounds = array<i64: 1, 50>}, {pipeline_mode = #tpu.pipeline_mode<synchronous>, transform_indices = @transform_14, window_bounds = array<i64: 50, 128>}, {pipeline_mode = #tpu.pipeline_mode<synchronous>, transform_indices = @transform_15, window_bounds = array<i64: 1, 128>}, {pipeline_mode = #tpu.pipeline_mode<synchronous>, transform_indices = @transform_16, window_bounds = array<i64: 128, 128>}, {transform_indices = @transform_17, window_bounds = array<i64: 256, 128>}]} {
    %c0 = arith.constant 0 : index
    %c0_0 = arith.constant 0 : index
    %0 = vector.load %arg1[%c0, %c0_0] : memref<256x144xf32, #tpu.memory_space<vmem>>, vector<256x144xf32>
    %1 = arith.truncf %0 : vector<256x144xf32> to vector<256x144xbf16>
    %c0_1 = arith.constant 0 : index
    %c0_2 = arith.constant 0 : index
    %2 = vector.load %arg2[%c0_1, %c0_2] : memref<144x1152xbf16, #tpu.memory_space<vmem>>, vector<144x1152xbf16>
    %cst = arith.constant dense<0.000000e+00> : vector<256x1152xf32>
    %3 = tpu.matmul %1, %2, %cst {dimension_numbers = #tpu.dot_dimension_numbers<[1], [0], [0], [1], [0, 0, 1, 1], [], []>} : vector<256x144xbf16>, vector<144x1152xbf16>, vector<256x1152xf32> -> vector<256x1152xf32>
    %c0_3 = arith.constant 0 : index
    %c0_4 = arith.constant 0 : index
    %4 = vector.load %arg3[%c0_3, %c0_4] : memref<1x1152xf32, #tpu.memory_space<vmem>>, vector<1x1152xf32>
    %5 = vector.broadcast %4 : vector<1x1152xf32> to vector<256x1152xf32>
    %6 = arith.addf %3, %5 : vector<256x1152xf32>
    %cst_5 = arith.constant 0.000000e+00 : f32
    %7 = vector.broadcast %cst_5 : f32 to vector<256x1152xf32>
    %8 = arith.maximumf %6, %7 : vector<256x1152xf32>
    %9 = arith.truncf %8 : vector<256x1152xf32> to vector<256x1152xbf16>
    %c0_6 = arith.constant 0 : index
    %c0_7 = arith.constant 0 : index
    %10 = vector.load %arg4[%c0_6, %c0_7] : memref<1152x128xbf16, #tpu.memory_space<vmem>>, vector<1152x128xbf16>
    %cst_8 = arith.constant dense<0.000000e+00> : vector<256x128xf32>
    %11 = tpu.matmul %9, %10, %cst_8 {dimension_numbers = #tpu.dot_dimension_numbers<[1], [0], [0], [1], [0, 0, 1, 1], [], []>} : vector<256x1152xbf16>, vector<1152x128xbf16>, vector<256x128xf32> -> vector<256x128xf32>
    %c0_9 = arith.constant 0 : index
    %c0_10 = arith.constant 0 : index
    %12 = vector.load %arg5[%c0_9, %c0_10] : memref<1x128xf32, #tpu.memory_space<vmem>>, vector<1x128xf32>
    %13 = vector.broadcast %12 : vector<1x128xf32> to vector<256x128xf32>
    %14 = arith.addf %11, %13 : vector<256x128xf32>
    %cst_11 = arith.constant 0.000000e+00 : f32
    %15 = vector.broadcast %cst_11 : f32 to vector<256x128xf32>
    %16 = arith.maximumf %14, %15 : vector<256x128xf32>
    %17 = arith.truncf %16 : vector<256x128xf32> to vector<256x128xbf16>
    %c0_12 = arith.constant 0 : index
    %c0_13 = arith.constant 0 : index
    %18 = vector.load %arg6[%c0_12, %c0_13] : memref<128x128xbf16, #tpu.memory_space<vmem>>, vector<128x128xbf16>
    %cst_14 = arith.constant dense<0.000000e+00> : vector<256x128xf32>
    %19 = tpu.matmul %17, %18, %cst_14 {dimension_numbers = #tpu.dot_dimension_numbers<[1], [0], [0], [1], [0, 0, 1, 1], [], []>} : vector<256x128xbf16>, vector<128x128xbf16>, vector<256x128xf32> -> vector<256x128xf32>
    %c0_15 = arith.constant 0 : index
    %c0_16 = arith.constant 0 : index
    %20 = vector.load %arg7[%c0_15, %c0_16] : memref<1x128xf32, #tpu.memory_space<vmem>>, vector<1x128xf32>
    %21 = vector.broadcast %20 : vector<1x128xf32> to vector<256x128xf32>
    %22 = arith.addf %19, %21 : vector<256x128xf32>
    %23 = math.tanh %22 : vector<256x128xf32>
    %c0_17 = arith.constant 0 : index
    %c0_18 = arith.constant 0 : index
    %24 = vector.load %arg9[%c0_17, %c0_18] : memref<144x128xbf16, #tpu.memory_space<vmem>>, vector<144x128xbf16>
    %cst_19 = arith.constant dense<0.000000e+00> : vector<256x128xf32>
    %25 = tpu.matmul %1, %24, %cst_19 {dimension_numbers = #tpu.dot_dimension_numbers<[1], [0], [0], [1], [0, 0, 1, 1], [], []>} : vector<256x144xbf16>, vector<144x128xbf16>, vector<256x128xf32> -> vector<256x128xf32>
    %c0_20 = arith.constant 0 : index
    %c0_21 = arith.constant 0 : index
    %26 = vector.load %arg10[%c0_20, %c0_21] : memref<1x128xf32, #tpu.memory_space<vmem>>, vector<1x128xf32>
    %27 = vector.broadcast %26 : vector<1x128xf32> to vector<256x128xf32>
    %28 = arith.addf %25, %27 : vector<256x128xf32>
    %29 = math.tanh %28 : vector<256x128xf32>
    %30 = arith.truncf %23 : vector<256x128xf32> to vector<256x128xbf16>
    %c0_22 = arith.constant 0 : index
    %c0_23 = arith.constant 0 : index
    %31 = vector.load %arg8[%c0_22, %c0_23] : memref<128x128xbf16, #tpu.memory_space<vmem>>, vector<128x128xbf16>
    %cst_24 = arith.constant dense<0.000000e+00> : vector<256x128xf32>
    %32 = tpu.matmul %30, %31, %cst_24 {dimension_numbers = #tpu.dot_dimension_numbers<[1], [0], [0], [1], [0, 0, 1, 1], [], []>} : vector<256x128xbf16>, vector<128x128xbf16>, vector<256x128xf32> -> vector<256x128xf32>
    %33 = arith.truncf %29 : vector<256x128xf32> to vector<256x128xbf16>
    %c0_25 = arith.constant 0 : index
    %c0_26 = arith.constant 0 : index
    %34 = vector.load %arg11[%c0_25, %c0_26] : memref<128x128xbf16, #tpu.memory_space<vmem>>, vector<128x128xbf16>
    %cst_27 = arith.constant dense<0.000000e+00> : vector<256x128xf32>
    %35 = tpu.matmul %33, %34, %cst_27 {dimension_numbers = #tpu.dot_dimension_numbers<[1], [0], [0], [1], [0, 0, 1, 1], [], []>} : vector<256x128xbf16>, vector<128x128xbf16>, vector<256x128xf32> -> vector<256x128xf32>
    %36 = arith.addf %32, %35 : vector<256x128xf32>
    %c0_28 = arith.constant 0 : index
    %c0_29 = arith.constant 0 : index
    %37 = vector.load %arg12[%c0_28, %c0_29] : memref<1x128xf32, #tpu.memory_space<vmem>>, vector<1x128xf32>
    %38 = vector.broadcast %37 : vector<1x128xf32> to vector<256x128xf32>
    %39 = arith.addf %36, %38 : vector<256x128xf32>
    %40 = math.tanh %39 : vector<256x128xf32>
    %41 = arith.truncf %40 : vector<256x128xf32> to vector<256x128xbf16>
    %c0_30 = arith.constant 0 : index
    %c0_31 = arith.constant 0 : index
    %42 = vector.load %arg13[%c0_30, %c0_31] : memref<128x50xbf16, #tpu.memory_space<vmem>>, vector<128x50xbf16>
    %cst_32 = arith.constant dense<0.000000e+00> : vector<256x50xf32>
    %43 = tpu.matmul %41, %42, %cst_32 {dimension_numbers = #tpu.dot_dimension_numbers<[1], [0], [0], [1], [0, 0, 1, 1], [], []>} : vector<256x128xbf16>, vector<128x50xbf16>, vector<256x50xf32> -> vector<256x50xf32>
    %c0_33 = arith.constant 0 : index
    %c0_34 = arith.constant 0 : index
    %44 = vector.load %arg14[%c0_33, %c0_34] : memref<1x50xf32, #tpu.memory_space<vmem>>, vector<1x50xf32>
    %45 = vector.broadcast %44 : vector<1x50xf32> to vector<256x50xf32>
    %46 = arith.addf %43, %45 : vector<256x50xf32>
    %47 = math.tanh %46 : vector<256x50xf32>
    %48 = arith.truncf %47 : vector<256x50xf32> to vector<256x50xbf16>
    %c0_35 = arith.constant 0 : index
    %c0_36 = arith.constant 0 : index
    %49 = vector.load %arg15[%c0_35, %c0_36] : memref<50x128xbf16, #tpu.memory_space<vmem>>, vector<50x128xbf16>
    %cst_37 = arith.constant dense<0.000000e+00> : vector<256x128xf32>
    %50 = tpu.matmul %48, %49, %cst_37 {dimension_numbers = #tpu.dot_dimension_numbers<[1], [0], [0], [1], [0, 0, 1, 1], [], []>} : vector<256x50xbf16>, vector<50x128xbf16>, vector<256x128xf32> -> vector<256x128xf32>
    %c0_38 = arith.constant 0 : index
    %c0_39 = arith.constant 0 : index
    %51 = vector.load %arg16[%c0_38, %c0_39] : memref<1x128xf32, #tpu.memory_space<vmem>>, vector<1x128xf32>
    %52 = vector.broadcast %51 : vector<1x128xf32> to vector<256x128xf32>
    %53 = arith.addf %50, %52 : vector<256x128xf32>
    %cst_40 = arith.constant dense<0xFF800000> : vector<256xf32>
    %54 = vector.multi_reduction <maximumf>, %53, %cst_40 [1] : vector<256x128xf32> to vector<256xf32>
    %55 = vector.shape_cast %54 : vector<256xf32> to vector<256x1xf32>
    %56 = vector.broadcast %55 : vector<256x1xf32> to vector<256x128xf32>
    %57 = arith.subf %53, %56 : vector<256x128xf32>
    %58 = math.exp %57 : vector<256x128xf32>
    %cst_41 = arith.constant dense<0.000000e+00> : vector<256xf32>
    %59 = vector.multi_reduction <add>, %58, %cst_41 [1] : vector<256x128xf32> to vector<256xf32>
    %60 = vector.shape_cast %59 : vector<256xf32> to vector<256x1xf32>
    %61 = tpu.reciprocal %60 : vector<256x1xf32> -> vector<256x1xf32>
    %62 = vector.broadcast %61 : vector<256x1xf32> to vector<256x128xf32>
    %63 = arith.mulf %58, %62 : vector<256x128xf32>
    %64 = arith.truncf %63 : vector<256x128xf32> to vector<256x128xbf16>
    %c0_42 = arith.constant 0 : index
    %c0_43 = arith.constant 0 : index
    %65 = vector.load %arg17[%c0_42, %c0_43] : memref<128x128xbf16, #tpu.memory_space<vmem>>, vector<128x128xbf16>
    %cst_44 = arith.constant dense<0.000000e+00> : vector<256x128xf32>
    %66 = tpu.matmul %64, %65, %cst_44 {dimension_numbers = #tpu.dot_dimension_numbers<[1], [0], [0], [1], [0, 0, 1, 1], [], []>} : vector<256x128xbf16>, vector<128x128xbf16>, vector<256x128xf32> -> vector<256x128xf32>
    %67 = tpu.iota {dimensions = array<i32: 1>} : vector<256x128xi32>
    %c4_i32 = arith.constant 4 : i32
    %68 = vector.broadcast %c4_i32 : i32 to vector<256x128xi32>
    %69 = arith.cmpi slt, %67, %68 : vector<256x128xi32>
    %70 = arith.select %69, %63, %66 : vector<256x128xi1>, vector<256x128xf32>
    %c0_45 = arith.constant 0 : index
    %c0_46 = arith.constant 0 : index
    %71 = vector.load %arg18[%c0_45, %c0_46] : memref<256x128xf32, #tpu.memory_space<vmem>>, vector<256x128xf32>
    tpu.vector_store %arg18[%c0_45, %c0_46], %70 {strides = array<i32>} : memref<256x128xf32, #tpu.memory_space<vmem>>, vector<256x128xf32>,
    return
  }
  func.func @transform_0(%arg0: i32) -> (i32, i32) {
    %c0_i32 = arith.constant 0 : i32
    %c0_i32_0 = arith.constant 0 : i32
    return %arg0, %c0_i32 : i32, i32
  }
  func.func @transform_1(%arg0: i32) -> (i32, i32) {
    %c0_i32 = arith.constant 0 : i32
    %c0_i32_0 = arith.constant 0 : i32
    %c0_i32_1 = arith.constant 0 : i32
    return %c0_i32, %c0_i32_0 : i32, i32
  }
  func.func @transform_2(%arg0: i32) -> (i32, i32) {
    %c0_i32 = arith.constant 0 : i32
    %c0_i32_0 = arith.constant 0 : i32
    %c0_i32_1 = arith.constant 0 : i32
    return %c0_i32, %c0_i32_0 : i32, i32
  }
  func.func @transform_3(%arg0: i32) -> (i32, i32) {
    %c0_i32 = arith.constant 0 : i32
    %c0_i32_0 = arith.constant 0 : i32
    %c0_i32_1 = arith.constant 0 : i32
    return %c0_i32, %c0_i32_0 : i32, i32
  }
  func.func @transform_4(%arg0: i32) -> (i32, i32) {
    %c0_i32 = arith.constant 0 : i32
    %c0_i32_0 = arith.constant 0 : i32
    %c0_i32_1 = arith.constant 0 : i32
    return %c0_i32, %c0_i32_0 : i32, i32
  }
  func.func @transform_5(%arg0: i32) -> (i32, i32) {
    %c0_i32 = arith.constant 0 : i32
    %c0_i32_0 = arith.constant 0 : i32
    %c0_i32_1 = arith.constant 0 : i32
    return %c0_i32, %c0_i32_0 : i32, i32
  }
  func.func @transform_6(%arg0: i32) -> (i32, i32) {
    %c0_i32 = arith.constant 0 : i32
    %c0_i32_0 = arith.constant 0 : i32
    %c0_i32_1 = arith.constant 0 : i32
    return %c0_i32, %c0_i32_0 : i32, i32
  }
  func.func @transform_7(%arg0: i32) -> (i32, i32) {
    %c0_i32 = arith.constant 0 : i32
    %c0_i32_0 = arith.constant 0 : i32
    %c0_i32_1 = arith.constant 0 : i32
    return %c0_i32, %c0_i32_0 : i32, i32
  }
  func.func @transform_8(%arg0: i32) -> (i32, i32) {
    %c0_i32 = arith.constant 0 : i32
    %c0_i32_0 = arith.constant 0 : i32
    %c0_i32_1 = arith.constant 0 : i32
    return %c0_i32, %c0_i32_0 : i32, i32
  }
  func.func @transform_9(%arg0: i32) -> (i32, i32) {
    %c0_i32 = arith.constant 0 : i32
    %c0_i32_0 = arith.constant 0 : i32
    %c0_i32_1 = arith.constant 0 : i32
    return %c0_i32, %c0_i32_0 : i32, i32
  }
  func.func @transform_10(%arg0: i32) -> (i32, i32) {
    %c0_i32 = arith.constant 0 : i32
    %c0_i32_0 = arith.constant 0 : i32
    %c0_i32_1 = arith.constant 0 : i32
    return %c0_i32, %c0_i32_0 : i32, i32
  }
  func.func @transform_11(%arg0: i32) -> (i32, i32) {
    %c0_i32 = arith.constant 0 : i32
    %c0_i32_0 = arith.constant 0 : i32
    %c0_i32_1 = arith.constant 0 : i32
    return %c0_i32, %c0_i32_0 : i32, i32
  }
  func.func @transform_12(%arg0: i32) -> (i32, i32) {
    %c0_i32 = arith.constant 0 : i32
    %c0_i32_0 = arith.constant 0 : i32
    %c0_i32_1 = arith.constant 0 : i32
    return %c0_i32, %c0_i32_0 : i32, i32
  }
  func.func @transform_13(%arg0: i32) -> (i32, i32) {
    %c0_i32 = arith.constant 0 : i32
    %c0_i32_0 = arith.constant 0 : i32
    %c0_i32_1 = arith.constant 0 : i32
    return %c0_i32, %c0_i32_0 : i32, i32
  }
  func.func @transform_14(%arg0: i32) -> (i32, i32) {
    %c0_i32 = arith.constant 0 : i32
    %c0_i32_0 = arith.constant 0 : i32
    %c0_i32_1 = arith.constant 0 : i32
    return %c0_i32, %c0_i32_0 : i32, i32
  }
  func.func @transform_15(%arg0: i32) -> (i32, i32) {
    %c0_i32 = arith.constant 0 : i32
    %c0_i32_0 = arith.constant 0 : i32
    %c0_i32_1 = arith.constant 0 : i32
    return %c0_i32, %c0_i32_0 : i32, i32
  }
  func.func @transform_16(%arg0: i32) -> (i32, i32) {
    %c0_i32 = arith.constant 0 : i32
    %c0_i32_0 = arith.constant 0 : i32
    %c0_i32_1 = arith.constant 0 : i32
    return %c0_i32, %c0_i32_0 : i32, i32
  }
  func.func @transform_17(%arg0: i32) -> (i32, i32) {
    %c0_i32 = arith.constant 0 : i32
    %c0_i32_0 = arith.constant 0 : i32
    return %arg0, %c0_i32 : i32, i32
  }
}

</mosaic_0001>

<llo_original>
// kernel: tpu_custom_call.1
$region0: #{tpu_custom_call.1}
  #allocation0 [shape = 'u32[]', space=smem, size = 0x4, offset = 0x4, fixed_abs, tag = 'smem constant byte address 0x4 - core index']
  #allocation1 [shape = 'u32[72,128]{1,0:T(1,128)}', space=vmem, size = 0x9000, scoped, tag = 'internal scratch']
  %s0 = inlined_call_operand.vmem [shape: f32[500,144], index: 0, kind: input, shape index: {}]
  %s1 = inlined_call_operand.vmem [shape: bf16[144,1152], index: 1, kind: input, shape index: {}]
  %s2 = inlined_call_operand.vmem [shape: f32[1,1152], index: 2, kind: input, shape index: {}]
  %s3 = inlined_call_operand.vmem [shape: bf16[1152,128], index: 3, kind: input, shape index: {}]
  %s4 = inlined_call_operand.vmem [shape: f32[1,128], index: 4, kind: input, shape index: {}]
  %s5 = inlined_call_operand.vmem [shape: bf16[128,128], index: 5, kind: input, shape index: {}]
  %s6 = inlined_call_operand.vmem [shape: f32[1,128], index: 6, kind: input, shape index: {}]
  %s7 = inlined_call_operand.vmem [shape: bf16[128,128], index: 7, kind: input, shape index: {}]
  %s8 = inlined_call_operand.vmem [shape: bf16[144,128], index: 8, kind: input, shape index: {}]
  %s9 = inlined_call_operand.vmem [shape: f32[1,128], index: 9, kind: input, shape index: {}]
  %s10 = inlined_call_operand.vmem [shape: bf16[128,128], index: 10, kind: input, shape index: {}]
  %s11 = inlined_call_operand.vmem [shape: f32[1,128], index: 11, kind: input, shape index: {}]
  %s12 = inlined_call_operand.vmem [shape: bf16[128,50], index: 12, kind: input, shape index: {}]
  %s13 = inlined_call_operand.vmem [shape: f32[1,50], index: 13, kind: input, shape index: {}]
  %s14 = inlined_call_operand.vmem [shape: bf16[50,128], index: 14, kind: input, shape index: {}]
  %s15 = inlined_call_operand.vmem [shape: f32[1,128], index: 15, kind: input, shape index: {}]
  %s16 = inlined_call_operand.vmem [shape: bf16[128,128], index: 16, kind: input, shape index: {}]
  %s17 = inlined_call_operand.hbm [shape: f32[500,128], index: 17, kind: output, shape index: {}]
  %s18 = sld [smem:[#allocation0]]
  $region101: #{tpu_custom_call.1} parent=0
    _
  %s20 = ssub.s32 1, %s18
  %s21 = scalar_select 0, %s20, %s18
  $region1: #{tpu_custom_call.1} parent=0
    #allocation2 [shape = 'u8[262144]{0}', space=vmem, size = 0x40000, scoped, tag = 'output window, operand 0']
    #allocation3 [shape = 's32[2]{0}', space=sflag, size = 0x8, scoped, tag = 'scoped memory for tpu_custom_call.1']
    %22 = vsyncpa [#allocation3], 0
    %s23 = scalar_lea.sflag [#allocation3], 1
    %24 = vsyncpa %s23, 0
    loop: start=0, step=1, limit=4
    $region2: #{tpu_custom_call.1} parent=1 // loop_pre_header
      _
    $region3: #{tpu_custom_call.1} parent=1 // loop_header
      %s26 = sphi 0, %s30
      %p27 = scmp.ge.s32.totalorder %s26, 4
      %s36 = sphi 0, %s38
      %s39 = sphi 0, %s36
      %s40 = sphi 0, %s39
      %s56 = sphi 0, %s40
      %s60 = sphi 0, %s60
      %s62 = sphi 0, %s60
      %s63 = sphi 0, %s62
      %s77 = sphi 0, %s63
      %s81 = sphi 0, %s81
      %s83 = sphi 0, %s81
      %s84 = sphi 0, %s83
      %s98 = sphi 0, %s84
      %s102 = sphi 0, %s102
      %s104 = sphi 0, %s102
      %s105 = sphi 0, %s104
      %s119 = sphi 0, %s105
      %s123 = sphi 0, %s123
      %s125 = sphi 0, %s123
      %s126 = sphi 0, %s125
      %s140 = sphi 0, %s126
      %s144 = sphi 0, %s144
      %s146 = sphi 0, %s144
      %s147 = sphi 0, %s146
      %s161 = sphi 0, %s147
      %s165 = sphi 0, %s165
      %s167 = sphi 0, %s165
      %s168 = sphi 0, %s167
      %s182 = sphi 0, %s168
      %s186 = sphi 0, %s186
      %s188 = sphi 0, %s186
      %s189 = sphi 0, %s188
      %s203 = sphi 0, %s189
      %s207 = sphi 0, %s207
      %s209 = sphi 0, %s207
      %s210 = sphi 0, %s209
      %s224 = sphi 0, %s210
      %s228 = sphi 0, %s228
      %s230 = sphi 0, %s228
      %s231 = sphi 0, %s230
      %s245 = sphi 0, %s231
      %s249 = sphi 0, %s249
      %s251 = sphi 0, %s249
      %s252 = sphi 0, %s251
      %s266 = sphi 0, %s252
      %s270 = sphi 0, %s270
      %s272 = sphi 0, %s270
      %s273 = sphi 0, %s272
      %s287 = sphi 0, %s273
      %s291 = sphi 0, %s291
      %s293 = sphi 0, %s291
      %s294 = sphi 0, %s293
      %s308 = sphi 0, %s294
      %s312 = sphi 0, %s312
      %s314 = sphi 0, %s312
      %s315 = sphi 0, %s314
      %s329 = sphi 0, %s315
      %s333 = sphi 0, %s333
      %s335 = sphi 0, %s333
      %s336 = sphi 0, %s335
      %s350 = sphi 0, %s336
      %s354 = sphi 0, %s354
      %s356 = sphi 0, %s354
      %s357 = sphi 0, %s356
      %s371 = sphi 0, %s357
      %s375 = sphi 0, %s375
      %s377 = sphi 0, %s375
      %s378 = sphi 0, %s377
      %s392 = sphi 0, %s378
      %s398 = sphi 0, %s400
      %s401 = sphi 0, %s398
      %s402 = sphi 0, %s401
      %s418 = sphi 0, %s402
    $region4: #{tpu_custom_call.1} parent=1 // loop_header_branch
      %29 = sbr.rel (%p27) target = $region8
    $region5: #{tpu_custom_call.1} parent=1 // loop_body
      %s31 = ssub.s32 %s26, 1
      %s32 = ssub.s32 %s26, 2
      %s33 = sadd.s32 %s26, 1
      %s34 = ssub.s32 %s26, %s33
      %p35 = scmp.eq.s32.totalorder %s34, 0
      %s37 = sadd.s32 %s36, 1
      %s38 = scalar_select %p35, %s36, %s37
      %p41 = pneg %p35
      %p42 = scmp.eq.s32.totalorder %s26, 1
      %p43 = por %p41, %p42
      %p44 = scmp.ne.s32.totalorder %s36, %s39
      %p45 = scmp.eq.s32.totalorder %s26, 0
      %p46 = por %p44, %p45
      %p47 = scmp.ne.s32.totalorder %s36, %s39
      %p48 = scmp.eq.s32.totalorder %s31, 1
      %p49 = por %p47, %p48
      %p50 = scmp.ne.s32.totalorder %s39, %s40
      %p51 = scmp.eq.s32.totalorder %s31, 0
      %p52 = por %p50, %p51
      %p53 = scmp.ne.s32.totalorder %s39, %s40
      %p54 = scmp.eq.s32.totalorder %s32, 1
      %p55 = por %p53, %p54
      %p57 = scmp.ne.s32.totalorder %s40, %s56
      %p58 = scmp.eq.s32.totalorder %s32, 0
      %p59 = por %p57, %p58
      %s61 = sadd.s32 %s60, 1
      %p64 = scmp.eq.s32.totalorder %s26, 1
      %p65 = scmp.ne.s32.totalorder %s60, %s62
      %p66 = scmp.eq.s32.totalorder %s26, 0
      %p67 = por %p65, %p66
      %p68 = scmp.ne.s32.totalorder %s60, %s62
      %p69 = scmp.eq.s32.totalorder %s31, 1
      %p70 = por %p68, %p69
      %p71 = scmp.ne.s32.totalorder %s62, %s63
      %p72 = scmp.eq.s32.totalorder %s31, 0
      %p73 = por %p71, %p72
      %p74 = scmp.ne.s32.totalorder %s62, %s63
      %p75 = scmp.eq.s32.totalorder %s32, 1
      %p76 = por %p74, %p75
      %p78 = scmp.ne.s32.totalorder %s63, %s77
      %p79 = scmp.eq.s32.totalorder %s32, 0
      %p80 = por %p78, %p79
      %s82 = sadd.s32 %s81, 1
      %p85 = scmp.eq.s32.totalorder %s26, 1
      %p86 = scmp.ne.s32.totalorder %s81, %s83
      %p87 = scmp.eq.s32.totalorder %s26, 0
      %p88 = por %p86, %p87
      %p89 = scmp.ne.s32.totalorder %s81, %s83
      %p90 = scmp.eq.s32.totalorder %s31, 1
      %p91 = por %p89, %p90
      %p92 = scmp.ne.s32.totalorder %s83, %s84
      %p93 = scmp.eq.s32.totalorder %s31, 0
      %p94 = por %p92, %p93
      %p95 = scmp.ne.s32.totalorder %s83, %s84
      %p96 = scmp.eq.s32.totalorder %s32, 1
      %p97 = por %p95, %p96
      %p99 = scmp.ne.s32.totalorder %s84, %s98
      %p100 = scmp.eq.s32.totalorder %s32, 0
      %p101 = por %p99, %p100
      %s103 = sadd.s32 %s102, 1
      %p106 = scmp.eq.s32.totalorder %s26, 1
      %p107 = scmp.ne.s32.totalorder %s102, %s104
      %p108 = scmp.eq.s32.totalorder %s26, 0
      %p109 = por %p107, %p108
      %p110 = scmp.ne.s32.totalorder %s102, %s104
      %p111 = scmp.eq.s32.totalorder %s31, 1
      %p112 = por %p110, %p111
      %p113 = scmp.ne.s32.totalorder %s104, %s105
      %p114 = scmp.eq.s32.totalorder %s31, 0
      %p115 = por %p113, %p114
      %p116 = scmp.ne.s32.totalorder %s104, %s105
      %p117 = scmp.eq.s32.totalorder %s32, 1
      %p118 = por %p116, %p117
      %p120 = scmp.ne.s32.totalorder %s105, %s119
      %p121 = scmp.eq.s32.totalorder %s32, 0
      %p122 = por %p120, %p121
      %s124 = sadd.s32 %s123, 1
      %p127 = scmp.eq.s32.totalorder %s26, 1
      %p128 = scmp.ne.s32.totalorder %s123, %s125
      %p129 = scmp.eq.s32.totalorder %s26, 0
      %p130 = por %p128, %p129
      %p131 = scmp.ne.s32.totalorder %s123, %s125
      %p132 = scmp.eq.s32.totalorder %s31, 1
      %p133 = por %p131, %p132
      %p134 = scmp.ne.s32.totalorder %s125, %s126
      %p135 = scmp.eq.s32.totalorder %s31, 0
      %p136 = por %p134, %p135
      %p137 = scmp.ne.s32.totalorder %s125, %s126
      %p138 = scmp.eq.s32.totalorder %s32, 1
      %p139 = por %p137, %p138
      %p141 = scmp.ne.s32.totalorder %s126, %s140
      %p142 = scmp.eq.s32.totalorder %s32, 0
      %p143 = por %p141, %p142
      %s145 = sadd.s32 %s144, 1
      %p148 = scmp.eq.s32.totalorder %s26, 1
      %p149 = scmp.ne.s32.totalorder %s144, %s146
      %p150 = scmp.eq.s32.totalorder %s26, 0
      %p151 = por %p149, %p150
      %p152 = scmp.ne.s32.totalorder %s144, %s146
      %p153 = scmp.eq.s32.totalorder %s31, 1
      %p154 = por %p152, %p153
      %p155 = scmp.ne.s32.totalorder %s146, %s147
      %p156 = scmp.eq.s32.totalorder %s31, 0
      %p157 = por %p155, %p156
      %p158 = scmp.ne.s32.totalorder %s146, %s147
      %p159 = scmp.eq.s32.totalorder %s32, 1
      %p160 = por %p158, %p159
      %p162 = scmp.ne.s32.totalorder %s147, %s161
      %p163 = scmp.eq.s32.totalorder %s32, 0
      %p164 = por %p162, %p163
      %s166 = sadd.s32 %s165, 1
      %p169 = scmp.eq.s32.totalorder %s26, 1
      %p170 = scmp.ne.s32.totalorder %s165, %s167
      %p171 = scmp.eq.s32.totalorder %s26, 0
      %p172 = por %p170, %p171
      %p173 = scmp.ne.s32.totalorder %s165, %s167
      %p174 = scmp.eq.s32.totalorder %s31, 1
      %p175 = por %p173, %p174
      %p176 = scmp.ne.s32.totalorder %s167, %s168
      %p177 = scmp.eq.s32.totalorder %s31, 0
      %p178 = por %p176, %p177
      %p179 = scmp.ne.s32.totalorder %s167, %s168
      %p180 = scmp.eq.s32.totalorder %s32, 1
      %p181 = por %p179, %p180
      %p183 = scmp.ne.s32.totalorder %s168, %s182
      %p184 = scmp.eq.s32.totalorder %s32, 0
      %p185 = por %p183, %p184
      %s187 = sadd.s32 %s186, 1
      %p190 = scmp.eq.s32.totalorder %s26, 1
      %p191 = scmp.ne.s32.totalorder %s186, %s188
      %p192 = scmp.eq.s32.totalorder %s26, 0
      %p193 = por %p191, %p192
      %p194 = scmp.ne.s32.totalorder %s186, %s188
      %p195 = scmp.eq.s32.totalorder %s31, 1
      %p196 = por %p194, %p195
      %p197 = scmp.ne.s32.totalorder %s188, %s189
      %p198 = scmp.eq.s32.totalorder %s31, 0
      %p199 = por %p197, %p198
      %p200 = scmp.ne.s32.totalorder %s188, %s189
      %p201 = scmp.eq.s32.totalorder %s32, 1
      %p202 = por %p200, %p201
      %p204 = scmp.ne.s32.totalorder %s189, %s203
      %p205 = scmp.eq.s32.totalorder %s32, 0
      %p206 = por %p204, %p205
      %s208 = sadd.s32 %s207, 1
      %p211 = scmp.eq.s32.totalorder %s26, 1
      %p212 = scmp.ne.s32.totalorder %s207, %s209
      %p213 = scmp.eq.s32.totalorder %s26, 0
      %p214 = por %p212, %p213
      %p215 = scmp.ne.s32.totalorder %s207, %s209
      %p216 = scmp.eq.s32.totalorder %s31, 1
      %p217 = por %p215, %p216
      %p218 = scmp.ne.s32.totalorder %s209, %s210
      %p219 = scmp.eq.s32.totalorder %s31, 0
      %p220 = por %p218, %p219
      %p221 = scmp.ne.s32.totalorder %s209, %s210
      %p222 = scmp.eq.s32.totalorder %s32, 1
      %p223 = por %p221, %p222
      %p225 = scmp.ne.s32.totalorder %s210, %s224
      %p226 = scmp.eq.s32.totalorder %s32, 0
      %p227 = por %p225, %p226
      %s229 = sadd.s32 %s228, 1
      %p232 = scmp.eq.s32.totalorder %s26, 1
      %p233 = scmp.ne.s32.totalorder %s228, %s230
      %p234 = scmp.eq.s32.totalorder %s26, 0
      %p235 = por %p233, %p234
      %p236 = scmp.ne.s32.totalorder %s228, %s230
      %p237 = scmp.eq.s32.totalorder %s31, 1
      %p238 = por %p236, %p237
      %p239 = scmp.ne.s32.totalorder %s230, %s231
      %p240 = scmp.eq.s32.totalorder %s31, 0
      %p241 = por %p239, %p240
      %p242 = scmp.ne.s32.totalorder %s230, %s231
      %p243 = scmp.eq.s32.totalorder %s32, 1
      %p244 = por %p242, %p243
      %p246 = scmp.ne.s32.totalorder %s231, %s245
      %p247 = scmp.eq.s32.totalorder %s32, 0
      %p248 = por %p246, %p247
      %s250 = sadd.s32 %s249, 1
      %p253 = scmp.eq.s32.totalorder %s26, 1
      %p254 = scmp.ne.s32.totalorder %s249, %s251
      %p255 = scmp.eq.s32.totalorder %s26, 0
      %p256 = por %p254, %p255
      %p257 = scmp.ne.s32.totalorder %s249, %s251
      %p258 = scmp.eq.s32.totalorder %s31, 1
      %p259 = por %p257, %p258
      %p260 = scmp.ne.s32.totalorder %s251, %s252
      %p261 = scmp.eq.s32.totalorder %s31, 0
      %p262 = por %p260, %p261
      %p263 = scmp.ne.s32.totalorder %s251, %s252
      %p264 = scmp.eq.s32.totalorder %s32, 1
      %p265 = por %p263, %p264
      %p267 = scmp.ne.s32.totalorder %s252, %s266
      %p268 = scmp.eq.s32.totalorder %s32, 0
      %p269 = por %p267, %p268
      %s271 = sadd.s32 %s270, 1
      %p274 = scmp.eq.s32.totalorder %s26, 1
      %p275 = scmp.ne.s32.totalorder %s270, %s272
      %p276 = scmp.eq.s32.totalorder %s26, 0
      %p277 = por %p275, %p276
      %p278 = scmp.ne.s32.totalorder %s270, %s272
      %p279 = scmp.eq.s32.totalorder %s31, 1
      %p280 = por %p278, %p279
      %p281 = scmp.ne.s32.totalorder %s272, %s273
      %p282 = scmp.eq.s32.totalorder %s31, 0
      %p283 = por %p281, %p282
      %p284 = scmp.ne.s32.totalorder %s272, %s273
      %p285 = scmp.eq.s32.totalorder %s32, 1
      %p286 = por %p284, %p285
      %p288 = scmp.ne.s32.totalorder %s273, %s287
      %p289 = scmp.eq.s32.totalorder %s32, 0
      %p290 = por %p288, %p289
      %s292 = sadd.s32 %s291, 1
      %p295 = scmp.eq.s32.totalorder %s26, 1
      %p296 = scmp.ne.s32.totalorder %s291, %s293
      %p297 = scmp.eq.s32.totalorder %s26, 0
      %p298 = por %p296, %p297
      %p299 = scmp.ne.s32.totalorder %s291, %s293
      %p300 = scmp.eq.s32.totalorder %s31, 1
      %p301 = por %p299, %p300
      %p302 = scmp.ne.s32.totalorder %s293, %s294
      %p303 = scmp.eq.s32.totalorder %s31, 0
      %p304 = por %p302, %p303
      %p305 = scmp.ne.s32.totalorder %s293, %s294
      %p306 = scmp.eq.s32.totalorder %s32, 1
      %p307 = por %p305, %p306
      %p309 = scmp.ne.s32.totalorder %s294, %s308
      %p310 = scmp.eq.s32.totalorder %s32, 0
      %p311 = por %p309, %p310
      %s313 = sadd.s32 %s312, 1
      %p316 = scmp.eq.s32.totalorder %s26, 1
      %p317 = scmp.ne.s32.totalorder %s312, %s314
      %p318 = scmp.eq.s32.totalorder %s26, 0
      %p319 = por %p317, %p318
      %p320 = scmp.ne.s32.totalorder %s312, %s314
      %p321 = scmp.eq.s32.totalorder %s31, 1
      %p322 = por %p320, %p321
      %p323 = scmp.ne.s32.totalorder %s314, %s315
      %p324 = scmp.eq.s32.totalorder %s31, 0
      %p325 = por %p323, %p324
      %p326 = scmp.ne.s32.totalorder %s314, %s315
      %p327 = scmp.eq.s32.totalorder %s32, 1
      %p328 = por %p326, %p327
      %p330 = scmp.ne.s32.totalorder %s315, %s329
      %p331 = scmp.eq.s32.totalorder %s32, 0
      %p332 = por %p330, %p331
      %s334 = sadd.s32 %s333, 1
      %p337 = scmp.eq.s32.totalorder %s26, 1
      %p338 = scmp.ne.s32.totalorder %s333, %s335
      %p339 = scmp.eq.s32.totalorder %s26, 0
      %p340 = por %p338, %p339
      %p341 = scmp.ne.s32.totalorder %s333, %s335
      %p342 = scmp.eq.s32.totalorder %s31, 1
      %p343 = por %p341, %p342
      %p344 = scmp.ne.s32.totalorder %s335, %s336
      %p345 = scmp.eq.s32.totalorder %s31, 0
      %p346 = por %p344, %p345
      %p347 = scmp.ne.s32.totalorder %s335, %s336
      %p348 = scmp.eq.s32.totalorder %s32, 1
      %p349 = por %p347, %p348
      %p351 = scmp.ne.s32.totalorder %s336, %s350
      %p352 = scmp.eq.s32.totalorder %s32, 0
      %p353 = por %p351, %p352
      %s355 = sadd.s32 %s354, 1
      %p358 = scmp.eq.s32.totalorder %s26, 1
      %p359 = scmp.ne.s32.totalorder %s354, %s356
      %p360 = scmp.eq.s32.totalorder %s26, 0
      %p361 = por %p359, %p360
      %p362 = scmp.ne.s32.totalorder %s354, %s356
      %p363 = scmp.eq.s32.totalorder %s31, 1
      %p364 = por %p362, %p363
      %p365 = scmp.ne.s32.totalorder %s356, %s357
      %p366 = scmp.eq.s32.totalorder %s31, 0
      %p367 = por %p365, %p366
      %p368 = scmp.ne.s32.totalorder %s356, %s357
      %p369 = scmp.eq.s32.totalorder %s32, 1
      %p370 = por %p368, %p369
      %p372 = scmp.ne.s32.totalorder %s357, %s371
      %p373 = scmp.eq.s32.totalorder %s32, 0
      %p374 = por %p372, %p373
      %s376 = sadd.s32 %s375, 1
      %p379 = scmp.eq.s32.totalorder %s26, 1
      %p380 = scmp.ne.s32.totalorder %s375, %s377
      %p381 = scmp.eq.s32.totalorder %s26, 0
      %p382 = por %p380, %p381
      %p383 = scmp.ne.s32.totalorder %s375, %s377
      %p384 = scmp.eq.s32.totalorder %s31, 1
      %p385 = por %p383, %p384
      %p386 = scmp.ne.s32.totalorder %s377, %s378
      %p387 = scmp.eq.s32.totalorder %s31, 0
      %p388 = por %p386, %p387
      %p389 = scmp.ne.s32.totalorder %s377, %s378
      %p390 = scmp.eq.s32.totalorder %s32, 1
      %p391 = por %p389, %p390
      %p393 = scmp.ne.s32.totalorder %s378, %s392
      %p394 = scmp.eq.s32.totalorder %s32, 0
      %p395 = por %p393, %p394
      %s396 = ssub.s32 %s26, %s33
      %p397 = scmp.eq.s32.totalorder %s396, 0
      %s399 = sadd.s32 %s398, 1
      %s400 = scalar_select %p397, %s398, %s399
      %p403 = pneg %p397
      %p404 = scmp.eq.s32.totalorder %s26, 1
      %p405 = por %p403, %p404
      %p406 = scmp.ne.s32.totalorder %s398, %s401
      %p407 = scmp.eq.s32.totalorder %s26, 0
      %p408 = por %p406, %p407
      %p409 = scmp.ne.s32.totalorder %s398, %s401
      %p410 = scmp.eq.s32.totalorder %s31, 1
      %p411 = por %p409, %p410
      %p412 = scmp.ne.s32.totalorder %s401, %s402
      %p413 = scmp.eq.s32.totalorder %s31, 0
      %p414 = por %p412, %p413
      %p415 = scmp.ne.s32.totalorder %s401, %s402
      %p416 = scmp.eq.s32.totalorder %s32, 1
      %p417 = por %p415, %p416
      %p419 = scmp.ne.s32.totalorder %s402, %s418
      %p420 = scmp.eq.s32.totalorder %s32, 0
      %p421 = por %p419, %p420
      %p422 = scmp.le.s32.totalorder 1, %s26
      %p423 = scmp.lt.s32.totalorder %s26, 3
      %p424 = pnand %p422, %p423
      %p425 = pneg %p424
      // Predicated region
      $region9: #{tpu_custom_call.1} parent=5 // pred_check
        _
      $region10: #{tpu_custom_call.1} parent=5 // pred_check_branch
        %427 = sbr.rel (%p424) target = $region12
      $region11: #{tpu_custom_call.1} parent=5 // pred_region
        %s428 = ssub.s32 %s26, 1
        // Predicated region
        $region13: #{tpu_custom_call.1} parent=11 // pred_check
          %p429 = pneg %p73
        $region14: #{tpu_custom_call.1} parent=11 // pred_check_branch
          %431 = sbr.rel (%p429) target = $region16
        $region15: #{tpu_custom_call.1} parent=11 // pred_region
          _
        $region16: #{tpu_custom_call.1} parent=11 // pred_fallthru
          _
        // Predicated region
        $region17: #{tpu_custom_call.1} parent=11 // pred_check
          %p432 = pneg %p94
        $region18: #{tpu_custom_call.1} parent=11 // pred_check_branch
          %434 = sbr.rel (%p432) target = $region20
        $region19: #{tpu_custom_call.1} parent=11 // pred_region
          _
        $region20: #{tpu_custom_call.1} parent=11 // pred_fallthru
          _
        // Predicated region
        $region21: #{tpu_custom_call.1} parent=11 // pred_check
          %p435 = pneg %p115
        $region22: #{tpu_custom_call.1} parent=11 // pred_check_branch
          %437 = sbr.rel (%p435) target = $region24
        $region23: #{tpu_custom_call.1} parent=11 // pred_region
          _
        $region24: #{tpu_custom_call.1} parent=11 // pred_fallthru
          _
        // Predicated region
        $region25: #{tpu_custom_call.1} parent=11 // pred_check
          %p438 = pneg %p136
        $region26: #{tpu_custom_call.1} parent=11 // pred_check_branch
          %440 = sbr.rel (%p438) target = $region28
        $region27: #{tpu_custom_call.1} parent=11 // pred_region
          _
        $region28: #{tpu_custom_call.1} parent=11 // pred_fallthru
          _
        // Predicated region
        $region29: #{tpu_custom_call.1} parent=11 // pred_check
          %p441 = pneg %p157
        $region30: #{tpu_custom_call.1} parent=11 // pred_check_branch
          %443 = sbr.rel (%p441) target = $region32
        $region31: #{tpu_custom_call.1} parent=11 // pred_region
          _
        $region32: #{tpu_custom_call.1} parent=11 // pred_fallthru
          _
        // Predicated region
        $region33: #{tpu_custom_call.1} parent=11 // pred_check
          %p444 = pneg %p178
        $region34: #{tpu_custom_call.1} parent=11 // pred_check_branch
          %446 = sbr.rel (%p444) target = $region36
        $region35: #{tpu_custom_call.1} parent=11 // pred_region
          _
        $region36: #{tpu_custom_call.1} parent=11 // pred_fallthru
          _
        // Predicated region
        $region37: #{tpu_custom_call.1} parent=11 // pred_check
          %p447 = pneg %p199
        $region38: #{tpu_custom_call.1} parent=11 // pred_check_branch
          %449 = sbr.rel (%p447) target = $region40
        $region39: #{tpu_custom_call.1} parent=11 // pred_region
          _
        $region40: #{tpu_custom_call.1} parent=11 // pred_fallthru
          _
        // Predicated region
        $region41: #{tpu_custom_call.1} parent=11 // pred_check
          %p450 = pneg %p220
        $region42: #{tpu_custom_call.1} parent=11 // pred_check_branch
          %452 = sbr.rel (%p450) target = $region44
        $region43: #{tpu_custom_call.1} parent=11 // pred_region
          _
        $region44: #{tpu_custom_call.1} parent=11 // pred_fallthru
          _
        // Predicated region
        $region45: #{tpu_custom_call.1} parent=11 // pred_check
          %p453 = pneg %p241
        $region46: #{tpu_custom_call.1} parent=11 // pred_check_branch
          %455 = sbr.rel (%p453) target = $region48
        $region47: #{tpu_custom_call.1} parent=11 // pred_region
          _
        $region48: #{tpu_custom_call.1} parent=11 // pred_fallthru
          _
        // Predicated region
        $region49: #{tpu_custom_call.1} parent=11 // pred_check
          %p456 = pneg %p262
        $region50: #{tpu_custom_call.1} parent=11 // pred_check_branch
          %458 = sbr.rel (%p456) target = $region52
        $region51: #{tpu_custom_call.1} parent=11 // pred_region
          _
        $region52: #{tpu_custom_call.1} parent=11 // pred_fallthru
          _
        // Predicated region
        $region53: #{tpu_custom_call.1} parent=11 // pred_check
          %p459 = pneg %p283
        $region54: #{tpu_custom_call.1} parent=11 // pred_check_branch
          %461 = sbr.rel (%p459) target = $region56
        $region55: #{tpu_custom_call.1} parent=11 // pred_region
          _
        $region56: #{tpu_custom_call.1} parent=11 // pred_fallthru
          _
        // Predicated region
        $region57: #{tpu_custom_call.1} parent=11 // pred_check
          %p462 = pneg %p304
        $region58: #{tpu_custom_call.1} parent=11 // pred_check_branch
          %464 = sbr.rel (%p462) target = $region60
        $region59: #{tpu_custom_call.1} parent=11 // pred_region
          _
        $region60: #{tpu_custom_call.1} parent=11 // pred_fallthru
          _
        // Predicated region
        $region61: #{tpu_custom_call.1} parent=11 // pred_check
          %p465 = pneg %p325
        $region62: #{tpu_custom_call.1} parent=11 // pred_check_branch
          %467 = sbr.rel (%p465) target = $region64
        $region63: #{tpu_custom_call.1} parent=11 // pred_region
          _
        $region64: #{tpu_custom_call.1} parent=11 // pred_fallthru
          _
        // Predicated region
        $region65: #{tpu_custom_call.1} parent=11 // pred_check
          %p468 = pneg %p346
        $region66: #{tpu_custom_call.1} parent=11 // pred_check_branch
          %470 = sbr.rel (%p468) target = $region68
        $region67: #{tpu_custom_call.1} parent=11 // pred_region
          _
        $region68: #{tpu_custom_call.1} parent=11 // pred_fallthru
          _
        // Predicated region
        $region69: #{tpu_custom_call.1} parent=11 // pred_check
          %p471 = pneg %p367
        $region70: #{tpu_custom_call.1} parent=11 // pred_check_branch
          %473 = sbr.rel (%p471) target = $region72
        $region71: #{tpu_custom_call.1} parent=11 // pred_region
          _
        $region72: #{tpu_custom_call.1} parent=11 // pred_fallthru
          _
        // Predicated region
        $region73: #{tpu_custom_call.1} parent=11 // pred_check
          %p474 = pneg %p388
        $region74: #{tpu_custom_call.1} parent=11 // pred_check_branch
          %476 = sbr.rel (%p474) target = $region76
        $region75: #{tpu_custom_call.1} parent=11 // pred_region
          _
        $region76: #{tpu_custom_call.1} parent=11 // pred_fallthru
          _
      $region12: #{tpu_custom_call.1} parent=5 // pred_fallthru
        _
      %p477 = scmp.lt.s32.totalorder %s26, 2
      // Predicated region
      $region77: #{tpu_custom_call.1} parent=5 // pred_check
        %p478 = pneg %p477
      $region78: #{tpu_custom_call.1} parent=5 // pred_check_branch
        %480 = sbr.rel (%p478) target = $region80
      $region79: #{tpu_custom_call.1} parent=5 // pred_region
        // Predicated region
        $region81: #{tpu_custom_call.1} parent=79 // pred_check
          %p481 = pneg %p46
        $region82: #{tpu_custom_call.1} parent=79 // pred_check_branch
          %483 = sbr.rel (%p481) target = $region84
        $region83: #{tpu_custom_call.1} parent=79 // pred_region
          %s484 = smul.u32 32, %s26
          %s485 = ssub.s32 63, %s484
          %p486 = scmp.lt.s32.totalorder %s485, 32
          %s487 = scalar_select %p486, %s485, 32
          %s488 = smul.u32 8, %s487
          %s489 = smul.u32 %s488, 2
          %p490 = scmp.lt.s32.totalorder %s484, 62
          %s491 = scalar_select %p490, %s484, 62
          %s492 = smul.addr %s491, 2
          %s493 = smul.addr %s492, 8
          %s494 = scalar_lea.vmem %s0, %s493
          %s495 = smul.u32 32, %s26
          %s496 = ssub.s32 63, %s495
          %p497 = scmp.lt.s32.totalorder %s496, 32
          %s498 = scalar_select %p497, %s496, 32
          %s499 = smul.u32 8, %s498
          %s500 = smul.u32 %s499, 2
        $region84: #{tpu_custom_call.1} parent=79 // pred_fallthru
          _
      $region80: #{tpu_custom_call.1} parent=5 // pred_fallthru
        _
      %p501 = scmp.le.s32.totalorder 1, %s26
      %p502 = scmp.lt.s32.totalorder %s26, 3
      %p503 = pnand %p501, %p502
      %p504 = pneg %p503
      // Predicated region
      $region85: #{tpu_custom_call.1} parent=5 // pred_check
        _
      $region86: #{tpu_custom_call.1} parent=5 // pred_check_branch
        %506 = sbr.rel (%p503) target = $region88
      $region87: #{tpu_custom_call.1} parent=5 // pred_region
        %s507 = ssub.s32 %s26, 1
        %s508 = smul.u32 32, %s31
        %s509 = ssub.s32 63, %s508
        %p510 = scmp.lt.s32.totalorder %s509, 32
        %s511 = scalar_select %p510, %s509, 32
        %s512 = smul.u32 8, %s511
        %s513 = smul.u32 %s512, 2
        %p514 = scmp.lt.s32.totalorder %s508, 62
        %s515 = scalar_select %p514, %s508, 62
        %s516 = smul.addr %s515, 2
        %s517 = smul.addr %s516, 8
        %s518 = scalar_lea.vmem %s0, %s517
        %p519 = pneg %p52
        %p520 = pneg %p49
        %p521 = pneg %p73
        %p522 = pneg %p70
        %p523 = pneg %p94
        %p524 = pneg %p91
        %p525 = pneg %p115
        %p526 = pneg %p112
        %p527 = pneg %p136
        %p528 = pneg %p133
        %p529 = pneg %p157
        %p530 = pneg %p154
        %p531 = pneg %p178
        %p532 = pneg %p175
        %p533 = pneg %p199
        %p534 = pneg %p196
        %p535 = pneg %p220
        %p536 = pneg %p217
        %p537 = pneg %p241
        %p538 = pneg %p238
        %p539 = pneg %p262
        %p540 = pneg %p259
        %p541 = pneg %p283
        %p542 = pneg %p280
        %p543 = pneg %p304
        %p544 = pneg %p301
        %p545 = pneg %p325
        %p546 = pneg %p322
        %p547 = pneg %p346
        %p548 = pneg %p343
        %p549 = pneg %p367
        %p550 = pneg %p364
        %p551 = pneg %p388
        %p552 = pneg %p385
        %p553 = pneg %p414
        %p554 = pneg %p411
        %s555 = sand.u32 %s401, 1
        %s556 = scalar_lea.sflag [#allocation3], %s555
        %s557 = sand.u32 %s401, 1
        %s558 = smul.addr %s557, 256
        %s559 = scalar_lea.vmem [#allocation2], %s558
        %s560 = smul.u32 32, %s31
        %s561 = ssub.s32 63, %s560
        %p562 = scmp.lt.s32.totalorder %s561, 32
        %s563 = scalar_select %p562, %s561, 32
        %s564 = smul.u32 8, %s563
        %s565 = smul.u32 %s564, 2
        %p566 = scmp.lt.s32.totalorder %s560, 62
        %s567 = scalar_select %p566, %s560, 62
        %s568 = smul.addr %s567, 2
        %s569 = smul.addr %s568, 8
        %s570 = scalar_lea.vmem %s0, %s569
        %s571 = smul.u32 32, %s31
        %s572 = ssub.s32 63, %s571
        %p573 = scmp.lt.s32.totalorder %s572, 32
        %s574 = scalar_select %p573, %s572, 32
        %s575 = smul.u32 8, %s574
        %s576 = smul.u32 %s575, 2
        %s577 = smul.u32 32, %s31
        %s578 = ssub.s32 63, %s577
        %p579 = scmp.lt.s32.totalorder %s578, 32
        %s580 = scalar_select %p579, %s578, 32
        %s581 = smul.u32 8, %s580
        %v583 = vld [vmem:[%s570] sm:$0xff]
        %v584 = vld [vmem:[%s570 + $0x8] sm:$0xff]
        %v585 = vld [vmem:[%s570 + $0x10] sm:$0xff]
        %v586 = vld [vmem:[%s570 + $0x18] sm:$0xff]
        %v587 = vld [vmem:[%s570 + $0x20] sm:$0xff]
        %v588 = vld [vmem:[%s570 + $0x28] sm:$0xff]
        %v589 = vld [vmem:[%s570 + $0x30] sm:$0xff]
        %v590 = vld [vmem:[%s570 + $0x38] sm:$0xff]
        %v591 = vld [vmem:[%s570 + $0x40] sm:$0xff]
        %v592 = vld [vmem:[%s570 + $0x48] sm:$0xff]
        %v593 = vld [vmem:[%s570 + $0x50] sm:$0xff]
        %v594 = vld [vmem:[%s570 + $0x58] sm:$0xff]
        %v595 = vld [vmem:[%s570 + $0x60] sm:$0xff]
        %v596 = vld [vmem:[%s570 + $0x68] sm:$0xff]
        %v597 = vld [vmem:[%s570 + $0x70] sm:$0xff]
        %v598 = vld [vmem:[%s570 + $0x78] sm:$0xff]
        %v599 = vld [vmem:[%s570 + $0x80] sm:$0xff]
        %v600 = vld [vmem:[%s570 + $0x88] sm:$0xff]
        %v601 = vld [vmem:[%s570 + $0x90] sm:$0xff]
        %v602 = vld [vmem:[%s570 + $0x98] sm:$0xff]
        %v603 = vld [vmem:[%s570 + $0xa0] sm:$0xff]
        %v604 = vld [vmem:[%s570 + $0xa8] sm:$0xff]
        %v605 = vld [vmem:[%s570 + $0xb0] sm:$0xff]
        %v606 = vld [vmem:[%s570 + $0xb8] sm:$0xff]
        %v607 = vld [vmem:[%s570 + $0xc0] sm:$0xff]
        %v608 = vld [vmem:[%s570 + $0xc8] sm:$0xff]
        %v609 = vld [vmem:[%s570 + $0xd0] sm:$0xff]
        %v610 = vld [vmem:[%s570 + $0xd8] sm:$0xff]
        %v611 = vld [vmem:[%s570 + $0xe0] sm:$0xff]
        %v612 = vld [vmem:[%s570 + $0xe8] sm:$0xff]
        %v613 = vld [vmem:[%s570 + $0xf0] sm:$0xff]
        %v614 = vld [vmem:[%s570 + $0xf8] sm:$0xff]
        %v615 = vld [vmem:[%s570 + $0x100] sm:$0xff]
        %v616 = vld [vmem:[%s570 + $0x108] sm:$0xff]
        %v617 = vld [vmem:[%s570 + $0x110] sm:$0xff]
        %v618 = vld [vmem:[%s570 + $0x118] sm:$0xff]
        %v619 = vld [vmem:[%s570 + $0x120] sm:$0xff]
        %v620 = vld [vmem:[%s570 + $0x128] sm:$0xff]
        %v621 = vld [vmem:[%s570 + $0x130] sm:$0xff]
        %v622 = vld [vmem:[%s570 + $0x138] sm:$0xff]
        %v623 = vld [vmem:[%s570 + $0x140] sm:$0xff]
        %v624 = vld [vmem:[%s570 + $0x148] sm:$0xff]
        %v625 = vld [vmem:[%s570 + $0x150] sm:$0xff]
        %v626 = vld [vmem:[%s570 + $0x158] sm:$0xff]
        %v627 = vld [vmem:[%s570 + $0x160] sm:$0xff]
        %v628 = vld [vmem:[%s570 + $0x168] sm:$0xff]
        %v629 = vld [vmem:[%s570 + $0x170] sm:$0xff]
        %v630 = vld [vmem:[%s570 + $0x178] sm:$0xff]
        %v631 = vld [vmem:[%s570 + $0x180] sm:$0xff]
        %v632 = vld [vmem:[%s570 + $0x188] sm:$0xff]
        %v633 = vld [vmem:[%s570 + $0x190] sm:$0xff]
        %v634 = vld [vmem:[%s570 + $0x198] sm:$0xff]
        %v635 = vld [vmem:[%s570 + $0x1a0] sm:$0xff]
        %v636 = vld [vmem:[%s570 + $0x1a8] sm:$0xff]
        %v637 = vld [vmem:[%s570 + $0x1b0] sm:$0xff]
        %v638 = vld [vmem:[%s570 + $0x1b8] sm:$0xff]
        %v639 = vld [vmem:[%s570 + $0x1c0] sm:$0xff]
        %v640 = vld [vmem:[%s570 + $0x1c8] sm:$0xff]
        %v641 = vld [vmem:[%s570 + $0x1d0] sm:$0xff]
        %v642 = vld [vmem:[%s570 + $0x1d8] sm:$0xff]
        %v643 = vld [vmem:[%s570 + $0x1e0] sm:$0xff]
        %v644 = vld [vmem:[%s570 + $0x1e8] sm:$0xff]
        %v645 = vld [vmem:[%s570 + $0x1f0] sm:$0xff]
        %v646 = vld [vmem:[%s570 + $0x1f8] sm:$0xff]
        %v647 = vpack.c.bf16 %v585, %v583
        %v648 = vpack.c.bf16 %v586, %v584
        %v649 = vpack.c.bf16 %v589, %v587
        %v650 = vpack.c.bf16 %v590, %v588
        %v651 = vpack.c.bf16 %v593, %v591
        %v652 = vpack.c.bf16 %v594, %v592
        %v653 = vpack.c.bf16 %v597, %v595
        %v654 = vpack.c.bf16 %v598, %v596
        %v655 = vpack.c.bf16 %v601, %v599
        %v656 = vpack.c.bf16 %v602, %v600
        %v657 = vpack.c.bf16 %v605, %v603
        %v658 = vpack.c.bf16 %v606, %v604
        %v659 = vpack.c.bf16 %v609, %v607
        %v660 = vpack.c.bf16 %v610, %v608
        %v661 = vpack.c.bf16 %v613, %v611
        %v662 = vpack.c.bf16 %v614, %v612
        %v663 = vpack.c.bf16 %v617, %v615
        %v664 = vpack.c.bf16 %v618, %v616
        %v665 = vpack.c.bf16 %v621, %v619
        %v666 = vpack.c.bf16 %v622, %v620
        %v667 = vpack.c.bf16 %v625, %v623
        %v668 = vpack.c.bf16 %v626, %v624
        %v669 = vpack.c.bf16 %v629, %v627
        %v670 = vpack.c.bf16 %v630, %v628
        %v671 = vpack.c.bf16 %v633, %v631
        %v672 = vpack.c.bf16 %v634, %v632
        %v673 = vpack.c.bf16 %v637, %v635
        %v674 = vpack.c.bf16 %v638, %v636
        %v675 = vpack.c.bf16 %v641, %v639
        %v676 = vpack.c.bf16 %v642, %v640
        %v677 = vpack.c.bf16 %v645, %v643
        %v678 = vpack.c.bf16 %v646, %v644
        %v679 = vld [vmem:[%s1] sm:$0xff]
        %v680 = vld [vmem:[%s1 + $0x8] sm:$0xff]
        %v681 = vld [vmem:[%s1 + $0x10] sm:$0xff]
        %v682 = vld [vmem:[%s1 + $0x18] sm:$0xff]
        %v683 = vld [vmem:[%s1 + $0x20] sm:$0xf]
        %v684 = vld [vmem:[%s1 + $0x24] sm:$0xff]
        %v685 = vld [vmem:[%s1 + $0x2c] sm:$0xff]
        %v686 = vld [vmem:[%s1 + $0x34] sm:$0xff]
        %v687 = vld [vmem:[%s1 + $0x3c] sm:$0xff]
        %v688 = vld [vmem:[%s1 + $0x44] sm:$0xf]
        %v689 = vld [vmem:[%s1 + $0x48] sm:$0xff]
        %v690 = vld [vmem:[%s1 + $0x50] sm:$0xff]
        %v691 = vld [vmem:[%s1 + $0x58] sm:$0xff]
        %v692 = vld [vmem:[%s1 + $0x60] sm:$0xff]
        %v693 = vld [vmem:[%s1 + $0x68] sm:$0xf]
        %v694 = vld [vmem:[%s1 + $0x6c] sm:$0xff]
        %v695 = vld [vmem:[%s1 + $0x74] sm:$0xff]
        %v696 = vld [vmem:[%s1 + $0x7c] sm:$0xff]
        %v697 = vld [vmem:[%s1 + $0x84] sm:$0xff]
        %v698 = vld [vmem:[%s1 + $0x8c] sm:$0xf]
        %v699 = vld [vmem:[%s1 + $0x90] sm:$0xff]
        %v700 = vld [vmem:[%s1 + $0x98] sm:$0xff]
        %v701 = vld [vmem:[%s1 + $0xa0] sm:$0xff]
        %v702 = vld [vmem:[%s1 + $0xa8] sm:$0xff]
        %v703 = vld [vmem:[%s1 + $0xb0] sm:$0xf]
        %v704 = vld [vmem:[%s1 + $0xb4] sm:$0xff]
        %v705 = vld [vmem:[%s1 + $0xbc] sm:$0xff]
        %v706 = vld [vmem:[%s1 + $0xc4] sm:$0xff]
        %v707 = vld [vmem:[%s1 + $0xcc] sm:$0xff]
        %v708 = vld [vmem:[%s1 + $0xd4] sm:$0xf]
        %v709 = vld [vmem:[%s1 + $0xd8] sm:$0xff]
        %v710 = vld [vmem:[%s1 + $0xe0] sm:$0xff]
        %v711 = vld [vmem:[%s1 + $0xe8] sm:$0xff]
        %v712 = vld [vmem:[%s1 + $0xf0] sm:$0xff]
        %v713 = vld [vmem:[%s1 + $0xf8] sm:$0xf]
        %v714 = vld [vmem:[%s1 + $0xfc] sm:$0xff]
        %v715 = vld [vmem:[%s1 + $0x104] sm:$0xff]
        %v716 = vld [vmem:[%s1 + $0x10c] sm:$0xff]
        %v717 = vld [vmem:[%s1 + $0x114] sm:$0xff]
        %v718 = vld [vmem:[%s1 + $0x11c] sm:$0xf]
        %v719 = vld [vmem:[%s1 + $0x120] sm:$0xff]
        %v720 = vld [vmem:[%s1 + $0x128] sm:$0xff]
        %v721 = vld [vmem:[%s1 + $0x130] sm:$0xff]
        %v722 = vld [vmem:[%s1 + $0x138] sm:$0xff]
        %v723 = vld [vmem:[%s1 + $0x140] sm:$0xf]
        %v724 = vld [vmem:[%s1 + $0x144] sm:$0xff]
        %v725 = vld [vmem:[%s1 + $0x14c] sm:$0xff]
        %v726 = vld [vmem:[%s1 + $0x154] sm:$0xff]
        %v727 = vld [vmem:[%s1 + $0x15c] sm:$0xff]
        %v728 = vld [vmem:[%s1 + $0x164] sm:$0xf]
        %v729 = vld [vmem:[%s1 + $0x168] sm:$0xff]
        %v730 = vld [vmem:[%s1 + $0x170] sm:$0xff]
        %v731 = vld [vmem:[%s1 + $0x178] sm:$0xff]
        %v732 = vld [vmem:[%s1 + $0x180] sm:$0xff]
        %v733 = vld [vmem:[%s1 + $0x188] sm:$0xf]
        %v734 = vld [vmem:[%s1 + $0x18c] sm:$0xff]
        %v735 = vld [vmem:[%s1 + $0x194] sm:$0xff]
        %v736 = vld [vmem:[%s1 + $0x19c] sm:$0xff]
        %v737 = vld [vmem:[%s1 + $0x1a4] sm:$0xff]
        %v738 = vld [vmem:[%s1 + $0x1ac] sm:$0xf]
        %v739 = vld [vmem:[%s1 + $0x1b0] sm:$0xff]
        %v740 = vld [vmem:[%s1 + $0x1b8] sm:$0xff]
        %v741 = vld [vmem:[%s1 + $0x1c0] sm:$0xff]
        %v742 = vld [vmem:[%s1 + $0x1c8] sm:$0xff]
        %v743 = vld [vmem:[%s1 + $0x1d0] sm:$0xf]
        %v744 = vld [vmem:[%s1 + $0x1d4] sm:$0xff]
        %v745 = vld [vmem:[%s1 + $0x1dc] sm:$0xff]
        %v746 = vld [vmem:[%s1 + $0x1e4] sm:$0xff]
        %v747 = vld [vmem:[%s1 + $0x1ec] sm:$0xff]
        %v748 = vld [vmem:[%s1 + $0x1f4] sm:$0xf]
        %v749 = vld [vmem:[%s1 + $0x1f8] sm:$0xff]
        %v750 = vld [vmem:[%s1 + $0x200] sm:$0xff]
        %v751 = vld [vmem:[%s1 + $0x208] sm:$0xff]
        %v752 = vld [vmem:[%s1 + $0x210] sm:$0xff]
        %v753 = vld [vmem:[%s1 + $0x218] sm:$0xf]
        %v754 = vld [vmem:[%s1 + $0x21c] sm:$0xff]
        %v755 = vld [vmem:[%s1 + $0x224] sm:$0xff]
        %v756 = vld [vmem:[%s1 + $0x22c] sm:$0xff]
        %v757 = vld [vmem:[%s1 + $0x234] sm:$0xff]
        %v758 = vld [vmem:[%s1 + $0x23c] sm:$0xf]
        %v759 = vld [vmem:[%s1 + $0x240] sm:$0xff]
        %v760 = vld [vmem:[%s1 + $0x248] sm:$0xff]
        %v761 = vld [vmem:[%s1 + $0x250] sm:$0xff]
        %v762 = vld [vmem:[%s1 + $0x258] sm:$0xff]
        %v763 = vld [vmem:[%s1 + $0x260] sm:$0xf]
        %v764 = vld [vmem:[%s1 + $0x264] sm:$0xff]
        %v765 = vld [vmem:[%s1 + $0x26c] sm:$0xff]
        %v766 = vld [vmem:[%s1 + $0x274] sm:$0xff]
        %v767 = vld [vmem:[%s1 + $0x27c] sm:$0xff]
        %v768 = vld [vmem:[%s1 + $0x284] sm:$0xf]
        %v769 = vld [vmem:[%s2] sm:$0xff]
        %v770 = vld [vmem:[%s2 + $0x8] sm:$0x1]
        %v773 = vperm.slane %v769, 0
        %v774 = vperm.slane %v769, 1
        %v775 = vperm.slane %v769, 2
        %v776 = vperm.slane %v769, 3
        %v777 = vperm.slane %v769, 4
        %v778 = vperm.slane %v769, 5
        %v779 = vperm.slane %v769, 6
        %v780 = vperm.slane %v769, 7
        %v781 = vperm.slane %v770, 0
        %v881 = vunpack.c.l.b16 %v679
        %v882 = vunpack.c.h.b16 %v679
        %v883 = vunpack.c.l.b16 %v680
        %v884 = vunpack.c.h.b16 %v680
        %v885 = vunpack.c.l.b16 %v681
        %v886 = vunpack.c.h.b16 %v681
        %v887 = vunpack.c.l.b16 %v682
        %v888 = vunpack.c.h.b16 %v682
        %v889 = vunpack.c.l.b16 %v683
        %v890 = vunpack.c.l.b16 %v684
        %v891 = vunpack.c.h.b16 %v684
        %v892 = vunpack.c.l.b16 %v685
        %v893 = vunpack.c.h.b16 %v685
        %v894 = vunpack.c.l.b16 %v686
        %v895 = vunpack.c.h.b16 %v686
        %v896 = vunpack.c.l.b16 %v687
        %v897 = vunpack.c.h.b16 %v687
        %v898 = vunpack.c.l.b16 %v688
        %v899 = vunpack.c.l.b16 %v689
        %v900 = vunpack.c.h.b16 %v689
        %v901 = vunpack.c.l.b16 %v690
        %v902 = vunpack.c.h.b16 %v690
        %v903 = vunpack.c.l.b16 %v691
        %v904 = vunpack.c.h.b16 %v691
        %v905 = vunpack.c.l.b16 %v692
        %v906 = vunpack.c.h.b16 %v692
        %v907 = vunpack.c.l.b16 %v693
        %v908 = vunpack.c.l.b16 %v694
        %v909 = vunpack.c.h.b16 %v694
        %v910 = vunpack.c.l.b16 %v695
        %v911 = vunpack.c.h.b16 %v695
        %v912 = vunpack.c.l.b16 %v696
        %v913 = vunpack.c.h.b16 %v696
        %v914 = vunpack.c.l.b16 %v697
        %v915 = vunpack.c.h.b16 %v697
        %v916 = vunpack.c.l.b16 %v698
        %v917 = vunpack.c.l.b16 %v699
        %v918 = vunpack.c.h.b16 %v699
        %v919 = vunpack.c.l.b16 %v700
        %v920 = vunpack.c.h.b16 %v700
        %v921 = vunpack.c.l.b16 %v701
        %v922 = vunpack.c.h.b16 %v701
        %v923 = vunpack.c.l.b16 %v702
        %v924 = vunpack.c.h.b16 %v702
        %v925 = vunpack.c.l.b16 %v703
        %v926 = vunpack.c.l.b16 %v704
        %v927 = vunpack.c.h.b16 %v704
        %v928 = vunpack.c.l.b16 %v705
        %v929 = vunpack.c.h.b16 %v705
        %v930 = vunpack.c.l.b16 %v706
        %v931 = vunpack.c.h.b16 %v706
        %v932 = vunpack.c.l.b16 %v707
        %v933 = vunpack.c.h.b16 %v707
        %v934 = vunpack.c.l.b16 %v708
        %v935 = vunpack.c.l.b16 %v709
        %v936 = vunpack.c.h.b16 %v709
        %v937 = vunpack.c.l.b16 %v710
        %v938 = vunpack.c.h.b16 %v710
        %v939 = vunpack.c.l.b16 %v711
        %v940 = vunpack.c.h.b16 %v711
        %v941 = vunpack.c.l.b16 %v712
        %v942 = vunpack.c.h.b16 %v712
        %v943 = vunpack.c.l.b16 %v713
        %v944 = vunpack.c.l.b16 %v714
        %v945 = vunpack.c.h.b16 %v714
        %v946 = vunpack.c.l.b16 %v715
        %v947 = vunpack.c.h.b16 %v715
        %v948 = vunpack.c.l.b16 %v716
        %v949 = vunpack.c.h.b16 %v716
        %v950 = vunpack.c.l.b16 %v717
        %v951 = vunpack.c.h.b16 %v717
        %v952 = vunpack.c.l.b16 %v718
        %v953 = vunpack.c.l.b16 %v719
        %v954 = vunpack.c.h.b16 %v719
        %v955 = vunpack.c.l.b16 %v720
        %v956 = vunpack.c.h.b16 %v720
        %v957 = vunpack.c.l.b16 %v721
        %v958 = vunpack.c.h.b16 %v721
        %v959 = vunpack.c.l.b16 %v722
        %v960 = vunpack.c.h.b16 %v722
        %v961 = vunpack.c.l.b16 %v723
        %v962 = vunpack.c.l.b16 %v724
        %v963 = vunpack.c.h.b16 %v724
        %v964 = vunpack.c.l.b16 %v725
        %v965 = vunpack.c.h.b16 %v725
        %v966 = vunpack.c.l.b16 %v726
        %v967 = vunpack.c.h.b16 %v726
        %v968 = vunpack.c.l.b16 %v727
        %v969 = vunpack.c.h.b16 %v727
        %v970 = vunpack.c.l.b16 %v728
        %v971 = vunpack.c.l.b16 %v729
        %v972 = vunpack.c.h.b16 %v729
        %v973 = vunpack.c.l.b16 %v730
        %v974 = vunpack.c.h.b16 %v730
        %v975 = vunpack.c.l.b16 %v731
        %v976 = vunpack.c.h.b16 %v731
        %v977 = vunpack.c.l.b16 %v732
        %v978 = vunpack.c.h.b16 %v732
        %v979 = vunpack.c.l.b16 %v733
        %v980 = vunpack.c.l.b16 %v734
        %v981 = vunpack.c.h.b16 %v734
        %v982 = vunpack.c.l.b16 %v735
        %v983 = vunpack.c.h.b16 %v735
        %v984 = vunpack.c.l.b16 %v736
        %v985 = vunpack.c.h.b16 %v736
        %v986 = vunpack.c.l.b16 %v737
        %v987 = vunpack.c.h.b16 %v737
        %v988 = vunpack.c.l.b16 %v738
        %v989 = vunpack.c.l.b16 %v739
        %v990 = vunpack.c.h.b16 %v739
        %v991 = vunpack.c.l.b16 %v740
        %v992 = vunpack.c.h.b16 %v740
        %v993 = vunpack.c.l.b16 %v741
        %v994 = vunpack.c.h.b16 %v741
        %v995 = vunpack.c.l.b16 %v742
        %v996 = vunpack.c.h.b16 %v742
        %v997 = vunpack.c.l.b16 %v743
        %v998 = vunpack.c.l.b16 %v744
        %v999 = vunpack.c.h.b16 %v744
        %v1000 = vunpack.c.l.b16 %v745
        %v1001 = vunpack.c.h.b16 %v745
        %v1002 = vunpack.c.l.b16 %v746
        %v1003 = vunpack.c.h.b16 %v746
        %v1004 = vunpack.c.l.b16 %v747
        %v1005 = vunpack.c.h.b16 %v747
        %v1006 = vunpack.c.l.b16 %v748
        %v1007 = vunpack.c.l.b16 %v749
        %v1008 = vunpack.c.h.b16 %v749
        %v1009 = vunpack.c.l.b16 %v750
        %v1010 = vunpack.c.h.b16 %v750
        %v1011 = vunpack.c.l.b16 %v751
        %v1012 = vunpack.c.h.b16 %v751
        %v1013 = vunpack.c.l.b16 %v752
        %v1014 = vunpack.c.h.b16 %v752
        %v1015 = vunpack.c.l.b16 %v753
        %v1016 = vunpack.c.l.b16 %v754
        %v1017 = vunpack.c.h.b16 %v754
        %v1018 = vunpack.c.l.b16 %v755
        %v1019 = vunpack.c.h.b16 %v755
        %v1020 = vunpack.c.l.b16 %v756
        %v1021 = vunpack.c.h.b16 %v756
        %v1022 = vunpack.c.l.b16 %v757
        %v1023 = vunpack.c.h.b16 %v757
        %v1024 = vunpack.c.l.b16 %v758
        %v1025 = vunpack.c.l.b16 %v759
        %v1026 = vunpack.c.h.b16 %v759
        %v1027 = vunpack.c.l.b16 %v760
        %v1028 = vunpack.c.h.b16 %v760
        %v1029 = vunpack.c.l.b16 %v761
        %v1030 = vunpack.c.h.b16 %v761
        %v1031 = vunpack.c.l.b16 %v762
        %v1032 = vunpack.c.h.b16 %v762
        %v1033 = vunpack.c.l.b16 %v763
        %v1034 = vunpack.c.l.b16 %v764
        %v1035 = vunpack.c.h.b16 %v764
        %v1036 = vunpack.c.l.b16 %v765
        %v1037 = vunpack.c.h.b16 %v765
        %v1038 = vunpack.c.l.b16 %v766
        %v1039 = vunpack.c.h.b16 %v766
        %v1040 = vunpack.c.l.b16 %v767
        %v1041 = vunpack.c.h.b16 %v767
        %v1042 = vunpack.c.l.b16 %v768
        %v1043 = vpack.c.b16 %v890, %v881
        %v1044 = vpack.c.b16 %v891, %v882
        %v1045 = vpack.c.b16 %v892, %v883
        %v1046 = vpack.c.b16 %v893, %v884
        %v1047 = vpack.c.b16 %v894, %v885
        %v1048 = vpack.c.b16 %v895, %v886
        %v1049 = vpack.c.b16 %v896, %v887
        %v1050 = vpack.c.b16 %v897, %v888
        %v1051 = vpack.c.b16 %v898, %v889
        %v1052 = vpack.c.b16 %v908, %v899
        %v1053 = vpack.c.b16 %v909, %v900
        %v1054 = vpack.c.b16 %v910, %v901
        %v1055 = vpack.c.b16 %v911, %v902
        %v1056 = vpack.c.b16 %v912, %v903
        %v1057 = vpack.c.b16 %v913, %v904
        %v1058 = vpack.c.b16 %v914, %v905
        %v1059 = vpack.c.b16 %v915, %v906
        %v1060 = vpack.c.b16 %v916, %v907
        %v1061 = vpack.c.b16 %v926, %v917
        %v1062 = vpack.c.b16 %v927, %v918
        %v1063 = vpack.c.b16 %v928, %v919
        %v1064 = vpack.c.b16 %v929, %v920
        %v1065 = vpack.c.b16 %v930, %v921
        %v1066 = vpack.c.b16 %v931, %v922
        %v1067 = vpack.c.b16 %v932, %v923
        %v1068 = vpack.c.b16 %v933, %v924
        %v1069 = vpack.c.b16 %v934, %v925
        %v1070 = vpack.c.b16 %v944, %v935
        %v1071 = vpack.c.b16 %v945, %v936
        %v1072 = vpack.c.b16 %v946, %v937
        %v1073 = vpack.c.b16 %v947, %v938
        %v1074 = vpack.c.b16 %v948, %v939
        %v1075 = vpack.c.b16 %v949, %v940
        %v1076 = vpack.c.b16 %v950, %v941
        %v1077 = vpack.c.b16 %v951, %v942
        %v1078 = vpack.c.b16 %v952, %v943
        %v1079 = vpack.c.b16 %v962, %v953
        %v1080 = vpack.c.b16 %v963, %v954
        %v1081 = vpack.c.b16 %v964, %v955
        %v1082 = vpack.c.b16 %v965, %v956
        %v1083 = vpack.c.b16 %v966, %v957
        %v1084 = vpack.c.b16 %v967, %v958
        %v1085 = vpack.c.b16 %v968, %v959
        %v1086 = vpack.c.b16 %v969, %v960
        %v1087 = vpack.c.b16 %v970, %v961
        %v1088 = vpack.c.b16 %v980, %v971
        %v1089 = vpack.c.b16 %v981, %v972
        %v1090 = vpack.c.b16 %v982, %v973
        %v1091 = vpack.c.b16 %v983, %v974
        %v1092 = vpack.c.b16 %v984, %v975
        %v1093 = vpack.c.b16 %v985, %v976
        %v1094 = vpack.c.b16 %v986, %v977
        %v1095 = vpack.c.b16 %v987, %v978
        %v1096 = vpack.c.b16 %v988, %v979
        %v1097 = vpack.c.b16 %v998, %v989
        %v1098 = vpack.c.b16 %v999, %v990
        %v1099 = vpack.c.b16 %v1000, %v991
        %v1100 = vpack.c.b16 %v1001, %v992
        %v1101 = vpack.c.b16 %v1002, %v993
        %v1102 = vpack.c.b16 %v1003, %v994
        %v1103 = vpack.c.b16 %v1004, %v995
        %v1104 = vpack.c.b16 %v1005, %v996
        %v1105 = vpack.c.b16 %v1006, %v997
        %v1106 = vpack.c.b16 %v1016, %v1007
        %v1107 = vpack.c.b16 %v1017, %v1008
        %v1108 = vpack.c.b16 %v1018, %v1009
        %v1109 = vpack.c.b16 %v1019, %v1010
        %v1110 = vpack.c.b16 %v1020, %v1011
        %v1111 = vpack.c.b16 %v1021, %v1012
        %v1112 = vpack.c.b16 %v1022, %v1013
        %v1113 = vpack.c.b16 %v1023, %v1014
        %v1114 = vpack.c.b16 %v1024, %v1015
        %v1115 = vpack.c.b16 %v1034, %v1025
        %v1116 = vpack.c.b16 %v1035, %v1026
        %v1117 = vpack.c.b16 %v1036, %v1027
        %v1118 = vpack.c.b16 %v1037, %v1028
        %v1119 = vpack.c.b16 %v1038, %v1029
        %v1120 = vpack.c.b16 %v1039, %v1030
        %v1121 = vpack.c.b16 %v1040, %v1031
        %v1122 = vpack.c.b16 %v1041, %v1032
        %v1123 = vpack.c.b16 %v1042, %v1033
        %vm1205 = vcmask 130048
        %v1207 = vsel %vm1205, %v648, 0
        %v1210 = vsel %vm1205, %v650, 0
        %v1213 = vsel %vm1205, %v652, 0
        %v1216 = vsel %vm1205, %v654, 0
        %v1219 = vsel %vm1205, %v656, 0
        %v1222 = vsel %vm1205, %v658, 0
        %v1225 = vsel %vm1205, %v660, 0
        %v1228 = vsel %vm1205, %v662, 0
        %v1231 = vsel %vm1205, %v664, 0
        %v1234 = vsel %vm1205, %v666, 0
        %v1237 = vsel %vm1205, %v668, 0
        %v1240 = vsel %vm1205, %v670, 0
        %v1243 = vsel %vm1205, %v672, 0
        %v1246 = vsel %vm1205, %v674, 0
        %v1249 = vsel %vm1205, %v676, 0
        %v1252 = vsel %vm1205, %v678, 0
        %1254 = vmatpush.bf16.msra.mxu0 %v1106
        %1255 = vmatpush.bf16.msra.mxu0 %v1097
        %1256 = vmatpush.bf16.msra.mxu0 %v1088
        %1257 = vmatpush.bf16.msra.mxu0 %v1079
        %1258 = vmatpush.bf16.msra.mxu0 %v1070
        %1259 = vmatpush.bf16.msra.mxu0 %v1061
        %1260 = vmatpush.bf16.msra.mxu0 %v1052
        %1261 = vmatpush.bf16.msra.mxu0 %v1043
        %1262 = vmatmul.bf16.gmra.mxu0 %v647
        %v1263 = vpop.f32.mrf.mxu0
        %v1264 = vadd.f32 %v773, %v1263
        %v1265 = vpop.f32.mrf.mxu0
        %v1266 = vadd.f32 %v773, %v1265
        %1267 = vmatmul.bf16.gmra.mxu0 %v649
        %v1268 = vpop.f32.mrf.mxu0
        %v1269 = vadd.f32 %v773, %v1268
        %v1270 = vpop.f32.mrf.mxu0
        %v1271 = vadd.f32 %v773, %v1270
        %1272 = vmatmul.bf16.gmra.mxu0 %v651
        %v1273 = vpop.f32.mrf.mxu0
        %v1274 = vadd.f32 %v773, %v1273
        %v1275 = vpop.f32.mrf.mxu0
        %v1276 = vadd.f32 %v773, %v1275
        %1277 = vmatmul.bf16.gmra.mxu0 %v653
        %v1278 = vpop.f32.mrf.mxu0
        %v1279 = vadd.f32 %v773, %v1278
        %v1280 = vpop.f32.mrf.mxu0
        %v1281 = vadd.f32 %v773, %v1280
        %1282 = vmatmul.bf16.gmra.mxu0 %v655
        %v1283 = vpop.f32.mrf.mxu0
        %v1284 = vadd.f32 %v773, %v1283
        %v1285 = vpop.f32.mrf.mxu0
        %v1286 = vadd.f32 %v773, %v1285
        %1287 = vmatmul.bf16.gmra.mxu0 %v657
        %v1288 = vpop.f32.mrf.mxu0
        %v1289 = vadd.f32 %v773, %v1288
        %v1290 = vpop.f32.mrf.mxu0
        %v1291 = vadd.f32 %v773, %v1290
        %1292 = vmatmul.bf16.gmra.mxu0 %v659
        %v1293 = vpop.f32.mrf.mxu0
        %v1294 = vadd.f32 %v773, %v1293
        %v1295 = vpop.f32.mrf.mxu0
        %v1296 = vadd.f32 %v773, %v1295
        %1297 = vmatmul.bf16.gmra.mxu0 %v661
        %v1298 = vpop.f32.mrf.mxu0
        %v1299 = vadd.f32 %v773, %v1298
        %v1300 = vpop.f32.mrf.mxu0
        %v1301 = vadd.f32 %v773, %v1300
        %1302 = vmatmul.bf16.gmra.mxu0 %v663
        %v1303 = vpop.f32.mrf.mxu0
        %v1304 = vadd.f32 %v773, %v1303
        %v1305 = vpop.f32.mrf.mxu0
        %v1306 = vadd.f32 %v773, %v1305
        %1307 = vmatmul.bf16.gmra.mxu0 %v665
        %v1308 = vpop.f32.mrf.mxu0
        %v1309 = vadd.f32 %v773, %v1308
        %v1310 = vpop.f32.mrf.mxu0
        %v1311 = vadd.f32 %v773, %v1310
        %1312 = vmatmul.bf16.gmra.mxu0 %v667
        %v1313 = vpop.f32.mrf.mxu0
        %v1314 = vadd.f32 %v773, %v1313
        %v1315 = vpop.f32.mrf.mxu0
        %v1316 = vadd.f32 %v773, %v1315
        %1317 = vmatmul.bf16.gmra.mxu0 %v669
        %v1318 = vpop.f32.mrf.mxu0
        %v1319 = vadd.f32 %v773, %v1318
        %v1320 = vpop.f32.mrf.mxu0
        %v1321 = vadd.f32 %v773, %v1320
        %1322 = vmatmul.bf16.gmra.mxu0 %v671
        %v1323 = vpop.f32.mrf.mxu0
        %v1324 = vadd.f32 %v773, %v1323
        %v1325 = vpop.f32.mrf.mxu0
        %v1326 = vadd.f32 %v773, %v1325
        %1327 = vmatmul.bf16.gmra.mxu0 %v673
        %v1328 = vpop.f32.mrf.mxu0
        %v1329 = vadd.f32 %v773, %v1328
        %v1330 = vpop.f32.mrf.mxu0
        %v1331 = vadd.f32 %v773, %v1330
        %1332 = vmatmul.bf16.gmra.mxu0 %v675
        %v1333 = vpop.f32.mrf.mxu0
        %v1334 = vadd.f32 %v773, %v1333
        %v1335 = vpop.f32.mrf.mxu0
        %v1336 = vadd.f32 %v773, %v1335
        %1337 = vmatmul.bf16.gmra.mxu0 %v677
        %v1338 = vpop.f32.mrf.mxu0
        %v1339 = vadd.f32 %v773, %v1338
        %v1340 = vpop.f32.mrf.mxu0
        %v1341 = vadd.f32 %v773, %v1340
        %1342 = vdwg.mxu0
        %1343 = vmatpush.bf16.msra.mxu0 0
        %1344 = vmatpush.bf16.msra.mxu0 0
        %1345 = vmatpush.bf16.msra.mxu0 0
        %1346 = vmatpush.bf16.msra.mxu0 0
        %1347 = vmatpush.bf16.msra.mxu0 0
        %1348 = vmatpush.bf16.msra.mxu0 0
        %1349 = vmatpush.bf16.msra.mxu0 0
        %1350 = vmatpush.bf16.msra.mxu0 %v1115
        %1351 = vmatmul.bf16.gmra.mxu0 %v1207
        %v1352 = vpop.f32.mrf.mxu0
        %v1353 = vadd.f32 %v1264, %v1352
        %v1354 = vpop.f32.mrf.mxu0
        %v1355 = vadd.f32 %v1266, %v1354
        %1356 = vmatmul.bf16.gmra.mxu0 %v1210
        %v1357 = vpop.f32.mrf.mxu0
        %v1358 = vadd.f32 %v1269, %v1357
        %v1359 = vpop.f32.mrf.mxu0
        %v1360 = vadd.f32 %v1271, %v1359
        %1361 = vmatmul.bf16.gmra.mxu0 %v1213
        %v1362 = vpop.f32.mrf.mxu0
        %v1363 = vadd.f32 %v1274, %v1362
        %v1364 = vpop.f32.mrf.mxu0
        %v1365 = vadd.f32 %v1276, %v1364
        %1366 = vmatmul.bf16.gmra.mxu0 %v1216
        %v1367 = vpop.f32.mrf.mxu0
        %v1368 = vadd.f32 %v1279, %v1367
        %v1369 = vpop.f32.mrf.mxu0
        %v1370 = vadd.f32 %v1281, %v1369
        %1371 = vmatmul.bf16.gmra.mxu0 %v1219
        %v1372 = vpop.f32.mrf.mxu0
        %v1373 = vadd.f32 %v1284, %v1372
        %v1374 = vpop.f32.mrf.mxu0
        %v1375 = vadd.f32 %v1286, %v1374
        %1376 = vmatmul.bf16.gmra.mxu0 %v1222
        %v1377 = vpop.f32.mrf.mxu0
        %v1378 = vadd.f32 %v1289, %v1377
        %v1379 = vpop.f32.mrf.mxu0
        %v1380 = vadd.f32 %v1291, %v1379
        %1381 = vmatmul.bf16.gmra.mxu0 %v1225
        %v1382 = vpop.f32.mrf.mxu0
        %v1383 = vadd.f32 %v1294, %v1382
        %v1384 = vpop.f32.mrf.mxu0
        %v1385 = vadd.f32 %v1296, %v1384
        %1386 = vmatmul.bf16.gmra.mxu0 %v1228
        %v1387 = vpop.f32.mrf.mxu0
        %v1388 = vadd.f32 %v1299, %v1387
        %v1389 = vpop.f32.mrf.mxu0
        %v1390 = vadd.f32 %v1301, %v1389
        %1391 = vmatmul.bf16.gmra.mxu0 %v1231
        %v1392 = vpop.f32.mrf.mxu0
        %v1393 = vadd.f32 %v1304, %v1392
        %v1394 = vpop.f32.mrf.mxu0
        %v1395 = vadd.f32 %v1306, %v1394
        %1396 = vmatmul.bf16.gmra.mxu0 %v1234
        %v1397 = vpop.f32.mrf.mxu0
        %v1398 = vadd.f32 %v1309, %v1397
        %v1399 = vpop.f32.mrf.mxu0
        %v1400 = vadd.f32 %v1311, %v1399
        %1401 = vmatmul.bf16.gmra.mxu0 %v1237
        %v1402 = vpop.f32.mrf.mxu0
        %v1403 = vadd.f32 %v1314, %v1402
        %v1404 = vpop.f32.mrf.mxu0
        %v1405 = vadd.f32 %v1316, %v1404
        %1406 = vmatmul.bf16.gmra.mxu0 %v1240
        %v1407 = vpop.f32.mrf.mxu0
        %v1408 = vadd.f32 %v1319, %v1407
        %v1409 = vpop.f32.mrf.mxu0
        %v1410 = vadd.f32 %v1321, %v1409
        %1411 = vmatmul.bf16.gmra.mxu0 %v1243
        %v1412 = vpop.f32.mrf.mxu0
        %v1413 = vadd.f32 %v1324, %v1412
        %v1414 = vpop.f32.mrf.mxu0
        %v1415 = vadd.f32 %v1326, %v1414
        %1416 = vmatmul.bf16.gmra.mxu0 %v1246
        %v1417 = vpop.f32.mrf.mxu0
        %v1418 = vadd.f32 %v1329, %v1417
        %v1419 = vpop.f32.mrf.mxu0
        %v1420 = vadd.f32 %v1331, %v1419
        %1421 = vmatmul.bf16.gmra.mxu0 %v1249
        %v1422 = vpop.f32.mrf.mxu0
        %v1423 = vadd.f32 %v1334, %v1422
        %v1424 = vpop.f32.mrf.mxu0
        %v1425 = vadd.f32 %v1336, %v1424
        %1426 = vmatmul.bf16.gmra.mxu0 %v1252
        %v1427 = vpop.f32.mrf.mxu0
        %v1428 = vadd.f32 %v1339, %v1427
        %v1429 = vpop.f32.mrf.mxu0
        %v1430 = vadd.f32 %v1341, %v1429
        %1431 = vdwg.mxu0
        %1432 = vmatpush.bf16.msra.mxu0 %v1107
        %1433 = vmatpush.bf16.msra.mxu0 %v1098
        %1434 = vmatpush.bf16.msra.mxu0 %v1089
        %1435 = vmatpush.bf16.msra.mxu0 %v1080
        %1436 = vmatpush.bf16.msra.mxu0 %v1071
        %1437 = vmatpush.bf16.msra.mxu0 %v1062
        %1438 = vmatpush.bf16.msra.mxu0 %v1053
        %1439 = vmatpush.bf16.msra.mxu0 %v1044
        %1440 = vmatmul.bf16.gmra.mxu0 %v647
        %v1441 = vpop.f32.mrf.mxu0
        %v1442 = vadd.f32 %v774, %v1441
        %v1443 = vpop.f32.mrf.mxu0
        %v1444 = vadd.f32 %v774, %v1443
        %1445 = vmatmul.bf16.gmra.mxu0 %v649
        %v1446 = vpop.f32.mrf.mxu0
        %v1447 = vadd.f32 %v774, %v1446
        %v1448 = vpop.f32.mrf.mxu0
        %v1449 = vadd.f32 %v774, %v1448
        %1450 = vmatmul.bf16.gmra.mxu0 %v651
        %v1451 = vpop.f32.mrf.mxu0
        %v1452 = vadd.f32 %v774, %v1451
        %v1453 = vpop.f32.mrf.mxu0
        %v1454 = vadd.f32 %v774, %v1453
        %1455 = vmatmul.bf16.gmra.mxu0 %v653
        %v1456 = vpop.f32.mrf.mxu0
        %v1457 = vadd.f32 %v774, %v1456
        %v1458 = vpop.f32.mrf.mxu0
        %v1459 = vadd.f32 %v774, %v1458
        %1460 = vmatmul.bf16.gmra.mxu0 %v655
        %v1461 = vpop.f32.mrf.mxu0
        %v1462 = vadd.f32 %v774, %v1461
        %v1463 = vpop.f32.mrf.mxu0
        %v1464 = vadd.f32 %v774, %v1463
        %1465 = vmatmul.bf16.gmra.mxu0 %v657
        %v1466 = vpop.f32.mrf.mxu0
        %v1467 = vadd.f32 %v774, %v1466
        %v1468 = vpop.f32.mrf.mxu0
        %v1469 = vadd.f32 %v774, %v1468
        %1470 = vmatmul.bf16.gmra.mxu0 %v659
        %v1471 = vpop.f32.mrf.mxu0
        %v1472 = vadd.f32 %v774, %v1471
        %v1473 = vpop.f32.mrf.mxu0
        %v1474 = vadd.f32 %v774, %v1473
        %1475 = vmatmul.bf16.gmra.mxu0 %v661
        %v1476 = vpop.f32.mrf.mxu0
        %v1477 = vadd.f32 %v774, %v1476
        %v1478 = vpop.f32.mrf.mxu0
        %v1479 = vadd.f32 %v774, %v1478
        %1480 = vmatmul.bf16.gmra.mxu0 %v663
        %v1481 = vpop.f32.mrf.mxu0
        %v1482 = vadd.f32 %v774, %v1481
        %v1483 = vpop.f32.mrf.mxu0
        %v1484 = vadd.f32 %v774, %v1483
        %1485 = vmatmul.bf16.gmra.mxu0 %v665
        %v1486 = vpop.f32.mrf.mxu0
        %v1487 = vadd.f32 %v774, %v1486
        %v1488 = vpop.f32.mrf.mxu0
        %v1489 = vadd.f32 %v774, %v1488
        %1490 = vmatmul.bf16.gmra.mxu0 %v667
        %v1491 = vpop.f32.mrf.mxu0
        %v1492 = vadd.f32 %v774, %v1491
        %v1493 = vpop.f32.mrf.mxu0
        %v1494 = vadd.f32 %v774, %v1493
        %1495 = vmatmul.bf16.gmra.mxu0 %v669
        %v1496 = vpop.f32.mrf.mxu0
        %v1497 = vadd.f32 %v774, %v1496
        %v1498 = vpop.f32.mrf.mxu0
        %v1499 = vadd.f32 %v774, %v1498
        %1500 = vmatmul.bf16.gmra.mxu0 %v671
        %v1501 = vpop.f32.mrf.mxu0
        %v1502 = vadd.f32 %v774, %v1501
        %v1503 = vpop.f32.mrf.mxu0
        %v1504 = vadd.f32 %v774, %v1503
        %1505 = vmatmul.bf16.gmra.mxu0 %v673
        %v1506 = vpop.f32.mrf.mxu0
        %v1507 = vadd.f32 %v774, %v1506
        %v1508 = vpop.f32.mrf.mxu0
        %v1509 = vadd.f32 %v774, %v1508
        %1510 = vmatmul.bf16.gmra.mxu0 %v675
        %v1511 = vpop.f32.mrf.mxu0
        %v1512 = vadd.f32 %v774, %v1511
        %v1513 = vpop.f32.mrf.mxu0
        %v1514 = vadd.f32 %v774, %v1513
        %1515 = vmatmul.bf16.gmra.mxu0 %v677
        %v1516 = vpop.f32.mrf.mxu0
        %v1517 = vadd.f32 %v774, %v1516
        %v1518 = vpop.f32.mrf.mxu0
        %v1519 = vadd.f32 %v774, %v1518
        %1520 = vdwg.mxu0
        %1521 = vmatpush.bf16.msra.mxu0 0
        %1522 = vmatpush.bf16.msra.mxu0 0
        %1523 = vmatpush.bf16.msra.mxu0 0
        %1524 = vmatpush.bf16.msra.mxu0 0
        %1525 = vmatpush.bf16.msra.mxu0 0
        %1526 = vmatpush.bf16.msra.mxu0 0
        %1527 = vmatpush.bf16.msra.mxu0 0
        %1528 = vmatpush.bf16.msra.mxu0 %v1116
        %1529 = vmatmul.bf16.gmra.mxu0 %v1207
        %v1530 = vpop.f32.mrf.mxu0
        %v1531 = vadd.f32 %v1442, %v1530
        %v1532 = vpop.f32.mrf.mxu0
        %v1533 = vadd.f32 %v1444, %v1532
        %1534 = vmatmul.bf16.gmra.mxu0 %v1210
        %v1535 = vpop.f32.mrf.mxu0
        %v1536 = vadd.f32 %v1447, %v1535
        %v1537 = vpop.f32.mrf.mxu0
        %v1538 = vadd.f32 %v1449, %v1537
        %1539 = vmatmul.bf16.gmra.mxu0 %v1213
        %v1540 = vpop.f32.mrf.mxu0
        %v1541 = vadd.f32 %v1452, %v1540
        %v1542 = vpop.f32.mrf.mxu0
        %v1543 = vadd.f32 %v1454, %v1542
        %1544 = vmatmul.bf16.gmra.mxu0 %v1216
        %v1545 = vpop.f32.mrf.mxu0
        %v1546 = vadd.f32 %v1457, %v1545
        %v1547 = vpop.f32.mrf.mxu0
        %v1548 = vadd.f32 %v1459, %v1547
        %1549 = vmatmul.bf16.gmra.mxu0 %v1219
        %v1550 = vpop.f32.mrf.mxu0
        %v1551 = vadd.f32 %v1462, %v1550
        %v1552 = vpop.f32.mrf.mxu0
        %v1553 = vadd.f32 %v1464, %v1552
        %1554 = vmatmul.bf16.gmra.mxu0 %v1222
        %v1555 = vpop.f32.mrf.mxu0
        %v1556 = vadd.f32 %v1467, %v1555
        %v1557 = vpop.f32.mrf.mxu0
        %v1558 = vadd.f32 %v1469, %v1557
        %1559 = vmatmul.bf16.gmra.mxu0 %v1225
        %v1560 = vpop.f32.mrf.mxu0
        %v1561 = vadd.f32 %v1472, %v1560
        %v1562 = vpop.f32.mrf.mxu0
        %v1563 = vadd.f32 %v1474, %v1562
        %1564 = vmatmul.bf16.gmra.mxu0 %v1228
        %v1565 = vpop.f32.mrf.mxu0
        %v1566 = vadd.f32 %v1477, %v1565
        %v1567 = vpop.f32.mrf.mxu0
        %v1568 = vadd.f32 %v1479, %v1567
        %1569 = vmatmul.bf16.gmra.mxu0 %v1231
        %v1570 = vpop.f32.mrf.mxu0
        %v1571 = vadd.f32 %v1482, %v1570
        %v1572 = vpop.f32.mrf.mxu0
        %v1573 = vadd.f32 %v1484, %v1572
        %1574 = vmatmul.bf16.gmra.mxu0 %v1234
        %v1575 = vpop.f32.mrf.mxu0
        %v1576 = vadd.f32 %v1487, %v1575
        %v1577 = vpop.f32.mrf.mxu0
        %v1578 = vadd.f32 %v1489, %v1577
        %1579 = vmatmul.bf16.gmra.mxu0 %v1237
        %v1580 = vpop.f32.mrf.mxu0
        %v1581 = vadd.f32 %v1492, %v1580
        %v1582 = vpop.f32.mrf.mxu0
        %v1583 = vadd.f32 %v1494, %v1582
        %1584 = vmatmul.bf16.gmra.mxu0 %v1240
        %v1585 = vpop.f32.mrf.mxu0
        %v1586 = vadd.f32 %v1497, %v1585
        %v1587 = vpop.f32.mrf.mxu0
        %v1588 = vadd.f32 %v1499, %v1587
        %1589 = vmatmul.bf16.gmra.mxu0 %v1243
        %v1590 = vpop.f32.mrf.mxu0
        %v1591 = vadd.f32 %v1502, %v1590
        %v1592 = vpop.f32.mrf.mxu0
        %v1593 = vadd.f32 %v1504, %v1592
        %1594 = vmatmul.bf16.gmra.mxu0 %v1246
        %v1595 = vpop.f32.mrf.mxu0
        %v1596 = vadd.f32 %v1507, %v1595
        %v1597 = vpop.f32.mrf.mxu0
        %v1598 = vadd.f32 %v1509, %v1597
        %1599 = vmatmul.bf16.gmra.mxu0 %v1249
        %v1600 = vpop.f32.mrf.mxu0
        %v1601 = vadd.f32 %v1512, %v1600
        %v1602 = vpop.f32.mrf.mxu0
        %v1603 = vadd.f32 %v1514, %v1602
        %1604 = vmatmul.bf16.gmra.mxu0 %v1252
        %v1605 = vpop.f32.mrf.mxu0
        %v1606 = vadd.f32 %v1517, %v1605
        %v1607 = vpop.f32.mrf.mxu0
        %v1608 = vadd.f32 %v1519, %v1607
        %1609 = vdwg.mxu0
        %1610 = vmatpush.bf16.msra.mxu0 %v1108
        %1611 = vmatpush.bf16.msra.mxu0 %v1099
        %1612 = vmatpush.bf16.msra.mxu0 %v1090
        %1613 = vmatpush.bf16.msra.mxu0 %v1081
        %1614 = vmatpush.bf16.msra.mxu0 %v1072
        %1615 = vmatpush.bf16.msra.mxu0 %v1063
        %1616 = vmatpush.bf16.msra.mxu0 %v1054
        %1617 = vmatpush.bf16.msra.mxu0 %v1045
        %1618 = vmatmul.bf16.gmra.mxu0 %v647
        %v1619 = vpop.f32.mrf.mxu0
        %v1620 = vadd.f32 %v775, %v1619
        %v1621 = vpop.f32.mrf.mxu0
        %v1622 = vadd.f32 %v775, %v1621
        %1623 = vmatmul.bf16.gmra.mxu0 %v649
        %v1624 = vpop.f32.mrf.mxu0
        %v1625 = vadd.f32 %v775, %v1624
        %v1626 = vpop.f32.mrf.mxu0
        %v1627 = vadd.f32 %v775, %v1626
        %1628 = vmatmul.bf16.gmra.mxu0 %v651
        %v1629 = vpop.f32.mrf.mxu0
        %v1630 = vadd.f32 %v775, %v1629
        %v1631 = vpop.f32.mrf.mxu0
        %v1632 = vadd.f32 %v775, %v1631
        %1633 = vmatmul.bf16.gmra.mxu0 %v653
        %v1634 = vpop.f32.mrf.mxu0
        %v1635 = vadd.f32 %v775, %v1634
        %v1636 = vpop.f32.mrf.mxu0
        %v1637 = vadd.f32 %v775, %v1636
        %1638 = vmatmul.bf16.gmra.mxu0 %v655
        %v1639 = vpop.f32.mrf.mxu0
        %v1640 = vadd.f32 %v775, %v1639
        %v1641 = vpop.f32.mrf.mxu0
        %v1642 = vadd.f32 %v775, %v1641
        %1643 = vmatmul.bf16.gmra.mxu0 %v657
        %v1644 = vpop.f32.mrf.mxu0
        %v1645 = vadd.f32 %v775, %v1644
        %v1646 = vpop.f32.mrf.mxu0
        %v1647 = vadd.f32 %v775, %v1646
        %1648 = vmatmul.bf16.gmra.mxu0 %v659
        %v1649 = vpop.f32.mrf.mxu0
        %v1650 = vadd.f32 %v775, %v1649
        %v1651 = vpop.f32.mrf.mxu0
        %v1652 = vadd.f32 %v775, %v1651
        %1653 = vmatmul.bf16.gmra.mxu0 %v661
        %v1654 = vpop.f32.mrf.mxu0
        %v1655 = vadd.f32 %v775, %v1654
        %v1656 = vpop.f32.mrf.mxu0
        %v1657 = vadd.f32 %v775, %v1656
        %1658 = vmatmul.bf16.gmra.mxu0 %v663
        %v1659 = vpop.f32.mrf.mxu0
        %v1660 = vadd.f32 %v775, %v1659
        %v1661 = vpop.f32.mrf.mxu0
        %v1662 = vadd.f32 %v775, %v1661
        %1663 = vmatmul.bf16.gmra.mxu0 %v665
        %v1664 = vpop.f32.mrf.mxu0
        %v1665 = vadd.f32 %v775, %v1664
        %v1666 = vpop.f32.mrf.mxu0
        %v1667 = vadd.f32 %v775, %v1666
        %1668 = vmatmul.bf16.gmra.mxu0 %v667
        %v1669 = vpop.f32.mrf.mxu0
        %v1670 = vadd.f32 %v775, %v1669
        %v1671 = vpop.f32.mrf.mxu0
        %v1672 = vadd.f32 %v775, %v1671
        %1673 = vmatmul.bf16.gmra.mxu0 %v669
        %v1674 = vpop.f32.mrf.mxu0
        %v1675 = vadd.f32 %v775, %v1674
        %v1676 = vpop.f32.mrf.mxu0
        %v1677 = vadd.f32 %v775, %v1676
        %1678 = vmatmul.bf16.gmra.mxu0 %v671
        %v1679 = vpop.f32.mrf.mxu0
        %v1680 = vadd.f32 %v775, %v1679
        %v1681 = vpop.f32.mrf.mxu0
        %v1682 = vadd.f32 %v775, %v1681
        %1683 = vmatmul.bf16.gmra.mxu0 %v673
        %v1684 = vpop.f32.mrf.mxu0
        %v1685 = vadd.f32 %v775, %v1684
        %v1686 = vpop.f32.mrf.mxu0
        %v1687 = vadd.f32 %v775, %v1686
        %1688 = vmatmul.bf16.gmra.mxu0 %v675
        %v1689 = vpop.f32.mrf.mxu0
        %v1690 = vadd.f32 %v775, %v1689
        %v1691 = vpop.f32.mrf.mxu0
        %v1692 = vadd.f32 %v775, %v1691
        %1693 = vmatmul.bf16.gmra.mxu0 %v677
        %v1694 = vpop.f32.mrf.mxu0
        %v1695 = vadd.f32 %v775, %v1694
        %v1696 = vpop.f32.mrf.mxu0
        %v1697 = vadd.f32 %v775, %v1696
        %1698 = vdwg.mxu0
        %1699 = vmatpush.bf16.msra.mxu0 0
        %1700 = vmatpush.bf16.msra.mxu0 0
        %1701 = vmatpush.bf16.msra.mxu0 0
        %1702 = vmatpush.bf16.msra.mxu0 0
        %1703 = vmatpush.bf16.msra.mxu0 0
        %1704 = vmatpush.bf16.msra.mxu0 0
        %1705 = vmatpush.bf16.msra.mxu0 0
        %1706 = vmatpush.bf16.msra.mxu0 %v1117
        %1707 = vmatmul.bf16.gmra.mxu0 %v1207
        %v1708 = vpop.f32.mrf.mxu0
        %v1709 = vadd.f32 %v1620, %v1708
        %v1710 = vpop.f32.mrf.mxu0
        %v1711 = vadd.f32 %v1622, %v1710
        %1712 = vmatmul.bf16.gmra.mxu0 %v1210
        %v1713 = vpop.f32.mrf.mxu0
        %v1714 = vadd.f32 %v1625, %v1713
        %v1715 = vpop.f32.mrf.mxu0
        %v1716 = vadd.f32 %v1627, %v1715
        %1717 = vmatmul.bf16.gmra.mxu0 %v1213
        %v1718 = vpop.f32.mrf.mxu0
        %v1719 = vadd.f32 %v1630, %v1718
        %v1720 = vpop.f32.mrf.mxu0
        %v1721 = vadd.f32 %v1632, %v1720
        %1722 = vmatmul.bf16.gmra.mxu0 %v1216
        %v1723 = vpop.f32.mrf.mxu0
        %v1724 = vadd.f32 %v1635, %v1723
        %v1725 = vpop.f32.mrf.mxu0
        %v1726 = vadd.f32 %v1637, %v1725
        %1727 = vmatmul.bf16.gmra.mxu0 %v1219
        %v1728 = vpop.f32.mrf.mxu0
        %v1729 = vadd.f32 %v1640, %v1728
        %v1730 = vpop.f32.mrf.mxu0
        %v1731 = vadd.f32 %v1642, %v1730
        %1732 = vmatmul.bf16.gmra.mxu0 %v1222
        %v1733 = vpop.f32.mrf.mxu0
        %v1734 = vadd.f32 %v1645, %v1733
        %v1735 = vpop.f32.mrf.mxu0
        %v1736 = vadd.f32 %v1647, %v1735
        %1737 = vmatmul.bf16.gmra.mxu0 %v1225
        %v1738 = vpop.f32.mrf.mxu0
        %v1739 = vadd.f32 %v1650, %v1738
        %v1740 = vpop.f32.mrf.mxu0
        %v1741 = vadd.f32 %v1652, %v1740
        %1742 = vmatmul.bf16.gmra.mxu0 %v1228
        %v1743 = vpop.f32.mrf.mxu0
        %v1744 = vadd.f32 %v1655, %v1743
        %v1745 = vpop.f32.mrf.mxu0
        %v1746 = vadd.f32 %v1657, %v1745
        %1747 = vmatmul.bf16.gmra.mxu0 %v1231
        %v1748 = vpop.f32.mrf.mxu0
        %v1749 = vadd.f32 %v1660, %v1748
        %v1750 = vpop.f32.mrf.mxu0
        %v1751 = vadd.f32 %v1662, %v1750
        %1752 = vmatmul.bf16.gmra.mxu0 %v1234
        %v1753 = vpop.f32.mrf.mxu0
        %v1754 = vadd.f32 %v1665, %v1753
        %v1755 = vpop.f32.mrf.mxu0
        %v1756 = vadd.f32 %v1667, %v1755
        %1757 = vmatmul.bf16.gmra.mxu0 %v1237
        %v1758 = vpop.f32.mrf.mxu0
        %v1759 = vadd.f32 %v1670, %v1758
        %v1760 = vpop.f32.mrf.mxu0
        %v1761 = vadd.f32 %v1672, %v1760
        %1762 = vmatmul.bf16.gmra.mxu0 %v1240
        %v1763 = vpop.f32.mrf.mxu0
        %v1764 = vadd.f32 %v1675, %v1763
        %v1765 = vpop.f32.mrf.mxu0
        %v1766 = vadd.f32 %v1677, %v1765
        %1767 = vmatmul.bf16.gmra.mxu0 %v1243
        %v1768 = vpop.f32.mrf.mxu0
        %v1769 = vadd.f32 %v1680, %v1768
        %v1770 = vpop.f32.mrf.mxu0
        %v1771 = vadd.f32 %v1682, %v1770
        %1772 = vmatmul.bf16.gmra.mxu0 %v1246
        %v1773 = vpop.f32.mrf.mxu0
        %v1774 = vadd.f32 %v1685, %v1773
        %v1775 = vpop.f32.mrf.mxu0
        %v1776 = vadd.f32 %v1687, %v1775
        %1777 = vmatmul.bf16.gmra.mxu0 %v1249
        %v1778 = vpop.f32.mrf.mxu0
        %v1779 = vadd.f32 %v1690, %v1778
        %v1780 = vpop.f32.mrf.mxu0
        %v1781 = vadd.f32 %v1692, %v1780
        %1782 = vmatmul.bf16.gmra.mxu0 %v1252
        %v1783 = vpop.f32.mrf.mxu0
        %v1784 = vadd.f32 %v1695, %v1783
        %v1785 = vpop.f32.mrf.mxu0
        %v1786 = vadd.f32 %v1697, %v1785
        %1787 = vdwg.mxu0
        %1788 = vmatpush.bf16.msra.mxu0 %v1109
        %1789 = vmatpush.bf16.msra.mxu0 %v1100
        %1790 = vmatpush.bf16.msra.mxu0 %v1091
        %1791 = vmatpush.bf16.msra.mxu0 %v1082
        %1792 = vmatpush.bf16.msra.mxu0 %v1073
        %1793 = vmatpush.bf16.msra.mxu0 %v1064
        %1794 = vmatpush.bf16.msra.mxu0 %v1055
        %1795 = vmatpush.bf16.msra.mxu0 %v1046
        %1796 = vmatmul.bf16.gmra.mxu0 %v647
        %v1797 = vpop.f32.mrf.mxu0
        %v1798 = vadd.f32 %v776, %v1797
        %v1799 = vpop.f32.mrf.mxu0
        %v1800 = vadd.f32 %v776, %v1799
        %1801 = vmatmul.bf16.gmra.mxu0 %v649
        %v1802 = vpop.f32.mrf.mxu0
        %v1803 = vadd.f32 %v776, %v1802
        %v1804 = vpop.f32.mrf.mxu0
        %v1805 = vadd.f32 %v776, %v1804
        %1806 = vmatmul.bf16.gmra.mxu0 %v651
        %v1807 = vpop.f32.mrf.mxu0
        %v1808 = vadd.f32 %v776, %v1807
        %v1809 = vpop.f32.mrf.mxu0
        %v1810 = vadd.f32 %v776, %v1809
        %1811 = vmatmul.bf16.gmra.mxu0 %v653
        %v1812 = vpop.f32.mrf.mxu0
        %v1813 = vadd.f32 %v776, %v1812
        %v1814 = vpop.f32.mrf.mxu0
        %v1815 = vadd.f32 %v776, %v1814
        %1816 = vmatmul.bf16.gmra.mxu0 %v655
        %v1817 = vpop.f32.mrf.mxu0
        %v1818 = vadd.f32 %v776, %v1817
        %v1819 = vpop.f32.mrf.mxu0
        %v1820 = vadd.f32 %v776, %v1819
        %1821 = vmatmul.bf16.gmra.mxu0 %v657
        %v1822 = vpop.f32.mrf.mxu0
        %v1823 = vadd.f32 %v776, %v1822
        %v1824 = vpop.f32.mrf.mxu0
        %v1825 = vadd.f32 %v776, %v1824
        %1826 = vmatmul.bf16.gmra.mxu0 %v659
        %v1827 = vpop.f32.mrf.mxu0
        %v1828 = vadd.f32 %v776, %v1827
        %v1829 = vpop.f32.mrf.mxu0
        %v1830 = vadd.f32 %v776, %v1829
        %1831 = vmatmul.bf16.gmra.mxu0 %v661
        %v1832 = vpop.f32.mrf.mxu0
        %v1833 = vadd.f32 %v776, %v1832
        %v1834 = vpop.f32.mrf.mxu0
        %v1835 = vadd.f32 %v776, %v1834
        %1836 = vmatmul.bf16.gmra.mxu0 %v663
        %v1837 = vpop.f32.mrf.mxu0
        %v1838 = vadd.f32 %v776, %v1837
        %v1839 = vpop.f32.mrf.mxu0
        %v1840 = vadd.f32 %v776, %v1839
        %1841 = vmatmul.bf16.gmra.mxu0 %v665
        %v1842 = vpop.f32.mrf.mxu0
        %v1843 = vadd.f32 %v776, %v1842
        %v1844 = vpop.f32.mrf.mxu0
        %v1845 = vadd.f32 %v776, %v1844
        %1846 = vmatmul.bf16.gmra.mxu0 %v667
        %v1847 = vpop.f32.mrf.mxu0
        %v1848 = vadd.f32 %v776, %v1847
        %v1849 = vpop.f32.mrf.mxu0
        %v1850 = vadd.f32 %v776, %v1849
        %1851 = vmatmul.bf16.gmra.mxu0 %v669
        %v1852 = vpop.f32.mrf.mxu0
        %v1853 = vadd.f32 %v776, %v1852
        %v1854 = vpop.f32.mrf.mxu0
        %v1855 = vadd.f32 %v776, %v1854
        %1856 = vmatmul.bf16.gmra.mxu0 %v671
        %v1857 = vpop.f32.mrf.mxu0
        %v1858 = vadd.f32 %v776, %v1857
        %v1859 = vpop.f32.mrf.mxu0
        %v1860 = vadd.f32 %v776, %v1859
        %1861 = vmatmul.bf16.gmra.mxu0 %v673
        %v1862 = vpop.f32.mrf.mxu0
        %v1863 = vadd.f32 %v776, %v1862
        %v1864 = vpop.f32.mrf.mxu0
        %v1865 = vadd.f32 %v776, %v1864
        %1866 = vmatmul.bf16.gmra.mxu0 %v675
        %v1867 = vpop.f32.mrf.mxu0
        %v1868 = vadd.f32 %v776, %v1867
        %v1869 = vpop.f32.mrf.mxu0
        %v1870 = vadd.f32 %v776, %v1869
        %1871 = vmatmul.bf16.gmra.mxu0 %v677
        %v1872 = vpop.f32.mrf.mxu0
        %v1873 = vadd.f32 %v776, %v1872
        %v1874 = vpop.f32.mrf.mxu0
        %v1875 = vadd.f32 %v776, %v1874
        %1876 = vdwg.mxu0
        %1877 = vmatpush.bf16.msra.mxu0 0
        %1878 = vmatpush.bf16.msra.mxu0 0
        %1879 = vmatpush.bf16.msra.mxu0 0
        %1880 = vmatpush.bf16.msra.mxu0 0
        %1881 = vmatpush.bf16.msra.mxu0 0
        %1882 = vmatpush.bf16.msra.mxu0 0
        %1883 = vmatpush.bf16.msra.mxu0 0
        %1884 = vmatpush.bf16.msra.mxu0 %v1118
        %1885 = vmatmul.bf16.gmra.mxu0 %v1207
        %v1886 = vpop.f32.mrf.mxu0
        %v1887 = vadd.f32 %v1798, %v1886
        %v1888 = vpop.f32.mrf.mxu0
        %v1889 = vadd.f32 %v1800, %v1888
        %1890 = vmatmul.bf16.gmra.mxu0 %v1210
        %v1891 = vpop.f32.mrf.mxu0
        %v1892 = vadd.f32 %v1803, %v1891
        %v1893 = vpop.f32.mrf.mxu0
        %v1894 = vadd.f32 %v1805, %v1893
        %1895 = vmatmul.bf16.gmra.mxu0 %v1213
        %v1896 = vpop.f32.mrf.mxu0
        %v1897 = vadd.f32 %v1808, %v1896
        %v1898 = vpop.f32.mrf.mxu0
        %v1899 = vadd.f32 %v1810, %v1898
        %1900 = vmatmul.bf16.gmra.mxu0 %v1216
        %v1901 = vpop.f32.mrf.mxu0
        %v1902 = vadd.f32 %v1813, %v1901
        %v1903 = vpop.f32.mrf.mxu0
        %v1904 = vadd.f32 %v1815, %v1903
        %1905 = vmatmul.bf16.gmra.mxu0 %v1219
        %v1906 = vpop.f32.mrf.mxu0
        %v1907 = vadd.f32 %v1818, %v1906
        %v1908 = vpop.f32.mrf.mxu0
        %v1909 = vadd.f32 %v1820, %v1908
        %1910 = vmatmul.bf16.gmra.mxu0 %v1222
        %v1911 = vpop.f32.mrf.mxu0
        %v1912 = vadd.f32 %v1823, %v1911
        %v1913 = vpop.f32.mrf.mxu0
        %v1914 = vadd.f32 %v1825, %v1913
        %1915 = vmatmul.bf16.gmra.mxu0 %v1225
        %v1916 = vpop.f32.mrf.mxu0
        %v1917 = vadd.f32 %v1828, %v1916
        %v1918 = vpop.f32.mrf.mxu0
        %v1919 = vadd.f32 %v1830, %v1918
        %1920 = vmatmul.bf16.gmra.mxu0 %v1228
        %v1921 = vpop.f32.mrf.mxu0
        %v1922 = vadd.f32 %v1833, %v1921
        %v1923 = vpop.f32.mrf.mxu0
        %v1924 = vadd.f32 %v1835, %v1923
        %1925 = vmatmul.bf16.gmra.mxu0 %v1231
        %v1926 = vpop.f32.mrf.mxu0
        %v1927 = vadd.f32 %v1838, %v1926
        %v1928 = vpop.f32.mrf.mxu0
        %v1929 = vadd.f32 %v1840, %v1928
        %1930 = vmatmul.bf16.gmra.mxu0 %v1234
        %v1931 = vpop.f32.mrf.mxu0
        %v1932 = vadd.f32 %v1843, %v1931
        %v1933 = vpop.f32.mrf.mxu0
        %v1934 = vadd.f32 %v1845, %v1933
        %1935 = vmatmul.bf16.gmra.mxu0 %v1237
        %v1936 = vpop.f32.mrf.mxu0
        %v1937 = vadd.f32 %v1848, %v1936
        %v1938 = vpop.f32.mrf.mxu0
        %v1939 = vadd.f32 %v1850, %v1938
        %1940 = vmatmul.bf16.gmra.mxu0 %v1240
        %v1941 = vpop.f32.mrf.mxu0
        %v1942 = vadd.f32 %v1853, %v1941
        %v1943 = vpop.f32.mrf.mxu0
        %v1944 = vadd.f32 %v1855, %v1943
        %1945 = vmatmul.bf16.gmra.mxu0 %v1243
        %v1946 = vpop.f32.mrf.mxu0
        %v1947 = vadd.f32 %v1858, %v1946
        %v1948 = vpop.f32.mrf.mxu0
        %v1949 = vadd.f32 %v1860, %v1948
        %1950 = vmatmul.bf16.gmra.mxu0 %v1246
        %v1951 = vpop.f32.mrf.mxu0
        %v1952 = vadd.f32 %v1863, %v1951
        %v1953 = vpop.f32.mrf.mxu0
        %v1954 = vadd.f32 %v1865, %v1953
        %1955 = vmatmul.bf16.gmra.mxu0 %v1249
        %v1956 = vpop.f32.mrf.mxu0
        %v1957 = vadd.f32 %v1868, %v1956
        %v1958 = vpop.f32.mrf.mxu0
        %v1959 = vadd.f32 %v1870, %v1958
        %1960 = vmatmul.bf16.gmra.mxu0 %v1252
        %v1961 = vpop.f32.mrf.mxu0
        %v1962 = vadd.f32 %v1873, %v1961
        %v1963 = vpop.f32.mrf.mxu0
        %v1964 = vadd.f32 %v1875, %v1963
        %1965 = vdwg.mxu0
        %1966 = vmatpush.bf16.msra.mxu0 %v1110
        %1967 = vmatpush.bf16.msra.mxu0 %v1101
        %1968 = vmatpush.bf16.msra.mxu0 %v1092
        %1969 = vmatpush.bf16.msra.mxu0 %v1083
        %1970 = vmatpush.bf16.msra.mxu0 %v1074
        %1971 = vmatpush.bf16.msra.mxu0 %v1065
        %1972 = vmatpush.bf16.msra.mxu0 %v1056
        %1973 = vmatpush.bf16.msra.mxu0 %v1047
        %1974 = vmatmul.bf16.gmra.mxu0 %v647
        %v1975 = vpop.f32.mrf.mxu0
        %v1976 = vadd.f32 %v777, %v1975
        %v1977 = vpop.f32.mrf.mxu0
        %v1978 = vadd.f32 %v777, %v1977
        %1979 = vmatmul.bf16.gmra.mxu0 %v649
        %v1980 = vpop.f32.mrf.mxu0
        %v1981 = vadd.f32 %v777, %v1980
        %v1982 = vpop.f32.mrf.mxu0
        %v1983 = vadd.f32 %v777, %v1982
        %1984 = vmatmul.bf16.gmra.mxu0 %v651
        %v1985 = vpop.f32.mrf.mxu0
        %v1986 = vadd.f32 %v777, %v1985
        %v1987 = vpop.f32.mrf.mxu0
        %v1988 = vadd.f32 %v777, %v1987
        %1989 = vmatmul.bf16.gmra.mxu0 %v653
        %v1990 = vpop.f32.mrf.mxu0
        %v1991 = vadd.f32 %v777, %v1990
        %v1992 = vpop.f32.mrf.mxu0
        %v1993 = vadd.f32 %v777, %v1992
        %1994 = vmatmul.bf16.gmra.mxu0 %v655
        %v1995 = vpop.f32.mrf.mxu0
        %v1996 = vadd.f32 %v777, %v1995
        %v1997 = vpop.f32.mrf.mxu0
        %v1998 = vadd.f32 %v777, %v1997
        %1999 = vmatmul.bf16.gmra.mxu0 %v657
        %v2000 = vpop.f32.mrf.mxu0
        %v2001 = vadd.f32 %v777, %v2000
        %v2002 = vpop.f32.mrf.mxu0
        %v2003 = vadd.f32 %v777, %v2002
        %2004 = vmatmul.bf16.gmra.mxu0 %v659
        %v2005 = vpop.f32.mrf.mxu0
        %v2006 = vadd.f32 %v777, %v2005
        %v2007 = vpop.f32.mrf.mxu0
        %v2008 = vadd.f32 %v777, %v2007
        %2009 = vmatmul.bf16.gmra.mxu0 %v661
        %v2010 = vpop.f32.mrf.mxu0
        %v2011 = vadd.f32 %v777, %v2010
        %v2012 = vpop.f32.mrf.mxu0
        %v2013 = vadd.f32 %v777, %v2012
        %2014 = vmatmul.bf16.gmra.mxu0 %v663
        %v2015 = vpop.f32.mrf.mxu0
        %v2016 = vadd.f32 %v777, %v2015
        %v2017 = vpop.f32.mrf.mxu0
        %v2018 = vadd.f32 %v777, %v2017
        %2019 = vmatmul.bf16.gmra.mxu0 %v665
        %v2020 = vpop.f32.mrf.mxu0
        %v2021 = vadd.f32 %v777, %v2020
        %v2022 = vpop.f32.mrf.mxu0
        %v2023 = vadd.f32 %v777, %v2022
        %2024 = vmatmul.bf16.gmra.mxu0 %v667
        %v2025 = vpop.f32.mrf.mxu0
        %v2026 = vadd.f32 %v777, %v2025
        %v2027 = vpop.f32.mrf.mxu0
        %v2028 = vadd.f32 %v777, %v2027
        %2029 = vmatmul.bf16.gmra.mxu0 %v669
        %v2030 = vpop.f32.mrf.mxu0
        %v2031 = vadd.f32 %v777, %v2030
        %v2032 = vpop.f32.mrf.mxu0
        %v2033 = vadd.f32 %v777, %v2032
        %2034 = vmatmul.bf16.gmra.mxu0 %v671
        %v2035 = vpop.f32.mrf.mxu0
        %v2036 = vadd.f32 %v777, %v2035
        %v2037 = vpop.f32.mrf.mxu0
        %v2038 = vadd.f32 %v777, %v2037
        %2039 = vmatmul.bf16.gmra.mxu0 %v673
        %v2040 = vpop.f32.mrf.mxu0
        %v2041 = vadd.f32 %v777, %v2040
        %v2042 = vpop.f32.mrf.mxu0
        %v2043 = vadd.f32 %v777, %v2042
        %2044 = vmatmul.bf16.gmra.mxu0 %v675
        %v2045 = vpop.f32.mrf.mxu0
        %v2046 = vadd.f32 %v777, %v2045
        %v2047 = vpop.f32.mrf.mxu0
        %v2048 = vadd.f32 %v777, %v2047
        %2049 = vmatmul.bf16.gmra.mxu0 %v677
        %v2050 = vpop.f32.mrf.mxu0
        %v2051 = vadd.f32 %v777, %v2050
        %v2052 = vpop.f32.mrf.mxu0
        %v2053 = vadd.f32 %v777, %v2052
        %2054 = vdwg.mxu0
        %2055 = vmatpush.bf16.msra.mxu0 0
        %2056 = vmatpush.bf16.msra.mxu0 0
        %2057 = vmatpush.bf16.msra.mxu0 0
        %2058 = vmatpush.bf16.msra.mxu0 0
        %2059 = vmatpush.bf16.msra.mxu0 0
        %2060 = vmatpush.bf16.msra.mxu0 0
        %2061 = vmatpush.bf16.msra.mxu0 0
        %2062 = vmatpush.bf16.msra.mxu0 %v1119
        %2063 = vmatmul.bf16.gmra.mxu0 %v1207
        %v2064 = vpop.f32.mrf.mxu0
        %v2065 = vadd.f32 %v1976, %v2064
        %v2066 = vpop.f32.mrf.mxu0
        %v2067 = vadd.f32 %v1978, %v2066
        %2068 = vmatmul.bf16.gmra.mxu0 %v1210
        %v2069 = vpop.f32.mrf.mxu0
        %v2070 = vadd.f32 %v1981, %v2069
        %v2071 = vpop.f32.mrf.mxu0
        %v2072 = vadd.f32 %v1983, %v2071
        %2073 = vmatmul.bf16.gmra.mxu0 %v1213
        %v2074 = vpop.f32.mrf.mxu0
        %v2075 = vadd.f32 %v1986, %v2074
        %v2076 = vpop.f32.mrf.mxu0
        %v2077 = vadd.f32 %v1988, %v2076
        %2078 = vmatmul.bf16.gmra.mxu0 %v1216
        %v2079 = vpop.f32.mrf.mxu0
        %v2080 = vadd.f32 %v1991, %v2079
        %v2081 = vpop.f32.mrf.mxu0
        %v2082 = vadd.f32 %v1993, %v2081
        %2083 = vmatmul.bf16.gmra.mxu0 %v1219
        %v2084 = vpop.f32.mrf.mxu0
        %v2085 = vadd.f32 %v1996, %v2084
        %v2086 = vpop.f32.mrf.mxu0
        %v2087 = vadd.f32 %v1998, %v2086
        %2088 = vmatmul.bf16.gmra.mxu0 %v1222
        %v2089 = vpop.f32.mrf.mxu0
        %v2090 = vadd.f32 %v2001, %v2089
        %v2091 = vpop.f32.mrf.mxu0
        %v2092 = vadd.f32 %v2003, %v2091
        %2093 = vmatmul.bf16.gmra.mxu0 %v1225
        %v2094 = vpop.f32.mrf.mxu0
        %v2095 = vadd.f32 %v2006, %v2094
        %v2096 = vpop.f32.mrf.mxu0
        %v2097 = vadd.f32 %v2008, %v2096
        %2098 = vmatmul.bf16.gmra.mxu0 %v1228
        %v2099 = vpop.f32.mrf.mxu0
        %v2100 = vadd.f32 %v2011, %v2099
        %v2101 = vpop.f32.mrf.mxu0
        %v2102 = vadd.f32 %v2013, %v2101
        %2103 = vmatmul.bf16.gmra.mxu0 %v1231
        %v2104 = vpop.f32.mrf.mxu0
        %v2105 = vadd.f32 %v2016, %v2104
        %v2106 = vpop.f32.mrf.mxu0
        %v2107 = vadd.f32 %v2018, %v2106
        %2108 = vmatmul.bf16.gmra.mxu0 %v1234
        %v2109 = vpop.f32.mrf.mxu0
        %v2110 = vadd.f32 %v2021, %v2109
        %v2111 = vpop.f32.mrf.mxu0
        %v2112 = vadd.f32 %v2023, %v2111
        %2113 = vmatmul.bf16.gmra.mxu0 %v1237
        %v2114 = vpop.f32.mrf.mxu0
        %v2115 = vadd.f32 %v2026, %v2114
        %v2116 = vpop.f32.mrf.mxu0
        %v2117 = vadd.f32 %v2028, %v2116
        %2118 = vmatmul.bf16.gmra.mxu0 %v1240
        %v2119 = vpop.f32.mrf.mxu0
        %v2120 = vadd.f32 %v2031, %v2119
        %v2121 = vpop.f32.mrf.mxu0
        %v2122 = vadd.f32 %v2033, %v2121
        %2123 = vmatmul.bf16.gmra.mxu0 %v1243
        %v2124 = vpop.f32.mrf.mxu0
        %v2125 = vadd.f32 %v2036, %v2124
        %v2126 = vpop.f32.mrf.mxu0
        %v2127 = vadd.f32 %v2038, %v2126
        %2128 = vmatmul.bf16.gmra.mxu0 %v1246
        %v2129 = vpop.f32.mrf.mxu0
        %v2130 = vadd.f32 %v2041, %v2129
        %v2131 = vpop.f32.mrf.mxu0
        %v2132 = vadd.f32 %v2043, %v2131
        %2133 = vmatmul.bf16.gmra.mxu0 %v1249
        %v2134 = vpop.f32.mrf.mxu0
        %v2135 = vadd.f32 %v2046, %v2134
        %v2136 = vpop.f32.mrf.mxu0
        %v2137 = vadd.f32 %v2048, %v2136
        %2138 = vmatmul.bf16.gmra.mxu0 %v1252
        %v2139 = vpop.f32.mrf.mxu0
        %v2140 = vadd.f32 %v2051, %v2139
        %v2141 = vpop.f32.mrf.mxu0
        %v2142 = vadd.f32 %v2053, %v2141
        %2143 = vdwg.mxu0
        %2144 = vmatpush.bf16.msra.mxu0 %v1111
        %2145 = vmatpush.bf16.msra.mxu0 %v1102
        %2146 = vmatpush.bf16.msra.mxu0 %v1093
        %2147 = vmatpush.bf16.msra.mxu0 %v1084
        %2148 = vmatpush.bf16.msra.mxu0 %v1075
        %2149 = vmatpush.bf16.msra.mxu0 %v1066
        %2150 = vmatpush.bf16.msra.mxu0 %v1057
        %2151 = vmatpush.bf16.msra.mxu0 %v1048
        %2152 = vmatmul.bf16.gmra.mxu0 %v647
        %v2153 = vpop.f32.mrf.mxu0
        %v2154 = vadd.f32 %v778, %v2153
        %v2155 = vpop.f32.mrf.mxu0
        %v2156 = vadd.f32 %v778, %v2155
        %2157 = vmatmul.bf16.gmra.mxu0 %v649
        %v2158 = vpop.f32.mrf.mxu0
        %v2159 = vadd.f32 %v778, %v2158
        %v2160 = vpop.f32.mrf.mxu0
        %v2161 = vadd.f32 %v778, %v2160
        %2162 = vmatmul.bf16.gmra.mxu0 %v651
        %v2163 = vpop.f32.mrf.mxu0
        %v2164 = vadd.f32 %v778, %v2163
        %v2165 = vpop.f32.mrf.mxu0
        %v2166 = vadd.f32 %v778, %v2165
        %2167 = vmatmul.bf16.gmra.mxu0 %v653
        %v2168 = vpop.f32.mrf.mxu0
        %v2169 = vadd.f32 %v778, %v2168
        %v2170 = vpop.f32.mrf.mxu0
        %v2171 = vadd.f32 %v778, %v2170
        %2172 = vmatmul.bf16.gmra.mxu0 %v655
        %v2173 = vpop.f32.mrf.mxu0
        %v2174 = vadd.f32 %v778, %v2173
        %v2175 = vpop.f32.mrf.mxu0
        %v2176 = vadd.f32 %v778, %v2175
        %2177 = vmatmul.bf16.gmra.mxu0 %v657
        %v2178 = vpop.f32.mrf.mxu0
        %v2179 = vadd.f32 %v778, %v2178
        %v2180 = vpop.f32.mrf.mxu0
        %v2181 = vadd.f32 %v778, %v2180
        %2182 = vmatmul.bf16.gmra.mxu0 %v659
        %v2183 = vpop.f32.mrf.mxu0
        %v2184 = vadd.f32 %v778, %v2183
        %v2185 = vpop.f32.mrf.mxu0
        %v2186 = vadd.f32 %v778, %v2185
        %2187 = vmatmul.bf16.gmra.mxu0 %v661
        %v2188 = vpop.f32.mrf.mxu0
        %v2189 = vadd.f32 %v778, %v2188
        %v2190 = vpop.f32.mrf.mxu0
        %v2191 = vadd.f32 %v778, %v2190
        %2192 = vmatmul.bf16.gmra.mxu0 %v663
        %v2193 = vpop.f32.mrf.mxu0
        %v2194 = vadd.f32 %v778, %v2193
        %v2195 = vpop.f32.mrf.mxu0
        %v2196 = vadd.f32 %v778, %v2195
        %2197 = vmatmul.bf16.gmra.mxu0 %v665
        %v2198 = vpop.f32.mrf.mxu0
        %v2199 = vadd.f32 %v778, %v2198
        %v2200 = vpop.f32.mrf.mxu0
        %v2201 = vadd.f32 %v778, %v2200
        %2202 = vmatmul.bf16.gmra.mxu0 %v667
        %v2203 = vpop.f32.mrf.mxu0
        %v2204 = vadd.f32 %v778, %v2203
        %v2205 = vpop.f32.mrf.mxu0
        %v2206 = vadd.f32 %v778, %v2205
        %2207 = vmatmul.bf16.gmra.mxu0 %v669
        %v2208 = vpop.f32.mrf.mxu0
        %v2209 = vadd.f32 %v778, %v2208
        %v2210 = vpop.f32.mrf.mxu0
        %v2211 = vadd.f32 %v778, %v2210
        %2212 = vmatmul.bf16.gmra.mxu0 %v671
        %v2213 = vpop.f32.mrf.mxu0
        %v2214 = vadd.f32 %v778, %v2213
        %v2215 = vpop.f32.mrf.mxu0
        %v2216 = vadd.f32 %v778, %v2215
        %2217 = vmatmul.bf16.gmra.mxu0 %v673
        %v2218 = vpop.f32.mrf.mxu0
        %v2219 = vadd.f32 %v778, %v2218
        %v2220 = vpop.f32.mrf.mxu0
        %v2221 = vadd.f32 %v778, %v2220
        %2222 = vmatmul.bf16.gmra.mxu0 %v675
        %v2223 = vpop.f32.mrf.mxu0
        %v2224 = vadd.f32 %v778, %v2223
        %v2225 = vpop.f32.mrf.mxu0
        %v2226 = vadd.f32 %v778, %v2225
        %2227 = vmatmul.bf16.gmra.mxu0 %v677
        %v2228 = vpop.f32.mrf.mxu0
        %v2229 = vadd.f32 %v778, %v2228
        %v2230 = vpop.f32.mrf.mxu0
        %v2231 = vadd.f32 %v778, %v2230
        %2232 = vdwg.mxu0
        %2233 = vmatpush.bf16.msra.mxu0 0
        %2234 = vmatpush.bf16.msra.mxu0 0
        %2235 = vmatpush.bf16.msra.mxu0 0
        %2236 = vmatpush.bf16.msra.mxu0 0
        %2237 = vmatpush.bf16.msra.mxu0 0
        %2238 = vmatpush.bf16.msra.mxu0 0
        %2239 = vmatpush.bf16.msra.mxu0 0
        %2240 = vmatpush.bf16.msra.mxu0 %v1120
        %2241 = vmatmul.bf16.gmra.mxu0 %v1207
        %v2242 = vpop.f32.mrf.mxu0
        %v2243 = vadd.f32 %v2154, %v2242
        %v2244 = vpop.f32.mrf.mxu0
        %v2245 = vadd.f32 %v2156, %v2244
        %2246 = vmatmul.bf16.gmra.mxu0 %v1210
        %v2247 = vpop.f32.mrf.mxu0
        %v2248 = vadd.f32 %v2159, %v2247
        %v2249 = vpop.f32.mrf.mxu0
        %v2250 = vadd.f32 %v2161, %v2249
        %2251 = vmatmul.bf16.gmra.mxu0 %v1213
        %v2252 = vpop.f32.mrf.mxu0
        %v2253 = vadd.f32 %v2164, %v2252
        %v2254 = vpop.f32.mrf.mxu0
        %v2255 = vadd.f32 %v2166, %v2254
        %2256 = vmatmul.bf16.gmra.mxu0 %v1216
        %v2257 = vpop.f32.mrf.mxu0
        %v2258 = vadd.f32 %v2169, %v2257
        %v2259 = vpop.f32.mrf.mxu0
        %v2260 = vadd.f32 %v2171, %v2259
        %2261 = vmatmul.bf16.gmra.mxu0 %v1219
        %v2262 = vpop.f32.mrf.mxu0
        %v2263 = vadd.f32 %v2174, %v2262
        %v2264 = vpop.f32.mrf.mxu0
        %v2265 = vadd.f32 %v2176, %v2264
        %2266 = vmatmul.bf16.gmra.mxu0 %v1222
        %v2267 = vpop.f32.mrf.mxu0
        %v2268 = vadd.f32 %v2179, %v2267
        %v2269 = vpop.f32.mrf.mxu0
        %v2270 = vadd.f32 %v2181, %v2269
        %2271 = vmatmul.bf16.gmra.mxu0 %v1225
        %v2272 = vpop.f32.mrf.mxu0
        %v2273 = vadd.f32 %v2184, %v2272
        %v2274 = vpop.f32.mrf.mxu0
        %v2275 = vadd.f32 %v2186, %v2274
        %2276 = vmatmul.bf16.gmra.mxu0 %v1228
        %v2277 = vpop.f32.mrf.mxu0
        %v2278 = vadd.f32 %v2189, %v2277
        %v2279 = vpop.f32.mrf.mxu0
        %v2280 = vadd.f32 %v2191, %v2279
        %2281 = vmatmul.bf16.gmra.mxu0 %v1231
        %v2282 = vpop.f32.mrf.mxu0
        %v2283 = vadd.f32 %v2194, %v2282
        %v2284 = vpop.f32.mrf.mxu0
        %v2285 = vadd.f32 %v2196, %v2284
        %2286 = vmatmul.bf16.gmra.mxu0 %v1234
        %v2287 = vpop.f32.mrf.mxu0
        %v2288 = vadd.f32 %v2199, %v2287
        %v2289 = vpop.f32.mrf.mxu0
        %v2290 = vadd.f32 %v2201, %v2289
        %2291 = vmatmul.bf16.gmra.mxu0 %v1237
        %v2292 = vpop.f32.mrf.mxu0
        %v2293 = vadd.f32 %v2204, %v2292
        %v2294 = vpop.f32.mrf.mxu0
        %v2295 = vadd.f32 %v2206, %v2294
        %2296 = vmatmul.bf16.gmra.mxu0 %v1240
        %v2297 = vpop.f32.mrf.mxu0
        %v2298 = vadd.f32 %v2209, %v2297
        %v2299 = vpop.f32.mrf.mxu0
        %v2300 = vadd.f32 %v2211, %v2299
        %2301 = vmatmul.bf16.gmra.mxu0 %v1243
        %v2302 = vpop.f32.mrf.mxu0
        %v2303 = vadd.f32 %v2214, %v2302
        %v2304 = vpop.f32.mrf.mxu0
        %v2305 = vadd.f32 %v2216, %v2304
        %2306 = vmatmul.bf16.gmra.mxu0 %v1246
        %v2307 = vpop.f32.mrf.mxu0
        %v2308 = vadd.f32 %v2219, %v2307
        %v2309 = vpop.f32.mrf.mxu0
        %v2310 = vadd.f32 %v2221, %v2309
        %2311 = vmatmul.bf16.gmra.mxu0 %v1249
        %v2312 = vpop.f32.mrf.mxu0
        %v2313 = vadd.f32 %v2224, %v2312
        %v2314 = vpop.f32.mrf.mxu0
        %v2315 = vadd.f32 %v2226, %v2314
        %2316 = vmatmul.bf16.gmra.mxu0 %v1252
        %v2317 = vpop.f32.mrf.mxu0
        %v2318 = vadd.f32 %v2229, %v2317
        %v2319 = vpop.f32.mrf.mxu0
        %v2320 = vadd.f32 %v2231, %v2319
        %2321 = vdwg.mxu0
        %2322 = vmatpush.bf16.msra.mxu0 %v1112
        %2323 = vmatpush.bf16.msra.mxu0 %v1103
        %2324 = vmatpush.bf16.msra.mxu0 %v1094
        %2325 = vmatpush.bf16.msra.mxu0 %v1085
        %2326 = vmatpush.bf16.msra.mxu0 %v1076
        %2327 = vmatpush.bf16.msra.mxu0 %v1067
        %2328 = vmatpush.bf16.msra.mxu0 %v1058
        %2329 = vmatpush.bf16.msra.mxu0 %v1049
        %2330 = vmatmul.bf16.gmra.mxu0 %v647
        %v2331 = vpop.f32.mrf.mxu0
        %v2332 = vadd.f32 %v779, %v2331
        %v2333 = vpop.f32.mrf.mxu0
        %v2334 = vadd.f32 %v779, %v2333
        %2335 = vmatmul.bf16.gmra.mxu0 %v649
        %v2336 = vpop.f32.mrf.mxu0
        %v2337 = vadd.f32 %v779, %v2336
        %v2338 = vpop.f32.mrf.mxu0
        %v2339 = vadd.f32 %v779, %v2338
        %2340 = vmatmul.bf16.gmra.mxu0 %v651
        %v2341 = vpop.f32.mrf.mxu0
        %v2342 = vadd.f32 %v779, %v2341
        %v2343 = vpop.f32.mrf.mxu0
        %v2344 = vadd.f32 %v779, %v2343
        %2345 = vmatmul.bf16.gmra.mxu0 %v653
        %v2346 = vpop.f32.mrf.mxu0
        %v2347 = vadd.f32 %v779, %v2346
        %v2348 = vpop.f32.mrf.mxu0
        %v2349 = vadd.f32 %v779, %v2348
        %2350 = vmatmul.bf16.gmra.mxu0 %v655
        %v2351 = vpop.f32.mrf.mxu0
        %v2352 = vadd.f32 %v779, %v2351
        %v2353 = vpop.f32.mrf.mxu0
        %v2354 = vadd.f32 %v779, %v2353
        %2355 = vmatmul.bf16.gmra.mxu0 %v657
        %v2356 = vpop.f32.mrf.mxu0
        %v2357 = vadd.f32 %v779, %v2356
        %v2358 = vpop.f32.mrf.mxu0
        %v2359 = vadd.f32 %v779, %v2358
        %2360 = vmatmul.bf16.gmra.mxu0 %v659
        %v2361 = vpop.f32.mrf.mxu0
        %v2362 = vadd.f32 %v779, %v2361
        %v2363 = vpop.f32.mrf.mxu0
        %v2364 = vadd.f32 %v779, %v2363
        %2365 = vmatmul.bf16.gmra.mxu0 %v661
        %v2366 = vpop.f32.mrf.mxu0
        %v2367 = vadd.f32 %v779, %v2366
        %v2368 = vpop.f32.mrf.mxu0
        %v2369 = vadd.f32 %v779, %v2368
        %2370 = vmatmul.bf16.gmra.mxu0 %v663
        %v2371 = vpop.f32.mrf.mxu0
        %v2372 = vadd.f32 %v779, %v2371
        %v2373 = vpop.f32.mrf.mxu0
        %v2374 = vadd.f32 %v779, %v2373
        %2375 = vmatmul.bf16.gmra.mxu0 %v665
        %v2376 = vpop.f32.mrf.mxu0
        %v2377 = vadd.f32 %v779, %v2376
        %v2378 = vpop.f32.mrf.mxu0
        %v2379 = vadd.f32 %v779, %v2378
        %2380 = vmatmul.bf16.gmra.mxu0 %v667
        %v2381 = vpop.f32.mrf.mxu0
        %v2382 = vadd.f32 %v779, %v2381
        %v2383 = vpop.f32.mrf.mxu0
        %v2384 = vadd.f32 %v779, %v2383
        %2385 = vmatmul.bf16.gmra.mxu0 %v669
        %v2386 = vpop.f32.mrf.mxu0
        %v2387 = vadd.f32 %v779, %v2386
        %v2388 = vpop.f32.mrf.mxu0
        %v2389 = vadd.f32 %v779, %v2388
        %2390 = vmatmul.bf16.gmra.mxu0 %v671
        %v2391 = vpop.f32.mrf.mxu0
        %v2392 = vadd.f32 %v779, %v2391
        %v2393 = vpop.f32.mrf.mxu0
        %v2394 = vadd.f32 %v779, %v2393
        %2395 = vmatmul.bf16.gmra.mxu0 %v673
        %v2396 = vpop.f32.mrf.mxu0
        %v2397 = vadd.f32 %v779, %v2396
        %v2398 = vpop.f32.mrf.mxu0
        %v2399 = vadd.f32 %v779, %v2398
        %2400 = vmatmul.bf16.gmra.mxu0 %v675
        %v2401 = vpop.f32.mrf.mxu0
        %v2402 = vadd.f32 %v779, %v2401
        %v2403 = vpop.f32.mrf.mxu0
        %v2404 = vadd.f32 %v779, %v2403
        %2405 = vmatmul.bf16.gmra.mxu0 %v677
        %v2406 = vpop.f32.mrf.mxu0
        %v2407 = vadd.f32 %v779, %v2406
        %v2408 = vpop.f32.mrf.mxu0
        %v2409 = vadd.f32 %v779, %v2408
        %2410 = vdwg.mxu0
        %2411 = vmatpush.bf16.msra.mxu0 0
        %2412 = vmatpush.bf16.msra.mxu0 0
        %2413 = vmatpush.bf16.msra.mxu0 0
        %2414 = vmatpush.bf16.msra.mxu0 0
        %2415 = vmatpush.bf16.msra.mxu0 0
        %2416 = vmatpush.bf16.msra.mxu0 0
        %2417 = vmatpush.bf16.msra.mxu0 0
        %2418 = vmatpush.bf16.msra.mxu0 %v1121
        %2419 = vmatmul.bf16.gmra.mxu0 %v1207
        %v2420 = vpop.f32.mrf.mxu0
        %v2421 = vadd.f32 %v2332, %v2420
        %v2422 = vpop.f32.mrf.mxu0
        %v2423 = vadd.f32 %v2334, %v2422
        %2424 = vmatmul.bf16.gmra.mxu0 %v1210
        %v2425 = vpop.f32.mrf.mxu0
        %v2426 = vadd.f32 %v2337, %v2425
        %v2427 = vpop.f32.mrf.mxu0
        %v2428 = vadd.f32 %v2339, %v2427
        %2429 = vmatmul.bf16.gmra.mxu0 %v1213
        %v2430 = vpop.f32.mrf.mxu0
        %v2431 = vadd.f32 %v2342, %v2430
        %v2432 = vpop.f32.mrf.mxu0
        %v2433 = vadd.f32 %v2344, %v2432
        %2434 = vmatmul.bf16.gmra.mxu0 %v1216
        %v2435 = vpop.f32.mrf.mxu0
        %v2436 = vadd.f32 %v2347, %v2435
        %v2437 = vpop.f32.mrf.mxu0
        %v2438 = vadd.f32 %v2349, %v2437
        %2439 = vmatmul.bf16.gmra.mxu0 %v1219
        %v2440 = vpop.f32.mrf.mxu0
        %v2441 = vadd.f32 %v2352, %v2440
        %v2442 = vpop.f32.mrf.mxu0
        %v2443 = vadd.f32 %v2354, %v2442
        %2444 = vmatmul.bf16.gmra.mxu0 %v1222
        %v2445 = vpop.f32.mrf.mxu0
        %v2446 = vadd.f32 %v2357, %v2445
        %v2447 = vpop.f32.mrf.mxu0
        %v2448 = vadd.f32 %v2359, %v2447
        %2449 = vmatmul.bf16.gmra.mxu0 %v1225
        %v2450 = vpop.f32.mrf.mxu0
        %v2451 = vadd.f32 %v2362, %v2450
        %v2452 = vpop.f32.mrf.mxu0
        %v2453 = vadd.f32 %v2364, %v2452
        %2454 = vmatmul.bf16.gmra.mxu0 %v1228
        %v2455 = vpop.f32.mrf.mxu0
        %v2456 = vadd.f32 %v2367, %v2455
        %v2457 = vpop.f32.mrf.mxu0
        %v2458 = vadd.f32 %v2369, %v2457
        %2459 = vmatmul.bf16.gmra.mxu0 %v1231
        %v2460 = vpop.f32.mrf.mxu0
        %v2461 = vadd.f32 %v2372, %v2460
        %v2462 = vpop.f32.mrf.mxu0
        %v2463 = vadd.f32 %v2374, %v2462
        %2464 = vmatmul.bf16.gmra.mxu0 %v1234
        %v2465 = vpop.f32.mrf.mxu0
        %v2466 = vadd.f32 %v2377, %v2465
        %v2467 = vpop.f32.mrf.mxu0
        %v2468 = vadd.f32 %v2379, %v2467
        %2469 = vmatmul.bf16.gmra.mxu0 %v1237
        %v2470 = vpop.f32.mrf.mxu0
        %v2471 = vadd.f32 %v2382, %v2470
        %v2472 = vpop.f32.mrf.mxu0
        %v2473 = vadd.f32 %v2384, %v2472
        %2474 = vmatmul.bf16.gmra.mxu0 %v1240
        %v2475 = vpop.f32.mrf.mxu0
        %v2476 = vadd.f32 %v2387, %v2475
        %v2477 = vpop.f32.mrf.mxu0
        %v2478 = vadd.f32 %v2389, %v2477
        %2479 = vmatmul.bf16.gmra.mxu0 %v1243
        %v2480 = vpop.f32.mrf.mxu0
        %v2481 = vadd.f32 %v2392, %v2480
        %v2482 = vpop.f32.mrf.mxu0
        %v2483 = vadd.f32 %v2394, %v2482
        %2484 = vmatmul.bf16.gmra.mxu0 %v1246
        %v2485 = vpop.f32.mrf.mxu0
        %v2486 = vadd.f32 %v2397, %v2485
        %v2487 = vpop.f32.mrf.mxu0
        %v2488 = vadd.f32 %v2399, %v2487
        %2489 = vmatmul.bf16.gmra.mxu0 %v1249
        %v2490 = vpop.f32.mrf.mxu0
        %v2491 = vadd.f32 %v2402, %v2490
        %v2492 = vpop.f32.mrf.mxu0
        %v2493 = vadd.f32 %v2404, %v2492
        %2494 = vmatmul.bf16.gmra.mxu0 %v1252
        %v2495 = vpop.f32.mrf.mxu0
        %v2496 = vadd.f32 %v2407, %v2495
        %v2497 = vpop.f32.mrf.mxu0
        %v2498 = vadd.f32 %v2409, %v2497
        %2499 = vdwg.mxu0
        %2500 = vmatpush.bf16.msra.mxu0 %v1113
        %2501 = vmatpush.bf16.msra.mxu0 %v1104
        %2502 = vmatpush.bf16.msra.mxu0 %v1095
        %2503 = vmatpush.bf16.msra.mxu0 %v1086
        %2504 = vmatpush.bf16.msra.mxu0 %v1077
        %2505 = vmatpush.bf16.msra.mxu0 %v1068
        %2506 = vmatpush.bf16.msra.mxu0 %v1059
        %2507 = vmatpush.bf16.msra.mxu0 %v1050
        %2508 = vmatmul.bf16.gmra.mxu0 %v647
        %v2509 = vpop.f32.mrf.mxu0
        %v2510 = vadd.f32 %v780, %v2509
        %v2511 = vpop.f32.mrf.mxu0
        %v2512 = vadd.f32 %v780, %v2511
        %2513 = vmatmul.bf16.gmra.mxu0 %v649
        %v2514 = vpop.f32.mrf.mxu0
        %v2515 = vadd.f32 %v780, %v2514
        %v2516 = vpop.f32.mrf.mxu0
        %v2517 = vadd.f32 %v780, %v2516
        %2518 = vmatmul.bf16.gmra.mxu0 %v651
        %v2519 = vpop.f32.mrf.mxu0
        %v2520 = vadd.f32 %v780, %v2519
        %v2521 = vpop.f32.mrf.mxu0
        %v2522 = vadd.f32 %v780, %v2521
        %2523 = vmatmul.bf16.gmra.mxu0 %v653
        %v2524 = vpop.f32.mrf.mxu0
        %v2525 = vadd.f32 %v780, %v2524
        %v2526 = vpop.f32.mrf.mxu0
        %v2527 = vadd.f32 %v780, %v2526
        %2528 = vmatmul.bf16.gmra.mxu0 %v655
        %v2529 = vpop.f32.mrf.mxu0
        %v2530 = vadd.f32 %v780, %v2529
        %v2531 = vpop.f32.mrf.mxu0
        %v2532 = vadd.f32 %v780, %v2531
        %2533 = vmatmul.bf16.gmra.mxu0 %v657
        %v2534 = vpop.f32.mrf.mxu0
        %v2535 = vadd.f32 %v780, %v2534
        %v2536 = vpop.f32.mrf.mxu0
        %v2537 = vadd.f32 %v780, %v2536
        %2538 = vmatmul.bf16.gmra.mxu0 %v659
        %v2539 = vpop.f32.mrf.mxu0
        %v2540 = vadd.f32 %v780, %v2539
        %v2541 = vpop.f32.mrf.mxu0
        %v2542 = vadd.f32 %v780, %v2541
        %2543 = vmatmul.bf16.gmra.mxu0 %v661
        %v2544 = vpop.f32.mrf.mxu0
        %v2545 = vadd.f32 %v780, %v2544
        %v2546 = vpop.f32.mrf.mxu0
        %v2547 = vadd.f32 %v780, %v2546
        %2548 = vmatmul.bf16.gmra.mxu0 %v663
        %v2549 = vpop.f32.mrf.mxu0
        %v2550 = vadd.f32 %v780, %v2549
        %v2551 = vpop.f32.mrf.mxu0
        %v2552 = vadd.f32 %v780, %v2551
        %2553 = vmatmul.bf16.gmra.mxu0 %v665
        %v2554 = vpop.f32.mrf.mxu0
        %v2555 = vadd.f32 %v780, %v2554
        %v2556 = vpop.f32.mrf.mxu0
        %v2557 = vadd.f32 %v780, %v2556
        %2558 = vmatmul.bf16.gmra.mxu0 %v667
        %v2559 = vpop.f32.mrf.mxu0
        %v2560 = vadd.f32 %v780, %v2559
        %v2561 = vpop.f32.mrf.mxu0
        %v2562 = vadd.f32 %v780, %v2561
        %2563 = vmatmul.bf16.gmra.mxu0 %v669
        %v2564 = vpop.f32.mrf.mxu0
        %v2565 = vadd.f32 %v780, %v2564
        %v2566 = vpop.f32.mrf.mxu0
        %v2567 = vadd.f32 %v780, %v2566
        %2568 = vmatmul.bf16.gmra.mxu0 %v671
        %v2569 = vpop.f32.mrf.mxu0
        %v2570 = vadd.f32 %v780, %v2569
        %v2571 = vpop.f32.mrf.mxu0
        %v2572 = vadd.f32 %v780, %v2571
        %2573 = vmatmul.bf16.gmra.mxu0 %v673
        %v2574 = vpop.f32.mrf.mxu0
        %v2575 = vadd.f32 %v780, %v2574
        %v2576 = vpop.f32.mrf.mxu0
        %v2577 = vadd.f32 %v780, %v2576
        %2578 = vmatmul.bf16.gmra.mxu0 %v675
        %v2579 = vpop.f32.mrf.mxu0
        %v2580 = vadd.f32 %v780, %v2579
        %v2581 = vpop.f32.mrf.mxu0
        %v2582 = vadd.f32 %v780, %v2581
        %2583 = vmatmul.bf16.gmra.mxu0 %v677
        %v2584 = vpop.f32.mrf.mxu0
        %v2585 = vadd.f32 %v780, %v2584
        %v2586 = vpop.f32.mrf.mxu0
        %v2587 = vadd.f32 %v780, %v2586
        %2588 = vdwg.mxu0
        %2589 = vmatpush.bf16.msra.mxu0 0
        %2590 = vmatpush.bf16.msra.mxu0 0
        %2591 = vmatpush.bf16.msra.mxu0 0
        %2592 = vmatpush.bf16.msra.mxu0 0
        %2593 = vmatpush.bf16.msra.mxu0 0
        %2594 = vmatpush.bf16.msra.mxu0 0
        %2595 = vmatpush.bf16.msra.mxu0 0
        %2596 = vmatpush.bf16.msra.mxu0 %v1122
        %2597 = vmatmul.bf16.gmra.mxu0 %v1207
        %v2598 = vpop.f32.mrf.mxu0
        %v2599 = vadd.f32 %v2510, %v2598
        %v2600 = vpop.f32.mrf.mxu0
        %v2601 = vadd.f32 %v2512, %v2600
        %2602 = vmatmul.bf16.gmra.mxu0 %v1210
        %v2603 = vpop.f32.mrf.mxu0
        %v2604 = vadd.f32 %v2515, %v2603
        %v2605 = vpop.f32.mrf.mxu0
        %v2606 = vadd.f32 %v2517, %v2605
        %2607 = vmatmul.bf16.gmra.mxu0 %v1213
        %v2608 = vpop.f32.mrf.mxu0
        %v2609 = vadd.f32 %v2520, %v2608
        %v2610 = vpop.f32.mrf.mxu0
        %v2611 = vadd.f32 %v2522, %v2610
        %2612 = vmatmul.bf16.gmra.mxu0 %v1216
        %v2613 = vpop.f32.mrf.mxu0
        %v2614 = vadd.f32 %v2525, %v2613
        %v2615 = vpop.f32.mrf.mxu0
        %v2616 = vadd.f32 %v2527, %v2615
        %2617 = vmatmul.bf16.gmra.mxu0 %v1219
        %v2618 = vpop.f32.mrf.mxu0
        %v2619 = vadd.f32 %v2530, %v2618
        %v2620 = vpop.f32.mrf.mxu0
        %v2621 = vadd.f32 %v2532, %v2620
        %2622 = vmatmul.bf16.gmra.mxu0 %v1222
        %v2623 = vpop.f32.mrf.mxu0
        %v2624 = vadd.f32 %v2535, %v2623
        %v2625 = vpop.f32.mrf.mxu0
        %v2626 = vadd.f32 %v2537, %v2625
        %2627 = vmatmul.bf16.gmra.mxu0 %v1225
        %v2628 = vpop.f32.mrf.mxu0
        %v2629 = vadd.f32 %v2540, %v2628
        %v2630 = vpop.f32.mrf.mxu0
        %v2631 = vadd.f32 %v2542, %v2630
        %2632 = vmatmul.bf16.gmra.mxu0 %v1228
        %v2633 = vpop.f32.mrf.mxu0
        %v2634 = vadd.f32 %v2545, %v2633
        %v2635 = vpop.f32.mrf.mxu0
        %v2636 = vadd.f32 %v2547, %v2635
        %2637 = vmatmul.bf16.gmra.mxu0 %v1231
        %v2638 = vpop.f32.mrf.mxu0
        %v2639 = vadd.f32 %v2550, %v2638
        %v2640 = vpop.f32.mrf.mxu0
        %v2641 = vadd.f32 %v2552, %v2640
        %2642 = vmatmul.bf16.gmra.mxu0 %v1234
        %v2643 = vpop.f32.mrf.mxu0
        %v2644 = vadd.f32 %v2555, %v2643
        %v2645 = vpop.f32.mrf.mxu0
        %v2646 = vadd.f32 %v2557, %v2645
        %2647 = vmatmul.bf16.gmra.mxu0 %v1237
        %v2648 = vpop.f32.mrf.mxu0
        %v2649 = vadd.f32 %v2560, %v2648
        %v2650 = vpop.f32.mrf.mxu0
        %v2651 = vadd.f32 %v2562, %v2650
        %2652 = vmatmul.bf16.gmra.mxu0 %v1240
        %v2653 = vpop.f32.mrf.mxu0
        %v2654 = vadd.f32 %v2565, %v2653
        %v2655 = vpop.f32.mrf.mxu0
        %v2656 = vadd.f32 %v2567, %v2655
        %2657 = vmatmul.bf16.gmra.mxu0 %v1243
        %v2658 = vpop.f32.mrf.mxu0
        %v2659 = vadd.f32 %v2570, %v2658
        %v2660 = vpop.f32.mrf.mxu0
        %v2661 = vadd.f32 %v2572, %v2660
        %2662 = vmatmul.bf16.gmra.mxu0 %v1246
        %v2663 = vpop.f32.mrf.mxu0
        %v2664 = vadd.f32 %v2575, %v2663
        %v2665 = vpop.f32.mrf.mxu0
        %v2666 = vadd.f32 %v2577, %v2665
        %2667 = vmatmul.bf16.gmra.mxu0 %v1249
        %v2668 = vpop.f32.mrf.mxu0
        %v2669 = vadd.f32 %v2580, %v2668
        %v2670 = vpop.f32.mrf.mxu0
        %v2671 = vadd.f32 %v2582, %v2670
        %2672 = vmatmul.bf16.gmra.mxu0 %v1252
        %v2673 = vpop.f32.mrf.mxu0
        %v2674 = vadd.f32 %v2585, %v2673
        %v2675 = vpop.f32.mrf.mxu0
        %v2676 = vadd.f32 %v2587, %v2675
        %2677 = vdwg.mxu0
        %2678 = vmatpush.bf16.msra.mxu0 %v1114
        %2679 = vmatpush.bf16.msra.mxu0 %v1105
        %2680 = vmatpush.bf16.msra.mxu0 %v1096
        %2681 = vmatpush.bf16.msra.mxu0 %v1087
        %2682 = vmatpush.bf16.msra.mxu0 %v1078
        %2683 = vmatpush.bf16.msra.mxu0 %v1069
        %2684 = vmatpush.bf16.msra.mxu0 %v1060
        %2685 = vmatpush.bf16.msra.mxu0 %v1051
        %2686 = vmatmul.bf16.gmra.mxu0 %v647
        %v2687 = vpop.f32.mrf.mxu0
        %v2688 = vadd.f32 %v781, %v2687
        %v2689 = vpop.f32.mrf.mxu0
        %v2690 = vadd.f32 %v781, %v2689
        %2691 = vmatmul.bf16.gmra.mxu0 %v649
        %v2692 = vpop.f32.mrf.mxu0
        %v2693 = vadd.f32 %v781, %v2692
        %v2694 = vpop.f32.mrf.mxu0
        %v2695 = vadd.f32 %v781, %v2694
        %2696 = vmatmul.bf16.gmra.mxu0 %v651
        %v2697 = vpop.f32.mrf.mxu0
        %v2698 = vadd.f32 %v781, %v2697
        %v2699 = vpop.f32.mrf.mxu0
        %v2700 = vadd.f32 %v781, %v2699
        %2701 = vmatmul.bf16.gmra.mxu0 %v653
        %v2702 = vpop.f32.mrf.mxu0
        %v2703 = vadd.f32 %v781, %v2702
        %v2704 = vpop.f32.mrf.mxu0
        %v2705 = vadd.f32 %v781, %v2704
        %2706 = vmatmul.bf16.gmra.mxu0 %v655
        %v2707 = vpop.f32.mrf.mxu0
        %v2708 = vadd.f32 %v781, %v2707
        %v2709 = vpop.f32.mrf.mxu0
        %v2710 = vadd.f32 %v781, %v2709
        %2711 = vmatmul.bf16.gmra.mxu0 %v657
        %v2712 = vpop.f32.mrf.mxu0
        %v2713 = vadd.f32 %v781, %v2712
        %v2714 = vpop.f32.mrf.mxu0
        %v2715 = vadd.f32 %v781, %v2714
        %2716 = vmatmul.bf16.gmra.mxu0 %v659
        %v2717 = vpop.f32.mrf.mxu0
        %v2718 = vadd.f32 %v781, %v2717
        %v2719 = vpop.f32.mrf.mxu0
        %v2720 = vadd.f32 %v781, %v2719
        %2721 = vmatmul.bf16.gmra.mxu0 %v661
        %v2722 = vpop.f32.mrf.mxu0
        %v2723 = vadd.f32 %v781, %v2722
        %v2724 = vpop.f32.mrf.mxu0
        %v2725 = vadd.f32 %v781, %v2724
        %2726 = vmatmul.bf16.gmra.mxu0 %v663
        %v2727 = vpop.f32.mrf.mxu0
        %v2728 = vadd.f32 %v781, %v2727
        %v2729 = vpop.f32.mrf.mxu0
        %v2730 = vadd.f32 %v781, %v2729
        %2731 = vmatmul.bf16.gmra.mxu0 %v665
        %v2732 = vpop.f32.mrf.mxu0
        %v2733 = vadd.f32 %v781, %v2732
        %v2734 = vpop.f32.mrf.mxu0
        %v2735 = vadd.f32 %v781, %v2734
        %2736 = vmatmul.bf16.gmra.mxu0 %v667
        %v2737 = vpop.f32.mrf.mxu0
        %v2738 = vadd.f32 %v781, %v2737
        %v2739 = vpop.f32.mrf.mxu0
        %v2740 = vadd.f32 %v781, %v2739
        %2741 = vmatmul.bf16.gmra.mxu0 %v669
        %v2742 = vpop.f32.mrf.mxu0
        %v2743 = vadd.f32 %v781, %v2742
        %v2744 = vpop.f32.mrf.mxu0
        %v2745 = vadd.f32 %v781, %v2744
        %2746 = vmatmul.bf16.gmra.mxu0 %v671
        %v2747 = vpop.f32.mrf.mxu0
        %v2748 = vadd.f32 %v781, %v2747
        %v2749 = vpop.f32.mrf.mxu0
        %v2750 = vadd.f32 %v781, %v2749
        %2751 = vmatmul.bf16.gmra.mxu0 %v673
        %v2752 = vpop.f32.mrf.mxu0
        %v2753 = vadd.f32 %v781, %v2752
        %v2754 = vpop.f32.mrf.mxu0
        %v2755 = vadd.f32 %v781, %v2754
        %2756 = vmatmul.bf16.gmra.mxu0 %v675
        %v2757 = vpop.f32.mrf.mxu0
        %v2758 = vadd.f32 %v781, %v2757
        %v2759 = vpop.f32.mrf.mxu0
        %v2760 = vadd.f32 %v781, %v2759
        %2761 = vmatmul.bf16.gmra.mxu0 %v677
        %v2762 = vpop.f32.mrf.mxu0
        %v2763 = vadd.f32 %v781, %v2762
        %v2764 = vpop.f32.mrf.mxu0
        %v2765 = vadd.f32 %v781, %v2764
        %2766 = vdwg.mxu0
        %2767 = vmatpush.bf16.msra.mxu0 0
        %2768 = vmatpush.bf16.msra.mxu0 0
        %2769 = vmatpush.bf16.msra.mxu0 0
        %2770 = vmatpush.bf16.msra.mxu0 0
        %2771 = vmatpush.bf16.msra.mxu0 0
        %2772 = vmatpush.bf16.msra.mxu0 0
        %2773 = vmatpush.bf16.msra.mxu0 0
        %2774 = vmatpush.bf16.msra.mxu0 %v1123
        %2775 = vmatmul.bf16.gmra.mxu0 %v1207
        %v2776 = vpop.f32.mrf.mxu0
        %v2777 = vadd.f32 %v2688, %v2776
        %v2778 = vpop.f32.mrf.mxu0
        %v2779 = vadd.f32 %v2690, %v2778
        %2780 = vmatmul.bf16.gmra.mxu0 %v1210
        %v2781 = vpop.f32.mrf.mxu0
        %v2782 = vadd.f32 %v2693, %v2781
        %v2783 = vpop.f32.mrf.mxu0
        %v2784 = vadd.f32 %v2695, %v2783
        %2785 = vmatmul.bf16.gmra.mxu0 %v1213
        %v2786 = vpop.f32.mrf.mxu0
        %v2787 = vadd.f32 %v2698, %v2786
        %v2788 = vpop.f32.mrf.mxu0
        %v2789 = vadd.f32 %v2700, %v2788
        %2790 = vmatmul.bf16.gmra.mxu0 %v1216
        %v2791 = vpop.f32.mrf.mxu0
        %v2792 = vadd.f32 %v2703, %v2791
        %v2793 = vpop.f32.mrf.mxu0
        %v2794 = vadd.f32 %v2705, %v2793
        %2795 = vmatmul.bf16.gmra.mxu0 %v1219
        %v2796 = vpop.f32.mrf.mxu0
        %v2797 = vadd.f32 %v2708, %v2796
        %v2798 = vpop.f32.mrf.mxu0
        %v2799 = vadd.f32 %v2710, %v2798
        %2800 = vmatmul.bf16.gmra.mxu0 %v1222
        %v2801 = vpop.f32.mrf.mxu0
        %v2802 = vadd.f32 %v2713, %v2801
        %v2803 = vpop.f32.mrf.mxu0
        %v2804 = vadd.f32 %v2715, %v2803
        %2805 = vmatmul.bf16.gmra.mxu0 %v1225
        %v2806 = vpop.f32.mrf.mxu0
        %v2807 = vadd.f32 %v2718, %v2806
        %v2808 = vpop.f32.mrf.mxu0
        %v2809 = vadd.f32 %v2720, %v2808
        %2810 = vmatmul.bf16.gmra.mxu0 %v1228
        %v2811 = vpop.f32.mrf.mxu0
        %v2812 = vadd.f32 %v2723, %v2811
        %v2813 = vpop.f32.mrf.mxu0
        %v2814 = vadd.f32 %v2725, %v2813
        %2815 = vmatmul.bf16.gmra.mxu0 %v1231
        %v2816 = vpop.f32.mrf.mxu0
        %v2817 = vadd.f32 %v2728, %v2816
        %v2818 = vpop.f32.mrf.mxu0
        %v2819 = vadd.f32 %v2730, %v2818
        %2820 = vmatmul.bf16.gmra.mxu0 %v1234
        %v2821 = vpop.f32.mrf.mxu0
        %v2822 = vadd.f32 %v2733, %v2821
        %v2823 = vpop.f32.mrf.mxu0
        %v2824 = vadd.f32 %v2735, %v2823
        %2825 = vmatmul.bf16.gmra.mxu0 %v1237
        %v2826 = vpop.f32.mrf.mxu0
        %v2827 = vadd.f32 %v2738, %v2826
        %v2828 = vpop.f32.mrf.mxu0
        %v2829 = vadd.f32 %v2740, %v2828
        %2830 = vmatmul.bf16.gmra.mxu0 %v1240
        %v2831 = vpop.f32.mrf.mxu0
        %v2832 = vadd.f32 %v2743, %v2831
        %v2833 = vpop.f32.mrf.mxu0
        %v2834 = vadd.f32 %v2745, %v2833
        %2835 = vmatmul.bf16.gmra.mxu0 %v1243
        %v2836 = vpop.f32.mrf.mxu0
        %v2837 = vadd.f32 %v2748, %v2836
        %v2838 = vpop.f32.mrf.mxu0
        %v2839 = vadd.f32 %v2750, %v2838
        %2840 = vmatmul.bf16.gmra.mxu0 %v1246
        %v2841 = vpop.f32.mrf.mxu0
        %v2842 = vadd.f32 %v2753, %v2841
        %v2843 = vpop.f32.mrf.mxu0
        %v2844 = vadd.f32 %v2755, %v2843
        %2845 = vmatmul.bf16.gmra.mxu0 %v1249
        %v2846 = vpop.f32.mrf.mxu0
        %v2847 = vadd.f32 %v2758, %v2846
        %v2848 = vpop.f32.mrf.mxu0
        %v2849 = vadd.f32 %v2760, %v2848
        %2850 = vmatmul.bf16.gmra.mxu0 %v1252
        %v2851 = vpop.f32.mrf.mxu0
        %v2852 = vadd.f32 %v2763, %v2851
        %v2853 = vpop.f32.mrf.mxu0
        %v2854 = vadd.f32 %v2765, %v2853
        %2855 = vdwg.mxu0
        %v2856 = vmax.f32 %v1353, 0.0
        %v2857 = vmax.f32 %v1531, 0.0
        %v2858 = vmax.f32 %v1709, 0.0
        %v2859 = vmax.f32 %v1887, 0.0
        %v2860 = vmax.f32 %v2065, 0.0
        %v2861 = vmax.f32 %v2243, 0.0
        %v2862 = vmax.f32 %v2421, 0.0
        %v2863 = vmax.f32 %v2599, 0.0
        %v2864 = vmax.f32 %v2777, 0.0
        %v2865 = vmax.f32 %v1355, 0.0
        %v2866 = vmax.f32 %v1533, 0.0
        %v2867 = vmax.f32 %v1711, 0.0
        %v2868 = vmax.f32 %v1889, 0.0
        %v2869 = vmax.f32 %v2067, 0.0
        %v2870 = vmax.f32 %v2245, 0.0
        %v2871 = vmax.f32 %v2423, 0.0
        %v2872 = vmax.f32 %v2601, 0.0
        %v2873 = vmax.f32 %v2779, 0.0
        %v2874 = vmax.f32 %v1358, 0.0
        %v2875 = vmax.f32 %v1536, 0.0
        %v2876 = vmax.f32 %v1714, 0.0
        %v2877 = vmax.f32 %v1892, 0.0
        %v2878 = vmax.f32 %v2070, 0.0
        %v2879 = vmax.f32 %v2248, 0.0
        %v2880 = vmax.f32 %v2426, 0.0
        %v2881 = vmax.f32 %v2604, 0.0
        %v2882 = vmax.f32 %v2782, 0.0
        %v2883 = vmax.f32 %v1360, 0.0
        %v2884 = vmax.f32 %v1538, 0.0
        %v2885 = vmax.f32 %v1716, 0.0
        %v2886 = vmax.f32 %v1894, 0.0
        %v2887 = vmax.f32 %v2072, 0.0
        %v2888 = vmax.f32 %v2250, 0.0
        %v2889 = vmax.f32 %v2428, 0.0
        %v2890 = vmax.f32 %v2606, 0.0
        %v2891 = vmax.f32 %v2784, 0.0
        %v2892 = vmax.f32 %v1363, 0.0
        %v2893 = vmax.f32 %v1541, 0.0
        %v2894 = vmax.f32 %v1719, 0.0
        %v2895 = vmax.f32 %v1897, 0.0
        %v2896 = vmax.f32 %v2075, 0.0
        %v2897 = vmax.f32 %v2253, 0.0
        %v2898 = vmax.f32 %v2431, 0.0
        %v2899 = vmax.f32 %v2609, 0.0
        %v2900 = vmax.f32 %v2787, 0.0
        %v2901 = vmax.f32 %v1365, 0.0
        %v2902 = vmax.f32 %v1543, 0.0
        %v2903 = vmax.f32 %v1721, 0.0
        %v2904 = vmax.f32 %v1899, 0.0
        %v2905 = vmax.f32 %v2077, 0.0
        %v2906 = vmax.f32 %v2255, 0.0
        %v2907 = vmax.f32 %v2433, 0.0
        %v2908 = vmax.f32 %v2611, 0.0
        %v2909 = vmax.f32 %v2789, 0.0
        %v2910 = vmax.f32 %v1368, 0.0
        %v2911 = vmax.f32 %v1546, 0.0
        %v2912 = vmax.f32 %v1724, 0.0
        %v2913 = vmax.f32 %v1902, 0.0
        %v2914 = vmax.f32 %v2080, 0.0
        %v2915 = vmax.f32 %v2258, 0.0
        %v2916 = vmax.f32 %v2436, 0.0
        %v2917 = vmax.f32 %v2614, 0.0
        %v2918 = vmax.f32 %v2792, 0.0
        %v2919 = vmax.f32 %v1370, 0.0
        %v2920 = vmax.f32 %v1548, 0.0
        %v2921 = vmax.f32 %v1726, 0.0
        %v2922 = vmax.f32 %v1904, 0.0
        %v2923 = vmax.f32 %v2082, 0.0
        %v2924 = vmax.f32 %v2260, 0.0
        %v2925 = vmax.f32 %v2438, 0.0
        %v2926 = vmax.f32 %v2616, 0.0
        %v2927 = vmax.f32 %v2794, 0.0
        %v2928 = vmax.f32 %v1373, 0.0
        %v2929 = vmax.f32 %v1551, 0.0
        %v2930 = vmax.f32 %v1729, 0.0
        %v2931 = vmax.f32 %v1907, 0.0
        %v2932 = vmax.f32 %v2085, 0.0
        %v2933 = vmax.f32 %v2263, 0.0
        %v2934 = vmax.f32 %v2441, 0.0
        %v2935 = vmax.f32 %v2619, 0.0
        %v2936 = vmax.f32 %v2797, 0.0
        %v2937 = vmax.f32 %v1375, 0.0
        %v2938 = vmax.f32 %v1553, 0.0
        %v2939 = vmax.f32 %v1731, 0.0
        %v2940 = vmax.f32 %v1909, 0.0
        %v2941 = vmax.f32 %v2087, 0.0
        %v2942 = vmax.f32 %v2265, 0.0
        %v2943 = vmax.f32 %v2443, 0.0
        %v2944 = vmax.f32 %v2621, 0.0
        %v2945 = vmax.f32 %v2799, 0.0
        %v2946 = vmax.f32 %v1378, 0.0
        %v2947 = vmax.f32 %v1556, 0.0
        %v2948 = vmax.f32 %v1734, 0.0
        %v2949 = vmax.f32 %v1912, 0.0
        %v2950 = vmax.f32 %v2090, 0.0
        %v2951 = vmax.f32 %v2268, 0.0
        %v2952 = vmax.f32 %v2446, 0.0
        %v2953 = vmax.f32 %v2624, 0.0
        %v2954 = vmax.f32 %v2802, 0.0
        %v2955 = vmax.f32 %v1380, 0.0
        %v2956 = vmax.f32 %v1558, 0.0
        %v2957 = vmax.f32 %v1736, 0.0
        %v2958 = vmax.f32 %v1914, 0.0
        %v2959 = vmax.f32 %v2092, 0.0
        %v2960 = vmax.f32 %v2270, 0.0
        %v2961 = vmax.f32 %v2448, 0.0
        %v2962 = vmax.f32 %v2626, 0.0
        %v2963 = vmax.f32 %v2804, 0.0
        %v2964 = vmax.f32 %v1383, 0.0
        %v2965 = vmax.f32 %v1561, 0.0
        %v2966 = vmax.f32 %v1739, 0.0
        %v2967 = vmax.f32 %v1917, 0.0
        %v2968 = vmax.f32 %v2095, 0.0
        %v2969 = vmax.f32 %v2273, 0.0
        %v2970 = vmax.f32 %v2451, 0.0
        %v2971 = vmax.f32 %v2629, 0.0
        %v2972 = vmax.f32 %v2807, 0.0
        %v2973 = vmax.f32 %v1385, 0.0
        %v2974 = vmax.f32 %v1563, 0.0
        %v2975 = vmax.f32 %v1741, 0.0
        %v2976 = vmax.f32 %v1919, 0.0
        %v2977 = vmax.f32 %v2097, 0.0
        %v2978 = vmax.f32 %v2275, 0.0
        %v2979 = vmax.f32 %v2453, 0.0
        %v2980 = vmax.f32 %v2631, 0.0
        %v2981 = vmax.f32 %v2809, 0.0
        %v2982 = vmax.f32 %v1388, 0.0
        %v2983 = vmax.f32 %v1566, 0.0
        %v2984 = vmax.f32 %v1744, 0.0
        %v2985 = vmax.f32 %v1922, 0.0
        %v2986 = vmax.f32 %v2100, 0.0
        %v2987 = vmax.f32 %v2278, 0.0
        %v2988 = vmax.f32 %v2456, 0.0
        %v2989 = vmax.f32 %v2634, 0.0
        %v2990 = vmax.f32 %v2812, 0.0
        %v2991 = vmax.f32 %v1390, 0.0
        %v2992 = vmax.f32 %v1568, 0.0
        %v2993 = vmax.f32 %v1746, 0.0
        %v2994 = vmax.f32 %v1924, 0.0
        %v2995 = vmax.f32 %v2102, 0.0
        %v2996 = vmax.f32 %v2280, 0.0
        %v2997 = vmax.f32 %v2458, 0.0
        %v2998 = vmax.f32 %v2636, 0.0
        %v2999 = vmax.f32 %v2814, 0.0
        %v3000 = vmax.f32 %v1393, 0.0
        %v3001 = vmax.f32 %v1571, 0.0
        %v3002 = vmax.f32 %v1749, 0.0
        %v3003 = vmax.f32 %v1927, 0.0
        %v3004 = vmax.f32 %v2105, 0.0
        %v3005 = vmax.f32 %v2283, 0.0
        %v3006 = vmax.f32 %v2461, 0.0
        %v3007 = vmax.f32 %v2639, 0.0
        %v3008 = vmax.f32 %v2817, 0.0
        %v3009 = vmax.f32 %v1395, 0.0
        %v3010 = vmax.f32 %v1573, 0.0
        %v3011 = vmax.f32 %v1751, 0.0
        %v3012 = vmax.f32 %v1929, 0.0
        %v3013 = vmax.f32 %v2107, 0.0
        %v3014 = vmax.f32 %v2285, 0.0
        %v3015 = vmax.f32 %v2463, 0.0
        %v3016 = vmax.f32 %v2641, 0.0
        %v3017 = vmax.f32 %v2819, 0.0
        %v3018 = vmax.f32 %v1398, 0.0
        %v3019 = vmax.f32 %v1576, 0.0
        %v3020 = vmax.f32 %v1754, 0.0
        %v3021 = vmax.f32 %v1932, 0.0
        %v3022 = vmax.f32 %v2110, 0.0
        %v3023 = vmax.f32 %v2288, 0.0
        %v3024 = vmax.f32 %v2466, 0.0
        %v3025 = vmax.f32 %v2644, 0.0
        %v3026 = vmax.f32 %v2822, 0.0
        %v3027 = vmax.f32 %v1400, 0.0
        %v3028 = vmax.f32 %v1578, 0.0
        %v3029 = vmax.f32 %v1756, 0.0
        %v3030 = vmax.f32 %v1934, 0.0
        %v3031 = vmax.f32 %v2112, 0.0
        %v3032 = vmax.f32 %v2290, 0.0
        %v3033 = vmax.f32 %v2468, 0.0
        %v3034 = vmax.f32 %v2646, 0.0
        %v3035 = vmax.f32 %v2824, 0.0
        %v3036 = vmax.f32 %v1403, 0.0
        %v3037 = vmax.f32 %v1581, 0.0
        %v3038 = vmax.f32 %v1759, 0.0
        %v3039 = vmax.f32 %v1937, 0.0
        %v3040 = vmax.f32 %v2115, 0.0
        %v3041 = vmax.f32 %v2293, 0.0
        %v3042 = vmax.f32 %v2471, 0.0
        %v3043 = vmax.f32 %v2649, 0.0
        %v3044 = vmax.f32 %v2827, 0.0
        %v3045 = vmax.f32 %v1405, 0.0
        %v3046 = vmax.f32 %v1583, 0.0
        %v3047 = vmax.f32 %v1761, 0.0
        %v3048 = vmax.f32 %v1939, 0.0
        %v3049 = vmax.f32 %v2117, 0.0
        %v3050 = vmax.f32 %v2295, 0.0
        %v3051 = vmax.f32 %v2473, 0.0
        %v3052 = vmax.f32 %v2651, 0.0
        %v3053 = vmax.f32 %v2829, 0.0
        %v3054 = vmax.f32 %v1408, 0.0
        %v3055 = vmax.f32 %v1586, 0.0
        %v3056 = vmax.f32 %v1764, 0.0
        %v3057 = vmax.f32 %v1942, 0.0
        %v3058 = vmax.f32 %v2120, 0.0
        %v3059 = vmax.f32 %v2298, 0.0
        %v3060 = vmax.f32 %v2476, 0.0
        %v3061 = vmax.f32 %v2654, 0.0
        %v3062 = vmax.f32 %v2832, 0.0
        %v3063 = vmax.f32 %v1410, 0.0
        %v3064 = vmax.f32 %v1588, 0.0
        %v3065 = vmax.f32 %v1766, 0.0
        %v3066 = vmax.f32 %v1944, 0.0
        %v3067 = vmax.f32 %v2122, 0.0
        %v3068 = vmax.f32 %v2300, 0.0
        %v3069 = vmax.f32 %v2478, 0.0
        %v3070 = vmax.f32 %v2656, 0.0
        %v3071 = vmax.f32 %v2834, 0.0
        %v3072 = vmax.f32 %v1413, 0.0
        %v3073 = vmax.f32 %v1591, 0.0
        %v3074 = vmax.f32 %v1769, 0.0
        %v3075 = vmax.f32 %v1947, 0.0
        %v3076 = vmax.f32 %v2125, 0.0
        %v3077 = vmax.f32 %v2303, 0.0
        %v3078 = vmax.f32 %v2481, 0.0
        %v3079 = vmax.f32 %v2659, 0.0
        %v3080 = vmax.f32 %v2837, 0.0
        %v3081 = vmax.f32 %v1415, 0.0
        %v3082 = vmax.f32 %v1593, 0.0
        %v3083 = vmax.f32 %v1771, 0.0
        %v3084 = vmax.f32 %v1949, 0.0
        %v3085 = vmax.f32 %v2127, 0.0
        %v3086 = vmax.f32 %v2305, 0.0
        %v3087 = vmax.f32 %v2483, 0.0
        %v3088 = vmax.f32 %v2661, 0.0
        %v3089 = vmax.f32 %v2839, 0.0
        %v3090 = vmax.f32 %v1418, 0.0
        %v3091 = vmax.f32 %v1596, 0.0
        %v3092 = vmax.f32 %v1774, 0.0
        %v3093 = vmax.f32 %v1952, 0.0
        %v3094 = vmax.f32 %v2130, 0.0
        %v3095 = vmax.f32 %v2308, 0.0
        %v3096 = vmax.f32 %v2486, 0.0
        %v3097 = vmax.f32 %v2664, 0.0
        %v3098 = vmax.f32 %v2842, 0.0
        %v3099 = vmax.f32 %v1420, 0.0
        %v3100 = vmax.f32 %v1598, 0.0
        %v3101 = vmax.f32 %v1776, 0.0
        %v3102 = vmax.f32 %v1954, 0.0
        %v3103 = vmax.f32 %v2132, 0.0
        %v3104 = vmax.f32 %v2310, 0.0
        %v3105 = vmax.f32 %v2488, 0.0
        %v3106 = vmax.f32 %v2666, 0.0
        %v3107 = vmax.f32 %v2844, 0.0
        %v3108 = vmax.f32 %v1423, 0.0
        %v3109 = vmax.f32 %v1601, 0.0
        %v3110 = vmax.f32 %v1779, 0.0
        %v3111 = vmax.f32 %v1957, 0.0
        %v3112 = vmax.f32 %v2135, 0.0
        %v3113 = vmax.f32 %v2313, 0.0
        %v3114 = vmax.f32 %v2491, 0.0
        %v3115 = vmax.f32 %v2669, 0.0
        %v3116 = vmax.f32 %v2847, 0.0
        %v3117 = vmax.f32 %v1425, 0.0
        %v3118 = vmax.f32 %v1603, 0.0
        %v3119 = vmax.f32 %v1781, 0.0
        %v3120 = vmax.f32 %v1959, 0.0
        %v3121 = vmax.f32 %v2137, 0.0
        %v3122 = vmax.f32 %v2315, 0.0
        %v3123 = vmax.f32 %v2493, 0.0
        %v3124 = vmax.f32 %v2671, 0.0
        %v3125 = vmax.f32 %v2849, 0.0
        %v3126 = vmax.f32 %v1428, 0.0
        %v3127 = vmax.f32 %v1606, 0.0
        %v3128 = vmax.f32 %v1784, 0.0
        %v3129 = vmax.f32 %v1962, 0.0
        %v3130 = vmax.f32 %v2140, 0.0
        %v3131 = vmax.f32 %v2318, 0.0
        %v3132 = vmax.f32 %v2496, 0.0
        %v3133 = vmax.f32 %v2674, 0.0
        %v3134 = vmax.f32 %v2852, 0.0
        %v3135 = vmax.f32 %v1430, 0.0
        %v3136 = vmax.f32 %v1608, 0.0
        %v3137 = vmax.f32 %v1786, 0.0
        %v3138 = vmax.f32 %v1964, 0.0
        %v3139 = vmax.f32 %v2142, 0.0
        %v3140 = vmax.f32 %v2320, 0.0
        %v3141 = vmax.f32 %v2498, 0.0
        %v3142 = vmax.f32 %v2676, 0.0
        %v3143 = vmax.f32 %v2854, 0.0
        %v3144 = vpack.c.bf16 %v2865, %v2856
        %v3145 = vpack.c.bf16 %v2866, %v2857
        %v3146 = vpack.c.bf16 %v2867, %v2858
        %v3147 = vpack.c.bf16 %v2868, %v2859
        %v3148 = vpack.c.bf16 %v2869, %v2860
        %v3149 = vpack.c.bf16 %v2870, %v2861
        %v3150 = vpack.c.bf16 %v2871, %v2862
        %v3151 = vpack.c.bf16 %v2872, %v2863
        %v3152 = vpack.c.bf16 %v2873, %v2864
        %v3153 = vpack.c.bf16 %v2883, %v2874
        %v3154 = vpack.c.bf16 %v2884, %v2875
        %v3155 = vpack.c.bf16 %v2885, %v2876
        %v3156 = vpack.c.bf16 %v2886, %v2877
        %v3157 = vpack.c.bf16 %v2887, %v2878
        %v3158 = vpack.c.bf16 %v2888, %v2879
        %v3159 = vpack.c.bf16 %v2889, %v2880
        %v3160 = vpack.c.bf16 %v2890, %v2881
        %v3161 = vpack.c.bf16 %v2891, %v2882
        %v3162 = vpack.c.bf16 %v2901, %v2892
        %v3163 = vpack.c.bf16 %v2902, %v2893
        %v3164 = vpack.c.bf16 %v2903, %v2894
        %v3165 = vpack.c.bf16 %v2904, %v2895
        %v3166 = vpack.c.bf16 %v2905, %v2896
        %v3167 = vpack.c.bf16 %v2906, %v2897
        %v3168 = vpack.c.bf16 %v2907, %v2898
        %v3169 = vpack.c.bf16 %v2908, %v2899
        %v3170 = vpack.c.bf16 %v2909, %v2900
        %v3171 = vpack.c.bf16 %v2919, %v2910
        %v3172 = vpack.c.bf16 %v2920, %v2911
        %v3173 = vpack.c.bf16 %v2921, %v2912
        %v3174 = vpack.c.bf16 %v2922, %v2913
        %v3175 = vpack.c.bf16 %v2923, %v2914
        %v3176 = vpack.c.bf16 %v2924, %v2915
        %v3177 = vpack.c.bf16 %v2925, %v2916
        %v3178 = vpack.c.bf16 %v2926, %v2917
        %v3179 = vpack.c.bf16 %v2927, %v2918
        %v3180 = vpack.c.bf16 %v2937, %v2928
        %v3181 = vpack.c.bf16 %v2938, %v2929
        %v3182 = vpack.c.bf16 %v2939, %v2930
        %v3183 = vpack.c.bf16 %v2940, %v2931
        %v3184 = vpack.c.bf16 %v2941, %v2932
        %v3185 = vpack.c.bf16 %v2942, %v2933
        %v3186 = vpack.c.bf16 %v2943, %v2934
        %v3187 = vpack.c.bf16 %v2944, %v2935
        %v3188 = vpack.c.bf16 %v2945, %v2936
        %v3189 = vpack.c.bf16 %v2955, %v2946
        %v3190 = vpack.c.bf16 %v2956, %v2947
        %v3191 = vpack.c.bf16 %v2957, %v2948
        %v3192 = vpack.c.bf16 %v2958, %v2949
        %v3193 = vpack.c.bf16 %v2959, %v2950
        %v3194 = vpack.c.bf16 %v2960, %v2951
        %v3195 = vpack.c.bf16 %v2961, %v2952
        %v3196 = vpack.c.bf16 %v2962, %v2953
        %v3197 = vpack.c.bf16 %v2963, %v2954
        %v3198 = vpack.c.bf16 %v2973, %v2964
        %v3199 = vpack.c.bf16 %v2974, %v2965
        %v3200 = vpack.c.bf16 %v2975, %v2966
        %v3201 = vpack.c.bf16 %v2976, %v2967
        %v3202 = vpack.c.bf16 %v2977, %v2968
        %v3203 = vpack.c.bf16 %v2978, %v2969
        %v3204 = vpack.c.bf16 %v2979, %v2970
        %v3205 = vpack.c.bf16 %v2980, %v2971
        %v3206 = vpack.c.bf16 %v2981, %v2972
        %v3207 = vpack.c.bf16 %v2991, %v2982
        %v3208 = vpack.c.bf16 %v2992, %v2983
        %v3209 = vpack.c.bf16 %v2993, %v2984
        %v3210 = vpack.c.bf16 %v2994, %v2985
        %v3211 = vpack.c.bf16 %v2995, %v2986
        %v3212 = vpack.c.bf16 %v2996, %v2987
        %v3213 = vpack.c.bf16 %v2997, %v2988
        %v3214 = vpack.c.bf16 %v2998, %v2989
        %v3215 = vpack.c.bf16 %v2999, %v2990
        %v3216 = vpack.c.bf16 %v3009, %v3000
        %v3217 = vpack.c.bf16 %v3010, %v3001
        %v3218 = vpack.c.bf16 %v3011, %v3002
        %v3219 = vpack.c.bf16 %v3012, %v3003
        %v3220 = vpack.c.bf16 %v3013, %v3004
        %v3221 = vpack.c.bf16 %v3014, %v3005
        %v3222 = vpack.c.bf16 %v3015, %v3006
        %v3223 = vpack.c.bf16 %v3016, %v3007
        %v3224 = vpack.c.bf16 %v3017, %v3008
        %v3225 = vpack.c.bf16 %v3027, %v3018
        %v3226 = vpack.c.bf16 %v3028, %v3019
        %v3227 = vpack.c.bf16 %v3029, %v3020
        %v3228 = vpack.c.bf16 %v3030, %v3021
        %v3229 = vpack.c.bf16 %v3031, %v3022
        %v3230 = vpack.c.bf16 %v3032, %v3023
        %v3231 = vpack.c.bf16 %v3033, %v3024
        %v3232 = vpack.c.bf16 %v3034, %v3025
        %v3233 = vpack.c.bf16 %v3035, %v3026
        %v3234 = vpack.c.bf16 %v3045, %v3036
        %v3235 = vpack.c.bf16 %v3046, %v3037
        %v3236 = vpack.c.bf16 %v3047, %v3038
        %v3237 = vpack.c.bf16 %v3048, %v3039
        %v3238 = vpack.c.bf16 %v3049, %v3040
        %v3239 = vpack.c.bf16 %v3050, %v3041
        %v3240 = vpack.c.bf16 %v3051, %v3042
        %v3241 = vpack.c.bf16 %v3052, %v3043
        %v3242 = vpack.c.bf16 %v3053, %v3044
        %v3243 = vpack.c.bf16 %v3063, %v3054
        %v3244 = vpack.c.bf16 %v3064, %v3055
        %v3245 = vpack.c.bf16 %v3065, %v3056
        %v3246 = vpack.c.bf16 %v3066, %v3057
        %v3247 = vpack.c.bf16 %v3067, %v3058
        %v3248 = vpack.c.bf16 %v3068, %v3059
        %v3249 = vpack.c.bf16 %v3069, %v3060
        %v3250 = vpack.c.bf16 %v3070, %v3061
        %v3251 = vpack.c.bf16 %v3071, %v3062
        %v3252 = vpack.c.bf16 %v3081, %v3072
        %v3253 = vpack.c.bf16 %v3082, %v3073
        %v3254 = vpack.c.bf16 %v3083, %v3074
        %v3255 = vpack.c.bf16 %v3084, %v3075
        %v3256 = vpack.c.bf16 %v3085, %v3076
        %v3257 = vpack.c.bf16 %v3086, %v3077
        %v3258 = vpack.c.bf16 %v3087, %v3078
        %v3259 = vpack.c.bf16 %v3088, %v3079
        %v3260 = vpack.c.bf16 %v3089, %v3080
        %v3261 = vpack.c.bf16 %v3099, %v3090
        %v3262 = vpack.c.bf16 %v3100, %v3091
        %v3263 = vpack.c.bf16 %v3101, %v3092
        %v3264 = vpack.c.bf16 %v3102, %v3093
        %v3265 = vpack.c.bf16 %v3103, %v3094
        %v3266 = vpack.c.bf16 %v3104, %v3095
        %v3267 = vpack.c.bf16 %v3105, %v3096
        %v3268 = vpack.c.bf16 %v3106, %v3097
        %v3269 = vpack.c.bf16 %v3107, %v3098
        %v3270 = vpack.c.bf16 %v3117, %v3108
        %v3271 = vpack.c.bf16 %v3118, %v3109
        %v3272 = vpack.c.bf16 %v3119, %v3110
        %v3273 = vpack.c.bf16 %v3120, %v3111
        %v3274 = vpack.c.bf16 %v3121, %v3112
        %v3275 = vpack.c.bf16 %v3122, %v3113
        %v3276 = vpack.c.bf16 %v3123, %v3114
        %v3277 = vpack.c.bf16 %v3124, %v3115
        %v3278 = vpack.c.bf16 %v3125, %v3116
        %v3279 = vpack.c.bf16 %v3135, %v3126
        %v3280 = vpack.c.bf16 %v3136, %v3127
        %v3281 = vpack.c.bf16 %v3137, %v3128
        %v3282 = vpack.c.bf16 %v3138, %v3129
        %v3283 = vpack.c.bf16 %v3139, %v3130
        %v3284 = vpack.c.bf16 %v3140, %v3131
        %v3285 = vpack.c.bf16 %v3141, %v3132
        %v3286 = vpack.c.bf16 %v3142, %v3133
        %v3287 = vpack.c.bf16 %v3143, %v3134
        %v3288 = vld [vmem:[%s3] sm:$0xf]
        %v3289 = vld [vmem:[%s3 + $0x4] sm:$0xf]
        %v3290 = vld [vmem:[%s3 + $0x8] sm:$0xf]
        %v3291 = vld [vmem:[%s3 + $0xc] sm:$0xf]
        %v3292 = vld [vmem:[%s3 + $0x10] sm:$0xf]
        %v3293 = vld [vmem:[%s3 + $0x14] sm:$0xf]
        %v3294 = vld [vmem:[%s3 + $0x18] sm:$0xf]
        %v3295 = vld [vmem:[%s3 + $0x1c] sm:$0xf]
        %v3296 = vld [vmem:[%s3 + $0x20] sm:$0xf]
        %v3297 = vld [vmem:[%s3 + $0x24] sm:$0xf]
        %v3298 = vld [vmem:[%s3 + $0x28] sm:$0xf]
        %v3299 = vld [vmem:[%s3 + $0x2c] sm:$0xf]
        %v3300 = vld [vmem:[%s3 + $0x30] sm:$0xf]
        %v3301 = vld [vmem:[%s3 + $0x34] sm:$0xf]
        %v3302 = vld [vmem:[%s3 + $0x38] sm:$0xf]
        %v3303 = vld [vmem:[%s3 + $0x3c] sm:$0xf]
        %v3304 = vld [vmem:[%s3 + $0x40] sm:$0xf]
        %v3305 = vld [vmem:[%s3 + $0x44] sm:$0xf]
        %v3306 = vld [vmem:[%s3 + $0x48] sm:$0xf]
        %v3307 = vld [vmem:[%s3 + $0x4c] sm:$0xf]
        %v3308 = vld [vmem:[%s3 + $0x50] sm:$0xf]
        %v3309 = vld [vmem:[%s3 + $0x54] sm:$0xf]
        %v3310 = vld [vmem:[%s3 + $0x58] sm:$0xf]
        %v3311 = vld [vmem:[%s3 + $0x5c] sm:$0xf]
        %v3312 = vld [vmem:[%s3 + $0x60] sm:$0xf]
        %v3313 = vld [vmem:[%s3 + $0x64] sm:$0xf]
        %v3314 = vld [vmem:[%s3 + $0x68] sm:$0xf]
        %v3315 = vld [vmem:[%s3 + $0x6c] sm:$0xf]
        %v3316 = vld [vmem:[%s3 + $0x70] sm:$0xf]
        %v3317 = vld [vmem:[%s3 + $0x74] sm:$0xf]
        %v3318 = vld [vmem:[%s3 + $0x78] sm:$0xf]
        %v3319 = vld [vmem:[%s3 + $0x7c] sm:$0xf]
        %v3320 = vld [vmem:[%s3 + $0x80] sm:$0xf]
        %v3321 = vld [vmem:[%s3 + $0x84] sm:$0xf]
        %v3322 = vld [vmem:[%s3 + $0x88] sm:$0xf]
        %v3323 = vld [vmem:[%s3 + $0x8c] sm:$0xf]
        %v3324 = vld [vmem:[%s3 + $0x90] sm:$0xf]
        %v3325 = vld [vmem:[%s3 + $0x94] sm:$0xf]
        %v3326 = vld [vmem:[%s3 + $0x98] sm:$0xf]
        %v3327 = vld [vmem:[%s3 + $0x9c] sm:$0xf]
        %v3328 = vld [vmem:[%s3 + $0xa0] sm:$0xf]
        %v3329 = vld [vmem:[%s3 + $0xa4] sm:$0xf]
        %v3330 = vld [vmem:[%s3 + $0xa8] sm:$0xf]
        %v3331 = vld [vmem:[%s3 + $0xac] sm:$0xf]
        %v3332 = vld [vmem:[%s3 + $0xb0] sm:$0xf]
        %v3333 = vld [vmem:[%s3 + $0xb4] sm:$0xf]
        %v3334 = vld [vmem:[%s3 + $0xb8] sm:$0xf]
        %v3335 = vld [vmem:[%s3 + $0xbc] sm:$0xf]
        %v3336 = vld [vmem:[%s3 + $0xc0] sm:$0xf]
        %v3337 = vld [vmem:[%s3 + $0xc4] sm:$0xf]
        %v3338 = vld [vmem:[%s3 + $0xc8] sm:$0xf]
        %v3339 = vld [vmem:[%s3 + $0xcc] sm:$0xf]
        %v3340 = vld [vmem:[%s3 + $0xd0] sm:$0xf]
        %v3341 = vld [vmem:[%s3 + $0xd4] sm:$0xf]
        %v3342 = vld [vmem:[%s3 + $0xd8] sm:$0xf]
        %v3343 = vld [vmem:[%s3 + $0xdc] sm:$0xf]
        %v3344 = vld [vmem:[%s3 + $0xe0] sm:$0xf]
        %v3345 = vld [vmem:[%s3 + $0xe4] sm:$0xf]
        %v3346 = vld [vmem:[%s3 + $0xe8] sm:$0xf]
        %v3347 = vld [vmem:[%s3 + $0xec] sm:$0xf]
        %v3348 = vld [vmem:[%s3 + $0xf0] sm:$0xf]
        %v3349 = vld [vmem:[%s3 + $0xf4] sm:$0xf]
        %v3350 = vld [vmem:[%s3 + $0xf8] sm:$0xf]
        %v3351 = vld [vmem:[%s3 + $0xfc] sm:$0xf]
        %v3352 = vld [vmem:[%s3 + $0x100] sm:$0xf]
        %v3353 = vld [vmem:[%s3 + $0x104] sm:$0xf]
        %v3354 = vld [vmem:[%s3 + $0x108] sm:$0xf]
        %v3355 = vld [vmem:[%s3 + $0x10c] sm:$0xf]
        %v3356 = vld [vmem:[%s3 + $0x110] sm:$0xf]
        %v3357 = vld [vmem:[%s3 + $0x114] sm:$0xf]
        %v3358 = vld [vmem:[%s3 + $0x118] sm:$0xf]
        %v3359 = vld [vmem:[%s3 + $0x11c] sm:$0xf]
        %v3360 = vld [vmem:[%s3 + $0x120] sm:$0xf]
        %v3361 = vld [vmem:[%s3 + $0x124] sm:$0xf]
        %v3362 = vld [vmem:[%s3 + $0x128] sm:$0xf]
        %v3363 = vld [vmem:[%s3 + $0x12c] sm:$0xf]
        %v3364 = vld [vmem:[%s3 + $0x130] sm:$0xf]
        %v3365 = vld [vmem:[%s3 + $0x134] sm:$0xf]
        %v3366 = vld [vmem:[%s3 + $0x138] sm:$0xf]
        %v3367 = vld [vmem:[%s3 + $0x13c] sm:$0xf]
        %v3368 = vld [vmem:[%s3 + $0x140] sm:$0xf]
        %v3369 = vld [vmem:[%s3 + $0x144] sm:$0xf]
        %v3370 = vld [vmem:[%s3 + $0x148] sm:$0xf]
        %v3371 = vld [vmem:[%s3 + $0x14c] sm:$0xf]
        %v3372 = vld [vmem:[%s3 + $0x150] sm:$0xf]
        %v3373 = vld [vmem:[%s3 + $0x154] sm:$0xf]
        %v3374 = vld [vmem:[%s3 + $0x158] sm:$0xf]
        %v3375 = vld [vmem:[%s3 + $0x15c] sm:$0xf]
        %v3376 = vld [vmem:[%s3 + $0x160] sm:$0xf]
        %v3377 = vld [vmem:[%s3 + $0x164] sm:$0xf]
        %v3378 = vld [vmem:[%s3 + $0x168] sm:$0xf]
        %v3379 = vld [vmem:[%s3 + $0x16c] sm:$0xf]
        %v3380 = vld [vmem:[%s3 + $0x170] sm:$0xf]
        %v3381 = vld [vmem:[%s3 + $0x174] sm:$0xf]
        %v3382 = vld [vmem:[%s3 + $0x178] sm:$0xf]
        %v3383 = vld [vmem:[%s3 + $0x17c] sm:$0xf]
        %v3384 = vld [vmem:[%s3 + $0x180] sm:$0xf]
        %v3385 = vld [vmem:[%s3 + $0x184] sm:$0xf]
        %v3386 = vld [vmem:[%s3 + $0x188] sm:$0xf]
        %v3387 = vld [vmem:[%s3 + $0x18c] sm:$0xf]
        %v3388 = vld [vmem:[%s3 + $0x190] sm:$0xf]
        %v3389 = vld [vmem:[%s3 + $0x194] sm:$0xf]
        %v3390 = vld [vmem:[%s3 + $0x198] sm:$0xf]
        %v3391 = vld [vmem:[%s3 + $0x19c] sm:$0xf]
        %v3392 = vld [vmem:[%s3 + $0x1a0] sm:$0xf]
        %v3393 = vld [vmem:[%s3 + $0x1a4] sm:$0xf]
        %v3394 = vld [vmem:[%s3 + $0x1a8] sm:$0xf]
        %v3395 = vld [vmem:[%s3 + $0x1ac] sm:$0xf]
        %v3396 = vld [vmem:[%s3 + $0x1b0] sm:$0xf]
        %v3397 = vld [vmem:[%s3 + $0x1b4] sm:$0xf]
        %v3398 = vld [vmem:[%s3 + $0x1b8] sm:$0xf]
        %v3399 = vld [vmem:[%s3 + $0x1bc] sm:$0xf]
        %v3400 = vld [vmem:[%s3 + $0x1c0] sm:$0xf]
        %v3401 = vld [vmem:[%s3 + $0x1c4] sm:$0xf]
        %v3402 = vld [vmem:[%s3 + $0x1c8] sm:$0xf]
        %v3403 = vld [vmem:[%s3 + $0x1cc] sm:$0xf]
        %v3404 = vld [vmem:[%s3 + $0x1d0] sm:$0xf]
        %v3405 = vld [vmem:[%s3 + $0x1d4] sm:$0xf]
        %v3406 = vld [vmem:[%s3 + $0x1d8] sm:$0xf]
        %v3407 = vld [vmem:[%s3 + $0x1dc] sm:$0xf]
        %v3408 = vld [vmem:[%s3 + $0x1e0] sm:$0xf]
        %v3409 = vld [vmem:[%s3 + $0x1e4] sm:$0xf]
        %v3410 = vld [vmem:[%s3 + $0x1e8] sm:$0xf]
        %v3411 = vld [vmem:[%s3 + $0x1ec] sm:$0xf]
        %v3412 = vld [vmem:[%s3 + $0x1f0] sm:$0xf]
        %v3413 = vld [vmem:[%s3 + $0x1f4] sm:$0xf]
        %v3414 = vld [vmem:[%s3 + $0x1f8] sm:$0xf]
        %v3415 = vld [vmem:[%s3 + $0x1fc] sm:$0xf]
        %v3416 = vld [vmem:[%s3 + $0x200] sm:$0xf]
        %v3417 = vld [vmem:[%s3 + $0x204] sm:$0xf]
        %v3418 = vld [vmem:[%s3 + $0x208] sm:$0xf]
        %v3419 = vld [vmem:[%s3 + $0x20c] sm:$0xf]
        %v3420 = vld [vmem:[%s3 + $0x210] sm:$0xf]
        %v3421 = vld [vmem:[%s3 + $0x214] sm:$0xf]
        %v3422 = vld [vmem:[%s3 + $0x218] sm:$0xf]
        %v3423 = vld [vmem:[%s3 + $0x21c] sm:$0xf]
        %v3424 = vld [vmem:[%s3 + $0x220] sm:$0xf]
        %v3425 = vld [vmem:[%s3 + $0x224] sm:$0xf]
        %v3426 = vld [vmem:[%s3 + $0x228] sm:$0xf]
        %v3427 = vld [vmem:[%s3 + $0x22c] sm:$0xf]
        %v3428 = vld [vmem:[%s3 + $0x230] sm:$0xf]
        %v3429 = vld [vmem:[%s3 + $0x234] sm:$0xf]
        %v3430 = vld [vmem:[%s3 + $0x238] sm:$0xf]
        %v3431 = vld [vmem:[%s3 + $0x23c] sm:$0xf]
        %v3432 = vld [vmem:[%s4] sm:$0x1]
        %v3434 = vperm.slane %v3432, 0
        %v3580 = vunpack.c.l.b16 %v3288
        %v3581 = vunpack.c.l.b16 %v3289
        %v3582 = vunpack.c.l.b16 %v3290
        %v3583 = vunpack.c.l.b16 %v3291
        %v3584 = vunpack.c.l.b16 %v3292
        %v3585 = vunpack.c.l.b16 %v3293
        %v3586 = vunpack.c.l.b16 %v3294
        %v3587 = vunpack.c.l.b16 %v3295
        %v3588 = vunpack.c.l.b16 %v3296
        %v3589 = vunpack.c.l.b16 %v3297
        %v3590 = vunpack.c.l.b16 %v3298
        %v3591 = vunpack.c.l.b16 %v3299
        %v3592 = vunpack.c.l.b16 %v3300
        %v3593 = vunpack.c.l.b16 %v3301
        %v3594 = vunpack.c.l.b16 %v3302
        %v3595 = vunpack.c.l.b16 %v3303
        %v3596 = vunpack.c.l.b16 %v3304
        %v3597 = vunpack.c.l.b16 %v3305
        %v3598 = vunpack.c.l.b16 %v3306
        %v3599 = vunpack.c.l.b16 %v3307
        %v3600 = vunpack.c.l.b16 %v3308
        %v3601 = vunpack.c.l.b16 %v3309
        %v3602 = vunpack.c.l.b16 %v3310
        %v3603 = vunpack.c.l.b16 %v3311
        %v3604 = vunpack.c.l.b16 %v3312
        %v3605 = vunpack.c.l.b16 %v3313
        %v3606 = vunpack.c.l.b16 %v3314
        %v3607 = vunpack.c.l.b16 %v3315
        %v3608 = vunpack.c.l.b16 %v3316
        %v3609 = vunpack.c.l.b16 %v3317
        %v3610 = vunpack.c.l.b16 %v3318
        %v3611 = vunpack.c.l.b16 %v3319
        %v3612 = vunpack.c.l.b16 %v3320
        %v3613 = vunpack.c.l.b16 %v3321
        %v3614 = vunpack.c.l.b16 %v3322
        %v3615 = vunpack.c.l.b16 %v3323
        %v3616 = vunpack.c.l.b16 %v3324
        %v3617 = vunpack.c.l.b16 %v3325
        %v3618 = vunpack.c.l.b16 %v3326
        %v3619 = vunpack.c.l.b16 %v3327
        %v3620 = vunpack.c.l.b16 %v3328
        %v3621 = vunpack.c.l.b16 %v3329
        %v3622 = vunpack.c.l.b16 %v3330
        %v3623 = vunpack.c.l.b16 %v3331
        %v3624 = vunpack.c.l.b16 %v3332
        %v3625 = vunpack.c.l.b16 %v3333
        %v3626 = vunpack.c.l.b16 %v3334
        %v3627 = vunpack.c.l.b16 %v3335
        %v3628 = vunpack.c.l.b16 %v3336
        %v3629 = vunpack.c.l.b16 %v3337
        %v3630 = vunpack.c.l.b16 %v3338
        %v3631 = vunpack.c.l.b16 %v3339
        %v3632 = vunpack.c.l.b16 %v3340
        %v3633 = vunpack.c.l.b16 %v3341
        %v3634 = vunpack.c.l.b16 %v3342
        %v3635 = vunpack.c.l.b16 %v3343
        %v3636 = vunpack.c.l.b16 %v3344
        %v3637 = vunpack.c.l.b16 %v3345
        %v3638 = vunpack.c.l.b16 %v3346
        %v3639 = vunpack.c.l.b16 %v3347
        %v3640 = vunpack.c.l.b16 %v3348
        %v3641 = vunpack.c.l.b16 %v3349
        %v3642 = vunpack.c.l.b16 %v3350
        %v3643 = vunpack.c.l.b16 %v3351
        %v3644 = vunpack.c.l.b16 %v3352
        %v3645 = vunpack.c.l.b16 %v3353
        %v3646 = vunpack.c.l.b16 %v3354
        %v3647 = vunpack.c.l.b16 %v3355
        %v3648 = vunpack.c.l.b16 %v3356
        %v3649 = vunpack.c.l.b16 %v3357
        %v3650 = vunpack.c.l.b16 %v3358
        %v3651 = vunpack.c.l.b16 %v3359
        %v3652 = vunpack.c.l.b16 %v3360
        %v3653 = vunpack.c.l.b16 %v3361
        %v3654 = vunpack.c.l.b16 %v3362
        %v3655 = vunpack.c.l.b16 %v3363
        %v3656 = vunpack.c.l.b16 %v3364
        %v3657 = vunpack.c.l.b16 %v3365
        %v3658 = vunpack.c.l.b16 %v3366
        %v3659 = vunpack.c.l.b16 %v3367
        %v3660 = vunpack.c.l.b16 %v3368
        %v3661 = vunpack.c.l.b16 %v3369
        %v3662 = vunpack.c.l.b16 %v3370
        %v3663 = vunpack.c.l.b16 %v3371
        %v3664 = vunpack.c.l.b16 %v3372
        %v3665 = vunpack.c.l.b16 %v3373
        %v3666 = vunpack.c.l.b16 %v3374
        %v3667 = vunpack.c.l.b16 %v3375
        %v3668 = vunpack.c.l.b16 %v3376
        %v3669 = vunpack.c.l.b16 %v3377
        %v3670 = vunpack.c.l.b16 %v3378
        %v3671 = vunpack.c.l.b16 %v3379
        %v3672 = vunpack.c.l.b16 %v3380
        %v3673 = vunpack.c.l.b16 %v3381
        %v3674 = vunpack.c.l.b16 %v3382
        %v3675 = vunpack.c.l.b16 %v3383
        %v3676 = vunpack.c.l.b16 %v3384
        %v3677 = vunpack.c.l.b16 %v3385
        %v3678 = vunpack.c.l.b16 %v3386
        %v3679 = vunpack.c.l.b16 %v3387
        %v3680 = vunpack.c.l.b16 %v3388
        %v3681 = vunpack.c.l.b16 %v3389
        %v3682 = vunpack.c.l.b16 %v3390
        %v3683 = vunpack.c.l.b16 %v3391
        %v3684 = vunpack.c.l.b16 %v3392
        %v3685 = vunpack.c.l.b16 %v3393
        %v3686 = vunpack.c.l.b16 %v3394
        %v3687 = vunpack.c.l.b16 %v3395
        %v3688 = vunpack.c.l.b16 %v3396
        %v3689 = vunpack.c.l.b16 %v3397
        %v3690 = vunpack.c.l.b16 %v3398
        %v3691 = vunpack.c.l.b16 %v3399
        %v3692 = vunpack.c.l.b16 %v3400
        %v3693 = vunpack.c.l.b16 %v3401
        %v3694 = vunpack.c.l.b16 %v3402
        %v3695 = vunpack.c.l.b16 %v3403
        %v3696 = vunpack.c.l.b16 %v3404
        %v3697 = vunpack.c.l.b16 %v3405
        %v3698 = vunpack.c.l.b16 %v3406
        %v3699 = vunpack.c.l.b16 %v3407
        %v3700 = vunpack.c.l.b16 %v3408
        %v3701 = vunpack.c.l.b16 %v3409
        %v3702 = vunpack.c.l.b16 %v3410
        %v3703 = vunpack.c.l.b16 %v3411
        %v3704 = vunpack.c.l.b16 %v3412
        %v3705 = vunpack.c.l.b16 %v3413
        %v3706 = vunpack.c.l.b16 %v3414
        %v3707 = vunpack.c.l.b16 %v3415
        %v3708 = vunpack.c.l.b16 %v3416
        %v3709 = vunpack.c.l.b16 %v3417
        %v3710 = vunpack.c.l.b16 %v3418
        %v3711 = vunpack.c.l.b16 %v3419
        %v3712 = vunpack.c.l.b16 %v3420
        %v3713 = vunpack.c.l.b16 %v3421
        %v3714 = vunpack.c.l.b16 %v3422
        %v3715 = vunpack.c.l.b16 %v3423
        %v3716 = vunpack.c.l.b16 %v3424
        %v3717 = vunpack.c.l.b16 %v3425
        %v3718 = vunpack.c.l.b16 %v3426
        %v3719 = vunpack.c.l.b16 %v3427
        %v3720 = vunpack.c.l.b16 %v3428
        %v3721 = vunpack.c.l.b16 %v3429
        %v3722 = vunpack.c.l.b16 %v3430
        %v3723 = vunpack.c.l.b16 %v3431
        %v3724 = vpack.c.b16 %v3581, %v3580
        %v3725 = vpack.c.b16 %v3583, %v3582
        %v3726 = vpack.c.b16 %v3585, %v3584
        %v3727 = vpack.c.b16 %v3587, %v3586
        %v3728 = vpack.c.b16 %v3589, %v3588
        %v3729 = vpack.c.b16 %v3591, %v3590
        %v3730 = vpack.c.b16 %v3593, %v3592
        %v3731 = vpack.c.b16 %v3595, %v3594
        %v3732 = vpack.c.b16 %v3597, %v3596
        %v3733 = vpack.c.b16 %v3599, %v3598
        %v3734 = vpack.c.b16 %v3601, %v3600
        %v3735 = vpack.c.b16 %v3603, %v3602
        %v3736 = vpack.c.b16 %v3605, %v3604
        %v3737 = vpack.c.b16 %v3607, %v3606
        %v3738 = vpack.c.b16 %v3609, %v3608
        %v3739 = vpack.c.b16 %v3611, %v3610
        %v3740 = vpack.c.b16 %v3613, %v3612
        %v3741 = vpack.c.b16 %v3615, %v3614
        %v3742 = vpack.c.b16 %v3617, %v3616
        %v3743 = vpack.c.b16 %v3619, %v3618
        %v3744 = vpack.c.b16 %v3621, %v3620
        %v3745 = vpack.c.b16 %v3623, %v3622
        %v3746 = vpack.c.b16 %v3625, %v3624
        %v3747 = vpack.c.b16 %v3627, %v3626
        %v3748 = vpack.c.b16 %v3629, %v3628
        %v3749 = vpack.c.b16 %v3631, %v3630
        %v3750 = vpack.c.b16 %v3633, %v3632
        %v3751 = vpack.c.b16 %v3635, %v3634
        %v3752 = vpack.c.b16 %v3637, %v3636
        %v3753 = vpack.c.b16 %v3639, %v3638
        %v3754 = vpack.c.b16 %v3641, %v3640
        %v3755 = vpack.c.b16 %v3643, %v3642
        %v3756 = vpack.c.b16 %v3645, %v3644
        %v3757 = vpack.c.b16 %v3647, %v3646
        %v3758 = vpack.c.b16 %v3649, %v3648
        %v3759 = vpack.c.b16 %v3651, %v3650
        %v3760 = vpack.c.b16 %v3653, %v3652
        %v3761 = vpack.c.b16 %v3655, %v3654
        %v3762 = vpack.c.b16 %v3657, %v3656
        %v3763 = vpack.c.b16 %v3659, %v3658
        %v3764 = vpack.c.b16 %v3661, %v3660
        %v3765 = vpack.c.b16 %v3663, %v3662
        %v3766 = vpack.c.b16 %v3665, %v3664
        %v3767 = vpack.c.b16 %v3667, %v3666
        %v3768 = vpack.c.b16 %v3669, %v3668
        %v3769 = vpack.c.b16 %v3671, %v3670
        %v3770 = vpack.c.b16 %v3673, %v3672
        %v3771 = vpack.c.b16 %v3675, %v3674
        %v3772 = vpack.c.b16 %v3677, %v3676
        %v3773 = vpack.c.b16 %v3679, %v3678
        %v3774 = vpack.c.b16 %v3681, %v3680
        %v3775 = vpack.c.b16 %v3683, %v3682
        %v3776 = vpack.c.b16 %v3685, %v3684
        %v3777 = vpack.c.b16 %v3687, %v3686
        %v3778 = vpack.c.b16 %v3689, %v3688
        %v3779 = vpack.c.b16 %v3691, %v3690
        %v3780 = vpack.c.b16 %v3693, %v3692
        %v3781 = vpack.c.b16 %v3695, %v3694
        %v3782 = vpack.c.b16 %v3697, %v3696
        %v3783 = vpack.c.b16 %v3699, %v3698
        %v3784 = vpack.c.b16 %v3701, %v3700
        %v3785 = vpack.c.b16 %v3703, %v3702
        %v3786 = vpack.c.b16 %v3705, %v3704
        %v3787 = vpack.c.b16 %v3707, %v3706
        %v3788 = vpack.c.b16 %v3709, %v3708
        %v3789 = vpack.c.b16 %v3711, %v3710
        %v3790 = vpack.c.b16 %v3713, %v3712
        %v3791 = vpack.c.b16 %v3715, %v3714
        %v3792 = vpack.c.b16 %v3717, %v3716
        %v3793 = vpack.c.b16 %v3719, %v3718
        %v3794 = vpack.c.b16 %v3721, %v3720
        %v3795 = vpack.c.b16 %v3723, %v3722
        %3868 = vmatpush.bf16.msra.mxu0 %v3731
        %3869 = vmatpush.bf16.msra.mxu0 %v3730
        %3870 = vmatpush.bf16.msra.mxu0 %v3729
        %3871 = vmatpush.bf16.msra.mxu0 %v3728
        %3872 = vmatpush.bf16.msra.mxu0 %v3727
        %3873 = vmatpush.bf16.msra.mxu0 %v3726
        %3874 = vmatpush.bf16.msra.mxu0 %v3725
        %3875 = vmatpush.bf16.msra.mxu0 %v3724
        %3876 = vmatmul.bf16.gmra.mxu0 %v3144
        %v3877 = vpop.f32.mrf.mxu0
        %v3878 = vadd.f32 %v3434, %v3877
        %v3879 = vpop.f32.mrf.mxu0
        %v3880 = vadd.f32 %v3434, %v3879
        %3881 = vmatmul.bf16.gmra.mxu0 %v3153
        %v3882 = vpop.f32.mrf.mxu0
        %v3883 = vadd.f32 %v3434, %v3882
        %v3884 = vpop.f32.mrf.mxu0
        %v3885 = vadd.f32 %v3434, %v3884
        %3886 = vmatmul.bf16.gmra.mxu0 %v3162
        %v3887 = vpop.f32.mrf.mxu0
        %v3888 = vadd.f32 %v3434, %v3887
        %v3889 = vpop.f32.mrf.mxu0
        %v3890 = vadd.f32 %v3434, %v3889
        %3891 = vmatmul.bf16.gmra.mxu0 %v3171
        %v3892 = vpop.f32.mrf.mxu0
        %v3893 = vadd.f32 %v3434, %v3892
        %v3894 = vpop.f32.mrf.mxu0
        %v3895 = vadd.f32 %v3434, %v3894
        %3896 = vmatmul.bf16.gmra.mxu0 %v3180
        %v3897 = vpop.f32.mrf.mxu0
        %v3898 = vadd.f32 %v3434, %v3897
        %v3899 = vpop.f32.mrf.mxu0
        %v3900 = vadd.f32 %v3434, %v3899
        %3901 = vmatmul.bf16.gmra.mxu0 %v3189
        %v3902 = vpop.f32.mrf.mxu0
        %v3903 = vadd.f32 %v3434, %v3902
        %v3904 = vpop.f32.mrf.mxu0
        %v3905 = vadd.f32 %v3434, %v3904
        %3906 = vmatmul.bf16.gmra.mxu0 %v3198
        %v3907 = vpop.f32.mrf.mxu0
        %v3908 = vadd.f32 %v3434, %v3907
        %v3909 = vpop.f32.mrf.mxu0
        %v3910 = vadd.f32 %v3434, %v3909
        %3911 = vmatmul.bf16.gmra.mxu0 %v3207
        %v3912 = vpop.f32.mrf.mxu0
        %v3913 = vadd.f32 %v3434, %v3912
        %v3914 = vpop.f32.mrf.mxu0
        %v3915 = vadd.f32 %v3434, %v3914
        %3916 = vmatmul.bf16.gmra.mxu0 %v3216
        %v3917 = vpop.f32.mrf.mxu0
        %v3918 = vadd.f32 %v3434, %v3917
        %v3919 = vpop.f32.mrf.mxu0
        %v3920 = vadd.f32 %v3434, %v3919
        %3921 = vmatmul.bf16.gmra.mxu0 %v3225
        %v3922 = vpop.f32.mrf.mxu0
        %v3923 = vadd.f32 %v3434, %v3922
        %v3924 = vpop.f32.mrf.mxu0
        %v3925 = vadd.f32 %v3434, %v3924
        %3926 = vmatmul.bf16.gmra.mxu0 %v3234
        %v3927 = vpop.f32.mrf.mxu0
        %v3928 = vadd.f32 %v3434, %v3927
        %v3929 = vpop.f32.mrf.mxu0
        %v3930 = vadd.f32 %v3434, %v3929
        %3931 = vmatmul.bf16.gmra.mxu0 %v3243
        %v3932 = vpop.f32.mrf.mxu0
        %v3933 = vadd.f32 %v3434, %v3932
        %v3934 = vpop.f32.mrf.mxu0
        %v3935 = vadd.f32 %v3434, %v3934
        %3936 = vmatmul.bf16.gmra.mxu0 %v3252
        %v3937 = vpop.f32.mrf.mxu0
        %v3938 = vadd.f32 %v3434, %v3937
        %v3939 = vpop.f32.mrf.mxu0
        %v3940 = vadd.f32 %v3434, %v3939
        %3941 = vmatmul.bf16.gmra.mxu0 %v3261
        %v3942 = vpop.f32.mrf.mxu0
        %v3943 = vadd.f32 %v3434, %v3942
        %v3944 = vpop.f32.mrf.mxu0
        %v3945 = vadd.f32 %v3434, %v3944
        %3946 = vmatmul.bf16.gmra.mxu0 %v3270
        %v3947 = vpop.f32.mrf.mxu0
        %v3948 = vadd.f32 %v3434, %v3947
        %v3949 = vpop.f32.mrf.mxu0
        %v3950 = vadd.f32 %v3434, %v3949
        %3951 = vmatmul.bf16.gmra.mxu0 %v3279
        %v3952 = vpop.f32.mrf.mxu0
        %v3953 = vadd.f32 %v3434, %v3952
        %v3954 = vpop.f32.mrf.mxu0
        %v3955 = vadd.f32 %v3434, %v3954
        %3956 = vdwg.mxu0
        %3957 = vmatpush.bf16.msra.mxu0 %v3739
        %3958 = vmatpush.bf16.msra.mxu0 %v3738
        %3959 = vmatpush.bf16.msra.mxu0 %v3737
        %3960 = vmatpush.bf16.msra.mxu0 %v3736
        %3961 = vmatpush.bf16.msra.mxu0 %v3735
        %3962 = vmatpush.bf16.msra.mxu0 %v3734
        %3963 = vmatpush.bf16.msra.mxu0 %v3733
        %3964 = vmatpush.bf16.msra.mxu0 %v3732
        %3965 = vmatmul.bf16.gmra.mxu0 %v3145
        %v3966 = vpop.f32.mrf.mxu0
        %v3967 = vadd.f32 %v3878, %v3966
        %v3968 = vpop.f32.mrf.mxu0
        %v3969 = vadd.f32 %v3880, %v3968
        %3970 = vmatmul.bf16.gmra.mxu0 %v3154
        %v3971 = vpop.f32.mrf.mxu0
        %v3972 = vadd.f32 %v3883, %v3971
        %v3973 = vpop.f32.mrf.mxu0
        %v3974 = vadd.f32 %v3885, %v3973
        %3975 = vmatmul.bf16.gmra.mxu0 %v3163
        %v3976 = vpop.f32.mrf.mxu0
        %v3977 = vadd.f32 %v3888, %v3976
        %v3978 = vpop.f32.mrf.mxu0
        %v3979 = vadd.f32 %v3890, %v3978
        %3980 = vmatmul.bf16.gmra.mxu0 %v3172
        %v3981 = vpop.f32.mrf.mxu0
        %v3982 = vadd.f32 %v3893, %v3981
        %v3983 = vpop.f32.mrf.mxu0
        %v3984 = vadd.f32 %v3895, %v3983
        %3985 = vmatmul.bf16.gmra.mxu0 %v3181
        %v3986 = vpop.f32.mrf.mxu0
        %v3987 = vadd.f32 %v3898, %v3986
        %v3988 = vpop.f32.mrf.mxu0
        %v3989 = vadd.f32 %v3900, %v3988
        %3990 = vmatmul.bf16.gmra.mxu0 %v3190
        %v3991 = vpop.f32.mrf.mxu0
        %v3992 = vadd.f32 %v3903, %v3991
        %v3993 = vpop.f32.mrf.mxu0
        %v3994 = vadd.f32 %v3905, %v3993
        %3995 = vmatmul.bf16.gmra.mxu0 %v3199
        %v3996 = vpop.f32.mrf.mxu0
        %v3997 = vadd.f32 %v3908, %v3996
        %v3998 = vpop.f32.mrf.mxu0
        %v3999 = vadd.f32 %v3910, %v3998
        %4000 = vmatmul.bf16.gmra.mxu0 %v3208
        %v4001 = vpop.f32.mrf.mxu0
        %v4002 = vadd.f32 %v3913, %v4001
        %v4003 = vpop.f32.mrf.mxu0
        %v4004 = vadd.f32 %v3915, %v4003
        %4005 = vmatmul.bf16.gmra.mxu0 %v3217
        %v4006 = vpop.f32.mrf.mxu0
        %v4007 = vadd.f32 %v3918, %v4006
        %v4008 = vpop.f32.mrf.mxu0
        %v4009 = vadd.f32 %v3920, %v4008
        %4010 = vmatmul.bf16.gmra.mxu0 %v3226
        %v4011 = vpop.f32.mrf.mxu0
        %v4012 = vadd.f32 %v3923, %v4011
        %v4013 = vpop.f32.mrf.mxu0
        %v4014 = vadd.f32 %v3925, %v4013
        %4015 = vmatmul.bf16.gmra.mxu0 %v3235
        %v4016 = vpop.f32.mrf.mxu0
        %v4017 = vadd.f32 %v3928, %v4016
        %v4018 = vpop.f32.mrf.mxu0
        %v4019 = vadd.f32 %v3930, %v4018
        %4020 = vmatmul.bf16.gmra.mxu0 %v3244
        %v4021 = vpop.f32.mrf.mxu0
        %v4022 = vadd.f32 %v3933, %v4021
        %v4023 = vpop.f32.mrf.mxu0
        %v4024 = vadd.f32 %v3935, %v4023
        %4025 = vmatmul.bf16.gmra.mxu0 %v3253
        %v4026 = vpop.f32.mrf.mxu0
        %v4027 = vadd.f32 %v3938, %v4026
        %v4028 = vpop.f32.mrf.mxu0
        %v4029 = vadd.f32 %v3940, %v4028
        %4030 = vmatmul.bf16.gmra.mxu0 %v3262
        %v4031 = vpop.f32.mrf.mxu0
        %v4032 = vadd.f32 %v3943, %v4031
        %v4033 = vpop.f32.mrf.mxu0
        %v4034 = vadd.f32 %v3945, %v4033
        %4035 = vmatmul.bf16.gmra.mxu0 %v3271
        %v4036 = vpop.f32.mrf.mxu0
        %v4037 = vadd.f32 %v3948, %v4036
        %v4038 = vpop.f32.mrf.mxu0
        %v4039 = vadd.f32 %v3950, %v4038
        %4040 = vmatmul.bf16.gmra.mxu0 %v3280
        %v4041 = vpop.f32.mrf.mxu0
        %v4042 = vadd.f32 %v3953, %v4041
        %v4043 = vpop.f32.mrf.mxu0
        %v4044 = vadd.f32 %v3955, %v4043
        %4045 = vdwg.mxu0
        %4046 = vmatpush.bf16.msra.mxu0 %v3747
        %4047 = vmatpush.bf16.msra.mxu0 %v3746
        %4048 = vmatpush.bf16.msra.mxu0 %v3745
        %4049 = vmatpush.bf16.msra.mxu0 %v3744
        %4050 = vmatpush.bf16.msra.mxu0 %v3743
        %4051 = vmatpush.bf16.msra.mxu0 %v3742
        %4052 = vmatpush.bf16.msra.mxu0 %v3741
        %4053 = vmatpush.bf16.msra.mxu0 %v3740
        %4054 = vmatmul.bf16.gmra.mxu0 %v3146
        %v4055 = vpop.f32.mrf.mxu0
        %v4056 = vadd.f32 %v3967, %v4055
        %v4057 = vpop.f32.mrf.mxu0
        %v4058 = vadd.f32 %v3969, %v4057
        %4059 = vmatmul.bf16.gmra.mxu0 %v3155
        %v4060 = vpop.f32.mrf.mxu0
        %v4061 = vadd.f32 %v3972, %v4060
        %v4062 = vpop.f32.mrf.mxu0
        %v4063 = vadd.f32 %v3974, %v4062
        %4064 = vmatmul.bf16.gmra.mxu0 %v3164
        %v4065 = vpop.f32.mrf.mxu0
        %v4066 = vadd.f32 %v3977, %v4065
        %v4067 = vpop.f32.mrf.mxu0
        %v4068 = vadd.f32 %v3979, %v4067
        %4069 = vmatmul.bf16.gmra.mxu0 %v3173
        %v4070 = vpop.f32.mrf.mxu0
        %v4071 = vadd.f32 %v3982, %v4070
        %v4072 = vpop.f32.mrf.mxu0
        %v4073 = vadd.f32 %v3984, %v4072
        %4074 = vmatmul.bf16.gmra.mxu0 %v3182
        %v4075 = vpop.f32.mrf.mxu0
        %v4076 = vadd.f32 %v3987, %v4075
        %v4077 = vpop.f32.mrf.mxu0
        %v4078 = vadd.f32 %v3989, %v4077
        %4079 = vmatmul.bf16.gmra.mxu0 %v3191
        %v4080 = vpop.f32.mrf.mxu0
        %v4081 = vadd.f32 %v3992, %v4080
        %v4082 = vpop.f32.mrf.mxu0
        %v4083 = vadd.f32 %v3994, %v4082
        %4084 = vmatmul.bf16.gmra.mxu0 %v3200
        %v4085 = vpop.f32.mrf.mxu0
        %v4086 = vadd.f32 %v3997, %v4085
        %v4087 = vpop.f32.mrf.mxu0
        %v4088 = vadd.f32 %v3999, %v4087
        %4089 = vmatmul.bf16.gmra.mxu0 %v3209
        %v4090 = vpop.f32.mrf.mxu0
        %v4091 = vadd.f32 %v4002, %v4090
        %v4092 = vpop.f32.mrf.mxu0
        %v4093 = vadd.f32 %v4004, %v4092
        %4094 = vmatmul.bf16.gmra.mxu0 %v3218
        %v4095 = vpop.f32.mrf.mxu0
        %v4096 = vadd.f32 %v4007, %v4095
        %v4097 = vpop.f32.mrf.mxu0
        %v4098 = vadd.f32 %v4009, %v4097
        %4099 = vmatmul.bf16.gmra.mxu0 %v3227
        %v4100 = vpop.f32.mrf.mxu0
        %v4101 = vadd.f32 %v4012, %v4100
        %v4102 = vpop.f32.mrf.mxu0
        %v4103 = vadd.f32 %v4014, %v4102
        %4104 = vmatmul.bf16.gmra.mxu0 %v3236
        %v4105 = vpop.f32.mrf.mxu0
        %v4106 = vadd.f32 %v4017, %v4105
        %v4107 = vpop.f32.mrf.mxu0
        %v4108 = vadd.f32 %v4019, %v4107
        %4109 = vmatmul.bf16.gmra.mxu0 %v3245
        %v4110 = vpop.f32.mrf.mxu0
        %v4111 = vadd.f32 %v4022, %v4110
        %v4112 = vpop.f32.mrf.mxu0
        %v4113 = vadd.f32 %v4024, %v4112
        %4114 = vmatmul.bf16.gmra.mxu0 %v3254
        %v4115 = vpop.f32.mrf.mxu0
        %v4116 = vadd.f32 %v4027, %v4115
        %v4117 = vpop.f32.mrf.mxu0
        %v4118 = vadd.f32 %v4029, %v4117
        %4119 = vmatmul.bf16.gmra.mxu0 %v3263
        %v4120 = vpop.f32.mrf.mxu0
        %v4121 = vadd.f32 %v4032, %v4120
        %v4122 = vpop.f32.mrf.mxu0
        %v4123 = vadd.f32 %v4034, %v4122
        %4124 = vmatmul.bf16.gmra.mxu0 %v3272
        %v4125 = vpop.f32.mrf.mxu0
        %v4126 = vadd.f32 %v4037, %v4125
        %v4127 = vpop.f32.mrf.mxu0
        %v4128 = vadd.f32 %v4039, %v4127
        %4129 = vmatmul.bf16.gmra.mxu0 %v3281
        %v4130 = vpop.f32.mrf.mxu0
        %v4131 = vadd.f32 %v4042, %v4130
        %v4132 = vpop.f32.mrf.mxu0
        %v4133 = vadd.f32 %v4044, %v4132
        %4134 = vdwg.mxu0
        %4135 = vmatpush.bf16.msra.mxu0 %v3755
        %4136 = vmatpush.bf16.msra.mxu0 %v3754
        %4137 = vmatpush.bf16.msra.mxu0 %v3753
        %4138 = vmatpush.bf16.msra.mxu0 %v3752
        %4139 = vmatpush.bf16.msra.mxu0 %v3751
        %4140 = vmatpush.bf16.msra.mxu0 %v3750
        %4141 = vmatpush.bf16.msra.mxu0 %v3749
        %4142 = vmatpush.bf16.msra.mxu0 %v3748
        %4143 = vmatmul.bf16.gmra.mxu0 %v3147
        %v4144 = vpop.f32.mrf.mxu0
        %v4145 = vadd.f32 %v4056, %v4144
        %v4146 = vpop.f32.mrf.mxu0
        %v4147 = vadd.f32 %v4058, %v4146
        %4148 = vmatmul.bf16.gmra.mxu0 %v3156
        %v4149 = vpop.f32.mrf.mxu0
        %v4150 = vadd.f32 %v4061, %v4149
        %v4151 = vpop.f32.mrf.mxu0
        %v4152 = vadd.f32 %v4063, %v4151
        %4153 = vmatmul.bf16.gmra.mxu0 %v3165
        %v4154 = vpop.f32.mrf.mxu0
        %v4155 = vadd.f32 %v4066, %v4154
        %v4156 = vpop.f32.mrf.mxu0
        %v4157 = vadd.f32 %v4068, %v4156
        %4158 = vmatmul.bf16.gmra.mxu0 %v3174
        %v4159 = vpop.f32.mrf.mxu0
        %v4160 = vadd.f32 %v4071, %v4159
        %v4161 = vpop.f32.mrf.mxu0
        %v4162 = vadd.f32 %v4073, %v4161
        %4163 = vmatmul.bf16.gmra.mxu0 %v3183
        %v4164 = vpop.f32.mrf.mxu0
        %v4165 = vadd.f32 %v4076, %v4164
        %v4166 = vpop.f32.mrf.mxu0
        %v4167 = vadd.f32 %v4078, %v4166
        %4168 = vmatmul.bf16.gmra.mxu0 %v3192
        %v4169 = vpop.f32.mrf.mxu0
        %v4170 = vadd.f32 %v4081, %v4169
        %v4171 = vpop.f32.mrf.mxu0
        %v4172 = vadd.f32 %v4083, %v4171
        %4173 = vmatmul.bf16.gmra.mxu0 %v3201
        %v4174 = vpop.f32.mrf.mxu0
        %v4175 = vadd.f32 %v4086, %v4174
        %v4176 = vpop.f32.mrf.mxu0
        %v4177 = vadd.f32 %v4088, %v4176
        %4178 = vmatmul.bf16.gmra.mxu0 %v3210
        %v4179 = vpop.f32.mrf.mxu0
        %v4180 = vadd.f32 %v4091, %v4179
        %v4181 = vpop.f32.mrf.mxu0
        %v4182 = vadd.f32 %v4093, %v4181
        %4183 = vmatmul.bf16.gmra.mxu0 %v3219
        %v4184 = vpop.f32.mrf.mxu0
        %v4185 = vadd.f32 %v4096, %v4184
        %v4186 = vpop.f32.mrf.mxu0
        %v4187 = vadd.f32 %v4098, %v4186
        %4188 = vmatmul.bf16.gmra.mxu0 %v3228
        %v4189 = vpop.f32.mrf.mxu0
        %v4190 = vadd.f32 %v4101, %v4189
        %v4191 = vpop.f32.mrf.mxu0
        %v4192 = vadd.f32 %v4103, %v4191
        %4193 = vmatmul.bf16.gmra.mxu0 %v3237
        %v4194 = vpop.f32.mrf.mxu0
        %v4195 = vadd.f32 %v4106, %v4194
        %v4196 = vpop.f32.mrf.mxu0
        %v4197 = vadd.f32 %v4108, %v4196
        %4198 = vmatmul.bf16.gmra.mxu0 %v3246
        %v4199 = vpop.f32.mrf.mxu0
        %v4200 = vadd.f32 %v4111, %v4199
        %v4201 = vpop.f32.mrf.mxu0
        %v4202 = vadd.f32 %v4113, %v4201
        %4203 = vmatmul.bf16.gmra.mxu0 %v3255
        %v4204 = vpop.f32.mrf.mxu0
        %v4205 = vadd.f32 %v4116, %v4204
        %v4206 = vpop.f32.mrf.mxu0
        %v4207 = vadd.f32 %v4118, %v4206
        %4208 = vmatmul.bf16.gmra.mxu0 %v3264
        %v4209 = vpop.f32.mrf.mxu0
        %v4210 = vadd.f32 %v4121, %v4209
        %v4211 = vpop.f32.mrf.mxu0
        %v4212 = vadd.f32 %v4123, %v4211
        %4213 = vmatmul.bf16.gmra.mxu0 %v3273
        %v4214 = vpop.f32.mrf.mxu0
        %v4215 = vadd.f32 %v4126, %v4214
        %v4216 = vpop.f32.mrf.mxu0
        %v4217 = vadd.f32 %v4128, %v4216
        %4218 = vmatmul.bf16.gmra.mxu0 %v3282
        %v4219 = vpop.f32.mrf.mxu0
        %v4220 = vadd.f32 %v4131, %v4219
        %v4221 = vpop.f32.mrf.mxu0
        %v4222 = vadd.f32 %v4133, %v4221
        %4223 = vdwg.mxu0
        %4224 = vmatpush.bf16.msra.mxu0 %v3763
        %4225 = vmatpush.bf16.msra.mxu0 %v3762
        %4226 = vmatpush.bf16.msra.mxu0 %v3761
        %4227 = vmatpush.bf16.msra.mxu0 %v3760
        %4228 = vmatpush.bf16.msra.mxu0 %v3759
        %4229 = vmatpush.bf16.msra.mxu0 %v3758
        %4230 = vmatpush.bf16.msra.mxu0 %v3757
        %4231 = vmatpush.bf16.msra.mxu0 %v3756
        %4232 = vmatmul.bf16.gmra.mxu0 %v3148
        %v4233 = vpop.f32.mrf.mxu0
        %v4234 = vadd.f32 %v4145, %v4233
        %v4235 = vpop.f32.mrf.mxu0
        %v4236 = vadd.f32 %v4147, %v4235
        %4237 = vmatmul.bf16.gmra.mxu0 %v3157
        %v4238 = vpop.f32.mrf.mxu0
        %v4239 = vadd.f32 %v4150, %v4238
        %v4240 = vpop.f32.mrf.mxu0
        %v4241 = vadd.f32 %v4152, %v4240
        %4242 = vmatmul.bf16.gmra.mxu0 %v3166
        %v4243 = vpop.f32.mrf.mxu0
        %v4244 = vadd.f32 %v4155, %v4243
        %v4245 = vpop.f32.mrf.mxu0
        %v4246 = vadd.f32 %v4157, %v4245
        %4247 = vmatmul.bf16.gmra.mxu0 %v3175
        %v4248 = vpop.f32.mrf.mxu0
        %v4249 = vadd.f32 %v4160, %v4248
        %v4250 = vpop.f32.mrf.mxu0
        %v4251 = vadd.f32 %v4162, %v4250
        %4252 = vmatmul.bf16.gmra.mxu0 %v3184
        %v4253 = vpop.f32.mrf.mxu0
        %v4254 = vadd.f32 %v4165, %v4253
        %v4255 = vpop.f32.mrf.mxu0
        %v4256 = vadd.f32 %v4167, %v4255
        %4257 = vmatmul.bf16.gmra.mxu0 %v3193
        %v4258 = vpop.f32.mrf.mxu0
        %v4259 = vadd.f32 %v4170, %v4258
        %v4260 = vpop.f32.mrf.mxu0
        %v4261 = vadd.f32 %v4172, %v4260
        %4262 = vmatmul.bf16.gmra.mxu0 %v3202
        %v4263 = vpop.f32.mrf.mxu0
        %v4264 = vadd.f32 %v4175, %v4263
        %v4265 = vpop.f32.mrf.mxu0
        %v4266 = vadd.f32 %v4177, %v4265
        %4267 = vmatmul.bf16.gmra.mxu0 %v3211
        %v4268 = vpop.f32.mrf.mxu0
        %v4269 = vadd.f32 %v4180, %v4268
        %v4270 = vpop.f32.mrf.mxu0
        %v4271 = vadd.f32 %v4182, %v4270
        %4272 = vmatmul.bf16.gmra.mxu0 %v3220
        %v4273 = vpop.f32.mrf.mxu0
        %v4274 = vadd.f32 %v4185, %v4273
        %v4275 = vpop.f32.mrf.mxu0
        %v4276 = vadd.f32 %v4187, %v4275
        %4277 = vmatmul.bf16.gmra.mxu0 %v3229
        %v4278 = vpop.f32.mrf.mxu0
        %v4279 = vadd.f32 %v4190, %v4278
        %v4280 = vpop.f32.mrf.mxu0
        %v4281 = vadd.f32 %v4192, %v4280
        %4282 = vmatmul.bf16.gmra.mxu0 %v3238
        %v4283 = vpop.f32.mrf.mxu0
        %v4284 = vadd.f32 %v4195, %v4283
        %v4285 = vpop.f32.mrf.mxu0
        %v4286 = vadd.f32 %v4197, %v4285
        %4287 = vmatmul.bf16.gmra.mxu0 %v3247
        %v4288 = vpop.f32.mrf.mxu0
        %v4289 = vadd.f32 %v4200, %v4288
        %v4290 = vpop.f32.mrf.mxu0
        %v4291 = vadd.f32 %v4202, %v4290
        %4292 = vmatmul.bf16.gmra.mxu0 %v3256
        %v4293 = vpop.f32.mrf.mxu0
        %v4294 = vadd.f32 %v4205, %v4293
        %v4295 = vpop.f32.mrf.mxu0
        %v4296 = vadd.f32 %v4207, %v4295
        %4297 = vmatmul.bf16.gmra.mxu0 %v3265
        %v4298 = vpop.f32.mrf.mxu0
        %v4299 = vadd.f32 %v4210, %v4298
        %v4300 = vpop.f32.mrf.mxu0
        %v4301 = vadd.f32 %v4212, %v4300
        %4302 = vmatmul.bf16.gmra.mxu0 %v3274
        %v4303 = vpop.f32.mrf.mxu0
        %v4304 = vadd.f32 %v4215, %v4303
        %v4305 = vpop.f32.mrf.mxu0
        %v4306 = vadd.f32 %v4217, %v4305
        %4307 = vmatmul.bf16.gmra.mxu0 %v3283
        %v4308 = vpop.f32.mrf.mxu0
        %v4309 = vadd.f32 %v4220, %v4308
        %v4310 = vpop.f32.mrf.mxu0
        %v4311 = vadd.f32 %v4222, %v4310
        %4312 = vdwg.mxu0
        %4313 = vmatpush.bf16.msra.mxu0 %v3771
        %4314 = vmatpush.bf16.msra.mxu0 %v3770
        %4315 = vmatpush.bf16.msra.mxu0 %v3769
        %4316 = vmatpush.bf16.msra.mxu0 %v3768
        %4317 = vmatpush.bf16.msra.mxu0 %v3767
        %4318 = vmatpush.bf16.msra.mxu0 %v3766
        %4319 = vmatpush.bf16.msra.mxu0 %v3765
        %4320 = vmatpush.bf16.msra.mxu0 %v3764
        %4321 = vmatmul.bf16.gmra.mxu0 %v3149
        %v4322 = vpop.f32.mrf.mxu0
        %v4323 = vadd.f32 %v4234, %v4322
        %v4324 = vpop.f32.mrf.mxu0
        %v4325 = vadd.f32 %v4236, %v4324
        %4326 = vmatmul.bf16.gmra.mxu0 %v3158
        %v4327 = vpop.f32.mrf.mxu0
        %v4328 = vadd.f32 %v4239, %v4327
        %v4329 = vpop.f32.mrf.mxu0
        %v4330 = vadd.f32 %v4241, %v4329
        %4331 = vmatmul.bf16.gmra.mxu0 %v3167
        %v4332 = vpop.f32.mrf.mxu0
        %v4333 = vadd.f32 %v4244, %v4332
        %v4334 = vpop.f32.mrf.mxu0
        %v4335 = vadd.f32 %v4246, %v4334
        %4336 = vmatmul.bf16.gmra.mxu0 %v3176
        %v4337 = vpop.f32.mrf.mxu0
        %v4338 = vadd.f32 %v4249, %v4337
        %v4339 = vpop.f32.mrf.mxu0
        %v4340 = vadd.f32 %v4251, %v4339
        %4341 = vmatmul.bf16.gmra.mxu0 %v3185
        %v4342 = vpop.f32.mrf.mxu0
        %v4343 = vadd.f32 %v4254, %v4342
        %v4344 = vpop.f32.mrf.mxu0
        %v4345 = vadd.f32 %v4256, %v4344
        %4346 = vmatmul.bf16.gmra.mxu0 %v3194
        %v4347 = vpop.f32.mrf.mxu0
        %v4348 = vadd.f32 %v4259, %v4347
        %v4349 = vpop.f32.mrf.mxu0
        %v4350 = vadd.f32 %v4261, %v4349
        %4351 = vmatmul.bf16.gmra.mxu0 %v3203
        %v4352 = vpop.f32.mrf.mxu0
        %v4353 = vadd.f32 %v4264, %v4352
        %v4354 = vpop.f32.mrf.mxu0
        %v4355 = vadd.f32 %v4266, %v4354
        %4356 = vmatmul.bf16.gmra.mxu0 %v3212
        %v4357 = vpop.f32.mrf.mxu0
        %v4358 = vadd.f32 %v4269, %v4357
        %v4359 = vpop.f32.mrf.mxu0
        %v4360 = vadd.f32 %v4271, %v4359
        %4361 = vmatmul.bf16.gmra.mxu0 %v3221
        %v4362 = vpop.f32.mrf.mxu0
        %v4363 = vadd.f32 %v4274, %v4362
        %v4364 = vpop.f32.mrf.mxu0
        %v4365 = vadd.f32 %v4276, %v4364
        %4366 = vmatmul.bf16.gmra.mxu0 %v3230
        %v4367 = vpop.f32.mrf.mxu0
        %v4368 = vadd.f32 %v4279, %v4367
        %v4369 = vpop.f32.mrf.mxu0
        %v4370 = vadd.f32 %v4281, %v4369
        %4371 = vmatmul.bf16.gmra.mxu0 %v3239
        %v4372 = vpop.f32.mrf.mxu0
        %v4373 = vadd.f32 %v4284, %v4372
        %v4374 = vpop.f32.mrf.mxu0
        %v4375 = vadd.f32 %v4286, %v4374
        %4376 = vmatmul.bf16.gmra.mxu0 %v3248
        %v4377 = vpop.f32.mrf.mxu0
        %v4378 = vadd.f32 %v4289, %v4377
        %v4379 = vpop.f32.mrf.mxu0
        %v4380 = vadd.f32 %v4291, %v4379
        %4381 = vmatmul.bf16.gmra.mxu0 %v3257
        %v4382 = vpop.f32.mrf.mxu0
        %v4383 = vadd.f32 %v4294, %v4382
        %v4384 = vpop.f32.mrf.mxu0
        %v4385 = vadd.f32 %v4296, %v4384
        %4386 = vmatmul.bf16.gmra.mxu0 %v3266
        %v4387 = vpop.f32.mrf.mxu0
        %v4388 = vadd.f32 %v4299, %v4387
        %v4389 = vpop.f32.mrf.mxu0
        %v4390 = vadd.f32 %v4301, %v4389
        %4391 = vmatmul.bf16.gmra.mxu0 %v3275
        %v4392 = vpop.f32.mrf.mxu0
        %v4393 = vadd.f32 %v4304, %v4392
        %v4394 = vpop.f32.mrf.mxu0
        %v4395 = vadd.f32 %v4306, %v4394
        %4396 = vmatmul.bf16.gmra.mxu0 %v3284
        %v4397 = vpop.f32.mrf.mxu0
        %v4398 = vadd.f32 %v4309, %v4397
        %v4399 = vpop.f32.mrf.mxu0
        %v4400 = vadd.f32 %v4311, %v4399
        %4401 = vdwg.mxu0
        %4402 = vmatpush.bf16.msra.mxu0 %v3779
        %4403 = vmatpush.bf16.msra.mxu0 %v3778
        %4404 = vmatpush.bf16.msra.mxu0 %v3777
        %4405 = vmatpush.bf16.msra.mxu0 %v3776
        %4406 = vmatpush.bf16.msra.mxu0 %v3775
        %4407 = vmatpush.bf16.msra.mxu0 %v3774
        %4408 = vmatpush.bf16.msra.mxu0 %v3773
        %4409 = vmatpush.bf16.msra.mxu0 %v3772
        %4410 = vmatmul.bf16.gmra.mxu0 %v3150
        %v4411 = vpop.f32.mrf.mxu0
        %v4412 = vadd.f32 %v4323, %v4411
        %v4413 = vpop.f32.mrf.mxu0
        %v4414 = vadd.f32 %v4325, %v4413
        %4415 = vmatmul.bf16.gmra.mxu0 %v3159
        %v4416 = vpop.f32.mrf.mxu0
        %v4417 = vadd.f32 %v4328, %v4416
        %v4418 = vpop.f32.mrf.mxu0
        %v4419 = vadd.f32 %v4330, %v4418
        %4420 = vmatmul.bf16.gmra.mxu0 %v3168
        %v4421 = vpop.f32.mrf.mxu0
        %v4422 = vadd.f32 %v4333, %v4421
        %v4423 = vpop.f32.mrf.mxu0
        %v4424 = vadd.f32 %v4335, %v4423
        %4425 = vmatmul.bf16.gmra.mxu0 %v3177
        %v4426 = vpop.f32.mrf.mxu0
        %v4427 = vadd.f32 %v4338, %v4426
        %v4428 = vpop.f32.mrf.mxu0
        %v4429 = vadd.f32 %v4340, %v4428
        %4430 = vmatmul.bf16.gmra.mxu0 %v3186
        %v4431 = vpop.f32.mrf.mxu0
        %v4432 = vadd.f32 %v4343, %v4431
        %v4433 = vpop.f32.mrf.mxu0
        %v4434 = vadd.f32 %v4345, %v4433
        %4435 = vmatmul.bf16.gmra.mxu0 %v3195
        %v4436 = vpop.f32.mrf.mxu0
        %v4437 = vadd.f32 %v4348, %v4436
        %v4438 = vpop.f32.mrf.mxu0
        %v4439 = vadd.f32 %v4350, %v4438
        %4440 = vmatmul.bf16.gmra.mxu0 %v3204
        %v4441 = vpop.f32.mrf.mxu0
        %v4442 = vadd.f32 %v4353, %v4441
        %v4443 = vpop.f32.mrf.mxu0
        %v4444 = vadd.f32 %v4355, %v4443
        %4445 = vmatmul.bf16.gmra.mxu0 %v3213
        %v4446 = vpop.f32.mrf.mxu0
        %v4447 = vadd.f32 %v4358, %v4446
        %v4448 = vpop.f32.mrf.mxu0
        %v4449 = vadd.f32 %v4360, %v4448
        %4450 = vmatmul.bf16.gmra.mxu0 %v3222
        %v4451 = vpop.f32.mrf.mxu0
        %v4452 = vadd.f32 %v4363, %v4451
        %v4453 = vpop.f32.mrf.mxu0
        %v4454 = vadd.f32 %v4365, %v4453
        %4455 = vmatmul.bf16.gmra.mxu0 %v3231
        %v4456 = vpop.f32.mrf.mxu0
        %v4457 = vadd.f32 %v4368, %v4456
        %v4458 = vpop.f32.mrf.mxu0
        %v4459 = vadd.f32 %v4370, %v4458
        %4460 = vmatmul.bf16.gmra.mxu0 %v3240
        %v4461 = vpop.f32.mrf.mxu0
        %v4462 = vadd.f32 %v4373, %v4461
        %v4463 = vpop.f32.mrf.mxu0
        %v4464 = vadd.f32 %v4375, %v4463
        %4465 = vmatmul.bf16.gmra.mxu0 %v3249
        %v4466 = vpop.f32.mrf.mxu0
        %v4467 = vadd.f32 %v4378, %v4466
        %v4468 = vpop.f32.mrf.mxu0
        %v4469 = vadd.f32 %v4380, %v4468
        %4470 = vmatmul.bf16.gmra.mxu0 %v3258
        %v4471 = vpop.f32.mrf.mxu0
        %v4472 = vadd.f32 %v4383, %v4471
        %v4473 = vpop.f32.mrf.mxu0
        %v4474 = vadd.f32 %v4385, %v4473
        %4475 = vmatmul.bf16.gmra.mxu0 %v3267
        %v4476 = vpop.f32.mrf.mxu0
        %v4477 = vadd.f32 %v4388, %v4476
        %v4478 = vpop.f32.mrf.mxu0
        %v4479 = vadd.f32 %v4390, %v4478
        %4480 = vmatmul.bf16.gmra.mxu0 %v3276
        %v4481 = vpop.f32.mrf.mxu0
        %v4482 = vadd.f32 %v4393, %v4481
        %v4483 = vpop.f32.mrf.mxu0
        %v4484 = vadd.f32 %v4395, %v4483
        %4485 = vmatmul.bf16.gmra.mxu0 %v3285
        %v4486 = vpop.f32.mrf.mxu0
        %v4487 = vadd.f32 %v4398, %v4486
        %v4488 = vpop.f32.mrf.mxu0
        %v4489 = vadd.f32 %v4400, %v4488
        %4490 = vdwg.mxu0
        %4491 = vmatpush.bf16.msra.mxu0 %v3787
        %4492 = vmatpush.bf16.msra.mxu0 %v3786
        %4493 = vmatpush.bf16.msra.mxu0 %v3785
        %4494 = vmatpush.bf16.msra.mxu0 %v3784
        %4495 = vmatpush.bf16.msra.mxu0 %v3783
        %4496 = vmatpush.bf16.msra.mxu0 %v3782
        %4497 = vmatpush.bf16.msra.mxu0 %v3781
        %4498 = vmatpush.bf16.msra.mxu0 %v3780
        %4499 = vmatmul.bf16.gmra.mxu0 %v3151
        %v4500 = vpop.f32.mrf.mxu0
        %v4501 = vadd.f32 %v4412, %v4500
        %v4502 = vpop.f32.mrf.mxu0
        %v4503 = vadd.f32 %v4414, %v4502
        %4504 = vmatmul.bf16.gmra.mxu0 %v3160
        %v4505 = vpop.f32.mrf.mxu0
        %v4506 = vadd.f32 %v4417, %v4505
        %v4507 = vpop.f32.mrf.mxu0
        %v4508 = vadd.f32 %v4419, %v4507
        %4509 = vmatmul.bf16.gmra.mxu0 %v3169
        %v4510 = vpop.f32.mrf.mxu0
        %v4511 = vadd.f32 %v4422, %v4510
        %v4512 = vpop.f32.mrf.mxu0
        %v4513 = vadd.f32 %v4424, %v4512
        %4514 = vmatmul.bf16.gmra.mxu0 %v3178
        %v4515 = vpop.f32.mrf.mxu0
        %v4516 = vadd.f32 %v4427, %v4515
        %v4517 = vpop.f32.mrf.mxu0
        %v4518 = vadd.f32 %v4429, %v4517
        %4519 = vmatmul.bf16.gmra.mxu0 %v3187
        %v4520 = vpop.f32.mrf.mxu0
        %v4521 = vadd.f32 %v4432, %v4520
        %v4522 = vpop.f32.mrf.mxu0
        %v4523 = vadd.f32 %v4434, %v4522
        %4524 = vmatmul.bf16.gmra.mxu0 %v3196
        %v4525 = vpop.f32.mrf.mxu0
        %v4526 = vadd.f32 %v4437, %v4525
        %v4527 = vpop.f32.mrf.mxu0
        %v4528 = vadd.f32 %v4439, %v4527
        %4529 = vmatmul.bf16.gmra.mxu0 %v3205
        %v4530 = vpop.f32.mrf.mxu0
        %v4531 = vadd.f32 %v4442, %v4530
        %v4532 = vpop.f32.mrf.mxu0
        %v4533 = vadd.f32 %v4444, %v4532
        %4534 = vmatmul.bf16.gmra.mxu0 %v3214
        %v4535 = vpop.f32.mrf.mxu0
        %v4536 = vadd.f32 %v4447, %v4535
        %v4537 = vpop.f32.mrf.mxu0
        %v4538 = vadd.f32 %v4449, %v4537
        %4539 = vmatmul.bf16.gmra.mxu0 %v3223
        %v4540 = vpop.f32.mrf.mxu0
        %v4541 = vadd.f32 %v4452, %v4540
        %v4542 = vpop.f32.mrf.mxu0
        %v4543 = vadd.f32 %v4454, %v4542
        %4544 = vmatmul.bf16.gmra.mxu0 %v3232
        %v4545 = vpop.f32.mrf.mxu0
        %v4546 = vadd.f32 %v4457, %v4545
        %v4547 = vpop.f32.mrf.mxu0
        %v4548 = vadd.f32 %v4459, %v4547
        %4549 = vmatmul.bf16.gmra.mxu0 %v3241
        %v4550 = vpop.f32.mrf.mxu0
        %v4551 = vadd.f32 %v4462, %v4550
        %v4552 = vpop.f32.mrf.mxu0
        %v4553 = vadd.f32 %v4464, %v4552
        %4554 = vmatmul.bf16.gmra.mxu0 %v3250
        %v4555 = vpop.f32.mrf.mxu0
        %v4556 = vadd.f32 %v4467, %v4555
        %v4557 = vpop.f32.mrf.mxu0
        %v4558 = vadd.f32 %v4469, %v4557
        %4559 = vmatmul.bf16.gmra.mxu0 %v3259
        %v4560 = vpop.f32.mrf.mxu0
        %v4561 = vadd.f32 %v4472, %v4560
        %v4562 = vpop.f32.mrf.mxu0
        %v4563 = vadd.f32 %v4474, %v4562
        %4564 = vmatmul.bf16.gmra.mxu0 %v3268
        %v4565 = vpop.f32.mrf.mxu0
        %v4566 = vadd.f32 %v4477, %v4565
        %v4567 = vpop.f32.mrf.mxu0
        %v4568 = vadd.f32 %v4479, %v4567
        %4569 = vmatmul.bf16.gmra.mxu0 %v3277
        %v4570 = vpop.f32.mrf.mxu0
        %v4571 = vadd.f32 %v4482, %v4570
        %v4572 = vpop.f32.mrf.mxu0
        %v4573 = vadd.f32 %v4484, %v4572
        %4574 = vmatmul.bf16.gmra.mxu0 %v3286
        %v4575 = vpop.f32.mrf.mxu0
        %v4576 = vadd.f32 %v4487, %v4575
        %v4577 = vpop.f32.mrf.mxu0
        %v4578 = vadd.f32 %v4489, %v4577
        %4579 = vdwg.mxu0
        %4580 = vmatpush.bf16.msra.mxu0 %v3795
        %4581 = vmatpush.bf16.msra.mxu0 %v3794
        %4582 = vmatpush.bf16.msra.mxu0 %v3793
        %4583 = vmatpush.bf16.msra.mxu0 %v3792
        %4584 = vmatpush.bf16.msra.mxu0 %v3791
        %4585 = vmatpush.bf16.msra.mxu0 %v3790
        %4586 = vmatpush.bf16.msra.mxu0 %v3789
        %4587 = vmatpush.bf16.msra.mxu0 %v3788
        %4588 = vmatmul.bf16.gmra.mxu0 %v3152
        %v4589 = vpop.f32.mrf.mxu0
        %v4590 = vadd.f32 %v4501, %v4589
        %v4591 = vpop.f32.mrf.mxu0
        %v4592 = vadd.f32 %v4503, %v4591
        %4593 = vmatmul.bf16.gmra.mxu0 %v3161
        %v4594 = vpop.f32.mrf.mxu0
        %v4595 = vadd.f32 %v4506, %v4594
        %v4596 = vpop.f32.mrf.mxu0
        %v4597 = vadd.f32 %v4508, %v4596
        %4598 = vmatmul.bf16.gmra.mxu0 %v3170
        %v4599 = vpop.f32.mrf.mxu0
        %v4600 = vadd.f32 %v4511, %v4599
        %v4601 = vpop.f32.mrf.mxu0
        %v4602 = vadd.f32 %v4513, %v4601
        %4603 = vmatmul.bf16.gmra.mxu0 %v3179
        %v4604 = vpop.f32.mrf.mxu0
        %v4605 = vadd.f32 %v4516, %v4604
        %v4606 = vpop.f32.mrf.mxu0
        %v4607 = vadd.f32 %v4518, %v4606
        %4608 = vmatmul.bf16.gmra.mxu0 %v3188
        %v4609 = vpop.f32.mrf.mxu0
        %v4610 = vadd.f32 %v4521, %v4609
        %v4611 = vpop.f32.mrf.mxu0
        %v4612 = vadd.f32 %v4523, %v4611
        %4613 = vmatmul.bf16.gmra.mxu0 %v3197
        %v4614 = vpop.f32.mrf.mxu0
        %v4615 = vadd.f32 %v4526, %v4614
        %v4616 = vpop.f32.mrf.mxu0
        %v4617 = vadd.f32 %v4528, %v4616
        %4618 = vmatmul.bf16.gmra.mxu0 %v3206
        %v4619 = vpop.f32.mrf.mxu0
        %v4620 = vadd.f32 %v4531, %v4619
        %v4621 = vpop.f32.mrf.mxu0
        %v4622 = vadd.f32 %v4533, %v4621
        %4623 = vmatmul.bf16.gmra.mxu0 %v3215
        %v4624 = vpop.f32.mrf.mxu0
        %v4625 = vadd.f32 %v4536, %v4624
        %v4626 = vpop.f32.mrf.mxu0
        %v4627 = vadd.f32 %v4538, %v4626
        %4628 = vmatmul.bf16.gmra.mxu0 %v3224
        %v4629 = vpop.f32.mrf.mxu0
        %v4630 = vadd.f32 %v4541, %v4629
        %v4631 = vpop.f32.mrf.mxu0
        %v4632 = vadd.f32 %v4543, %v4631
        %4633 = vmatmul.bf16.gmra.mxu0 %v3233
        %v4634 = vpop.f32.mrf.mxu0
        %v4635 = vadd.f32 %v4546, %v4634
        %v4636 = vpop.f32.mrf.mxu0
        %v4637 = vadd.f32 %v4548, %v4636
        %4638 = vmatmul.bf16.gmra.mxu0 %v3242
        %v4639 = vpop.f32.mrf.mxu0
        %v4640 = vadd.f32 %v4551, %v4639
        %v4641 = vpop.f32.mrf.mxu0
        %v4642 = vadd.f32 %v4553, %v4641
        %4643 = vmatmul.bf16.gmra.mxu0 %v3251
        %v4644 = vpop.f32.mrf.mxu0
        %v4645 = vadd.f32 %v4556, %v4644
        %v4646 = vpop.f32.mrf.mxu0
        %v4647 = vadd.f32 %v4558, %v4646
        %4648 = vmatmul.bf16.gmra.mxu0 %v3260
        %v4649 = vpop.f32.mrf.mxu0
        %v4650 = vadd.f32 %v4561, %v4649
        %v4651 = vpop.f32.mrf.mxu0
        %v4652 = vadd.f32 %v4563, %v4651
        %4653 = vmatmul.bf16.gmra.mxu0 %v3269
        %v4654 = vpop.f32.mrf.mxu0
        %v4655 = vadd.f32 %v4566, %v4654
        %v4656 = vpop.f32.mrf.mxu0
        %v4657 = vadd.f32 %v4568, %v4656
        %4658 = vmatmul.bf16.gmra.mxu0 %v3278
        %v4659 = vpop.f32.mrf.mxu0
        %v4660 = vadd.f32 %v4571, %v4659
        %v4661 = vpop.f32.mrf.mxu0
        %v4662 = vadd.f32 %v4573, %v4661
        %4663 = vmatmul.bf16.gmra.mxu0 %v3287
        %v4664 = vpop.f32.mrf.mxu0
        %v4665 = vadd.f32 %v4576, %v4664
        %v4666 = vpop.f32.mrf.mxu0
        %v4667 = vadd.f32 %v4578, %v4666
        %4668 = vdwg.mxu0
        %v4669 = vmax.f32 %v4590, 0.0
        %v4670 = vmax.f32 %v4592, 0.0
        %v4671 = vmax.f32 %v4595, 0.0
        %v4672 = vmax.f32 %v4597, 0.0
        %v4673 = vmax.f32 %v4600, 0.0
        %v4674 = vmax.f32 %v4602, 0.0
        %v4675 = vmax.f32 %v4605, 0.0
        %v4676 = vmax.f32 %v4607, 0.0
        %v4677 = vmax.f32 %v4610, 0.0
        %v4678 = vmax.f32 %v4612, 0.0
        %v4679 = vmax.f32 %v4615, 0.0
        %v4680 = vmax.f32 %v4617, 0.0
        %v4681 = vmax.f32 %v4620, 0.0
        %v4682 = vmax.f32 %v4622, 0.0
        %v4683 = vmax.f32 %v4625, 0.0
        %v4684 = vmax.f32 %v4627, 0.0
        %v4685 = vmax.f32 %v4630, 0.0
        %v4686 = vmax.f32 %v4632, 0.0
        %v4687 = vmax.f32 %v4635, 0.0
        %v4688 = vmax.f32 %v4637, 0.0
        %v4689 = vmax.f32 %v4640, 0.0
        %v4690 = vmax.f32 %v4642, 0.0
        %v4691 = vmax.f32 %v4645, 0.0
        %v4692 = vmax.f32 %v4647, 0.0
        %v4693 = vmax.f32 %v4650, 0.0
        %v4694 = vmax.f32 %v4652, 0.0
        %v4695 = vmax.f32 %v4655, 0.0
        %v4696 = vmax.f32 %v4657, 0.0
        %v4697 = vmax.f32 %v4660, 0.0
        %v4698 = vmax.f32 %v4662, 0.0
        %v4699 = vmax.f32 %v4665, 0.0
        %v4700 = vmax.f32 %v4667, 0.0
        %v4701 = vpack.c.bf16 %v4670, %v4669
        %v4702 = vpack.c.bf16 %v4672, %v4671
        %v4703 = vpack.c.bf16 %v4674, %v4673
        %v4704 = vpack.c.bf16 %v4676, %v4675
        %v4705 = vpack.c.bf16 %v4678, %v4677
        %v4706 = vpack.c.bf16 %v4680, %v4679
        %v4707 = vpack.c.bf16 %v4682, %v4681
        %v4708 = vpack.c.bf16 %v4684, %v4683
        %v4709 = vpack.c.bf16 %v4686, %v4685
        %v4710 = vpack.c.bf16 %v4688, %v4687
        %v4711 = vpack.c.bf16 %v4690, %v4689
        %v4712 = vpack.c.bf16 %v4692, %v4691
        %v4713 = vpack.c.bf16 %v4694, %v4693
        %v4714 = vpack.c.bf16 %v4696, %v4695
        %v4715 = vpack.c.bf16 %v4698, %v4697
        %v4716 = vpack.c.bf16 %v4700, %v4699
        %v4717 = vld [vmem:[%s5] sm:$0xf]
        %v4718 = vld [vmem:[%s5 + $0x4] sm:$0xf]
        %v4719 = vld [vmem:[%s5 + $0x8] sm:$0xf]
        %v4720 = vld [vmem:[%s5 + $0xc] sm:$0xf]
        %v4721 = vld [vmem:[%s5 + $0x10] sm:$0xf]
        %v4722 = vld [vmem:[%s5 + $0x14] sm:$0xf]
        %v4723 = vld [vmem:[%s5 + $0x18] sm:$0xf]
        %v4724 = vld [vmem:[%s5 + $0x1c] sm:$0xf]
        %v4725 = vld [vmem:[%s5 + $0x20] sm:$0xf]
        %v4726 = vld [vmem:[%s5 + $0x24] sm:$0xf]
        %v4727 = vld [vmem:[%s5 + $0x28] sm:$0xf]
        %v4728 = vld [vmem:[%s5 + $0x2c] sm:$0xf]
        %v4729 = vld [vmem:[%s5 + $0x30] sm:$0xf]
        %v4730 = vld [vmem:[%s5 + $0x34] sm:$0xf]
        %v4731 = vld [vmem:[%s5 + $0x38] sm:$0xf]
        %v4732 = vld [vmem:[%s5 + $0x3c] sm:$0xf]
        %v4733 = vld [vmem:[%s6] sm:$0x1]
        %v4735 = vperm.slane %v4733, 0
        %v4753 = vunpack.c.l.b16 %v4717
        %v4754 = vunpack.c.l.b16 %v4718
        %v4755 = vunpack.c.l.b16 %v4719
        %v4756 = vunpack.c.l.b16 %v4720
        %v4757 = vunpack.c.l.b16 %v4721
        %v4758 = vunpack.c.l.b16 %v4722
        %v4759 = vunpack.c.l.b16 %v4723
        %v4760 = vunpack.c.l.b16 %v4724
        %v4761 = vunpack.c.l.b16 %v4725
        %v4762 = vunpack.c.l.b16 %v4726
        %v4763 = vunpack.c.l.b16 %v4727
        %v4764 = vunpack.c.l.b16 %v4728
        %v4765 = vunpack.c.l.b16 %v4729
        %v4766 = vunpack.c.l.b16 %v4730
        %v4767 = vunpack.c.l.b16 %v4731
        %v4768 = vunpack.c.l.b16 %v4732
        %v4769 = vpack.c.b16 %v4754, %v4753
        %v4770 = vpack.c.b16 %v4756, %v4755
        %v4771 = vpack.c.b16 %v4758, %v4757
        %v4772 = vpack.c.b16 %v4760, %v4759
        %v4773 = vpack.c.b16 %v4762, %v4761
        %v4774 = vpack.c.b16 %v4764, %v4763
        %v4775 = vpack.c.b16 %v4766, %v4765
        %v4776 = vpack.c.b16 %v4768, %v4767
        %4785 = vmatpush.bf16.msra.mxu0 %v4776
        %4786 = vmatpush.bf16.msra.mxu0 %v4775
        %4787 = vmatpush.bf16.msra.mxu0 %v4774
        %4788 = vmatpush.bf16.msra.mxu0 %v4773
        %4789 = vmatpush.bf16.msra.mxu0 %v4772
        %4790 = vmatpush.bf16.msra.mxu0 %v4771
        %4791 = vmatpush.bf16.msra.mxu0 %v4770
        %4792 = vmatpush.bf16.msra.mxu0 %v4769
        %4793 = vmatmul.bf16.gmra.mxu0 %v4701
        %v4794 = vpop.f32.mrf.mxu0
        %v4795 = vadd.f32 %v4735, %v4794
        %v4796 = vpop.f32.mrf.mxu0
        %v4797 = vadd.f32 %v4735, %v4796
        %4798 = vmatmul.bf16.gmra.mxu0 %v4702
        %v4799 = vpop.f32.mrf.mxu0
        %v4800 = vadd.f32 %v4735, %v4799
        %v4801 = vpop.f32.mrf.mxu0
        %v4802 = vadd.f32 %v4735, %v4801
        %4803 = vmatmul.bf16.gmra.mxu0 %v4703
        %v4804 = vpop.f32.mrf.mxu0
        %v4805 = vadd.f32 %v4735, %v4804
        %v4806 = vpop.f32.mrf.mxu0
        %v4807 = vadd.f32 %v4735, %v4806
        %4808 = vmatmul.bf16.gmra.mxu0 %v4704
        %v4809 = vpop.f32.mrf.mxu0
        %v4810 = vadd.f32 %v4735, %v4809
        %v4811 = vpop.f32.mrf.mxu0
        %v4812 = vadd.f32 %v4735, %v4811
        %4813 = vmatmul.bf16.gmra.mxu0 %v4705
        %v4814 = vpop.f32.mrf.mxu0
        %v4815 = vadd.f32 %v4735, %v4814
        %v4816 = vpop.f32.mrf.mxu0
        %v4817 = vadd.f32 %v4735, %v4816
        %4818 = vmatmul.bf16.gmra.mxu0 %v4706
        %v4819 = vpop.f32.mrf.mxu0
        %v4820 = vadd.f32 %v4735, %v4819
        %v4821 = vpop.f32.mrf.mxu0
        %v4822 = vadd.f32 %v4735, %v4821
        %4823 = vmatmul.bf16.gmra.mxu0 %v4707
        %v4824 = vpop.f32.mrf.mxu0
        %v4825 = vadd.f32 %v4735, %v4824
        %v4826 = vpop.f32.mrf.mxu0
        %v4827 = vadd.f32 %v4735, %v4826
        %4828 = vmatmul.bf16.gmra.mxu0 %v4708
        %v4829 = vpop.f32.mrf.mxu0
        %v4830 = vadd.f32 %v4735, %v4829
        %v4831 = vpop.f32.mrf.mxu0
        %v4832 = vadd.f32 %v4735, %v4831
        %4833 = vmatmul.bf16.gmra.mxu0 %v4709
        %v4834 = vpop.f32.mrf.mxu0
        %v4835 = vadd.f32 %v4735, %v4834
        %v4836 = vpop.f32.mrf.mxu0
        %v4837 = vadd.f32 %v4735, %v4836
        %4838 = vmatmul.bf16.gmra.mxu0 %v4710
        %v4839 = vpop.f32.mrf.mxu0
        %v4840 = vadd.f32 %v4735, %v4839
        %v4841 = vpop.f32.mrf.mxu0
        %v4842 = vadd.f32 %v4735, %v4841
        %4843 = vmatmul.bf16.gmra.mxu0 %v4711
        %v4844 = vpop.f32.mrf.mxu0
        %v4845 = vadd.f32 %v4735, %v4844
        %v4846 = vpop.f32.mrf.mxu0
        %v4847 = vadd.f32 %v4735, %v4846
        %4848 = vmatmul.bf16.gmra.mxu0 %v4712
        %v4849 = vpop.f32.mrf.mxu0
        %v4850 = vadd.f32 %v4735, %v4849
        %v4851 = vpop.f32.mrf.mxu0
        %v4852 = vadd.f32 %v4735, %v4851
        %4853 = vmatmul.bf16.gmra.mxu0 %v4713
        %v4854 = vpop.f32.mrf.mxu0
        %v4855 = vadd.f32 %v4735, %v4854
        %v4856 = vpop.f32.mrf.mxu0
        %v4857 = vadd.f32 %v4735, %v4856
        %4858 = vmatmul.bf16.gmra.mxu0 %v4714
        %v4859 = vpop.f32.mrf.mxu0
        %v4860 = vadd.f32 %v4735, %v4859
        %v4861 = vpop.f32.mrf.mxu0
        %v4862 = vadd.f32 %v4735, %v4861
        %4863 = vmatmul.bf16.gmra.mxu0 %v4715
        %v4864 = vpop.f32.mrf.mxu0
        %v4865 = vadd.f32 %v4735, %v4864
        %v4866 = vpop.f32.mrf.mxu0
        %v4867 = vadd.f32 %v4735, %v4866
        %4868 = vmatmul.bf16.gmra.mxu0 %v4716
        %v4869 = vpop.f32.mrf.mxu0
        %v4870 = vadd.f32 %v4735, %v4869
        %v4871 = vpop.f32.mrf.mxu0
        %v4872 = vadd.f32 %v4735, %v4871
        %4873 = vdwg.mxu0
        %v4874 = vtanh.pop %v4795
        %v4875 = vtanh.pop %v4797
        %v4876 = vtanh.pop %v4800
        %v4877 = vtanh.pop %v4802
        %v4878 = vtanh.pop %v4805
        %v4879 = vtanh.pop %v4807
        %v4880 = vtanh.pop %v4810
        %v4881 = vtanh.pop %v4812
        %v4882 = vtanh.pop %v4815
        %v4883 = vtanh.pop %v4817
        %v4884 = vtanh.pop %v4820
        %v4885 = vtanh.pop %v4822
        %v4886 = vtanh.pop %v4825
        %v4887 = vtanh.pop %v4827
        %v4888 = vtanh.pop %v4830
        %v4889 = vtanh.pop %v4832
        %v4890 = vtanh.pop %v4835
        %v4891 = vtanh.pop %v4837
        %v4892 = vtanh.pop %v4840
        %v4893 = vtanh.pop %v4842
        %v4894 = vtanh.pop %v4845
        %v4895 = vtanh.pop %v4847
        %v4896 = vtanh.pop %v4850
        %v4897 = vtanh.pop %v4852
        %v4898 = vtanh.pop %v4855
        %v4899 = vtanh.pop %v4857
        %v4900 = vtanh.pop %v4860
        %v4901 = vtanh.pop %v4862
        %v4902 = vtanh.pop %v4865
        %v4903 = vtanh.pop %v4867
        %v4904 = vtanh.pop %v4870
        %v4905 = vtanh.pop %v4872
        %v4906 = vld [vmem:[%s8] sm:$0xf]
        %v4907 = vld [vmem:[%s8 + $0x4] sm:$0xf]
        %v4908 = vld [vmem:[%s8 + $0x8] sm:$0xf]
        %v4909 = vld [vmem:[%s8 + $0xc] sm:$0xf]
        %v4910 = vld [vmem:[%s8 + $0x10] sm:$0xf]
        %v4911 = vld [vmem:[%s8 + $0x14] sm:$0xf]
        %v4912 = vld [vmem:[%s8 + $0x18] sm:$0xf]
        %v4913 = vld [vmem:[%s8 + $0x1c] sm:$0xf]
        %v4914 = vld [vmem:[%s8 + $0x20] sm:$0xf]
        %v4915 = vld [vmem:[%s8 + $0x24] sm:$0xf]
        %v4916 = vld [vmem:[%s8 + $0x28] sm:$0xf]
        %v4917 = vld [vmem:[%s8 + $0x2c] sm:$0xf]
        %v4918 = vld [vmem:[%s8 + $0x30] sm:$0xf]
        %v4919 = vld [vmem:[%s8 + $0x34] sm:$0xf]
        %v4920 = vld [vmem:[%s8 + $0x38] sm:$0xf]
        %v4921 = vld [vmem:[%s8 + $0x3c] sm:$0xf]
        %v4922 = vld [vmem:[%s8 + $0x40] sm:$0xf]
        %v4923 = vld [vmem:[%s8 + $0x44] sm:$0xf]
        %v4924 = vld [vmem:[%s9] sm:$0x1]
        %v4926 = vperm.slane %v4924, 0
        %v4946 = vunpack.c.l.b16 %v4906
        %v4947 = vunpack.c.l.b16 %v4907
        %v4948 = vunpack.c.l.b16 %v4908
        %v4949 = vunpack.c.l.b16 %v4909
        %v4950 = vunpack.c.l.b16 %v4910
        %v4951 = vunpack.c.l.b16 %v4911
        %v4952 = vunpack.c.l.b16 %v4912
        %v4953 = vunpack.c.l.b16 %v4913
        %v4954 = vunpack.c.l.b16 %v4914
        %v4955 = vunpack.c.l.b16 %v4915
        %v4956 = vunpack.c.l.b16 %v4916
        %v4957 = vunpack.c.l.b16 %v4917
        %v4958 = vunpack.c.l.b16 %v4918
        %v4959 = vunpack.c.l.b16 %v4919
        %v4960 = vunpack.c.l.b16 %v4920
        %v4961 = vunpack.c.l.b16 %v4921
        %v4962 = vunpack.c.l.b16 %v4922
        %v4963 = vunpack.c.l.b16 %v4923
        %v4964 = vpack.c.b16 %v4947, %v4946
        %v4965 = vpack.c.b16 %v4949, %v4948
        %v4966 = vpack.c.b16 %v4951, %v4950
        %v4967 = vpack.c.b16 %v4953, %v4952
        %v4968 = vpack.c.b16 %v4955, %v4954
        %v4969 = vpack.c.b16 %v4957, %v4956
        %v4970 = vpack.c.b16 %v4959, %v4958
        %v4971 = vpack.c.b16 %v4961, %v4960
        %v4972 = vpack.c.b16 %v4963, %v4962
        %4982 = vmatpush.bf16.msra.mxu0 %v4971
        %4983 = vmatpush.bf16.msra.mxu0 %v4970
        %4984 = vmatpush.bf16.msra.mxu0 %v4969
        %4985 = vmatpush.bf16.msra.mxu0 %v4968
        %4986 = vmatpush.bf16.msra.mxu0 %v4967
        %4987 = vmatpush.bf16.msra.mxu0 %v4966
        %4988 = vmatpush.bf16.msra.mxu0 %v4965
        %4989 = vmatpush.bf16.msra.mxu0 %v4964
        %4990 = vmatmul.bf16.gmra.mxu0 %v647
        %v4991 = vpop.f32.mrf.mxu0
        %v4992 = vadd.f32 %v4926, %v4991
        %v4993 = vpop.f32.mrf.mxu0
        %v4994 = vadd.f32 %v4926, %v4993
        %4995 = vmatmul.bf16.gmra.mxu0 %v649
        %v4996 = vpop.f32.mrf.mxu0
        %v4997 = vadd.f32 %v4926, %v4996
        %v4998 = vpop.f32.mrf.mxu0
        %v4999 = vadd.f32 %v4926, %v4998
        %5000 = vmatmul.bf16.gmra.mxu0 %v651
        %v5001 = vpop.f32.mrf.mxu0
        %v5002 = vadd.f32 %v4926, %v5001
        %v5003 = vpop.f32.mrf.mxu0
        %v5004 = vadd.f32 %v4926, %v5003
        %5005 = vmatmul.bf16.gmra.mxu0 %v653
        %v5006 = vpop.f32.mrf.mxu0
        %v5007 = vadd.f32 %v4926, %v5006
        %v5008 = vpop.f32.mrf.mxu0
        %v5009 = vadd.f32 %v4926, %v5008
        %5010 = vmatmul.bf16.gmra.mxu0 %v655
        %v5011 = vpop.f32.mrf.mxu0
        %v5012 = vadd.f32 %v4926, %v5011
        %v5013 = vpop.f32.mrf.mxu0
        %v5014 = vadd.f32 %v4926, %v5013
        %5015 = vmatmul.bf16.gmra.mxu0 %v657
        %v5016 = vpop.f32.mrf.mxu0
        %v5017 = vadd.f32 %v4926, %v5016
        %v5018 = vpop.f32.mrf.mxu0
        %v5019 = vadd.f32 %v4926, %v5018
        %5020 = vmatmul.bf16.gmra.mxu0 %v659
        %v5021 = vpop.f32.mrf.mxu0
        %v5022 = vadd.f32 %v4926, %v5021
        %v5023 = vpop.f32.mrf.mxu0
        %v5024 = vadd.f32 %v4926, %v5023
        %5025 = vmatmul.bf16.gmra.mxu0 %v661
        %v5026 = vpop.f32.mrf.mxu0
        %v5027 = vadd.f32 %v4926, %v5026
        %v5028 = vpop.f32.mrf.mxu0
        %v5029 = vadd.f32 %v4926, %v5028
        %5030 = vmatmul.bf16.gmra.mxu0 %v663
        %v5031 = vpop.f32.mrf.mxu0
        %v5032 = vadd.f32 %v4926, %v5031
        %v5033 = vpop.f32.mrf.mxu0
        %v5034 = vadd.f32 %v4926, %v5033
        %5035 = vmatmul.bf16.gmra.mxu0 %v665
        %v5036 = vpop.f32.mrf.mxu0
        %v5037 = vadd.f32 %v4926, %v5036
        %v5038 = vpop.f32.mrf.mxu0
        %v5039 = vadd.f32 %v4926, %v5038
        %5040 = vmatmul.bf16.gmra.mxu0 %v667
        %v5041 = vpop.f32.mrf.mxu0
        %v5042 = vadd.f32 %v4926, %v5041
        %v5043 = vpop.f32.mrf.mxu0
        %v5044 = vadd.f32 %v4926, %v5043
        %5045 = vmatmul.bf16.gmra.mxu0 %v669
        %v5046 = vpop.f32.mrf.mxu0
        %v5047 = vadd.f32 %v4926, %v5046
        %v5048 = vpop.f32.mrf.mxu0
        %v5049 = vadd.f32 %v4926, %v5048
        %5050 = vmatmul.bf16.gmra.mxu0 %v671
        %v5051 = vpop.f32.mrf.mxu0
        %v5052 = vadd.f32 %v4926, %v5051
        %v5053 = vpop.f32.mrf.mxu0
        %v5054 = vadd.f32 %v4926, %v5053
        %5055 = vmatmul.bf16.gmra.mxu0 %v673
        %v5056 = vpop.f32.mrf.mxu0
        %v5057 = vadd.f32 %v4926, %v5056
        %v5058 = vpop.f32.mrf.mxu0
        %v5059 = vadd.f32 %v4926, %v5058
        %5060 = vmatmul.bf16.gmra.mxu0 %v675
        %v5061 = vpop.f32.mrf.mxu0
        %v5062 = vadd.f32 %v4926, %v5061
        %v5063 = vpop.f32.mrf.mxu0
        %v5064 = vadd.f32 %v4926, %v5063
        %5065 = vmatmul.bf16.gmra.mxu0 %v677
        %v5066 = vpop.f32.mrf.mxu0
        %v5067 = vadd.f32 %v4926, %v5066
        %v5068 = vpop.f32.mrf.mxu0
        %v5069 = vadd.f32 %v4926, %v5068
        %5070 = vdwg.mxu0
        %5071 = vmatpush.bf16.msra.mxu0 0
        %5072 = vmatpush.bf16.msra.mxu0 0
        %5073 = vmatpush.bf16.msra.mxu0 0
        %5074 = vmatpush.bf16.msra.mxu0 0
        %5075 = vmatpush.bf16.msra.mxu0 0
        %5076 = vmatpush.bf16.msra.mxu0 0
        %5077 = vmatpush.bf16.msra.mxu0 0
        %5078 = vmatpush.bf16.msra.mxu0 %v4972
        %5079 = vmatmul.bf16.gmra.mxu0 %v1207
        %v5080 = vpop.f32.mrf.mxu0
        %v5081 = vadd.f32 %v4992, %v5080
        %v5082 = vpop.f32.mrf.mxu0
        %v5083 = vadd.f32 %v4994, %v5082
        %5084 = vmatmul.bf16.gmra.mxu0 %v1210
        %v5085 = vpop.f32.mrf.mxu0
        %v5086 = vadd.f32 %v4997, %v5085
        %v5087 = vpop.f32.mrf.mxu0
        %v5088 = vadd.f32 %v4999, %v5087
        %5089 = vmatmul.bf16.gmra.mxu0 %v1213
        %v5090 = vpop.f32.mrf.mxu0
        %v5091 = vadd.f32 %v5002, %v5090
        %v5092 = vpop.f32.mrf.mxu0
        %v5093 = vadd.f32 %v5004, %v5092
        %5094 = vmatmul.bf16.gmra.mxu0 %v1216
        %v5095 = vpop.f32.mrf.mxu0
        %v5096 = vadd.f32 %v5007, %v5095
        %v5097 = vpop.f32.mrf.mxu0
        %v5098 = vadd.f32 %v5009, %v5097
        %5099 = vmatmul.bf16.gmra.mxu0 %v1219
        %v5100 = vpop.f32.mrf.mxu0
        %v5101 = vadd.f32 %v5012, %v5100
        %v5102 = vpop.f32.mrf.mxu0
        %v5103 = vadd.f32 %v5014, %v5102
        %5104 = vmatmul.bf16.gmra.mxu0 %v1222
        %v5105 = vpop.f32.mrf.mxu0
        %v5106 = vadd.f32 %v5017, %v5105
        %v5107 = vpop.f32.mrf.mxu0
        %v5108 = vadd.f32 %v5019, %v5107
        %5109 = vmatmul.bf16.gmra.mxu0 %v1225
        %v5110 = vpop.f32.mrf.mxu0
        %v5111 = vadd.f32 %v5022, %v5110
        %v5112 = vpop.f32.mrf.mxu0
        %v5113 = vadd.f32 %v5024, %v5112
        %5114 = vmatmul.bf16.gmra.mxu0 %v1228
        %v5115 = vpop.f32.mrf.mxu0
        %v5116 = vadd.f32 %v5027, %v5115
        %v5117 = vpop.f32.mrf.mxu0
        %v5118 = vadd.f32 %v5029, %v5117
        %5119 = vmatmul.bf16.gmra.mxu0 %v1231
        %v5120 = vpop.f32.mrf.mxu0
        %v5121 = vadd.f32 %v5032, %v5120
        %v5122 = vpop.f32.mrf.mxu0
        %v5123 = vadd.f32 %v5034, %v5122
        %5124 = vmatmul.bf16.gmra.mxu0 %v1234
        %v5125 = vpop.f32.mrf.mxu0
        %v5126 = vadd.f32 %v5037, %v5125
        %v5127 = vpop.f32.mrf.mxu0
        %v5128 = vadd.f32 %v5039, %v5127
        %5129 = vmatmul.bf16.gmra.mxu0 %v1237
        %v5130 = vpop.f32.mrf.mxu0
        %v5131 = vadd.f32 %v5042, %v5130
        %v5132 = vpop.f32.mrf.mxu0
        %v5133 = vadd.f32 %v5044, %v5132
        %5134 = vmatmul.bf16.gmra.mxu0 %v1240
        %v5135 = vpop.f32.mrf.mxu0
        %v5136 = vadd.f32 %v5047, %v5135
        %v5137 = vpop.f32.mrf.mxu0
        %v5138 = vadd.f32 %v5049, %v5137
        %5139 = vmatmul.bf16.gmra.mxu0 %v1243
        %v5140 = vpop.f32.mrf.mxu0
        %v5141 = vadd.f32 %v5052, %v5140
        %v5142 = vpop.f32.mrf.mxu0
        %v5143 = vadd.f32 %v5054, %v5142
        %5144 = vmatmul.bf16.gmra.mxu0 %v1246
        %v5145 = vpop.f32.mrf.mxu0
        %v5146 = vadd.f32 %v5057, %v5145
        %v5147 = vpop.f32.mrf.mxu0
        %v5148 = vadd.f32 %v5059, %v5147
        %5149 = vmatmul.bf16.gmra.mxu0 %v1249
        %v5150 = vpop.f32.mrf.mxu0
        %v5151 = vadd.f32 %v5062, %v5150
        %v5152 = vpop.f32.mrf.mxu0
        %v5153 = vadd.f32 %v5064, %v5152
        %5154 = vmatmul.bf16.gmra.mxu0 %v1252
        %v5155 = vpop.f32.mrf.mxu0
        %v5156 = vadd.f32 %v5067, %v5155
        %v5157 = vpop.f32.mrf.mxu0
        %v5158 = vadd.f32 %v5069, %v5157
        %5159 = vdwg.mxu0
        %v5160 = vtanh.pop %v5081
        %v5161 = vtanh.pop %v5083
        %v5162 = vtanh.pop %v5086
        %v5163 = vtanh.pop %v5088
        %v5164 = vtanh.pop %v5091
        %v5165 = vtanh.pop %v5093
        %v5166 = vtanh.pop %v5096
        %v5167 = vtanh.pop %v5098
        %v5168 = vtanh.pop %v5101
        %v5169 = vtanh.pop %v5103
        %v5170 = vtanh.pop %v5106
        %v5171 = vtanh.pop %v5108
        %v5172 = vtanh.pop %v5111
        %v5173 = vtanh.pop %v5113
        %v5174 = vtanh.pop %v5116
        %v5175 = vtanh.pop %v5118
        %v5176 = vtanh.pop %v5121
        %v5177 = vtanh.pop %v5123
        %v5178 = vtanh.pop %v5126
        %v5179 = vtanh.pop %v5128
        %v5180 = vtanh.pop %v5131
        %v5181 = vtanh.pop %v5133
        %v5182 = vtanh.pop %v5136
        %v5183 = vtanh.pop %v5138
        %v5184 = vtanh.pop %v5141
        %v5185 = vtanh.pop %v5143
        %v5186 = vtanh.pop %v5146
        %v5187 = vtanh.pop %v5148
        %v5188 = vtanh.pop %v5151
        %v5189 = vtanh.pop %v5153
        %v5190 = vtanh.pop %v5156
        %v5191 = vtanh.pop %v5158
        %v5192 = vpack.c.bf16 %v4875, %v4874
        %v5193 = vpack.c.bf16 %v4877, %v4876
        %v5194 = vpack.c.bf16 %v4879, %v4878
        %v5195 = vpack.c.bf16 %v4881, %v4880
        %v5196 = vpack.c.bf16 %v4883, %v4882
        %v5197 = vpack.c.bf16 %v4885, %v4884
        %v5198 = vpack.c.bf16 %v4887, %v4886
        %v5199 = vpack.c.bf16 %v4889, %v4888
        %v5200 = vpack.c.bf16 %v4891, %v4890
        %v5201 = vpack.c.bf16 %v4893, %v4892
        %v5202 = vpack.c.bf16 %v4895, %v4894
        %v5203 = vpack.c.bf16 %v4897, %v4896
        %v5204 = vpack.c.bf16 %v4899, %v4898
        %v5205 = vpack.c.bf16 %v4901, %v4900
        %v5206 = vpack.c.bf16 %v4903, %v4902
        %v5207 = vpack.c.bf16 %v4905, %v4904
        %v5208 = vld [vmem:[%s7] sm:$0xf]
        %v5209 = vld [vmem:[%s7 + $0x4] sm:$0xf]
        %v5210 = vld [vmem:[%s7 + $0x8] sm:$0xf]
        %v5211 = vld [vmem:[%s7 + $0xc] sm:$0xf]
        %v5212 = vld [vmem:[%s7 + $0x10] sm:$0xf]
        %v5213 = vld [vmem:[%s7 + $0x14] sm:$0xf]
        %v5214 = vld [vmem:[%s7 + $0x18] sm:$0xf]
        %v5215 = vld [vmem:[%s7 + $0x1c] sm:$0xf]
        %v5216 = vld [vmem:[%s7 + $0x20] sm:$0xf]
        %v5217 = vld [vmem:[%s7 + $0x24] sm:$0xf]
        %v5218 = vld [vmem:[%s7 + $0x28] sm:$0xf]
        %v5219 = vld [vmem:[%s7 + $0x2c] sm:$0xf]
        %v5220 = vld [vmem:[%s7 + $0x30] sm:$0xf]
        %v5221 = vld [vmem:[%s7 + $0x34] sm:$0xf]
        %v5222 = vld [vmem:[%s7 + $0x38] sm:$0xf]
        %v5223 = vld [vmem:[%s7 + $0x3c] sm:$0xf]
        %v5224 = vpack.c.bf16 %v5161, %v5160
        %v5225 = vpack.c.bf16 %v5163, %v5162
        %v5226 = vpack.c.bf16 %v5165, %v5164
        %v5227 = vpack.c.bf16 %v5167, %v5166
        %v5228 = vpack.c.bf16 %v5169, %v5168
        %v5229 = vpack.c.bf16 %v5171, %v5170
        %v5230 = vpack.c.bf16 %v5173, %v5172
        %v5231 = vpack.c.bf16 %v5175, %v5174
        %v5232 = vpack.c.bf16 %v5177, %v5176
        %v5233 = vpack.c.bf16 %v5179, %v5178
        %v5234 = vpack.c.bf16 %v5181, %v5180
        %v5235 = vpack.c.bf16 %v5183, %v5182
        %v5236 = vpack.c.bf16 %v5185, %v5184
        %v5237 = vpack.c.bf16 %v5187, %v5186
        %v5238 = vpack.c.bf16 %v5189, %v5188
        %v5239 = vpack.c.bf16 %v5191, %v5190
        %v5240 = vld [vmem:[%s10] sm:$0xf]
        %v5241 = vld [vmem:[%s10 + $0x4] sm:$0xf]
        %v5242 = vld [vmem:[%s10 + $0x8] sm:$0xf]
        %v5243 = vld [vmem:[%s10 + $0xc] sm:$0xf]
        %v5244 = vld [vmem:[%s10 + $0x10] sm:$0xf]
        %v5245 = vld [vmem:[%s10 + $0x14] sm:$0xf]
        %v5246 = vld [vmem:[%s10 + $0x18] sm:$0xf]
        %v5247 = vld [vmem:[%s10 + $0x1c] sm:$0xf]
        %v5248 = vld [vmem:[%s10 + $0x20] sm:$0xf]
        %v5249 = vld [vmem:[%s10 + $0x24] sm:$0xf]
        %v5250 = vld [vmem:[%s10 + $0x28] sm:$0xf]
        %v5251 = vld [vmem:[%s10 + $0x2c] sm:$0xf]
        %v5252 = vld [vmem:[%s10 + $0x30] sm:$0xf]
        %v5253 = vld [vmem:[%s10 + $0x34] sm:$0xf]
        %v5254 = vld [vmem:[%s10 + $0x38] sm:$0xf]
        %v5255 = vld [vmem:[%s10 + $0x3c] sm:$0xf]
        %v5272 = vunpack.c.l.b16 %v5240
        %v5273 = vunpack.c.l.b16 %v5241
        %v5274 = vunpack.c.l.b16 %v5242
        %v5275 = vunpack.c.l.b16 %v5243
        %v5276 = vunpack.c.l.b16 %v5244
        %v5277 = vunpack.c.l.b16 %v5245
        %v5278 = vunpack.c.l.b16 %v5246
        %v5279 = vunpack.c.l.b16 %v5247
        %v5280 = vunpack.c.l.b16 %v5248
        %v5281 = vunpack.c.l.b16 %v5249
        %v5282 = vunpack.c.l.b16 %v5250
        %v5283 = vunpack.c.l.b16 %v5251
        %v5284 = vunpack.c.l.b16 %v5252
        %v5285 = vunpack.c.l.b16 %v5253
        %v5286 = vunpack.c.l.b16 %v5254
        %v5287 = vunpack.c.l.b16 %v5255
        %v5288 = vpack.c.b16 %v5273, %v5272
        %v5289 = vpack.c.b16 %v5275, %v5274
        %v5290 = vpack.c.b16 %v5277, %v5276
        %v5291 = vpack.c.b16 %v5279, %v5278
        %v5292 = vpack.c.b16 %v5281, %v5280
        %v5293 = vpack.c.b16 %v5283, %v5282
        %v5294 = vpack.c.b16 %v5285, %v5284
        %v5295 = vpack.c.b16 %v5287, %v5286
        %5304 = vmatpush.bf16.msra.mxu0 %v5295
        %5305 = vmatpush.bf16.msra.mxu0 %v5294
        %5306 = vmatpush.bf16.msra.mxu0 %v5293
        %5307 = vmatpush.bf16.msra.mxu0 %v5292
        %5308 = vmatpush.bf16.msra.mxu0 %v5291
        %5309 = vmatpush.bf16.msra.mxu0 %v5290
        %5310 = vmatpush.bf16.msra.mxu0 %v5289
        %5311 = vmatpush.bf16.msra.mxu0 %v5288
        %5312 = vmatmul.bf16.gmra.mxu0 %v5224
        %v5313 = vpop.f32.mrf.mxu0
        %v5314 = vadd.f32 0.0, %v5313
        %v5315 = vpop.f32.mrf.mxu0
        %v5316 = vadd.f32 0.0, %v5315
        %5317 = vmatmul.bf16.gmra.mxu0 %v5225
        %v5318 = vpop.f32.mrf.mxu0
        %v5319 = vadd.f32 0.0, %v5318
        %v5320 = vpop.f32.mrf.mxu0
        %v5321 = vadd.f32 0.0, %v5320
        %5322 = vmatmul.bf16.gmra.mxu0 %v5226
        %v5323 = vpop.f32.mrf.mxu0
        %v5324 = vadd.f32 0.0, %v5323
        %v5325 = vpop.f32.mrf.mxu0
        %v5326 = vadd.f32 0.0, %v5325
        %5327 = vmatmul.bf16.gmra.mxu0 %v5227
        %v5328 = vpop.f32.mrf.mxu0
        %v5329 = vadd.f32 0.0, %v5328
        %v5330 = vpop.f32.mrf.mxu0
        %v5331 = vadd.f32 0.0, %v5330
        %5332 = vmatmul.bf16.gmra.mxu0 %v5228
        %v5333 = vpop.f32.mrf.mxu0
        %v5334 = vadd.f32 0.0, %v5333
        %v5335 = vpop.f32.mrf.mxu0
        %v5336 = vadd.f32 0.0, %v5335
        %5337 = vmatmul.bf16.gmra.mxu0 %v5229
        %v5338 = vpop.f32.mrf.mxu0
        %v5339 = vadd.f32 0.0, %v5338
        %v5340 = vpop.f32.mrf.mxu0
        %v5341 = vadd.f32 0.0, %v5340
        %5342 = vmatmul.bf16.gmra.mxu0 %v5230
        %v5343 = vpop.f32.mrf.mxu0
        %v5344 = vadd.f32 0.0, %v5343
        %v5345 = vpop.f32.mrf.mxu0
        %v5346 = vadd.f32 0.0, %v5345
        %5347 = vmatmul.bf16.gmra.mxu0 %v5231
        %v5348 = vpop.f32.mrf.mxu0
        %v5349 = vadd.f32 0.0, %v5348
        %v5350 = vpop.f32.mrf.mxu0
        %v5351 = vadd.f32 0.0, %v5350
        %5352 = vmatmul.bf16.gmra.mxu0 %v5232
        %v5353 = vpop.f32.mrf.mxu0
        %v5354 = vadd.f32 0.0, %v5353
        %v5355 = vpop.f32.mrf.mxu0
        %v5356 = vadd.f32 0.0, %v5355
        %5357 = vmatmul.bf16.gmra.mxu0 %v5233
        %v5358 = vpop.f32.mrf.mxu0
        %v5359 = vadd.f32 0.0, %v5358
        %v5360 = vpop.f32.mrf.mxu0
        %v5361 = vadd.f32 0.0, %v5360
        %5362 = vmatmul.bf16.gmra.mxu0 %v5234
        %v5363 = vpop.f32.mrf.mxu0
        %v5364 = vadd.f32 0.0, %v5363
        %v5365 = vpop.f32.mrf.mxu0
        %v5366 = vadd.f32 0.0, %v5365
        %5367 = vmatmul.bf16.gmra.mxu0 %v5235
        %v5368 = vpop.f32.mrf.mxu0
        %v5369 = vadd.f32 0.0, %v5368
        %v5370 = vpop.f32.mrf.mxu0
        %v5371 = vadd.f32 0.0, %v5370
        %5372 = vmatmul.bf16.gmra.mxu0 %v5236
        %v5373 = vpop.f32.mrf.mxu0
        %v5374 = vadd.f32 0.0, %v5373
        %v5375 = vpop.f32.mrf.mxu0
        %v5376 = vadd.f32 0.0, %v5375
        %5377 = vmatmul.bf16.gmra.mxu0 %v5237
        %v5378 = vpop.f32.mrf.mxu0
        %v5379 = vadd.f32 0.0, %v5378
        %v5380 = vpop.f32.mrf.mxu0
        %v5381 = vadd.f32 0.0, %v5380
        %5382 = vmatmul.bf16.gmra.mxu0 %v5238
        %v5383 = vpop.f32.mrf.mxu0
        %v5384 = vadd.f32 0.0, %v5383
        %v5385 = vpop.f32.mrf.mxu0
        %v5386 = vadd.f32 0.0, %v5385
        %5387 = vmatmul.bf16.gmra.mxu0 %v5239
        %v5388 = vpop.f32.mrf.mxu0
        %v5389 = vadd.f32 0.0, %v5388
        %v5390 = vpop.f32.mrf.mxu0
        %v5391 = vadd.f32 0.0, %v5390
        %5392 = vdwg.mxu0
        %v5409 = vunpack.c.l.b16 %v5208
        %v5410 = vunpack.c.l.b16 %v5209
        %v5411 = vunpack.c.l.b16 %v5210
        %v5412 = vunpack.c.l.b16 %v5211
        %v5413 = vunpack.c.l.b16 %v5212
        %v5414 = vunpack.c.l.b16 %v5213
        %v5415 = vunpack.c.l.b16 %v5214
        %v5416 = vunpack.c.l.b16 %v5215
        %v5417 = vunpack.c.l.b16 %v5216
        %v5418 = vunpack.c.l.b16 %v5217
        %v5419 = vunpack.c.l.b16 %v5218
        %v5420 = vunpack.c.l.b16 %v5219
        %v5421 = vunpack.c.l.b16 %v5220
        %v5422 = vunpack.c.l.b16 %v5221
        %v5423 = vunpack.c.l.b16 %v5222
        %v5424 = vunpack.c.l.b16 %v5223
        %v5425 = vpack.c.b16 %v5410, %v5409
        %v5426 = vpack.c.b16 %v5412, %v5411
        %v5427 = vpack.c.b16 %v5414, %v5413
        %v5428 = vpack.c.b16 %v5416, %v5415
        %v5429 = vpack.c.b16 %v5418, %v5417
        %v5430 = vpack.c.b16 %v5420, %v5419
        %v5431 = vpack.c.b16 %v5422, %v5421
        %v5432 = vpack.c.b16 %v5424, %v5423
        %5441 = vmatpush.bf16.msra.mxu0 %v5432
        %5442 = vmatpush.bf16.msra.mxu0 %v5431
        %5443 = vmatpush.bf16.msra.mxu0 %v5430
        %5444 = vmatpush.bf16.msra.mxu0 %v5429
        %5445 = vmatpush.bf16.msra.mxu0 %v5428
        %5446 = vmatpush.bf16.msra.mxu0 %v5427
        %5447 = vmatpush.bf16.msra.mxu0 %v5426
        %5448 = vmatpush.bf16.msra.mxu0 %v5425
        %5449 = vmatmul.bf16.gmra.mxu0 %v5192
        %v5450 = vpop.f32.mrf.mxu0
        %v5451 = vadd.f32 %v5314, %v5450
        %v5452 = vpop.f32.mrf.mxu0
        %v5453 = vadd.f32 %v5316, %v5452
        %5454 = vmatmul.bf16.gmra.mxu0 %v5193
        %v5455 = vpop.f32.mrf.mxu0
        %v5456 = vadd.f32 %v5319, %v5455
        %v5457 = vpop.f32.mrf.mxu0
        %v5458 = vadd.f32 %v5321, %v5457
        %5459 = vmatmul.bf16.gmra.mxu0 %v5194
        %v5460 = vpop.f32.mrf.mxu0
        %v5461 = vadd.f32 %v5324, %v5460
        %v5462 = vpop.f32.mrf.mxu0
        %v5463 = vadd.f32 %v5326, %v5462
        %5464 = vmatmul.bf16.gmra.mxu0 %v5195
        %v5465 = vpop.f32.mrf.mxu0
        %v5466 = vadd.f32 %v5329, %v5465
        %v5467 = vpop.f32.mrf.mxu0
        %v5468 = vadd.f32 %v5331, %v5467
        %5469 = vmatmul.bf16.gmra.mxu0 %v5196
        %v5470 = vpop.f32.mrf.mxu0
        %v5471 = vadd.f32 %v5334, %v5470
        %v5472 = vpop.f32.mrf.mxu0
        %v5473 = vadd.f32 %v5336, %v5472
        %5474 = vmatmul.bf16.gmra.mxu0 %v5197
        %v5475 = vpop.f32.mrf.mxu0
        %v5476 = vadd.f32 %v5339, %v5475
        %v5477 = vpop.f32.mrf.mxu0
        %v5478 = vadd.f32 %v5341, %v5477
        %5479 = vmatmul.bf16.gmra.mxu0 %v5198
        %v5480 = vpop.f32.mrf.mxu0
        %v5481 = vadd.f32 %v5344, %v5480
        %v5482 = vpop.f32.mrf.mxu0
        %v5483 = vadd.f32 %v5346, %v5482
        %5484 = vmatmul.bf16.gmra.mxu0 %v5199
        %v5485 = vpop.f32.mrf.mxu0
        %v5486 = vadd.f32 %v5349, %v5485
        %v5487 = vpop.f32.mrf.mxu0
        %v5488 = vadd.f32 %v5351, %v5487
        %5489 = vmatmul.bf16.gmra.mxu0 %v5200
        %v5490 = vpop.f32.mrf.mxu0
        %v5491 = vadd.f32 %v5354, %v5490
        %v5492 = vpop.f32.mrf.mxu0
        %v5493 = vadd.f32 %v5356, %v5492
        %5494 = vmatmul.bf16.gmra.mxu0 %v5201
        %v5495 = vpop.f32.mrf.mxu0
        %v5496 = vadd.f32 %v5359, %v5495
        %v5497 = vpop.f32.mrf.mxu0
        %v5498 = vadd.f32 %v5361, %v5497
        %5499 = vmatmul.bf16.gmra.mxu0 %v5202
        %v5500 = vpop.f32.mrf.mxu0
        %v5501 = vadd.f32 %v5364, %v5500
        %v5502 = vpop.f32.mrf.mxu0
        %v5503 = vadd.f32 %v5366, %v5502
        %5504 = vmatmul.bf16.gmra.mxu0 %v5203
        %v5505 = vpop.f32.mrf.mxu0
        %v5506 = vadd.f32 %v5369, %v5505
        %v5507 = vpop.f32.mrf.mxu0
        %v5508 = vadd.f32 %v5371, %v5507
        %5509 = vmatmul.bf16.gmra.mxu0 %v5204
        %v5510 = vpop.f32.mrf.mxu0
        %v5511 = vadd.f32 %v5374, %v5510
        %v5512 = vpop.f32.mrf.mxu0
        %v5513 = vadd.f32 %v5376, %v5512
        %5514 = vmatmul.bf16.gmra.mxu0 %v5205
        %v5515 = vpop.f32.mrf.mxu0
        %v5516 = vadd.f32 %v5379, %v5515
        %v5517 = vpop.f32.mrf.mxu0
        %v5518 = vadd.f32 %v5381, %v5517
        %5519 = vmatmul.bf16.gmra.mxu0 %v5206
        %v5520 = vpop.f32.mrf.mxu0
        %v5521 = vadd.f32 %v5384, %v5520
        %v5522 = vpop.f32.mrf.mxu0
        %v5523 = vadd.f32 %v5386, %v5522
        %5524 = vmatmul.bf16.gmra.mxu0 %v5207
        %v5525 = vpop.f32.mrf.mxu0
        %v5526 = vadd.f32 %v5389, %v5525
        %v5527 = vpop.f32.mrf.mxu0
        %v5528 = vadd.f32 %v5391, %v5527
        %5529 = vdwg.mxu0
        %v5530 = vld [vmem:[%s11] sm:$0x1]
        %v5532 = vperm.slane %v5530, 0
        %v5534 = vadd.f32 %v5451, %v5532
        %v5535 = vadd.f32 %v5453, %v5532
        %v5536 = vadd.f32 %v5456, %v5532
        %v5537 = vadd.f32 %v5458, %v5532
        %v5538 = vadd.f32 %v5461, %v5532
        %v5539 = vadd.f32 %v5463, %v5532
        %v5540 = vadd.f32 %v5466, %v5532
        %v5541 = vadd.f32 %v5468, %v5532
        %v5542 = vadd.f32 %v5471, %v5532
        %v5543 = vadd.f32 %v5473, %v5532
        %v5544 = vadd.f32 %v5476, %v5532
        %v5545 = vadd.f32 %v5478, %v5532
        %v5546 = vadd.f32 %v5481, %v5532
        %v5547 = vadd.f32 %v5483, %v5532
        %v5548 = vadd.f32 %v5486, %v5532
        %v5549 = vadd.f32 %v5488, %v5532
        %v5550 = vadd.f32 %v5491, %v5532
        %v5551 = vadd.f32 %v5493, %v5532
        %v5552 = vadd.f32 %v5496, %v5532
        %v5553 = vadd.f32 %v5498, %v5532
        %v5554 = vadd.f32 %v5501, %v5532
        %v5555 = vadd.f32 %v5503, %v5532
        %v5556 = vadd.f32 %v5506, %v5532
        %v5557 = vadd.f32 %v5508, %v5532
        %v5558 = vadd.f32 %v5511, %v5532
        %v5559 = vadd.f32 %v5513, %v5532
        %v5560 = vadd.f32 %v5516, %v5532
        %v5561 = vadd.f32 %v5518, %v5532
        %v5562 = vadd.f32 %v5521, %v5532
        %v5563 = vadd.f32 %v5523, %v5532
        %v5564 = vadd.f32 %v5526, %v5532
        %v5565 = vadd.f32 %v5528, %v5532
        %v5566 = vtanh.pop %v5534
        %v5567 = vtanh.pop %v5535
        %v5568 = vtanh.pop %v5536
        %v5569 = vtanh.pop %v5537
        %v5570 = vtanh.pop %v5538
        %v5571 = vtanh.pop %v5539
        %v5572 = vtanh.pop %v5540
        %v5573 = vtanh.pop %v5541
        %v5574 = vtanh.pop %v5542
        %v5575 = vtanh.pop %v5543
        %v5576 = vtanh.pop %v5544
        %v5577 = vtanh.pop %v5545
        %v5578 = vtanh.pop %v5546
        %v5579 = vtanh.pop %v5547
        %v5580 = vtanh.pop %v5548
        %v5581 = vtanh.pop %v5549
        %v5582 = vtanh.pop %v5550
        %v5583 = vtanh.pop %v5551
        %v5584 = vtanh.pop %v5552
        %v5585 = vtanh.pop %v5553
        %v5586 = vtanh.pop %v5554
        %v5587 = vtanh.pop %v5555
        %v5588 = vtanh.pop %v5556
        %v5589 = vtanh.pop %v5557
        %v5590 = vtanh.pop %v5558
        %v5591 = vtanh.pop %v5559
        %v5592 = vtanh.pop %v5560
        %v5593 = vtanh.pop %v5561
        %v5594 = vtanh.pop %v5562
        %v5595 = vtanh.pop %v5563
        %v5596 = vtanh.pop %v5564
        %v5597 = vtanh.pop %v5565
        %v5598 = vpack.c.bf16 %v5567, %v5566
        %v5599 = vpack.c.bf16 %v5569, %v5568
        %v5600 = vpack.c.bf16 %v5571, %v5570
        %v5601 = vpack.c.bf16 %v5573, %v5572
        %v5602 = vpack.c.bf16 %v5575, %v5574
        %v5603 = vpack.c.bf16 %v5577, %v5576
        %v5604 = vpack.c.bf16 %v5579, %v5578
        %v5605 = vpack.c.bf16 %v5581, %v5580
        %v5606 = vpack.c.bf16 %v5583, %v5582
        %v5607 = vpack.c.bf16 %v5585, %v5584
        %v5608 = vpack.c.bf16 %v5587, %v5586
        %v5609 = vpack.c.bf16 %v5589, %v5588
        %v5610 = vpack.c.bf16 %v5591, %v5590
        %v5611 = vpack.c.bf16 %v5593, %v5592
        %v5612 = vpack.c.bf16 %v5595, %v5594
        %v5613 = vpack.c.bf16 %v5597, %v5596
        %v5614 = vld [vmem:[%s12] sm:$0xf]
        %v5615 = vld [vmem:[%s12 + $0x4] sm:$0xf]
        %v5616 = vld [vmem:[%s12 + $0x8] sm:$0xf]
        %v5617 = vld [vmem:[%s12 + $0xc] sm:$0xf]
        %v5618 = vld [vmem:[%s12 + $0x10] sm:$0xf]
        %v5619 = vld [vmem:[%s12 + $0x14] sm:$0xf]
        %v5620 = vld [vmem:[%s12 + $0x18] sm:$0xf]
        %v5621 = vld [vmem:[%s12 + $0x1c] sm:$0xf]
        %v5622 = vld [vmem:[%s12 + $0x20] sm:$0xf]
        %v5623 = vld [vmem:[%s12 + $0x24] sm:$0xf]
        %v5624 = vld [vmem:[%s12 + $0x28] sm:$0xf]
        %v5625 = vld [vmem:[%s12 + $0x2c] sm:$0xf]
        %v5626 = vld [vmem:[%s12 + $0x30] sm:$0xf]
        %v5627 = vld [vmem:[%s12 + $0x34] sm:$0xf]
        %v5628 = vld [vmem:[%s12 + $0x38] sm:$0xf]
        %v5629 = vld [vmem:[%s12 + $0x3c] sm:$0xf]
        %v5630 = vld [vmem:[%s13] sm:$0x1]
        %v5632 = vperm.slane %v5630, 0
        %v5650 = vunpack.c.l.b16 %v5614
        %v5651 = vunpack.c.l.b16 %v5615
        %v5652 = vunpack.c.l.b16 %v5616
        %v5653 = vunpack.c.l.b16 %v5617
        %v5654 = vunpack.c.l.b16 %v5618
        %v5655 = vunpack.c.l.b16 %v5619
        %v5656 = vunpack.c.l.b16 %v5620
        %v5657 = vunpack.c.l.b16 %v5621
        %v5658 = vunpack.c.l.b16 %v5622
        %v5659 = vunpack.c.l.b16 %v5623
        %v5660 = vunpack.c.l.b16 %v5624
        %v5661 = vunpack.c.l.b16 %v5625
        %v5662 = vunpack.c.l.b16 %v5626
        %v5663 = vunpack.c.l.b16 %v5627
        %v5664 = vunpack.c.l.b16 %v5628
        %v5665 = vunpack.c.l.b16 %v5629
        %v5666 = vpack.c.b16 %v5651, %v5650
        %v5667 = vpack.c.b16 %v5653, %v5652
        %v5668 = vpack.c.b16 %v5655, %v5654
        %v5669 = vpack.c.b16 %v5657, %v5656
        %v5670 = vpack.c.b16 %v5659, %v5658
        %v5671 = vpack.c.b16 %v5661, %v5660
        %v5672 = vpack.c.b16 %v5663, %v5662
        %v5673 = vpack.c.b16 %v5665, %v5664
        %5682 = vmatpush.bf16.msra.mxu0 %v5673
        %5683 = vmatpush.bf16.msra.mxu0 %v5672
        %5684 = vmatpush.bf16.msra.mxu0 %v5671
        %5685 = vmatpush.bf16.msra.mxu0 %v5670
        %5686 = vmatpush.bf16.msra.mxu0 %v5669
        %5687 = vmatpush.bf16.msra.mxu0 %v5668
        %5688 = vmatpush.bf16.msra.mxu0 %v5667
        %5689 = vmatpush.bf16.msra.mxu0 %v5666
        %5690 = vmatmul.bf16.gmra.mxu0 %v5598
        %v5691 = vpop.f32.mrf.mxu0
        %v5692 = vadd.f32 %v5632, %v5691
        %v5693 = vpop.f32.mrf.mxu0
        %v5694 = vadd.f32 %v5632, %v5693
        %5695 = vmatmul.bf16.gmra.mxu0 %v5599
        %v5696 = vpop.f32.mrf.mxu0
        %v5697 = vadd.f32 %v5632, %v5696
        %v5698 = vpop.f32.mrf.mxu0
        %v5699 = vadd.f32 %v5632, %v5698
        %5700 = vmatmul.bf16.gmra.mxu0 %v5600
        %v5701 = vpop.f32.mrf.mxu0
        %v5702 = vadd.f32 %v5632, %v5701
        %v5703 = vpop.f32.mrf.mxu0
        %v5704 = vadd.f32 %v5632, %v5703
        %5705 = vmatmul.bf16.gmra.mxu0 %v5601
        %v5706 = vpop.f32.mrf.mxu0
        %v5707 = vadd.f32 %v5632, %v5706
        %v5708 = vpop.f32.mrf.mxu0
        %v5709 = vadd.f32 %v5632, %v5708
        %5710 = vmatmul.bf16.gmra.mxu0 %v5602
        %v5711 = vpop.f32.mrf.mxu0
        %v5712 = vadd.f32 %v5632, %v5711
        %v5713 = vpop.f32.mrf.mxu0
        %v5714 = vadd.f32 %v5632, %v5713
        %5715 = vmatmul.bf16.gmra.mxu0 %v5603
        %v5716 = vpop.f32.mrf.mxu0
        %v5717 = vadd.f32 %v5632, %v5716
        %v5718 = vpop.f32.mrf.mxu0
        %v5719 = vadd.f32 %v5632, %v5718
        %5720 = vmatmul.bf16.gmra.mxu0 %v5604
        %v5721 = vpop.f32.mrf.mxu0
        %v5722 = vadd.f32 %v5632, %v5721
        %v5723 = vpop.f32.mrf.mxu0
        %v5724 = vadd.f32 %v5632, %v5723
        %5725 = vmatmul.bf16.gmra.mxu0 %v5605
        %v5726 = vpop.f32.mrf.mxu0
        %v5727 = vadd.f32 %v5632, %v5726
        %v5728 = vpop.f32.mrf.mxu0
        %v5729 = vadd.f32 %v5632, %v5728
        %5730 = vmatmul.bf16.gmra.mxu0 %v5606
        %v5731 = vpop.f32.mrf.mxu0
        %v5732 = vadd.f32 %v5632, %v5731
        %v5733 = vpop.f32.mrf.mxu0
        %v5734 = vadd.f32 %v5632, %v5733
        %5735 = vmatmul.bf16.gmra.mxu0 %v5607
        %v5736 = vpop.f32.mrf.mxu0
        %v5737 = vadd.f32 %v5632, %v5736
        %v5738 = vpop.f32.mrf.mxu0
        %v5739 = vadd.f32 %v5632, %v5738
        %5740 = vmatmul.bf16.gmra.mxu0 %v5608
        %v5741 = vpop.f32.mrf.mxu0
        %v5742 = vadd.f32 %v5632, %v5741
        %v5743 = vpop.f32.mrf.mxu0
        %v5744 = vadd.f32 %v5632, %v5743
        %5745 = vmatmul.bf16.gmra.mxu0 %v5609
        %v5746 = vpop.f32.mrf.mxu0
        %v5747 = vadd.f32 %v5632, %v5746
        %v5748 = vpop.f32.mrf.mxu0
        %v5749 = vadd.f32 %v5632, %v5748
        %5750 = vmatmul.bf16.gmra.mxu0 %v5610
        %v5751 = vpop.f32.mrf.mxu0
        %v5752 = vadd.f32 %v5632, %v5751
        %v5753 = vpop.f32.mrf.mxu0
        %v5754 = vadd.f32 %v5632, %v5753
        %5755 = vmatmul.bf16.gmra.mxu0 %v5611
        %v5756 = vpop.f32.mrf.mxu0
        %v5757 = vadd.f32 %v5632, %v5756
        %v5758 = vpop.f32.mrf.mxu0
        %v5759 = vadd.f32 %v5632, %v5758
        %5760 = vmatmul.bf16.gmra.mxu0 %v5612
        %v5761 = vpop.f32.mrf.mxu0
        %v5762 = vadd.f32 %v5632, %v5761
        %v5763 = vpop.f32.mrf.mxu0
        %v5764 = vadd.f32 %v5632, %v5763
        %5765 = vmatmul.bf16.gmra.mxu0 %v5613
        %v5766 = vpop.f32.mrf.mxu0
        %v5767 = vadd.f32 %v5632, %v5766
        %v5768 = vpop.f32.mrf.mxu0
        %v5769 = vadd.f32 %v5632, %v5768
        %5770 = vdwg.mxu0
        %v5771 = vtanh.pop %v5692
        %v5772 = vtanh.pop %v5694
        %v5773 = vtanh.pop %v5697
        %v5774 = vtanh.pop %v5699
        %v5775 = vtanh.pop %v5702
        %v5776 = vtanh.pop %v5704
        %v5777 = vtanh.pop %v5707
        %v5778 = vtanh.pop %v5709
        %v5779 = vtanh.pop %v5712
        %v5780 = vtanh.pop %v5714
        %v5781 = vtanh.pop %v5717
        %v5782 = vtanh.pop %v5719
        %v5783 = vtanh.pop %v5722
        %v5784 = vtanh.pop %v5724
        %v5785 = vtanh.pop %v5727
        %v5786 = vtanh.pop %v5729
        %v5787 = vtanh.pop %v5732
        %v5788 = vtanh.pop %v5734
        %v5789 = vtanh.pop %v5737
        %v5790 = vtanh.pop %v5739
        %v5791 = vtanh.pop %v5742
        %v5792 = vtanh.pop %v5744
        %v5793 = vtanh.pop %v5747
        %v5794 = vtanh.pop %v5749
        %v5795 = vtanh.pop %v5752
        %v5796 = vtanh.pop %v5754
        %v5797 = vtanh.pop %v5757
        %v5798 = vtanh.pop %v5759
        %v5799 = vtanh.pop %v5762
        %v5800 = vtanh.pop %v5764
        %v5801 = vtanh.pop %v5767
        %v5802 = vtanh.pop %v5769
        %v5803 = vpack.c.bf16 %v5772, %v5771
        %v5804 = vpack.c.bf16 %v5774, %v5773
        %v5805 = vpack.c.bf16 %v5776, %v5775
        %v5806 = vpack.c.bf16 %v5778, %v5777
        %v5807 = vpack.c.bf16 %v5780, %v5779
        %v5808 = vpack.c.bf16 %v5782, %v5781
        %v5809 = vpack.c.bf16 %v5784, %v5783
        %v5810 = vpack.c.bf16 %v5786, %v5785
        %v5811 = vpack.c.bf16 %v5788, %v5787
        %v5812 = vpack.c.bf16 %v5790, %v5789
        %v5813 = vpack.c.bf16 %v5792, %v5791
        %v5814 = vpack.c.bf16 %v5794, %v5793
        %v5815 = vpack.c.bf16 %v5796, %v5795
        %v5816 = vpack.c.bf16 %v5798, %v5797
        %v5817 = vpack.c.bf16 %v5800, %v5799
        %v5818 = vpack.c.bf16 %v5802, %v5801
        %v5819 = vld [vmem:[%s14] sm:$0xf]
        %v5820 = vld [vmem:[%s14 + $0x4] sm:$0xf]
        %v5821 = vld [vmem:[%s14 + $0x8] sm:$0xf]
        %v5822 = vld [vmem:[%s14 + $0xc] sm:$0xf]
        %v5823 = vld [vmem:[%s14 + $0x10] sm:$0xf]
        %v5824 = vld [vmem:[%s14 + $0x14] sm:$0xf]
        %v5825 = vld [vmem:[%s14 + $0x18] sm:$0x1]
        %v5826 = vld [vmem:[%s15] sm:$0x1]
        %v5828 = vperm.slane %v5826, 0
        %v5837 = vunpack.c.l.b16 %v5819
        %v5838 = vunpack.c.l.b16 %v5820
        %v5839 = vunpack.c.l.b16 %v5821
        %v5840 = vunpack.c.l.b16 %v5822
        %v5841 = vunpack.c.l.b16 %v5823
        %v5842 = vunpack.c.l.b16 %v5824
        %v5843 = vunpack.c.l.b16 %v5825
        %v5844 = vpack.c.b16 %v5838, %v5837
        %v5845 = vpack.c.b16 %v5840, %v5839
        %v5846 = vpack.c.b16 %v5842, %v5841
        %v5847 = vpack.c.b16 %v5843, %v5843
        %vm5851 = vcmask 408576
        %v5853 = vsel %vm5851, %v5803, 0
        %v5856 = vsel %vm5851, %v5804, 0
        %v5859 = vsel %vm5851, %v5805, 0
        %v5862 = vsel %vm5851, %v5806, 0
        %v5865 = vsel %vm5851, %v5807, 0
        %v5868 = vsel %vm5851, %v5808, 0
        %v5871 = vsel %vm5851, %v5809, 0
        %v5874 = vsel %vm5851, %v5810, 0
        %v5877 = vsel %vm5851, %v5811, 0
        %v5880 = vsel %vm5851, %v5812, 0
        %v5883 = vsel %vm5851, %v5813, 0
        %v5886 = vsel %vm5851, %v5814, 0
        %v5889 = vsel %vm5851, %v5815, 0
        %v5892 = vsel %vm5851, %v5816, 0
        %v5895 = vsel %vm5851, %v5817, 0
        %v5898 = vsel %vm5851, %v5818, 0
        %vm5900 = vcmask 1040384
        %v5902 = vsel %vm5900, %v5847, 0
        %5904 = vmatpush.bf16.msra.mxu0 0
        %5905 = vmatpush.bf16.msra.mxu0 0
        %5906 = vmatpush.bf16.msra.mxu0 0
        %5907 = vmatpush.bf16.msra.mxu0 0
        %5908 = vmatpush.bf16.msra.mxu0 %v5902
        %5909 = vmatpush.bf16.msra.mxu0 %v5846
        %5910 = vmatpush.bf16.msra.mxu0 %v5845
        %5911 = vmatpush.bf16.msra.mxu0 %v5844
        %5912 = vmatmul.bf16.gmra.mxu0 %v5853
        %v5913 = vpop.f32.mrf.mxu0
        %v5914 = vadd.f32 %v5828, %v5913
        %v5915 = vpop.f32.mrf.mxu0
        %v5916 = vadd.f32 %v5828, %v5915
        %5917 = vmatmul.bf16.gmra.mxu0 %v5856
        %v5918 = vpop.f32.mrf.mxu0
        %v5919 = vadd.f32 %v5828, %v5918
        %v5920 = vpop.f32.mrf.mxu0
        %v5921 = vadd.f32 %v5828, %v5920
        %5922 = vmatmul.bf16.gmra.mxu0 %v5859
        %v5923 = vpop.f32.mrf.mxu0
        %v5924 = vadd.f32 %v5828, %v5923
        %v5925 = vpop.f32.mrf.mxu0
        %v5926 = vadd.f32 %v5828, %v5925
        %5927 = vmatmul.bf16.gmra.mxu0 %v5862
        %v5928 = vpop.f32.mrf.mxu0
        %v5929 = vadd.f32 %v5828, %v5928
        %v5930 = vpop.f32.mrf.mxu0
        %v5931 = vadd.f32 %v5828, %v5930
        %5932 = vmatmul.bf16.gmra.mxu0 %v5865
        %v5933 = vpop.f32.mrf.mxu0
        %v5934 = vadd.f32 %v5828, %v5933
        %v5935 = vpop.f32.mrf.mxu0
        %v5936 = vadd.f32 %v5828, %v5935
        %5937 = vmatmul.bf16.gmra.mxu0 %v5868
        %v5938 = vpop.f32.mrf.mxu0
        %v5939 = vadd.f32 %v5828, %v5938
        %v5940 = vpop.f32.mrf.mxu0
        %v5941 = vadd.f32 %v5828, %v5940
        %5942 = vmatmul.bf16.gmra.mxu0 %v5871
        %v5943 = vpop.f32.mrf.mxu0
        %v5944 = vadd.f32 %v5828, %v5943
        %v5945 = vpop.f32.mrf.mxu0
        %v5946 = vadd.f32 %v5828, %v5945
        %5947 = vmatmul.bf16.gmra.mxu0 %v5874
        %v5948 = vpop.f32.mrf.mxu0
        %v5949 = vadd.f32 %v5828, %v5948
        %v5950 = vpop.f32.mrf.mxu0
        %v5951 = vadd.f32 %v5828, %v5950
        %5952 = vmatmul.bf16.gmra.mxu0 %v5877
        %v5953 = vpop.f32.mrf.mxu0
        %v5954 = vadd.f32 %v5828, %v5953
        %v5955 = vpop.f32.mrf.mxu0
        %v5956 = vadd.f32 %v5828, %v5955
        %5957 = vmatmul.bf16.gmra.mxu0 %v5880
        %v5958 = vpop.f32.mrf.mxu0
        %v5959 = vadd.f32 %v5828, %v5958
        %v5960 = vpop.f32.mrf.mxu0
        %v5961 = vadd.f32 %v5828, %v5960
        %5962 = vmatmul.bf16.gmra.mxu0 %v5883
        %v5963 = vpop.f32.mrf.mxu0
        %v5964 = vadd.f32 %v5828, %v5963
        %v5965 = vpop.f32.mrf.mxu0
        %v5966 = vadd.f32 %v5828, %v5965
        %5967 = vmatmul.bf16.gmra.mxu0 %v5886
        %v5968 = vpop.f32.mrf.mxu0
        %v5969 = vadd.f32 %v5828, %v5968
        %v5970 = vpop.f32.mrf.mxu0
        %v5971 = vadd.f32 %v5828, %v5970
        %5972 = vmatmul.bf16.gmra.mxu0 %v5889
        %v5973 = vpop.f32.mrf.mxu0
        %v5974 = vadd.f32 %v5828, %v5973
        %v5975 = vpop.f32.mrf.mxu0
        %v5976 = vadd.f32 %v5828, %v5975
        %5977 = vmatmul.bf16.gmra.mxu0 %v5892
        %v5978 = vpop.f32.mrf.mxu0
        %v5979 = vadd.f32 %v5828, %v5978
        %v5980 = vpop.f32.mrf.mxu0
        %v5981 = vadd.f32 %v5828, %v5980
        %5982 = vmatmul.bf16.gmra.mxu0 %v5895
        %v5983 = vpop.f32.mrf.mxu0
        %v5984 = vadd.f32 %v5828, %v5983
        %v5985 = vpop.f32.mrf.mxu0
        %v5986 = vadd.f32 %v5828, %v5985
        %5987 = vmatmul.bf16.gmra.mxu0 %v5898
        %v5988 = vpop.f32.mrf.mxu0
        %v5989 = vadd.f32 %v5828, %v5988
        %v5990 = vpop.f32.mrf.mxu0
        %v5991 = vadd.f32 %v5828, %v5990
        %5992 = vdwg.mxu0
        %5993 = vmax.xlane.f32.xlu0 %v5914
        %v5994 = vpop.xlane.xlu0 %5993
        %5995 = vmax.xlane.f32.xlu0 %v5916
        %v5996 = vpop.xlane.xlu0 %5995
        %5997 = vmax.xlane.f32.xlu0 %v5919
        %v5998 = vpop.xlane.xlu0 %5997
        %5999 = vmax.xlane.f32.xlu0 %v5921
        %v6000 = vpop.xlane.xlu0 %5999
        %6001 = vmax.xlane.f32.xlu0 %v5924
        %v6002 = vpop.xlane.xlu0 %6001
        %6003 = vmax.xlane.f32.xlu0 %v5926
        %v6004 = vpop.xlane.xlu0 %6003
        %6005 = vmax.xlane.f32.xlu0 %v5929
        %v6006 = vpop.xlane.xlu0 %6005
        %6007 = vmax.xlane.f32.xlu0 %v5931
        %v6008 = vpop.xlane.xlu0 %6007
        %6009 = vmax.xlane.f32.xlu0 %v5934
        %v6010 = vpop.xlane.xlu0 %6009
        %6011 = vmax.xlane.f32.xlu0 %v5936
        %v6012 = vpop.xlane.xlu0 %6011
        %6013 = vmax.xlane.f32.xlu0 %v5939
        %v6014 = vpop.xlane.xlu0 %6013
        %6015 = vmax.xlane.f32.xlu0 %v5941
        %v6016 = vpop.xlane.xlu0 %6015
        %6017 = vmax.xlane.f32.xlu0 %v5944
        %v6018 = vpop.xlane.xlu0 %6017
        %6019 = vmax.xlane.f32.xlu0 %v5946
        %v6020 = vpop.xlane.xlu0 %6019
        %6021 = vmax.xlane.f32.xlu0 %v5949
        %v6022 = vpop.xlane.xlu0 %6021
        %6023 = vmax.xlane.f32.xlu0 %v5951
        %v6024 = vpop.xlane.xlu0 %6023
        %6025 = vmax.xlane.f32.xlu0 %v5954
        %v6026 = vpop.xlane.xlu0 %6025
        %6027 = vmax.xlane.f32.xlu0 %v5956
        %v6028 = vpop.xlane.xlu0 %6027
        %6029 = vmax.xlane.f32.xlu0 %v5959
        %v6030 = vpop.xlane.xlu0 %6029
        %6031 = vmax.xlane.f32.xlu0 %v5961
        %v6032 = vpop.xlane.xlu0 %6031
        %6033 = vmax.xlane.f32.xlu0 %v5964
        %v6034 = vpop.xlane.xlu0 %6033
        %6035 = vmax.xlane.f32.xlu0 %v5966
        %v6036 = vpop.xlane.xlu0 %6035
        %6037 = vmax.xlane.f32.xlu0 %v5969
        %v6038 = vpop.xlane.xlu0 %6037
        %6039 = vmax.xlane.f32.xlu0 %v5971
        %v6040 = vpop.xlane.xlu0 %6039
        %6041 = vmax.xlane.f32.xlu0 %v5974
        %v6042 = vpop.xlane.xlu0 %6041
        %6043 = vmax.xlane.f32.xlu0 %v5976
        %v6044 = vpop.xlane.xlu0 %6043
        %6045 = vmax.xlane.f32.xlu0 %v5979
        %v6046 = vpop.xlane.xlu0 %6045
        %6047 = vmax.xlane.f32.xlu0 %v5981
        %v6048 = vpop.xlane.xlu0 %6047
        %6049 = vmax.xlane.f32.xlu0 %v5984
        %v6050 = vpop.xlane.xlu0 %6049
        %6051 = vmax.xlane.f32.xlu0 %v5986
        %v6052 = vpop.xlane.xlu0 %6051
        %6053 = vmax.xlane.f32.xlu0 %v5989
        %v6054 = vpop.xlane.xlu0 %6053
        %6055 = vmax.xlane.f32.xlu0 %v5991
        %v6056 = vpop.xlane.xlu0 %6055
        %v6057 = vsub.f32 %v5914, %v5994
        %v6058 = vsub.f32 %v5916, %v5996
        %v6059 = vsub.f32 %v5919, %v5998
        %v6060 = vsub.f32 %v5921, %v6000
        %v6061 = vsub.f32 %v5924, %v6002
        %v6062 = vsub.f32 %v5926, %v6004
        %v6063 = vsub.f32 %v5929, %v6006
        %v6064 = vsub.f32 %v5931, %v6008
        %v6065 = vsub.f32 %v5934, %v6010
        %v6066 = vsub.f32 %v5936, %v6012
        %v6067 = vsub.f32 %v5939, %v6014
        %v6068 = vsub.f32 %v5941, %v6016
        %v6069 = vsub.f32 %v5944, %v6018
        %v6070 = vsub.f32 %v5946, %v6020
        %v6071 = vsub.f32 %v5949, %v6022
        %v6072 = vsub.f32 %v5951, %v6024
        %v6073 = vsub.f32 %v5954, %v6026
        %v6074 = vsub.f32 %v5956, %v6028
        %v6075 = vsub.f32 %v5959, %v6030
        %v6076 = vsub.f32 %v5961, %v6032
        %v6077 = vsub.f32 %v5964, %v6034
        %v6078 = vsub.f32 %v5966, %v6036
        %v6079 = vsub.f32 %v5969, %v6038
        %v6080 = vsub.f32 %v5971, %v6040
        %v6081 = vsub.f32 %v5974, %v6042
        %v6082 = vsub.f32 %v5976, %v6044
        %v6083 = vsub.f32 %v5979, %v6046
        %v6084 = vsub.f32 %v5981, %v6048
        %v6085 = vsub.f32 %v5984, %v6050
        %v6086 = vsub.f32 %v5986, %v6052
        %v6087 = vsub.f32 %v5989, %v6054
        %v6088 = vsub.f32 %v5991, %v6056
        %v6089 = vmul.f32 %v6057, 1.442695
        %v6090 = vpow.pop %v6089
        %v6091 = vmul.f32 %v6058, 1.442695
        %v6092 = vpow.pop %v6091
        %v6093 = vmul.f32 %v6059, 1.442695
        %v6094 = vpow.pop %v6093
        %v6095 = vmul.f32 %v6060, 1.442695
        %v6096 = vpow.pop %v6095
        %v6097 = vmul.f32 %v6061, 1.442695
        %v6098 = vpow.pop %v6097
        %v6099 = vmul.f32 %v6062, 1.442695
        %v6100 = vpow.pop %v6099
        %v6101 = vmul.f32 %v6063, 1.442695
        %v6102 = vpow.pop %v6101
        %v6103 = vmul.f32 %v6064, 1.442695
        %v6104 = vpow.pop %v6103
        %v6105 = vmul.f32 %v6065, 1.442695
        %v6106 = vpow.pop %v6105
        %v6107 = vmul.f32 %v6066, 1.442695
        %v6108 = vpow.pop %v6107
        %v6109 = vmul.f32 %v6067, 1.442695
        %v6110 = vpow.pop %v6109
        %v6111 = vmul.f32 %v6068, 1.442695
        %v6112 = vpow.pop %v6111
        %v6113 = vmul.f32 %v6069, 1.442695
        %v6114 = vpow.pop %v6113
        %v6115 = vmul.f32 %v6070, 1.442695
        %v6116 = vpow.pop %v6115
        %v6117 = vmul.f32 %v6071, 1.442695
        %v6118 = vpow.pop %v6117
        %v6119 = vmul.f32 %v6072, 1.442695
        %v6120 = vpow.pop %v6119
        %v6121 = vmul.f32 %v6073, 1.442695
        %v6122 = vpow.pop %v6121
        %v6123 = vmul.f32 %v6074, 1.442695
        %v6124 = vpow.pop %v6123
        %v6125 = vmul.f32 %v6075, 1.442695
        %v6126 = vpow.pop %v6125
        %v6127 = vmul.f32 %v6076, 1.442695
        %v6128 = vpow.pop %v6127
        %v6129 = vmul.f32 %v6077, 1.442695
        %v6130 = vpow.pop %v6129
        %v6131 = vmul.f32 %v6078, 1.442695
        %v6132 = vpow.pop %v6131
        %v6133 = vmul.f32 %v6079, 1.442695
        %v6134 = vpow.pop %v6133
        %v6135 = vmul.f32 %v6080, 1.442695
        %v6136 = vpow.pop %v6135
        %v6137 = vmul.f32 %v6081, 1.442695
        %v6138 = vpow.pop %v6137
        %v6139 = vmul.f32 %v6082, 1.442695
        %v6140 = vpow.pop %v6139
        %v6141 = vmul.f32 %v6083, 1.442695
        %v6142 = vpow.pop %v6141
        %v6143 = vmul.f32 %v6084, 1.442695
        %v6144 = vpow.pop %v6143
        %v6145 = vmul.f32 %v6085, 1.442695
        %v6146 = vpow.pop %v6145
        %v6147 = vmul.f32 %v6086, 1.442695
        %v6148 = vpow.pop %v6147
        %v6149 = vmul.f32 %v6087, 1.442695
        %v6150 = vpow.pop %v6149
        %v6151 = vmul.f32 %v6088, 1.442695
        %v6152 = vpow.pop %v6151
        %6153 = vadd.xlane.f32.xlu0 %v6090
        %v6154 = vpop.xlane.xlu0 %6153
        %6155 = vadd.xlane.f32.xlu0 %v6092
        %v6156 = vpop.xlane.xlu0 %6155
        %6157 = vadd.xlane.f32.xlu0 %v6094
        %v6158 = vpop.xlane.xlu0 %6157
        %6159 = vadd.xlane.f32.xlu0 %v6096
        %v6160 = vpop.xlane.xlu0 %6159
        %6161 = vadd.xlane.f32.xlu0 %v6098
        %v6162 = vpop.xlane.xlu0 %6161
        %6163 = vadd.xlane.f32.xlu0 %v6100
        %v6164 = vpop.xlane.xlu0 %6163
        %6165 = vadd.xlane.f32.xlu0 %v6102
        %v6166 = vpop.xlane.xlu0 %6165
        %6167 = vadd.xlane.f32.xlu0 %v6104
        %v6168 = vpop.xlane.xlu0 %6167
        %6169 = vadd.xlane.f32.xlu0 %v6106
        %v6170 = vpop.xlane.xlu0 %6169
        %6171 = vadd.xlane.f32.xlu0 %v6108
        %v6172 = vpop.xlane.xlu0 %6171
        %6173 = vadd.xlane.f32.xlu0 %v6110
        %v6174 = vpop.xlane.xlu0 %6173
        %6175 = vadd.xlane.f32.xlu0 %v6112
        %v6176 = vpop.xlane.xlu0 %6175
        %6177 = vadd.xlane.f32.xlu0 %v6114
        %v6178 = vpop.xlane.xlu0 %6177
        %6179 = vadd.xlane.f32.xlu0 %v6116
        %v6180 = vpop.xlane.xlu0 %6179
        %6181 = vadd.xlane.f32.xlu0 %v6118
        %v6182 = vpop.xlane.xlu0 %6181
        %6183 = vadd.xlane.f32.xlu0 %v6120
        %v6184 = vpop.xlane.xlu0 %6183
        %6185 = vadd.xlane.f32.xlu0 %v6122
        %v6186 = vpop.xlane.xlu0 %6185
        %6187 = vadd.xlane.f32.xlu0 %v6124
        %v6188 = vpop.xlane.xlu0 %6187
        %6189 = vadd.xlane.f32.xlu0 %v6126
        %v6190 = vpop.xlane.xlu0 %6189
        %6191 = vadd.xlane.f32.xlu0 %v6128
        %v6192 = vpop.xlane.xlu0 %6191
        %6193 = vadd.xlane.f32.xlu0 %v6130
        %v6194 = vpop.xlane.xlu0 %6193
        %6195 = vadd.xlane.f32.xlu0 %v6132
        %v6196 = vpop.xlane.xlu0 %6195
        %6197 = vadd.xlane.f32.xlu0 %v6134
        %v6198 = vpop.xlane.xlu0 %6197
        %6199 = vadd.xlane.f32.xlu0 %v6136
        %v6200 = vpop.xlane.xlu0 %6199
        %6201 = vadd.xlane.f32.xlu0 %v6138
        %v6202 = vpop.xlane.xlu0 %6201
        %6203 = vadd.xlane.f32.xlu0 %v6140
        %v6204 = vpop.xlane.xlu0 %6203
        %6205 = vadd.xlane.f32.xlu0 %v6142
        %v6206 = vpop.xlane.xlu0 %6205
        %6207 = vadd.xlane.f32.xlu0 %v6144
        %v6208 = vpop.xlane.xlu0 %6207
        %6209 = vadd.xlane.f32.xlu0 %v6146
        %v6210 = vpop.xlane.xlu0 %6209
        %6211 = vadd.xlane.f32.xlu0 %v6148
        %v6212 = vpop.xlane.xlu0 %6211
        %6213 = vadd.xlane.f32.xlu0 %v6150
        %v6214 = vpop.xlane.xlu0 %6213
        %6215 = vadd.xlane.f32.xlu0 %v6152
        %v6216 = vpop.xlane.xlu0 %6215
        %v6217 = vrcp.pop %v6154
        %v6218 = vmul.f32 %v6154, %v6217
        %v6219 = vsub.f32 1.0, %v6218
        %v6220 = vmul.f32 %v6217, %v6219
        %v6221 = vadd.f32 %v6217, %v6220
        %vm6222 = vweird.f32 %v6154
        %vm6223 = vweird.f32 %v6217
        %vm6224 = vmor %vm6222, %vm6223
        %v6225 = vsel %vm6224, %v6217, %v6221
        %v6226 = vand.u32 2147483647, %v6154
        %vm6227 = vcmp.eq.f32.partialorder %v6226, 8.507059e+37
        %v6228 = vand.u32 %v6154, 2147483648
        %v6229 = vor.u32 1.1754944e-38, %v6228
        %v6230 = vsel %vm6227, %v6229, %v6225
        %v6231 = vrcp.pop %v6156
        %v6232 = vmul.f32 %v6156, %v6231
        %v6233 = vsub.f32 1.0, %v6232
        %v6234 = vmul.f32 %v6231, %v6233
        %v6235 = vadd.f32 %v6231, %v6234
        %vm6236 = vweird.f32 %v6156
        %vm6237 = vweird.f32 %v6231
        %vm6238 = vmor %vm6236, %vm6237
        %v6239 = vsel %vm6238, %v6231, %v6235
        %v6240 = vand.u32 2147483647, %v6156
        %vm6241 = vcmp.eq.f32.partialorder %v6240, 8.507059e+37
        %v6242 = vand.u32 %v6156, 2147483648
        %v6243 = vor.u32 1.1754944e-38, %v6242
        %v6244 = vsel %vm6241, %v6243, %v6239
        %v6245 = vrcp.pop %v6158
        %v6246 = vmul.f32 %v6158, %v6245
        %v6247 = vsub.f32 1.0, %v6246
        %v6248 = vmul.f32 %v6245, %v6247
        %v6249 = vadd.f32 %v6245, %v6248
        %vm6250 = vweird.f32 %v6158
        %vm6251 = vweird.f32 %v6245
        %vm6252 = vmor %vm6250, %vm6251
        %v6253 = vsel %vm6252, %v6245, %v6249
        %v6254 = vand.u32 2147483647, %v6158
        %vm6255 = vcmp.eq.f32.partialorder %v6254, 8.507059e+37
        %v6256 = vand.u32 %v6158, 2147483648
        %v6257 = vor.u32 1.1754944e-38, %v6256
        %v6258 = vsel %vm6255, %v6257, %v6253
        %v6259 = vrcp.pop %v6160
        %v6260 = vmul.f32 %v6160, %v6259
        %v6261 = vsub.f32 1.0, %v6260
        %v6262 = vmul.f32 %v6259, %v6261
        %v6263 = vadd.f32 %v6259, %v6262
        %vm6264 = vweird.f32 %v6160
        %vm6265 = vweird.f32 %v6259
        %vm6266 = vmor %vm6264, %vm6265
        %v6267 = vsel %vm6266, %v6259, %v6263
        %v6268 = vand.u32 2147483647, %v6160
        %vm6269 = vcmp.eq.f32.partialorder %v6268, 8.507059e+37
        %v6270 = vand.u32 %v6160, 2147483648
        %v6271 = vor.u32 1.1754944e-38, %v6270
        %v6272 = vsel %vm6269, %v6271, %v6267
        %v6273 = vrcp.pop %v6162
        %v6274 = vmul.f32 %v6162, %v6273
        %v6275 = vsub.f32 1.0, %v6274
        %v6276 = vmul.f32 %v6273, %v6275
        %v6277 = vadd.f32 %v6273, %v6276
        %vm6278 = vweird.f32 %v6162
        %vm6279 = vweird.f32 %v6273
        %vm6280 = vmor %vm6278, %vm6279
        %v6281 = vsel %vm6280, %v6273, %v6277
        %v6282 = vand.u32 2147483647, %v6162
        %vm6283 = vcmp.eq.f32.partialorder %v6282, 8.507059e+37
        %v6284 = vand.u32 %v6162, 2147483648
        %v6285 = vor.u32 1.1754944e-38, %v6284
        %v6286 = vsel %vm6283, %v6285, %v6281
        %v6287 = vrcp.pop %v6164
        %v6288 = vmul.f32 %v6164, %v6287
        %v6289 = vsub.f32 1.0, %v6288
        %v6290 = vmul.f32 %v6287, %v6289
        %v6291 = vadd.f32 %v6287, %v6290
        %vm6292 = vweird.f32 %v6164
        %vm6293 = vweird.f32 %v6287
        %vm6294 = vmor %vm6292, %vm6293
        %v6295 = vsel %vm6294, %v6287, %v6291
        %v6296 = vand.u32 2147483647, %v6164
        %vm6297 = vcmp.eq.f32.partialorder %v6296, 8.507059e+37
        %v6298 = vand.u32 %v6164, 2147483648
        %v6299 = vor.u32 1.1754944e-38, %v6298
        %v6300 = vsel %vm6297, %v6299, %v6295
        %v6301 = vrcp.pop %v6166
        %v6302 = vmul.f32 %v6166, %v6301
        %v6303 = vsub.f32 1.0, %v6302
        %v6304 = vmul.f32 %v6301, %v6303
        %v6305 = vadd.f32 %v6301, %v6304
        %vm6306 = vweird.f32 %v6166
        %vm6307 = vweird.f32 %v6301
        %vm6308 = vmor %vm6306, %vm6307
        %v6309 = vsel %vm6308, %v6301, %v6305
        %v6310 = vand.u32 2147483647, %v6166
        %vm6311 = vcmp.eq.f32.partialorder %v6310, 8.507059e+37
        %v6312 = vand.u32 %v6166, 2147483648
        %v6313 = vor.u32 1.1754944e-38, %v6312
        %v6314 = vsel %vm6311, %v6313, %v6309
        %v6315 = vrcp.pop %v6168
        %v6316 = vmul.f32 %v6168, %v6315
        %v6317 = vsub.f32 1.0, %v6316
        %v6318 = vmul.f32 %v6315, %v6317
        %v6319 = vadd.f32 %v6315, %v6318
        %vm6320 = vweird.f32 %v6168
        %vm6321 = vweird.f32 %v6315
        %vm6322 = vmor %vm6320, %vm6321
        %v6323 = vsel %vm6322, %v6315, %v6319
        %v6324 = vand.u32 2147483647, %v6168
        %vm6325 = vcmp.eq.f32.partialorder %v6324, 8.507059e+37
        %v6326 = vand.u32 %v6168, 2147483648
        %v6327 = vor.u32 1.1754944e-38, %v6326
        %v6328 = vsel %vm6325, %v6327, %v6323
        %v6329 = vrcp.pop %v6170
        %v6330 = vmul.f32 %v6170, %v6329
        %v6331 = vsub.f32 1.0, %v6330
        %v6332 = vmul.f32 %v6329, %v6331
        %v6333 = vadd.f32 %v6329, %v6332
        %vm6334 = vweird.f32 %v6170
        %vm6335 = vweird.f32 %v6329
        %vm6336 = vmor %vm6334, %vm6335
        %v6337 = vsel %vm6336, %v6329, %v6333
        %v6338 = vand.u32 2147483647, %v6170
        %vm6339 = vcmp.eq.f32.partialorder %v6338, 8.507059e+37
        %v6340 = vand.u32 %v6170, 2147483648
        %v6341 = vor.u32 1.1754944e-38, %v6340
        %v6342 = vsel %vm6339, %v6341, %v6337
        %v6343 = vrcp.pop %v6172
        %v6344 = vmul.f32 %v6172, %v6343
        %v6345 = vsub.f32 1.0, %v6344
        %v6346 = vmul.f32 %v6343, %v6345
        %v6347 = vadd.f32 %v6343, %v6346
        %vm6348 = vweird.f32 %v6172
        %vm6349 = vweird.f32 %v6343
        %vm6350 = vmor %vm6348, %vm6349
        %v6351 = vsel %vm6350, %v6343, %v6347
        %v6352 = vand.u32 2147483647, %v6172
        %vm6353 = vcmp.eq.f32.partialorder %v6352, 8.507059e+37
        %v6354 = vand.u32 %v6172, 2147483648
        %v6355 = vor.u32 1.1754944e-38, %v6354
        %v6356 = vsel %vm6353, %v6355, %v6351
        %v6357 = vrcp.pop %v6174
        %v6358 = vmul.f32 %v6174, %v6357
        %v6359 = vsub.f32 1.0, %v6358
        %v6360 = vmul.f32 %v6357, %v6359
        %v6361 = vadd.f32 %v6357, %v6360
        %vm6362 = vweird.f32 %v6174
        %vm6363 = vweird.f32 %v6357
        %vm6364 = vmor %vm6362, %vm6363
        %v6365 = vsel %vm6364, %v6357, %v6361
        %v6366 = vand.u32 2147483647, %v6174
        %vm6367 = vcmp.eq.f32.partialorder %v6366, 8.507059e+37
        %v6368 = vand.u32 %v6174, 2147483648
        %v6369 = vor.u32 1.1754944e-38, %v6368
        %v6370 = vsel %vm6367, %v6369, %v6365
        %v6371 = vrcp.pop %v6176
        %v6372 = vmul.f32 %v6176, %v6371
        %v6373 = vsub.f32 1.0, %v6372
        %v6374 = vmul.f32 %v6371, %v6373
        %v6375 = vadd.f32 %v6371, %v6374
        %vm6376 = vweird.f32 %v6176
        %vm6377 = vweird.f32 %v6371
        %vm6378 = vmor %vm6376, %vm6377
        %v6379 = vsel %vm6378, %v6371, %v6375
        %v6380 = vand.u32 2147483647, %v6176
        %vm6381 = vcmp.eq.f32.partialorder %v6380, 8.507059e+37
        %v6382 = vand.u32 %v6176, 2147483648
        %v6383 = vor.u32 1.1754944e-38, %v6382
        %v6384 = vsel %vm6381, %v6383, %v6379
        %v6385 = vrcp.pop %v6178
        %v6386 = vmul.f32 %v6178, %v6385
        %v6387 = vsub.f32 1.0, %v6386
        %v6388 = vmul.f32 %v6385, %v6387
        %v6389 = vadd.f32 %v6385, %v6388
        %vm6390 = vweird.f32 %v6178
        %vm6391 = vweird.f32 %v6385
        %vm6392 = vmor %vm6390, %vm6391
        %v6393 = vsel %vm6392, %v6385, %v6389
        %v6394 = vand.u32 2147483647, %v6178
        %vm6395 = vcmp.eq.f32.partialorder %v6394, 8.507059e+37
        %v6396 = vand.u32 %v6178, 2147483648
        %v6397 = vor.u32 1.1754944e-38, %v6396
        %v6398 = vsel %vm6395, %v6397, %v6393
        %v6399 = vrcp.pop %v6180
        %v6400 = vmul.f32 %v6180, %v6399
        %v6401 = vsub.f32 1.0, %v6400
        %v6402 = vmul.f32 %v6399, %v6401
        %v6403 = vadd.f32 %v6399, %v6402
        %vm6404 = vweird.f32 %v6180
        %vm6405 = vweird.f32 %v6399
        %vm6406 = vmor %vm6404, %vm6405
        %v6407 = vsel %vm6406, %v6399, %v6403
        %v6408 = vand.u32 2147483647, %v6180
        %vm6409 = vcmp.eq.f32.partialorder %v6408, 8.507059e+37
        %v6410 = vand.u32 %v6180, 2147483648
        %v6411 = vor.u32 1.1754944e-38, %v6410
        %v6412 = vsel %vm6409, %v6411, %v6407
        %v6413 = vrcp.pop %v6182
        %v6414 = vmul.f32 %v6182, %v6413
        %v6415 = vsub.f32 1.0, %v6414
        %v6416 = vmul.f32 %v6413, %v6415
        %v6417 = vadd.f32 %v6413, %v6416
        %vm6418 = vweird.f32 %v6182
        %vm6419 = vweird.f32 %v6413
        %vm6420 = vmor %vm6418, %vm6419
        %v6421 = vsel %vm6420, %v6413, %v6417
        %v6422 = vand.u32 2147483647, %v6182
        %vm6423 = vcmp.eq.f32.partialorder %v6422, 8.507059e+37
        %v6424 = vand.u32 %v6182, 2147483648
        %v6425 = vor.u32 1.1754944e-38, %v6424
        %v6426 = vsel %vm6423, %v6425, %v6421
        %v6427 = vrcp.pop %v6184
        %v6428 = vmul.f32 %v6184, %v6427
        %v6429 = vsub.f32 1.0, %v6428
        %v6430 = vmul.f32 %v6427, %v6429
        %v6431 = vadd.f32 %v6427, %v6430
        %vm6432 = vweird.f32 %v6184
        %vm6433 = vweird.f32 %v6427
        %vm6434 = vmor %vm6432, %vm6433
        %v6435 = vsel %vm6434, %v6427, %v6431
        %v6436 = vand.u32 2147483647, %v6184
        %vm6437 = vcmp.eq.f32.partialorder %v6436, 8.507059e+37
        %v6438 = vand.u32 %v6184, 2147483648
        %v6439 = vor.u32 1.1754944e-38, %v6438
        %v6440 = vsel %vm6437, %v6439, %v6435
        %v6441 = vrcp.pop %v6186
        %v6442 = vmul.f32 %v6186, %v6441
        %v6443 = vsub.f32 1.0, %v6442
        %v6444 = vmul.f32 %v6441, %v6443
        %v6445 = vadd.f32 %v6441, %v6444
        %vm6446 = vweird.f32 %v6186
        %vm6447 = vweird.f32 %v6441
        %vm6448 = vmor %vm6446, %vm6447
        %v6449 = vsel %vm6448, %v6441, %v6445
        %v6450 = vand.u32 2147483647, %v6186
        %vm6451 = vcmp.eq.f32.partialorder %v6450, 8.507059e+37
        %v6452 = vand.u32 %v6186, 2147483648
        %v6453 = vor.u32 1.1754944e-38, %v6452
        %v6454 = vsel %vm6451, %v6453, %v6449
        %v6455 = vrcp.pop %v6188
        %v6456 = vmul.f32 %v6188, %v6455
        %v6457 = vsub.f32 1.0, %v6456
        %v6458 = vmul.f32 %v6455, %v6457
        %v6459 = vadd.f32 %v6455, %v6458
        %vm6460 = vweird.f32 %v6188
        %vm6461 = vweird.f32 %v6455
        %vm6462 = vmor %vm6460, %vm6461
        %v6463 = vsel %vm6462, %v6455, %v6459
        %v6464 = vand.u32 2147483647, %v6188
        %vm6465 = vcmp.eq.f32.partialorder %v6464, 8.507059e+37
        %v6466 = vand.u32 %v6188, 2147483648
        %v6467 = vor.u32 1.1754944e-38, %v6466
        %v6468 = vsel %vm6465, %v6467, %v6463
        %v6469 = vrcp.pop %v6190
        %v6470 = vmul.f32 %v6190, %v6469
        %v6471 = vsub.f32 1.0, %v6470
        %v6472 = vmul.f32 %v6469, %v6471
        %v6473 = vadd.f32 %v6469, %v6472
        %vm6474 = vweird.f32 %v6190
        %vm6475 = vweird.f32 %v6469
        %vm6476 = vmor %vm6474, %vm6475
        %v6477 = vsel %vm6476, %v6469, %v6473
        %v6478 = vand.u32 2147483647, %v6190
        %vm6479 = vcmp.eq.f32.partialorder %v6478, 8.507059e+37
        %v6480 = vand.u32 %v6190, 2147483648
        %v6481 = vor.u32 1.1754944e-38, %v6480
        %v6482 = vsel %vm6479, %v6481, %v6477
        %v6483 = vrcp.pop %v6192
        %v6484 = vmul.f32 %v6192, %v6483
        %v6485 = vsub.f32 1.0, %v6484
        %v6486 = vmul.f32 %v6483, %v6485
        %v6487 = vadd.f32 %v6483, %v6486
        %vm6488 = vweird.f32 %v6192
        %vm6489 = vweird.f32 %v6483
        %vm6490 = vmor %vm6488, %vm6489
        %v6491 = vsel %vm6490, %v6483, %v6487
        %v6492 = vand.u32 2147483647, %v6192
        %vm6493 = vcmp.eq.f32.partialorder %v6492, 8.507059e+37
        %v6494 = vand.u32 %v6192, 2147483648
        %v6495 = vor.u32 1.1754944e-38, %v6494
        %v6496 = vsel %vm6493, %v6495, %v6491
        %v6497 = vrcp.pop %v6194
        %v6498 = vmul.f32 %v6194, %v6497
        %v6499 = vsub.f32 1.0, %v6498
        %v6500 = vmul.f32 %v6497, %v6499
        %v6501 = vadd.f32 %v6497, %v6500
        %vm6502 = vweird.f32 %v6194
        %vm6503 = vweird.f32 %v6497
        %vm6504 = vmor %vm6502, %vm6503
        %v6505 = vsel %vm6504, %v6497, %v6501
        %v6506 = vand.u32 2147483647, %v6194
        %vm6507 = vcmp.eq.f32.partialorder %v6506, 8.507059e+37
        %v6508 = vand.u32 %v6194, 2147483648
        %v6509 = vor.u32 1.1754944e-38, %v6508
        %v6510 = vsel %vm6507, %v6509, %v6505
        %v6511 = vrcp.pop %v6196
        %v6512 = vmul.f32 %v6196, %v6511
        %v6513 = vsub.f32 1.0, %v6512
        %v6514 = vmul.f32 %v6511, %v6513
        %v6515 = vadd.f32 %v6511, %v6514
        %vm6516 = vweird.f32 %v6196
        %vm6517 = vweird.f32 %v6511
        %vm6518 = vmor %vm6516, %vm6517
        %v6519 = vsel %vm6518, %v6511, %v6515
        %v6520 = vand.u32 2147483647, %v6196
        %vm6521 = vcmp.eq.f32.partialorder %v6520, 8.507059e+37
        %v6522 = vand.u32 %v6196, 2147483648
        %v6523 = vor.u32 1.1754944e-38, %v6522
        %v6524 = vsel %vm6521, %v6523, %v6519
        %v6525 = vrcp.pop %v6198
        %v6526 = vmul.f32 %v6198, %v6525
        %v6527 = vsub.f32 1.0, %v6526
        %v6528 = vmul.f32 %v6525, %v6527
        %v6529 = vadd.f32 %v6525, %v6528
        %vm6530 = vweird.f32 %v6198
        %vm6531 = vweird.f32 %v6525
        %vm6532 = vmor %vm6530, %vm6531
        %v6533 = vsel %vm6532, %v6525, %v6529
        %v6534 = vand.u32 2147483647, %v6198
        %vm6535 = vcmp.eq.f32.partialorder %v6534, 8.507059e+37
        %v6536 = vand.u32 %v6198, 2147483648
        %v6537 = vor.u32 1.1754944e-38, %v6536
        %v6538 = vsel %vm6535, %v6537, %v6533
        %v6539 = vrcp.pop %v6200
        %v6540 = vmul.f32 %v6200, %v6539
        %v6541 = vsub.f32 1.0, %v6540
        %v6542 = vmul.f32 %v6539, %v6541
        %v6543 = vadd.f32 %v6539, %v6542
        %vm6544 = vweird.f32 %v6200
        %vm6545 = vweird.f32 %v6539
        %vm6546 = vmor %vm6544, %vm6545
        %v6547 = vsel %vm6546, %v6539, %v6543
        %v6548 = vand.u32 2147483647, %v6200
        %vm6549 = vcmp.eq.f32.partialorder %v6548, 8.507059e+37
        %v6550 = vand.u32 %v6200, 2147483648
        %v6551 = vor.u32 1.1754944e-38, %v6550
        %v6552 = vsel %vm6549, %v6551, %v6547
        %v6553 = vrcp.pop %v6202
        %v6554 = vmul.f32 %v6202, %v6553
        %v6555 = vsub.f32 1.0, %v6554
        %v6556 = vmul.f32 %v6553, %v6555
        %v6557 = vadd.f32 %v6553, %v6556
        %vm6558 = vweird.f32 %v6202
        %vm6559 = vweird.f32 %v6553
        %vm6560 = vmor %vm6558, %vm6559
        %v6561 = vsel %vm6560, %v6553, %v6557
        %v6562 = vand.u32 2147483647, %v6202
        %vm6563 = vcmp.eq.f32.partialorder %v6562, 8.507059e+37
        %v6564 = vand.u32 %v6202, 2147483648
        %v6565 = vor.u32 1.1754944e-38, %v6564
        %v6566 = vsel %vm6563, %v6565, %v6561
        %v6567 = vrcp.pop %v6204
        %v6568 = vmul.f32 %v6204, %v6567
        %v6569 = vsub.f32 1.0, %v6568
        %v6570 = vmul.f32 %v6567, %v6569
        %v6571 = vadd.f32 %v6567, %v6570
        %vm6572 = vweird.f32 %v6204
        %vm6573 = vweird.f32 %v6567
        %vm6574 = vmor %vm6572, %vm6573
        %v6575 = vsel %vm6574, %v6567, %v6571
        %v6576 = vand.u32 2147483647, %v6204
        %vm6577 = vcmp.eq.f32.partialorder %v6576, 8.507059e+37
        %v6578 = vand.u32 %v6204, 2147483648
        %v6579 = vor.u32 1.1754944e-38, %v6578
        %v6580 = vsel %vm6577, %v6579, %v6575
        %v6581 = vrcp.pop %v6206
        %v6582 = vmul.f32 %v6206, %v6581
        %v6583 = vsub.f32 1.0, %v6582
        %v6584 = vmul.f32 %v6581, %v6583
        %v6585 = vadd.f32 %v6581, %v6584
        %vm6586 = vweird.f32 %v6206
        %vm6587 = vweird.f32 %v6581
        %vm6588 = vmor %vm6586, %vm6587
        %v6589 = vsel %vm6588, %v6581, %v6585
        %v6590 = vand.u32 2147483647, %v6206
        %vm6591 = vcmp.eq.f32.partialorder %v6590, 8.507059e+37
        %v6592 = vand.u32 %v6206, 2147483648
        %v6593 = vor.u32 1.1754944e-38, %v6592
        %v6594 = vsel %vm6591, %v6593, %v6589
        %v6595 = vrcp.pop %v6208
        %v6596 = vmul.f32 %v6208, %v6595
        %v6597 = vsub.f32 1.0, %v6596
        %v6598 = vmul.f32 %v6595, %v6597
        %v6599 = vadd.f32 %v6595, %v6598
        %vm6600 = vweird.f32 %v6208
        %vm6601 = vweird.f32 %v6595
        %vm6602 = vmor %vm6600, %vm6601
        %v6603 = vsel %vm6602, %v6595, %v6599
        %v6604 = vand.u32 2147483647, %v6208
        %vm6605 = vcmp.eq.f32.partialorder %v6604, 8.507059e+37
        %v6606 = vand.u32 %v6208, 2147483648
        %v6607 = vor.u32 1.1754944e-38, %v6606
        %v6608 = vsel %vm6605, %v6607, %v6603
        %v6609 = vrcp.pop %v6210
        %v6610 = vmul.f32 %v6210, %v6609
        %v6611 = vsub.f32 1.0, %v6610
        %v6612 = vmul.f32 %v6609, %v6611
        %v6613 = vadd.f32 %v6609, %v6612
        %vm6614 = vweird.f32 %v6210
        %vm6615 = vweird.f32 %v6609
        %vm6616 = vmor %vm6614, %vm6615
        %v6617 = vsel %vm6616, %v6609, %v6613
        %v6618 = vand.u32 2147483647, %v6210
        %vm6619 = vcmp.eq.f32.partialorder %v6618, 8.507059e+37
        %v6620 = vand.u32 %v6210, 2147483648
        %v6621 = vor.u32 1.1754944e-38, %v6620
        %v6622 = vsel %vm6619, %v6621, %v6617
        %v6623 = vrcp.pop %v6212
        %v6624 = vmul.f32 %v6212, %v6623
        %v6625 = vsub.f32 1.0, %v6624
        %v6626 = vmul.f32 %v6623, %v6625
        %v6627 = vadd.f32 %v6623, %v6626
        %vm6628 = vweird.f32 %v6212
        %vm6629 = vweird.f32 %v6623
        %vm6630 = vmor %vm6628, %vm6629
        %v6631 = vsel %vm6630, %v6623, %v6627
        %v6632 = vand.u32 2147483647, %v6212
        %vm6633 = vcmp.eq.f32.partialorder %v6632, 8.507059e+37
        %v6634 = vand.u32 %v6212, 2147483648
        %v6635 = vor.u32 1.1754944e-38, %v6634
        %v6636 = vsel %vm6633, %v6635, %v6631
        %v6637 = vrcp.pop %v6214
        %v6638 = vmul.f32 %v6214, %v6637
        %v6639 = vsub.f32 1.0, %v6638
        %v6640 = vmul.f32 %v6637, %v6639
        %v6641 = vadd.f32 %v6637, %v6640
        %vm6642 = vweird.f32 %v6214
        %vm6643 = vweird.f32 %v6637
        %vm6644 = vmor %vm6642, %vm6643
        %v6645 = vsel %vm6644, %v6637, %v6641
        %v6646 = vand.u32 2147483647, %v6214
        %vm6647 = vcmp.eq.f32.partialorder %v6646, 8.507059e+37
        %v6648 = vand.u32 %v6214, 2147483648
        %v6649 = vor.u32 1.1754944e-38, %v6648
        %v6650 = vsel %vm6647, %v6649, %v6645
        %v6651 = vrcp.pop %v6216
        %v6652 = vmul.f32 %v6216, %v6651
        %v6653 = vsub.f32 1.0, %v6652
        %v6654 = vmul.f32 %v6651, %v6653
        %v6655 = vadd.f32 %v6651, %v6654
        %vm6656 = vweird.f32 %v6216
        %vm6657 = vweird.f32 %v6651
        %vm6658 = vmor %vm6656, %vm6657
        %v6659 = vsel %vm6658, %v6651, %v6655
        %v6660 = vand.u32 2147483647, %v6216
        %vm6661 = vcmp.eq.f32.partialorder %v6660, 8.507059e+37
        %v6662 = vand.u32 %v6216, 2147483648
        %v6663 = vor.u32 1.1754944e-38, %v6662
        %v6664 = vsel %vm6661, %v6663, %v6659
        %v6665 = vmul.f32 %v6090, %v6230
        %v6666 = vmul.f32 %v6092, %v6244
        %v6667 = vmul.f32 %v6094, %v6258
        %v6668 = vmul.f32 %v6096, %v6272
        %v6669 = vmul.f32 %v6098, %v6286
        %v6670 = vmul.f32 %v6100, %v6300
        %v6671 = vmul.f32 %v6102, %v6314
        %v6672 = vmul.f32 %v6104, %v6328
        %v6673 = vmul.f32 %v6106, %v6342
        %v6674 = vmul.f32 %v6108, %v6356
        %v6675 = vmul.f32 %v6110, %v6370
        %v6676 = vmul.f32 %v6112, %v6384
        %v6677 = vmul.f32 %v6114, %v6398
        %v6678 = vmul.f32 %v6116, %v6412
        %v6679 = vmul.f32 %v6118, %v6426
        %v6680 = vmul.f32 %v6120, %v6440
        %v6681 = vmul.f32 %v6122, %v6454
        %v6682 = vmul.f32 %v6124, %v6468
        %v6683 = vmul.f32 %v6126, %v6482
        %v6684 = vmul.f32 %v6128, %v6496
        %v6685 = vmul.f32 %v6130, %v6510
        %v6686 = vmul.f32 %v6132, %v6524
        %v6687 = vmul.f32 %v6134, %v6538
        %v6688 = vmul.f32 %v6136, %v6552
        %v6689 = vmul.f32 %v6138, %v6566
        %v6690 = vmul.f32 %v6140, %v6580
        %v6691 = vmul.f32 %v6142, %v6594
        %v6692 = vmul.f32 %v6144, %v6608
        %v6693 = vmul.f32 %v6146, %v6622
        %v6694 = vmul.f32 %v6148, %v6636
        %v6695 = vmul.f32 %v6150, %v6650
        %v6696 = vmul.f32 %v6152, %v6664
        %v6697 = vpack.c.bf16 %v6666, %v6665
        %v6698 = vpack.c.bf16 %v6668, %v6667
        %v6699 = vpack.c.bf16 %v6670, %v6669
        %v6700 = vpack.c.bf16 %v6672, %v6671
        %v6701 = vpack.c.bf16 %v6674, %v6673
        %v6702 = vpack.c.bf16 %v6676, %v6675
        %v6703 = vpack.c.bf16 %v6678, %v6677
        %v6704 = vpack.c.bf16 %v6680, %v6679
        %v6705 = vpack.c.bf16 %v6682, %v6681
        %v6706 = vpack.c.bf16 %v6684, %v6683
        %v6707 = vpack.c.bf16 %v6686, %v6685
        %v6708 = vpack.c.bf16 %v6688, %v6687
        %v6709 = vpack.c.bf16 %v6690, %v6689
        %v6710 = vpack.c.bf16 %v6692, %v6691
        %v6711 = vpack.c.bf16 %v6694, %v6693
        %v6712 = vpack.c.bf16 %v6696, %v6695
        %v6713 = vld [vmem:[%s16] sm:$0xf]
        %v6714 = vld [vmem:[%s16 + $0x4] sm:$0xf]
        %v6715 = vld [vmem:[%s16 + $0x8] sm:$0xf]
        %v6716 = vld [vmem:[%s16 + $0xc] sm:$0xf]
        %v6717 = vld [vmem:[%s16 + $0x10] sm:$0xf]
        %v6718 = vld [vmem:[%s16 + $0x14] sm:$0xf]
        %v6719 = vld [vmem:[%s16 + $0x18] sm:$0xf]
        %v6720 = vld [vmem:[%s16 + $0x1c] sm:$0xf]
        %v6721 = vld [vmem:[%s16 + $0x20] sm:$0xf]
        %v6722 = vld [vmem:[%s16 + $0x24] sm:$0xf]
        %v6723 = vld [vmem:[%s16 + $0x28] sm:$0xf]
        %v6724 = vld [vmem:[%s16 + $0x2c] sm:$0xf]
        %v6725 = vld [vmem:[%s16 + $0x30] sm:$0xf]
        %v6726 = vld [vmem:[%s16 + $0x34] sm:$0xf]
        %v6727 = vld [vmem:[%s16 + $0x38] sm:$0xf]
        %v6728 = vld [vmem:[%s16 + $0x3c] sm:$0xf]
        %v6745 = vunpack.c.l.b16 %v6713
        %v6746 = vunpack.c.l.b16 %v6714
        %v6747 = vunpack.c.l.b16 %v6715
        %v6748 = vunpack.c.l.b16 %v6716
        %v6749 = vunpack.c.l.b16 %v6717
        %v6750 = vunpack.c.l.b16 %v6718
        %v6751 = vunpack.c.l.b16 %v6719
        %v6752 = vunpack.c.l.b16 %v6720
        %v6753 = vunpack.c.l.b16 %v6721
        %v6754 = vunpack.c.l.b16 %v6722
        %v6755 = vunpack.c.l.b16 %v6723
        %v6756 = vunpack.c.l.b16 %v6724
        %v6757 = vunpack.c.l.b16 %v6725
        %v6758 = vunpack.c.l.b16 %v6726
        %v6759 = vunpack.c.l.b16 %v6727
        %v6760 = vunpack.c.l.b16 %v6728
        %v6761 = vpack.c.b16 %v6746, %v6745
        %v6762 = vpack.c.b16 %v6748, %v6747
        %v6763 = vpack.c.b16 %v6750, %v6749
        %v6764 = vpack.c.b16 %v6752, %v6751
        %v6765 = vpack.c.b16 %v6754, %v6753
        %v6766 = vpack.c.b16 %v6756, %v6755
        %v6767 = vpack.c.b16 %v6758, %v6757
        %v6768 = vpack.c.b16 %v6760, %v6759
        %6777 = vmatpush.bf16.msra.mxu0 %v6768
        %6778 = vmatpush.bf16.msra.mxu0 %v6767
        %6779 = vmatpush.bf16.msra.mxu0 %v6766
        %6780 = vmatpush.bf16.msra.mxu0 %v6765
        %6781 = vmatpush.bf16.msra.mxu0 %v6764
        %6782 = vmatpush.bf16.msra.mxu0 %v6763
        %6783 = vmatpush.bf16.msra.mxu0 %v6762
        %6784 = vmatpush.bf16.msra.mxu0 %v6761
        %6785 = vmatmul.bf16.gmra.mxu0 %v6697
        %v6786 = vpop.f32.mrf.mxu0
        %v6787 = vadd.f32 0.0, %v6786
        %v6788 = vpop.f32.mrf.mxu0
        %v6789 = vadd.f32 0.0, %v6788
        %6790 = vmatmul.bf16.gmra.mxu0 %v6698
        %v6791 = vpop.f32.mrf.mxu0
        %v6792 = vadd.f32 0.0, %v6791
        %v6793 = vpop.f32.mrf.mxu0
        %v6794 = vadd.f32 0.0, %v6793
        %6795 = vmatmul.bf16.gmra.mxu0 %v6699
        %v6796 = vpop.f32.mrf.mxu0
        %v6797 = vadd.f32 0.0, %v6796
        %v6798 = vpop.f32.mrf.mxu0
        %v6799 = vadd.f32 0.0, %v6798
        %6800 = vmatmul.bf16.gmra.mxu0 %v6700
        %v6801 = vpop.f32.mrf.mxu0
        %v6802 = vadd.f32 0.0, %v6801
        %v6803 = vpop.f32.mrf.mxu0
        %v6804 = vadd.f32 0.0, %v6803
        %6805 = vmatmul.bf16.gmra.mxu0 %v6701
        %v6806 = vpop.f32.mrf.mxu0
        %v6807 = vadd.f32 0.0, %v6806
        %v6808 = vpop.f32.mrf.mxu0
        %v6809 = vadd.f32 0.0, %v6808
        %6810 = vmatmul.bf16.gmra.mxu0 %v6702
        %v6811 = vpop.f32.mrf.mxu0
        %v6812 = vadd.f32 0.0, %v6811
        %v6813 = vpop.f32.mrf.mxu0
        %v6814 = vadd.f32 0.0, %v6813
        %6815 = vmatmul.bf16.gmra.mxu0 %v6703
        %v6816 = vpop.f32.mrf.mxu0
        %v6817 = vadd.f32 0.0, %v6816
        %v6818 = vpop.f32.mrf.mxu0
        %v6819 = vadd.f32 0.0, %v6818
        %6820 = vmatmul.bf16.gmra.mxu0 %v6704
        %v6821 = vpop.f32.mrf.mxu0
        %v6822 = vadd.f32 0.0, %v6821
        %v6823 = vpop.f32.mrf.mxu0
        %v6824 = vadd.f32 0.0, %v6823
        %6825 = vmatmul.bf16.gmra.mxu0 %v6705
        %v6826 = vpop.f32.mrf.mxu0
        %v6827 = vadd.f32 0.0, %v6826
        %v6828 = vpop.f32.mrf.mxu0
        %v6829 = vadd.f32 0.0, %v6828
        %6830 = vmatmul.bf16.gmra.mxu0 %v6706
        %v6831 = vpop.f32.mrf.mxu0
        %v6832 = vadd.f32 0.0, %v6831
        %v6833 = vpop.f32.mrf.mxu0
        %v6834 = vadd.f32 0.0, %v6833
        %6835 = vmatmul.bf16.gmra.mxu0 %v6707
        %v6836 = vpop.f32.mrf.mxu0
        %v6837 = vadd.f32 0.0, %v6836
        %v6838 = vpop.f32.mrf.mxu0
        %v6839 = vadd.f32 0.0, %v6838
        %6840 = vmatmul.bf16.gmra.mxu0 %v6708
        %v6841 = vpop.f32.mrf.mxu0
        %v6842 = vadd.f32 0.0, %v6841
        %v6843 = vpop.f32.mrf.mxu0
        %v6844 = vadd.f32 0.0, %v6843
        %6845 = vmatmul.bf16.gmra.mxu0 %v6709
        %v6846 = vpop.f32.mrf.mxu0
        %v6847 = vadd.f32 0.0, %v6846
        %v6848 = vpop.f32.mrf.mxu0
        %v6849 = vadd.f32 0.0, %v6848
        %6850 = vmatmul.bf16.gmra.mxu0 %v6710
        %v6851 = vpop.f32.mrf.mxu0
        %v6852 = vadd.f32 0.0, %v6851
        %v6853 = vpop.f32.mrf.mxu0
        %v6854 = vadd.f32 0.0, %v6853
        %6855 = vmatmul.bf16.gmra.mxu0 %v6711
        %v6856 = vpop.f32.mrf.mxu0
        %v6857 = vadd.f32 0.0, %v6856
        %v6858 = vpop.f32.mrf.mxu0
        %v6859 = vadd.f32 0.0, %v6858
        %6860 = vmatmul.bf16.gmra.mxu0 %v6712
        %v6861 = vpop.f32.mrf.mxu0
        %v6862 = vadd.f32 0.0, %v6861
        %v6863 = vpop.f32.mrf.mxu0
        %v6864 = vadd.f32 0.0, %v6863
        %6865 = vdwg.mxu0
        %v6866 = vlaneseq
        %v6867 = vand.u32 %v6866, 127
        %vm6868 = vcmp.lt.s32.totalorder %v6867, 4
        %v6869 = vsel %vm6868, %v6665, %v6787
        %v6870 = vsel %vm6868, %v6666, %v6789
        %v6871 = vsel %vm6868, %v6667, %v6792
        %v6872 = vsel %vm6868, %v6668, %v6794
        %v6873 = vsel %vm6868, %v6669, %v6797
        %v6874 = vsel %vm6868, %v6670, %v6799
        %v6875 = vsel %vm6868, %v6671, %v6802
        %v6876 = vsel %vm6868, %v6672, %v6804
        %v6877 = vsel %vm6868, %v6673, %v6807
        %v6878 = vsel %vm6868, %v6674, %v6809
        %v6879 = vsel %vm6868, %v6675, %v6812
        %v6880 = vsel %vm6868, %v6676, %v6814
        %v6881 = vsel %vm6868, %v6677, %v6817
        %v6882 = vsel %vm6868, %v6678, %v6819
        %v6883 = vsel %vm6868, %v6679, %v6822
        %v6884 = vsel %vm6868, %v6680, %v6824
        %v6885 = vsel %vm6868, %v6681, %v6827
        %v6886 = vsel %vm6868, %v6682, %v6829
        %v6887 = vsel %vm6868, %v6683, %v6832
        %v6888 = vsel %vm6868, %v6684, %v6834
        %v6889 = vsel %vm6868, %v6685, %v6837
        %v6890 = vsel %vm6868, %v6686, %v6839
        %v6891 = vsel %vm6868, %v6687, %v6842
        %v6892 = vsel %vm6868, %v6688, %v6844
        %v6893 = vsel %vm6868, %v6689, %v6847
        %v6894 = vsel %vm6868, %v6690, %v6849
        %v6895 = vsel %vm6868, %v6691, %v6852
        %v6896 = vsel %vm6868, %v6692, %v6854
        %v6897 = vsel %vm6868, %v6693, %v6857
        %v6898 = vsel %vm6868, %v6694, %v6859
        %v6899 = vsel %vm6868, %v6695, %v6862
        %v6900 = vsel %vm6868, %v6696, %v6864
        %6901 = vst [vmem:[%s559] sm:$0xff] %v6869
        %6902 = vst [vmem:[%s559 + $0x8] sm:$0xff] %v6870
        %6903 = vst [vmem:[%s559 + $0x10] sm:$0xff] %v6871
        %6904 = vst [vmem:[%s559 + $0x18] sm:$0xff] %v6872
        %6905 = vst [vmem:[%s559 + $0x20] sm:$0xff] %v6873
        %6906 = vst [vmem:[%s559 + $0x28] sm:$0xff] %v6874
        %6907 = vst [vmem:[%s559 + $0x30] sm:$0xff] %v6875
        %6908 = vst [vmem:[%s559 + $0x38] sm:$0xff] %v6876
        %6909 = vst [vmem:[%s559 + $0x40] sm:$0xff] %v6877
        %6910 = vst [vmem:[%s559 + $0x48] sm:$0xff] %v6878
        %6911 = vst [vmem:[%s559 + $0x50] sm:$0xff] %v6879
        %6912 = vst [vmem:[%s559 + $0x58] sm:$0xff] %v6880
        %6913 = vst [vmem:[%s559 + $0x60] sm:$0xff] %v6881
        %6914 = vst [vmem:[%s559 + $0x68] sm:$0xff] %v6882
        %6915 = vst [vmem:[%s559 + $0x70] sm:$0xff] %v6883
        %6916 = vst [vmem:[%s559 + $0x78] sm:$0xff] %v6884
        %6917 = vst [vmem:[%s559 + $0x80] sm:$0xff] %v6885
        %6918 = vst [vmem:[%s559 + $0x88] sm:$0xff] %v6886
        %6919 = vst [vmem:[%s559 + $0x90] sm:$0xff] %v6887
        %6920 = vst [vmem:[%s559 + $0x98] sm:$0xff] %v6888
        %6921 = vst [vmem:[%s559 + $0xa0] sm:$0xff] %v6889
        %6922 = vst [vmem:[%s559 + $0xa8] sm:$0xff] %v6890
        %6923 = vst [vmem:[%s559 + $0xb0] sm:$0xff] %v6891
        %6924 = vst [vmem:[%s559 + $0xb8] sm:$0xff] %v6892
        %6925 = vst [vmem:[%s559 + $0xc0] sm:$0xff] %v6893
        %6926 = vst [vmem:[%s559 + $0xc8] sm:$0xff] %v6894
        %6927 = vst [vmem:[%s559 + $0xd0] sm:$0xff] %v6895
        %6928 = vst [vmem:[%s559 + $0xd8] sm:$0xff] %v6896
        %6929 = vst [vmem:[%s559 + $0xe0] sm:$0xff] %v6897
        %6930 = vst [vmem:[%s559 + $0xe8] sm:$0xff] %v6898
        %6931 = vst [vmem:[%s559 + $0xf0] sm:$0xff] %v6899
        %6932 = vst [vmem:[%s559 + $0xf8] sm:$0xff] %v6900
        %s6933 = sand.u32 %s401, 1
        %s6934 = scalar_lea.sflag [#allocation3], %s6933
        %s6935 = sand.u32 %s401, 1
        %s6936 = smul.addr %s6935, 256
        %s6937 = scalar_lea.vmem [#allocation2], %s6936
        // Predicated region
        $region89: #{tpu_custom_call.1} parent=87 // pred_check
          %p6938 = pneg %p411
        $region90: #{tpu_custom_call.1} parent=87 // pred_check_branch
          %6940 = sbr.rel (%p6938) target = $region92
        $region91: #{tpu_custom_call.1} parent=87 // pred_region
          %s6941 = smul.u32 32, %s31
          %s6942 = ssub.s32 63, %s6941
          %p6943 = scmp.lt.s32.totalorder %s6942, 32
          %s6944 = scalar_select %p6943, %s6942, 32
          %s6945 = smul.u32 8, %s6944
          %s6946 = ssub.s32 256, %s6945
          %s6947 = sshll.u32 %s6946, 4
          %6948 = vsyncadd %s6934, %s6947
          %p6949 = scmp.ne.s32.totalorder 0, %s6945
          %s6950 = smul.addr %s6941, 8
          %s6951 = scalar_lea.hbm %s17, %s6950
          %s6952 = smul.u32 8, %s6944
          %s6953 = sshll.u32 %s6937, 4
          %s6954 = int_to_ptr.vmem [resolvable:$true] %s6953
          %s6955 = sshll.u32 %s6951, 4
          %s6956 = int_to_ptr.hbm [resolvable:$true] %s6955
          %s6957 = sshll.u32 %s6952, 4
          %6961 = dma.vmem_to_hbm [thread:$0]  (%p6949), %s6954, %s6957, %s6956, %s6934, 128, 128, 8
        $region92: #{tpu_custom_call.1} parent=87 // pred_fallthru
          _
      $region88: #{tpu_custom_call.1} parent=5 // pred_fallthru
        _
      %p6962 = scmp.le.s32.totalorder 2, %s26
      // Predicated region
      $region93: #{tpu_custom_call.1} parent=5 // pred_check
        %p6963 = pneg %p6962
      $region94: #{tpu_custom_call.1} parent=5 // pred_check_branch
        %6965 = sbr.rel (%p6963) target = $region96
      $region95: #{tpu_custom_call.1} parent=5 // pred_region
        %s6966 = ssub.s32 %s26, 2
        // Predicated region
        $region97: #{tpu_custom_call.1} parent=95 // pred_check
          %p6967 = pneg %p417
        $region98: #{tpu_custom_call.1} parent=95 // pred_check_branch
          %6969 = sbr.rel (%p6967) target = $region100
        $region99: #{tpu_custom_call.1} parent=95 // pred_region
          %s6970 = sand.u32 %s402, 1
          %s6971 = scalar_lea.sflag [#allocation3], %s6970
          %s6972 = sand.u32 %s402, 1
          %s6973 = smul.addr %s6972, 256
          %s6974 = scalar_lea.vmem [#allocation2], %s6973
          %6976 = dma.done %s6971, 4096
        $region100: #{tpu_custom_call.1} parent=95 // pred_fallthru
          _
      $region96: #{tpu_custom_call.1} parent=5 // pred_fallthru
        _
    $region6: #{tpu_custom_call.1} parent=1 // loop_footer
      %s30 = sadd.s32 1, %s26
    $region7: #{tpu_custom_call.1} parent=1 // loop_footer_branch
      %25 = sbr.rel target = $region3
    $region8: #{tpu_custom_call.1} parent=1 // loop_exit
      _
    %6977 = vsyncpa [#allocation3], 1
    %s6978 = scalar_lea.sflag [#allocation3], 1
    %6979 = vsyncpa %s6978, 1

</llo_original>
